<compile_context>
chip_gen: v5e
topology: v5e:2x2
jax: 0.10.0
libtpu: 0.0.40
codegen_flags: <defaults>
</compile_context>

<pallas_src>
import jax
import jax.numpy as jnp
from jax import lax
from jax.experimental import pallas as pl
from jax.experimental.pallas import tpu as pltpu


def _vmem_spec():
    return pl.BlockSpec(memory_space=pltpu.MemorySpace.VMEM)


# --------------------------------------------------------------------------
# Glue: im2col for the 3x3 "same" convolution (layout plumbing, outside kernel)
# --------------------------------------------------------------------------
def _im2col(images_nchw):
    n, c, h, w = images_nchw.shape
    x = jnp.transpose(images_nchw, (0, 2, 3, 1))                 # NHWC
    xp = jnp.pad(x, ((0, 0), (1, 1), (1, 1), (0, 0)))
    cols = []
    for dy in range(3):
        for dx in range(3):
            cols.append(xp[:, dy:dy + h, dx:dx + w, :])
    patches = jnp.concatenate(cols, axis=-1)                     # [N,H,W,9*C]
    return patches.reshape(n * h * w, 9 * c)


# --------------------------------------------------------------------------
# Fused kernel factory: backbone + bi-LSTM support encoder + attention-LSTM
# query encoder + matching head, all in one pallas_call.
# --------------------------------------------------------------------------
def _make_fused_kernel(s, q, p, feat_dim):
    fd = feat_dim

    def cell(xg, h, c, whh):
        # xg already contains x @ W_ih + b (hoisted). PyTorch gate order i,f,g,o.
        gates = xg + jnp.dot(h, whh, preferred_element_type=jnp.float32)
        sig = jax.nn.sigmoid(gates)      # full 4F-wide EUP op
        tah = jnp.tanh(gates)            # full 4F-wide EUP op
        i = sig[:, 0 * fd:1 * fd]
        f = sig[:, 1 * fd:2 * fd]
        g = tah[:, 2 * fd:3 * fd]
        o = sig[:, 3 * fd:4 * fd]
        c_new = f * c + i * g
        h_new = o * jnp.tanh(c_new)
        return h_new, c_new

    def softmax_rows(scores):
        m = jnp.max(scores, axis=1, keepdims=True)
        e = jnp.exp(scores - m)
        inv = pl.reciprocal(jnp.sum(e, axis=1, keepdims=True), approx=True)
        return e * inv

    def kernel(patches_ref, wconv_ref, bconv_ref, wproj_ref, bproj_ref,
               wih_fb_ref, b_fb_ref, whh_f_ref, whh_b_ref,
               qwih_x_ref, qwih_r_ref, qwhh_ref, qb_ref,
               onehot_ref, out_ref):
        # ---------------- backbone: conv3x3(im2col) + ReLU + GAP + linear ----
        conv = jnp.dot(patches_ref[...], wconv_ref[...],
                       preferred_element_type=jnp.float32) + bconv_ref[...]
        conv = jnp.maximum(conv, 0.0)                            # [(S+Q)*P, C]
        # Per-image spatial SUM; the 1/P scale is folded into wproj (wrapper).
        pooled = jnp.concatenate(
            [jnp.sum(conv[n * p:(n + 1) * p, :], axis=0, keepdims=True)
             for n in range(s + q)], axis=0)                     # [S+Q, C]
        feats = jnp.dot(pooled, wproj_ref[...],
                        preferred_element_type=jnp.float32) + bproj_ref[...]
        sf = feats[:s, :]                                        # [S, F]
        qf = feats[s:, :]                                        # [Q, F]

        # ---------------- support encoder: bidirectional LSTM ----------------
        whh_f = whh_f_ref[...]
        whh_b = whh_b_ref[...]
        # Hoisted input projections: BOTH directions in one batched matmul.
        xg_fb = jnp.dot(sf, wih_fb_ref[...],
                        preferred_element_type=jnp.float32) + b_fb_ref[...]
        xg_f = xg_fb[:, :4 * fd]          # vreg-boundary slice (4F = 128)
        xg_b = xg_fb[:, 4 * fd:]
        zero = jnp.zeros((1, fd), jnp.float32)
        h_f, c_f, h_b, c_b = zero, zero, zero, zero
        hf_rows = [None] * s
        hb_rows = [None] * s
        for t in range(s):                # both directions per unrolled step
            tb = s - 1 - t
            h_f, c_f = cell(xg_f[t:t + 1, :], h_f, c_f, whh_f)
            h_b, c_b = cell(xg_b[tb:tb + 1, :], h_b, c_b, whh_b)
            hf_rows[t] = h_f
            hb_rows[tb] = h_b
        ctx = sf + jnp.concatenate(hf_rows, axis=0) \
                 + jnp.concatenate(hb_rows, axis=0)              # [S, F]

        # ---------------- query encoder: attention + LSTMCell ----------------
        ctx_t = jnp.transpose(ctx)                 # [F, S], hoisted
        # read_out @ W_ih_r == attn @ (ctx @ W_ih_r): fold the read-out
        # projection into ctx ONCE, outside the sequential loop.
        ctx_w = jnp.dot(ctx, qwih_r_ref[...],
                        preferred_element_type=jnp.float32)      # [S, 4F]
        qg = jnp.dot(qf, qwih_x_ref[...],
                     preferred_element_type=jnp.float32) + qb_ref[...]
        qwhh = qwhh_ref[...]
        h = qf
        c = jnp.zeros((q, fd), jnp.float32)
        for _ in range(s):
            scores = jnp.dot(h, ctx_t, preferred_element_type=jnp.float32)
            attn = softmax_rows(scores)                          # [Q, S]
            xg = qg + jnp.dot(attn, ctx_w,
                              preferred_element_type=jnp.float32)
            h, c = cell(xg, h, c, qwhh)
            h = h + qf

        # ---------------- matching head --------------------------------------
        inv_norm = lax.rsqrt(jnp.sum(ctx * ctx, axis=1, keepdims=True) + 1e-24)
        sn_t = jnp.transpose(ctx * inv_norm)                     # [F, S], once
        sims = softmax_rows(jnp.dot(h, sn_t,
                                    preferred_element_type=jnp.float32))
        probs = jnp.dot(sims, onehot_ref[...],
                        preferred_element_type=jnp.float32) + 1e-4
        out_ref[...] = jnp.log(probs)

    return kernel


# --------------------------------------------------------------------------
# Full forward: one pallas_call
# --------------------------------------------------------------------------
def matching_network_forward(params, support_images, support_labels,
                             query_images, num_classes):
    s = support_images.shape[0]
    q = query_images.shape[0]
    _, _, h, w = support_images.shape
    p = h * w
    feat_dim = params["wproj"].shape[1]

    images = jnp.concatenate([support_images, query_images], axis=0)
    patches = _im2col(images)                                    # [(S+Q)*P, 9C]
    one_hot = jax.nn.one_hot(support_labels, num_classes, dtype=jnp.float32)

    # Host-side weight massaging (pure layout / algebraic folding, no compute
    # moved out of the kernel's math):
    wproj_scaled = params["wproj"] * (1.0 / float(p))            # GAP 1/P fold
    sup_wih_fb = jnp.concatenate([params["sup_wih_f"],
                                  params["sup_wih_b"]], axis=1)  # [F, 8F]
    sup_b_fb = jnp.concatenate([params["sup_b_f"],
                                params["sup_b_b"]], axis=1)      # [1, 8F]
    qry_wih_x = params["qry_wih"][:feat_dim, :]                  # [F, 4F]
    qry_wih_r = params["qry_wih"][feat_dim:, :]                  # [F, 4F]

    kernel = _make_fused_kernel(s, q, p, feat_dim)
    return pl.pallas_call(
        kernel,
        out_shape=jax.ShapeDtypeStruct((q, num_classes), jnp.float32),
        in_specs=[_vmem_spec()] * 14,
        out_specs=_vmem_spec(),
    )(patches,
      params["wconv"], params["bconv"], wproj_scaled, params["bproj"],
      sup_wih_fb, sup_b_fb, params["sup_whh_f"], params["sup_whh_b"],
      qry_wih_x, qry_wih_r, params["qry_whh"], params["qry_b"],
      one_hot)


# --------------------------------------------------------------------------
# Plain-JAX reference (same math) for a correctness check
# --------------------------------------------------------------------------
def reference_forward(params, support_images, support_labels, query_images,
                      num_classes):
    fdim = params["wproj"].shape[1]

    def backbone_ref(images):
        n, c, h, w = images.shape
        patches = _im2col(images)
        conv = jnp.maximum(patches @ params["wconv"] + params["bconv"], 0.0)
        pooled = conv.reshape(n, h * w, -1).mean(axis=1)
        return pooled @ params["wproj"] + params["bproj"]

    def cell(x, h, c, wih, whh, b):
        g = x @ wih + h @ whh + b
        i = jax.nn.sigmoid(g[:, :fdim])
        f = jax.nn.sigmoid(g[:, fdim:2 * fdim])
        gg = jnp.tanh(g[:, 2 * fdim:3 * fdim])
        o = jax.nn.sigmoid(g[:, 3 * fdim:])
        c = f * c + i * gg
        return o * jnp.tanh(c), c

    sf = backbone_ref(support_images)
    s = sf.shape[0]
    z = jnp.zeros((1, fdim), jnp.float32)
    h, c = z, z
    hf = []
    for t in range(s):
        h, c = cell(sf[t:t + 1], h, c, params["sup_wih_f"],
                    params["sup_whh_f"], params["sup_b_f"])
        hf.append(h)
    h, c = z, z
    hb = [None] * s
    for t in range(s - 1, -1, -1):
        h, c = cell(sf[t:t + 1], h, c, params["sup_wih_b"],
                    params["sup_whh_b"], params["sup_b_b"])
        hb[t] = h
    ctx_s = sf + jnp.concatenate(hf, 0) + jnp.concatenate(hb, 0)
    one_hot = jax.nn.one_hot(support_labels, num_classes, dtype=jnp.float32)

    qf = backbone_ref(query_images)
    h, c = qf, jnp.zeros_like(qf)
    for _ in range(s):
        attn = jax.nn.softmax(h @ ctx_s.T, axis=1)
        ro = attn @ ctx_s
        x = jnp.concatenate([qf, ro], axis=1)
        h, c = cell(x, h, c, params["qry_wih"], params["qry_whh"],
                    params["qry_b"])
        h = h + qf
    sctx_n = ctx_s / jnp.maximum(
        jnp.sqrt(jnp.sum(ctx_s ** 2, axis=1, keepdims=True)), 1e-12)
    sims = jax.nn.softmax(h @ sctx_n.T, axis=1)
    return jnp.log(sims @ one_hot + 1e-4)


# --------------------------------------------------------------------------
# Deterministic parameter init
# --------------------------------------------------------------------------
def init_params(key, in_channels=3, conv_channels=8, feat_dim=32):
    ks = jax.random.split(key, 13)

    def u(k, shape, fan_in):
        scale = 1.0 / (fan_in ** 0.5)
        return jax.random.uniform(k, shape, jnp.float32, -scale, scale)

    kdim = in_channels * 9
    return dict(
        # backbone
        wconv=u(ks[0], (kdim, conv_channels), kdim),
        bconv=u(ks[1], (1, conv_channels), kdim),
        wproj=u(ks[2], (conv_channels, feat_dim), conv_channels),
        bproj=u(ks[3], (1, feat_dim), conv_channels),
        # bidirectional support LSTM (weights stored transposed: [in, 4F];
        # biases are b_ih + b_hh combined: [1, 4F])
        sup_wih_f=u(ks[4], (feat_dim, 4 * feat_dim), feat_dim),
        sup_whh_f=u(ks[5], (feat_dim, 4 * feat_dim), feat_dim),
        sup_b_f=u(ks[6], (1, 4 * feat_dim), feat_dim),
        sup_wih_b=u(ks[7], (feat_dim, 4 * feat_dim), feat_dim),
        sup_whh_b=u(ks[8], (feat_dim, 4 * feat_dim), feat_dim),
        sup_b_b=u(ks[9], (1, 4 * feat_dim), feat_dim),
        # query LSTMCell (input = 2F)
        qry_wih=u(ks[10], (2 * feat_dim, 4 * feat_dim), feat_dim),
        qry_whh=u(ks[11], (feat_dim, 4 * feat_dim), feat_dim),
        qry_b=u(ks[12], (1, 4 * feat_dim), feat_dim),
    )


if __name__ == "__main__":
    key = jax.random.PRNGKey(0)
    k_params, k_sup, k_qry = jax.random.split(key, 3)

    # Small few-shot episode: 4-way 2-shot support, 4 queries, 16x16 RGB.
    num_classes = 4
    support_images = jax.random.normal(k_sup, (8, 3, 16, 16), jnp.float32)
    support_labels = jnp.array([0, 1, 2, 3, 0, 1, 2, 3], dtype=jnp.int32)
    query_images = jax.random.normal(k_qry, (4, 3, 16, 16), jnp.float32)

    params = init_params(k_params, in_channels=3, conv_channels=8, feat_dim=32)

    fwd = jax.jit(matching_network_forward, static_argnums=(4,))
    log_probs = fwd(params, support_images, support_labels, query_images,
                    num_classes)
    log_probs = jax.block_until_ready(log_probs)

    ref = reference_forward(params, support_images, support_labels,
                            query_images, num_classes)
    assert log_probs.shape == (4, num_classes)
    # Slightly looser tolerance than exact-math version: softmax denominators
    # use the EUP approximate reciprocal and two matmuls are re-associated.
    assert jnp.allclose(log_probs, ref, rtol=5e-3, atol=5e-3), (
        f"mismatch:\n{log_probs}\nvs ref\n{ref}")

    print("KERNEL_OK")
</pallas_src>

<mosaic_0001>
module attributes {stable_mosaic.version = 11 : i64} {
  func.func @kernel(%arg0: memref<3072x27xf32, #tpu.memory_space<vmem>>, %arg1: memref<27x8xf32, #tpu.memory_space<vmem>>, %arg2: memref<1x8xf32, #tpu.memory_space<vmem>>, %arg3: memref<8x32xf32, #tpu.memory_space<vmem>>, %arg4: memref<1x32xf32, #tpu.memory_space<vmem>>, %arg5: memref<32x256xf32, #tpu.memory_space<vmem>>, %arg6: memref<1x256xf32, #tpu.memory_space<vmem>>, %arg7: memref<32x128xf32, #tpu.memory_space<vmem>>, %arg8: memref<32x128xf32, #tpu.memory_space<vmem>>, %arg9: memref<32x128xf32, #tpu.memory_space<vmem>>, %arg10: memref<32x128xf32, #tpu.memory_space<vmem>>, %arg11: memref<32x128xf32, #tpu.memory_space<vmem>>, %arg12: memref<1x128xf32, #tpu.memory_space<vmem>>, %arg13: memref<8x4xf32, #tpu.memory_space<vmem>>, %arg14: memref<4x4xf32, #tpu.memory_space<vmem>>) attributes {dimension_semantics = [], scalar_prefetch = 0 : i64, scratch_operands = 0 : i64, tpu.core_type = #tpu.core_type<tc>} {
    %c0 = arith.constant 0 : index
    %c0_0 = arith.constant 0 : index
    %0 = vector.load %arg0[%c0, %c0_0] : memref<3072x27xf32, #tpu.memory_space<vmem>>, vector<3072x27xf32>
    %c0_1 = arith.constant 0 : index
    %c0_2 = arith.constant 0 : index
    %1 = vector.load %arg1[%c0_1, %c0_2] : memref<27x8xf32, #tpu.memory_space<vmem>>, vector<27x8xf32>
    %cst = arith.constant dense<0.000000e+00> : vector<3072x8xf32>
    %2 = tpu.matmul %0, %1, %cst {dimension_numbers = #tpu.dot_dimension_numbers<[1], [0], [0], [1], [0, 0, 1, 1], [], []>} : vector<3072x27xf32>, vector<27x8xf32>, vector<3072x8xf32> -> vector<3072x8xf32>
    %c0_3 = arith.constant 0 : index
    %c0_4 = arith.constant 0 : index
    %3 = vector.load %arg2[%c0_3, %c0_4] : memref<1x8xf32, #tpu.memory_space<vmem>>, vector<1x8xf32>
    %4 = vector.broadcast %3 : vector<1x8xf32> to vector<3072x8xf32>
    %5 = arith.addf %2, %4 : vector<3072x8xf32>
    %cst_5 = arith.constant 0.000000e+00 : f32
    %6 = vector.broadcast %cst_5 : f32 to vector<3072x8xf32>
    %7 = arith.maximumf %5, %6 : vector<3072x8xf32>
    %8 = vector.extract_strided_slice %7 {offsets = [0, 0], sizes = [256, 8], strides = [1, 1]} : vector<3072x8xf32> to vector<256x8xf32>
    %cst_6 = arith.constant dense<0.000000e+00> : vector<8xf32>
    %9 = vector.multi_reduction <add>, %8, %cst_6 [0] : vector<256x8xf32> to vector<8xf32>
    %10 = vector.shape_cast %9 : vector<8xf32> to vector<1x8xf32>
    %11 = vector.extract_strided_slice %7 {offsets = [256, 0], sizes = [256, 8], strides = [1, 1]} : vector<3072x8xf32> to vector<256x8xf32>
    %cst_7 = arith.constant dense<0.000000e+00> : vector<8xf32>
    %12 = vector.multi_reduction <add>, %11, %cst_7 [0] : vector<256x8xf32> to vector<8xf32>
    %13 = vector.shape_cast %12 : vector<8xf32> to vector<1x8xf32>
    %14 = vector.extract_strided_slice %7 {offsets = [512, 0], sizes = [256, 8], strides = [1, 1]} : vector<3072x8xf32> to vector<256x8xf32>
    %cst_8 = arith.constant dense<0.000000e+00> : vector<8xf32>
    %15 = vector.multi_reduction <add>, %14, %cst_8 [0] : vector<256x8xf32> to vector<8xf32>
    %16 = vector.shape_cast %15 : vector<8xf32> to vector<1x8xf32>
    %17 = vector.extract_strided_slice %7 {offsets = [768, 0], sizes = [256, 8], strides = [1, 1]} : vector<3072x8xf32> to vector<256x8xf32>
    %cst_9 = arith.constant dense<0.000000e+00> : vector<8xf32>
    %18 = vector.multi_reduction <add>, %17, %cst_9 [0] : vector<256x8xf32> to vector<8xf32>
    %19 = vector.shape_cast %18 : vector<8xf32> to vector<1x8xf32>
    %20 = vector.extract_strided_slice %7 {offsets = [1024, 0], sizes = [256, 8], strides = [1, 1]} : vector<3072x8xf32> to vector<256x8xf32>
    %cst_10 = arith.constant dense<0.000000e+00> : vector<8xf32>
    %21 = vector.multi_reduction <add>, %20, %cst_10 [0] : vector<256x8xf32> to vector<8xf32>
    %22 = vector.shape_cast %21 : vector<8xf32> to vector<1x8xf32>
    %23 = vector.extract_strided_slice %7 {offsets = [1280, 0], sizes = [256, 8], strides = [1, 1]} : vector<3072x8xf32> to vector<256x8xf32>
    %cst_11 = arith.constant dense<0.000000e+00> : vector<8xf32>
    %24 = vector.multi_reduction <add>, %23, %cst_11 [0] : vector<256x8xf32> to vector<8xf32>
    %25 = vector.shape_cast %24 : vector<8xf32> to vector<1x8xf32>
    %26 = vector.extract_strided_slice %7 {offsets = [1536, 0], sizes = [256, 8], strides = [1, 1]} : vector<3072x8xf32> to vector<256x8xf32>
    %cst_12 = arith.constant dense<0.000000e+00> : vector<8xf32>
    %27 = vector.multi_reduction <add>, %26, %cst_12 [0] : vector<256x8xf32> to vector<8xf32>
    %28 = vector.shape_cast %27 : vector<8xf32> to vector<1x8xf32>
    %29 = vector.extract_strided_slice %7 {offsets = [1792, 0], sizes = [256, 8], strides = [1, 1]} : vector<3072x8xf32> to vector<256x8xf32>
    %cst_13 = arith.constant dense<0.000000e+00> : vector<8xf32>
    %30 = vector.multi_reduction <add>, %29, %cst_13 [0] : vector<256x8xf32> to vector<8xf32>
    %31 = vector.shape_cast %30 : vector<8xf32> to vector<1x8xf32>
    %32 = vector.extract_strided_slice %7 {offsets = [2048, 0], sizes = [256, 8], strides = [1, 1]} : vector<3072x8xf32> to vector<256x8xf32>
    %cst_14 = arith.constant dense<0.000000e+00> : vector<8xf32>
    %33 = vector.multi_reduction <add>, %32, %cst_14 [0] : vector<256x8xf32> to vector<8xf32>
    %34 = vector.shape_cast %33 : vector<8xf32> to vector<1x8xf32>
    %35 = vector.extract_strided_slice %7 {offsets = [2304, 0], sizes = [256, 8], strides = [1, 1]} : vector<3072x8xf32> to vector<256x8xf32>
    %cst_15 = arith.constant dense<0.000000e+00> : vector<8xf32>
    %36 = vector.multi_reduction <add>, %35, %cst_15 [0] : vector<256x8xf32> to vector<8xf32>
    %37 = vector.shape_cast %36 : vector<8xf32> to vector<1x8xf32>
    %38 = vector.extract_strided_slice %7 {offsets = [2560, 0], sizes = [256, 8], strides = [1, 1]} : vector<3072x8xf32> to vector<256x8xf32>
    %cst_16 = arith.constant dense<0.000000e+00> : vector<8xf32>
    %39 = vector.multi_reduction <add>, %38, %cst_16 [0] : vector<256x8xf32> to vector<8xf32>
    %40 = vector.shape_cast %39 : vector<8xf32> to vector<1x8xf32>
    %41 = vector.extract_strided_slice %7 {offsets = [2816, 0], sizes = [256, 8], strides = [1, 1]} : vector<3072x8xf32> to vector<256x8xf32>
    %cst_17 = arith.constant dense<0.000000e+00> : vector<8xf32>
    %42 = vector.multi_reduction <add>, %41, %cst_17 [0] : vector<256x8xf32> to vector<8xf32>
    %43 = vector.shape_cast %42 : vector<8xf32> to vector<1x8xf32>
    %44 = tpu.concatenate %10, %13, %16, %19, %22, %25, %28, %31, %34, %37, %40, %43 in 0 : vector<1x8xf32>, vector<1x8xf32>, vector<1x8xf32>, vector<1x8xf32>, vector<1x8xf32>, vector<1x8xf32>, vector<1x8xf32>, vector<1x8xf32>, vector<1x8xf32>, vector<1x8xf32>, vector<1x8xf32>, vector<1x8xf32> -> vector<12x8xf32>
    %c0_18 = arith.constant 0 : index
    %c0_19 = arith.constant 0 : index
    %45 = vector.load %arg3[%c0_18, %c0_19] : memref<8x32xf32, #tpu.memory_space<vmem>>, vector<8x32xf32>
    %cst_20 = arith.constant dense<0.000000e+00> : vector<12x32xf32>
    %46 = tpu.matmul %44, %45, %cst_20 {dimension_numbers = #tpu.dot_dimension_numbers<[1], [0], [0], [1], [0, 0, 1, 1], [], []>} : vector<12x8xf32>, vector<8x32xf32>, vector<12x32xf32> -> vector<12x32xf32>
    %c0_21 = arith.constant 0 : index
    %c0_22 = arith.constant 0 : index
    %47 = vector.load %arg4[%c0_21, %c0_22] : memref<1x32xf32, #tpu.memory_space<vmem>>, vector<1x32xf32>
    %48 = vector.broadcast %47 : vector<1x32xf32> to vector<12x32xf32>
    %49 = arith.addf %46, %48 : vector<12x32xf32>
    %50 = vector.extract_strided_slice %49 {offsets = [0, 0], sizes = [8, 32], strides = [1, 1]} : vector<12x32xf32> to vector<8x32xf32>
    %51 = vector.extract_strided_slice %49 {offsets = [8, 0], sizes = [4, 32], strides = [1, 1]} : vector<12x32xf32> to vector<4x32xf32>
    %c0_23 = arith.constant 0 : index
    %c0_24 = arith.constant 0 : index
    %52 = vector.load %arg7[%c0_23, %c0_24] : memref<32x128xf32, #tpu.memory_space<vmem>>, vector<32x128xf32>
    %c0_25 = arith.constant 0 : index
    %c0_26 = arith.constant 0 : index
    %53 = vector.load %arg8[%c0_25, %c0_26] : memref<32x128xf32, #tpu.memory_space<vmem>>, vector<32x128xf32>
    %c0_27 = arith.constant 0 : index
    %c0_28 = arith.constant 0 : index
    %54 = vector.load %arg5[%c0_27, %c0_28] : memref<32x256xf32, #tpu.memory_space<vmem>>, vector<32x256xf32>
    %cst_29 = arith.constant dense<0.000000e+00> : vector<8x256xf32>
    %55 = tpu.matmul %50, %54, %cst_29 {dimension_numbers = #tpu.dot_dimension_numbers<[1], [0], [0], [1], [0, 0, 1, 1], [], []>} : vector<8x32xf32>, vector<32x256xf32>, vector<8x256xf32> -> vector<8x256xf32>
    %c0_30 = arith.constant 0 : index
    %c0_31 = arith.constant 0 : index
    %56 = vector.load %arg6[%c0_30, %c0_31] : memref<1x256xf32, #tpu.memory_space<vmem>>, vector<1x256xf32>
    %57 = vector.broadcast %56 : vector<1x256xf32> to vector<8x256xf32>
    %58 = arith.addf %55, %57 : vector<8x256xf32>
    %59 = vector.extract_strided_slice %58 {offsets = [0, 0], sizes = [8, 128], strides = [1, 1]} : vector<8x256xf32> to vector<8x128xf32>
    %60 = vector.extract_strided_slice %58 {offsets = [0, 128], sizes = [8, 128], strides = [1, 1]} : vector<8x256xf32> to vector<8x128xf32>
    %cst_32 = arith.constant 0.000000e+00 : f32
    %61 = vector.broadcast %cst_32 : f32 to vector<1x32xf32>
    %62 = vector.extract_strided_slice %59 {offsets = [0, 0], sizes = [1, 128], strides = [1, 1]} : vector<8x128xf32> to vector<1x128xf32>
    %cst_33 = arith.constant dense<0.000000e+00> : vector<1x128xf32>
    %63 = tpu.matmul %61, %52, %cst_33 {dimension_numbers = #tpu.dot_dimension_numbers<[1], [0], [0], [1], [0, 0, 1, 1], [], []>} : vector<1x32xf32>, vector<32x128xf32>, vector<1x128xf32> -> vector<1x128xf32>
    %64 = arith.addf %62, %63 : vector<1x128xf32>
    %65 = arith.negf %64 : vector<1x128xf32>
    %66 = math.exp %65 : vector<1x128xf32>
    %cst_34 = arith.constant 1.000000e+00 : f32
    %67 = vector.broadcast %cst_34 : f32 to vector<1x128xf32>
    %68 = arith.addf %67, %66 : vector<1x128xf32>
    %69 = arith.divf %67, %68 : vector<1x128xf32>
    %70 = math.tanh %64 : vector<1x128xf32>
    %71 = vector.extract_strided_slice %69 {offsets = [0, 0], sizes = [1, 32], strides = [1, 1]} : vector<1x128xf32> to vector<1x32xf32>
    %72 = vector.extract_strided_slice %69 {offsets = [0, 32], sizes = [1, 32], strides = [1, 1]} : vector<1x128xf32> to vector<1x32xf32>
    %73 = vector.extract_strided_slice %70 {offsets = [0, 64], sizes = [1, 32], strides = [1, 1]} : vector<1x128xf32> to vector<1x32xf32>
    %74 = vector.extract_strided_slice %69 {offsets = [0, 96], sizes = [1, 32], strides = [1, 1]} : vector<1x128xf32> to vector<1x32xf32>
    %75 = arith.mulf %72, %61 : vector<1x32xf32>
    %76 = arith.mulf %71, %73 : vector<1x32xf32>
    %77 = arith.addf %75, %76 : vector<1x32xf32>
    %78 = math.tanh %77 : vector<1x32xf32>
    %79 = arith.mulf %74, %78 : vector<1x32xf32>
    %80 = vector.extract_strided_slice %60 {offsets = [7, 0], sizes = [1, 128], strides = [1, 1]} : vector<8x128xf32> to vector<1x128xf32>
    %cst_35 = arith.constant dense<0.000000e+00> : vector<1x128xf32>
    %81 = tpu.matmul %61, %53, %cst_35 {dimension_numbers = #tpu.dot_dimension_numbers<[1], [0], [0], [1], [0, 0, 1, 1], [], []>} : vector<1x32xf32>, vector<32x128xf32>, vector<1x128xf32> -> vector<1x128xf32>
    %82 = arith.addf %80, %81 : vector<1x128xf32>
    %83 = arith.negf %82 : vector<1x128xf32>
    %84 = math.exp %83 : vector<1x128xf32>
    %cst_36 = arith.constant 1.000000e+00 : f32
    %85 = vector.broadcast %cst_36 : f32 to vector<1x128xf32>
    %86 = arith.addf %85, %84 : vector<1x128xf32>
    %87 = arith.divf %85, %86 : vector<1x128xf32>
    %88 = math.tanh %82 : vector<1x128xf32>
    %89 = vector.extract_strided_slice %87 {offsets = [0, 0], sizes = [1, 32], strides = [1, 1]} : vector<1x128xf32> to vector<1x32xf32>
    %90 = vector.extract_strided_slice %87 {offsets = [0, 32], sizes = [1, 32], strides = [1, 1]} : vector<1x128xf32> to vector<1x32xf32>
    %91 = vector.extract_strided_slice %88 {offsets = [0, 64], sizes = [1, 32], strides = [1, 1]} : vector<1x128xf32> to vector<1x32xf32>
    %92 = vector.extract_strided_slice %87 {offsets = [0, 96], sizes = [1, 32], strides = [1, 1]} : vector<1x128xf32> to vector<1x32xf32>
    %93 = arith.mulf %90, %61 : vector<1x32xf32>
    %94 = arith.mulf %89, %91 : vector<1x32xf32>
    %95 = arith.addf %93, %94 : vector<1x32xf32>
    %96 = math.tanh %95 : vector<1x32xf32>
    %97 = arith.mulf %92, %96 : vector<1x32xf32>
    %98 = vector.extract_strided_slice %59 {offsets = [1, 0], sizes = [1, 128], strides = [1, 1]} : vector<8x128xf32> to vector<1x128xf32>
    %cst_37 = arith.constant dense<0.000000e+00> : vector<1x128xf32>
    %99 = tpu.matmul %79, %52, %cst_37 {dimension_numbers = #tpu.dot_dimension_numbers<[1], [0], [0], [1], [0, 0, 1, 1], [], []>} : vector<1x32xf32>, vector<32x128xf32>, vector<1x128xf32> -> vector<1x128xf32>
    %100 = arith.addf %98, %99 : vector<1x128xf32>
    %101 = arith.negf %100 : vector<1x128xf32>
    %102 = math.exp %101 : vector<1x128xf32>
    %cst_38 = arith.constant 1.000000e+00 : f32
    %103 = vector.broadcast %cst_38 : f32 to vector<1x128xf32>
    %104 = arith.addf %103, %102 : vector<1x128xf32>
    %105 = arith.divf %103, %104 : vector<1x128xf32>
    %106 = math.tanh %100 : vector<1x128xf32>
    %107 = vector.extract_strided_slice %105 {offsets = [0, 0], sizes = [1, 32], strides = [1, 1]} : vector<1x128xf32> to vector<1x32xf32>
    %108 = vector.extract_strided_slice %105 {offsets = [0, 32], sizes = [1, 32], strides = [1, 1]} : vector<1x128xf32> to vector<1x32xf32>
    %109 = vector.extract_strided_slice %106 {offsets = [0, 64], sizes = [1, 32], strides = [1, 1]} : vector<1x128xf32> to vector<1x32xf32>
    %110 = vector.extract_strided_slice %105 {offsets = [0, 96], sizes = [1, 32], strides = [1, 1]} : vector<1x128xf32> to vector<1x32xf32>
    %111 = arith.mulf %108, %77 : vector<1x32xf32>
    %112 = arith.mulf %107, %109 : vector<1x32xf32>
    %113 = arith.addf %111, %112 : vector<1x32xf32>
    %114 = math.tanh %113 : vector<1x32xf32>
    %115 = arith.mulf %110, %114 : vector<1x32xf32>
    %116 = vector.extract_strided_slice %60 {offsets = [6, 0], sizes = [1, 128], strides = [1, 1]} : vector<8x128xf32> to vector<1x128xf32>
    %cst_39 = arith.constant dense<0.000000e+00> : vector<1x128xf32>
    %117 = tpu.matmul %97, %53, %cst_39 {dimension_numbers = #tpu.dot_dimension_numbers<[1], [0], [0], [1], [0, 0, 1, 1], [], []>} : vector<1x32xf32>, vector<32x128xf32>, vector<1x128xf32> -> vector<1x128xf32>
    %118 = arith.addf %116, %117 : vector<1x128xf32>
    %119 = arith.negf %118 : vector<1x128xf32>
    %120 = math.exp %119 : vector<1x128xf32>
    %cst_40 = arith.constant 1.000000e+00 : f32
    %121 = vector.broadcast %cst_40 : f32 to vector<1x128xf32>
    %122 = arith.addf %121, %120 : vector<1x128xf32>
    %123 = arith.divf %121, %122 : vector<1x128xf32>
    %124 = math.tanh %118 : vector<1x128xf32>
    %125 = vector.extract_strided_slice %123 {offsets = [0, 0], sizes = [1, 32], strides = [1, 1]} : vector<1x128xf32> to vector<1x32xf32>
    %126 = vector.extract_strided_slice %123 {offsets = [0, 32], sizes = [1, 32], strides = [1, 1]} : vector<1x128xf32> to vector<1x32xf32>
    %127 = vector.extract_strided_slice %124 {offsets = [0, 64], sizes = [1, 32], strides = [1, 1]} : vector<1x128xf32> to vector<1x32xf32>
    %128 = vector.extract_strided_slice %123 {offsets = [0, 96], sizes = [1, 32], strides = [1, 1]} : vector<1x128xf32> to vector<1x32xf32>
    %129 = arith.mulf %126, %95 : vector<1x32xf32>
    %130 = arith.mulf %125, %127 : vector<1x32xf32>
    %131 = arith.addf %129, %130 : vector<1x32xf32>
    %132 = math.tanh %131 : vector<1x32xf32>
    %133 = arith.mulf %128, %132 : vector<1x32xf32>
    %134 = vector.extract_strided_slice %59 {offsets = [2, 0], sizes = [1, 128], strides = [1, 1]} : vector<8x128xf32> to vector<1x128xf32>
    %cst_41 = arith.constant dense<0.000000e+00> : vector<1x128xf32>
    %135 = tpu.matmul %115, %52, %cst_41 {dimension_numbers = #tpu.dot_dimension_numbers<[1], [0], [0], [1], [0, 0, 1, 1], [], []>} : vector<1x32xf32>, vector<32x128xf32>, vector<1x128xf32> -> vector<1x128xf32>
    %136 = arith.addf %134, %135 : vector<1x128xf32>
    %137 = arith.negf %136 : vector<1x128xf32>
    %138 = math.exp %137 : vector<1x128xf32>
    %cst_42 = arith.constant 1.000000e+00 : f32
    %139 = vector.broadcast %cst_42 : f32 to vector<1x128xf32>
    %140 = arith.addf %139, %138 : vector<1x128xf32>
    %141 = arith.divf %139, %140 : vector<1x128xf32>
    %142 = math.tanh %136 : vector<1x128xf32>
    %143 = vector.extract_strided_slice %141 {offsets = [0, 0], sizes = [1, 32], strides = [1, 1]} : vector<1x128xf32> to vector<1x32xf32>
    %144 = vector.extract_strided_slice %141 {offsets = [0, 32], sizes = [1, 32], strides = [1, 1]} : vector<1x128xf32> to vector<1x32xf32>
    %145 = vector.extract_strided_slice %142 {offsets = [0, 64], sizes = [1, 32], strides = [1, 1]} : vector<1x128xf32> to vector<1x32xf32>
    %146 = vector.extract_strided_slice %141 {offsets = [0, 96], sizes = [1, 32], strides = [1, 1]} : vector<1x128xf32> to vector<1x32xf32>
    %147 = arith.mulf %144, %113 : vector<1x32xf32>
    %148 = arith.mulf %143, %145 : vector<1x32xf32>
    %149 = arith.addf %147, %148 : vector<1x32xf32>
    %150 = math.tanh %149 : vector<1x32xf32>
    %151 = arith.mulf %146, %150 : vector<1x32xf32>
    %152 = vector.extract_strided_slice %60 {offsets = [5, 0], sizes = [1, 128], strides = [1, 1]} : vector<8x128xf32> to vector<1x128xf32>
    %cst_43 = arith.constant dense<0.000000e+00> : vector<1x128xf32>
    %153 = tpu.matmul %133, %53, %cst_43 {dimension_numbers = #tpu.dot_dimension_numbers<[1], [0], [0], [1], [0, 0, 1, 1], [], []>} : vector<1x32xf32>, vector<32x128xf32>, vector<1x128xf32> -> vector<1x128xf32>
    %154 = arith.addf %152, %153 : vector<1x128xf32>
    %155 = arith.negf %154 : vector<1x128xf32>
    %156 = math.exp %155 : vector<1x128xf32>
    %cst_44 = arith.constant 1.000000e+00 : f32
    %157 = vector.broadcast %cst_44 : f32 to vector<1x128xf32>
    %158 = arith.addf %157, %156 : vector<1x128xf32>
    %159 = arith.divf %157, %158 : vector<1x128xf32>
    %160 = math.tanh %154 : vector<1x128xf32>
    %161 = vector.extract_strided_slice %159 {offsets = [0, 0], sizes = [1, 32], strides = [1, 1]} : vector<1x128xf32> to vector<1x32xf32>
    %162 = vector.extract_strided_slice %159 {offsets = [0, 32], sizes = [1, 32], strides = [1, 1]} : vector<1x128xf32> to vector<1x32xf32>
    %163 = vector.extract_strided_slice %160 {offsets = [0, 64], sizes = [1, 32], strides = [1, 1]} : vector<1x128xf32> to vector<1x32xf32>
    %164 = vector.extract_strided_slice %159 {offsets = [0, 96], sizes = [1, 32], strides = [1, 1]} : vector<1x128xf32> to vector<1x32xf32>
    %165 = arith.mulf %162, %131 : vector<1x32xf32>
    %166 = arith.mulf %161, %163 : vector<1x32xf32>
    %167 = arith.addf %165, %166 : vector<1x32xf32>
    %168 = math.tanh %167 : vector<1x32xf32>
    %169 = arith.mulf %164, %168 : vector<1x32xf32>
    %170 = vector.extract_strided_slice %59 {offsets = [3, 0], sizes = [1, 128], strides = [1, 1]} : vector<8x128xf32> to vector<1x128xf32>
    %cst_45 = arith.constant dense<0.000000e+00> : vector<1x128xf32>
    %171 = tpu.matmul %151, %52, %cst_45 {dimension_numbers = #tpu.dot_dimension_numbers<[1], [0], [0], [1], [0, 0, 1, 1], [], []>} : vector<1x32xf32>, vector<32x128xf32>, vector<1x128xf32> -> vector<1x128xf32>
    %172 = arith.addf %170, %171 : vector<1x128xf32>
    %173 = arith.negf %172 : vector<1x128xf32>
    %174 = math.exp %173 : vector<1x128xf32>
    %cst_46 = arith.constant 1.000000e+00 : f32
    %175 = vector.broadcast %cst_46 : f32 to vector<1x128xf32>
    %176 = arith.addf %175, %174 : vector<1x128xf32>
    %177 = arith.divf %175, %176 : vector<1x128xf32>
    %178 = math.tanh %172 : vector<1x128xf32>
    %179 = vector.extract_strided_slice %177 {offsets = [0, 0], sizes = [1, 32], strides = [1, 1]} : vector<1x128xf32> to vector<1x32xf32>
    %180 = vector.extract_strided_slice %177 {offsets = [0, 32], sizes = [1, 32], strides = [1, 1]} : vector<1x128xf32> to vector<1x32xf32>
    %181 = vector.extract_strided_slice %178 {offsets = [0, 64], sizes = [1, 32], strides = [1, 1]} : vector<1x128xf32> to vector<1x32xf32>
    %182 = vector.extract_strided_slice %177 {offsets = [0, 96], sizes = [1, 32], strides = [1, 1]} : vector<1x128xf32> to vector<1x32xf32>
    %183 = arith.mulf %180, %149 : vector<1x32xf32>
    %184 = arith.mulf %179, %181 : vector<1x32xf32>
    %185 = arith.addf %183, %184 : vector<1x32xf32>
    %186 = math.tanh %185 : vector<1x32xf32>
    %187 = arith.mulf %182, %186 : vector<1x32xf32>
    %188 = vector.extract_strided_slice %60 {offsets = [4, 0], sizes = [1, 128], strides = [1, 1]} : vector<8x128xf32> to vector<1x128xf32>
    %cst_47 = arith.constant dense<0.000000e+00> : vector<1x128xf32>
    %189 = tpu.matmul %169, %53, %cst_47 {dimension_numbers = #tpu.dot_dimension_numbers<[1], [0], [0], [1], [0, 0, 1, 1], [], []>} : vector<1x32xf32>, vector<32x128xf32>, vector<1x128xf32> -> vector<1x128xf32>
    %190 = arith.addf %188, %189 : vector<1x128xf32>
    %191 = arith.negf %190 : vector<1x128xf32>
    %192 = math.exp %191 : vector<1x128xf32>
    %cst_48 = arith.constant 1.000000e+00 : f32
    %193 = vector.broadcast %cst_48 : f32 to vector<1x128xf32>
    %194 = arith.addf %193, %192 : vector<1x128xf32>
    %195 = arith.divf %193, %194 : vector<1x128xf32>
    %196 = math.tanh %190 : vector<1x128xf32>
    %197 = vector.extract_strided_slice %195 {offsets = [0, 0], sizes = [1, 32], strides = [1, 1]} : vector<1x128xf32> to vector<1x32xf32>
    %198 = vector.extract_strided_slice %195 {offsets = [0, 32], sizes = [1, 32], strides = [1, 1]} : vector<1x128xf32> to vector<1x32xf32>
    %199 = vector.extract_strided_slice %196 {offsets = [0, 64], sizes = [1, 32], strides = [1, 1]} : vector<1x128xf32> to vector<1x32xf32>
    %200 = vector.extract_strided_slice %195 {offsets = [0, 96], sizes = [1, 32], strides = [1, 1]} : vector<1x128xf32> to vector<1x32xf32>
    %201 = arith.mulf %198, %167 : vector<1x32xf32>
    %202 = arith.mulf %197, %199 : vector<1x32xf32>
    %203 = arith.addf %201, %202 : vector<1x32xf32>
    %204 = math.tanh %203 : vector<1x32xf32>
    %205 = arith.mulf %200, %204 : vector<1x32xf32>
    %206 = vector.extract_strided_slice %59 {offsets = [4, 0], sizes = [1, 128], strides = [1, 1]} : vector<8x128xf32> to vector<1x128xf32>
    %cst_49 = arith.constant dense<0.000000e+00> : vector<1x128xf32>
    %207 = tpu.matmul %187, %52, %cst_49 {dimension_numbers = #tpu.dot_dimension_numbers<[1], [0], [0], [1], [0, 0, 1, 1], [], []>} : vector<1x32xf32>, vector<32x128xf32>, vector<1x128xf32> -> vector<1x128xf32>
    %208 = arith.addf %206, %207 : vector<1x128xf32>
    %209 = arith.negf %208 : vector<1x128xf32>
    %210 = math.exp %209 : vector<1x128xf32>
    %cst_50 = arith.constant 1.000000e+00 : f32
    %211 = vector.broadcast %cst_50 : f32 to vector<1x128xf32>
    %212 = arith.addf %211, %210 : vector<1x128xf32>
    %213 = arith.divf %211, %212 : vector<1x128xf32>
    %214 = math.tanh %208 : vector<1x128xf32>
    %215 = vector.extract_strided_slice %213 {offsets = [0, 0], sizes = [1, 32], strides = [1, 1]} : vector<1x128xf32> to vector<1x32xf32>
    %216 = vector.extract_strided_slice %213 {offsets = [0, 32], sizes = [1, 32], strides = [1, 1]} : vector<1x128xf32> to vector<1x32xf32>
    %217 = vector.extract_strided_slice %214 {offsets = [0, 64], sizes = [1, 32], strides = [1, 1]} : vector<1x128xf32> to vector<1x32xf32>
    %218 = vector.extract_strided_slice %213 {offsets = [0, 96], sizes = [1, 32], strides = [1, 1]} : vector<1x128xf32> to vector<1x32xf32>
    %219 = arith.mulf %216, %185 : vector<1x32xf32>
    %220 = arith.mulf %215, %217 : vector<1x32xf32>
    %221 = arith.addf %219, %220 : vector<1x32xf32>
    %222 = math.tanh %221 : vector<1x32xf32>
    %223 = arith.mulf %218, %222 : vector<1x32xf32>
    %224 = vector.extract_strided_slice %60 {offsets = [3, 0], sizes = [1, 128], strides = [1, 1]} : vector<8x128xf32> to vector<1x128xf32>
    %cst_51 = arith.constant dense<0.000000e+00> : vector<1x128xf32>
    %225 = tpu.matmul %205, %53, %cst_51 {dimension_numbers = #tpu.dot_dimension_numbers<[1], [0], [0], [1], [0, 0, 1, 1], [], []>} : vector<1x32xf32>, vector<32x128xf32>, vector<1x128xf32> -> vector<1x128xf32>
    %226 = arith.addf %224, %225 : vector<1x128xf32>
    %227 = arith.negf %226 : vector<1x128xf32>
    %228 = math.exp %227 : vector<1x128xf32>
    %cst_52 = arith.constant 1.000000e+00 : f32
    %229 = vector.broadcast %cst_52 : f32 to vector<1x128xf32>
    %230 = arith.addf %229, %228 : vector<1x128xf32>
    %231 = arith.divf %229, %230 : vector<1x128xf32>
    %232 = math.tanh %226 : vector<1x128xf32>
    %233 = vector.extract_strided_slice %231 {offsets = [0, 0], sizes = [1, 32], strides = [1, 1]} : vector<1x128xf32> to vector<1x32xf32>
    %234 = vector.extract_strided_slice %231 {offsets = [0, 32], sizes = [1, 32], strides = [1, 1]} : vector<1x128xf32> to vector<1x32xf32>
    %235 = vector.extract_strided_slice %232 {offsets = [0, 64], sizes = [1, 32], strides = [1, 1]} : vector<1x128xf32> to vector<1x32xf32>
    %236 = vector.extract_strided_slice %231 {offsets = [0, 96], sizes = [1, 32], strides = [1, 1]} : vector<1x128xf32> to vector<1x32xf32>
    %237 = arith.mulf %234, %203 : vector<1x32xf32>
    %238 = arith.mulf %233, %235 : vector<1x32xf32>
    %239 = arith.addf %237, %238 : vector<1x32xf32>
    %240 = math.tanh %239 : vector<1x32xf32>
    %241 = arith.mulf %236, %240 : vector<1x32xf32>
    %242 = vector.extract_strided_slice %59 {offsets = [5, 0], sizes = [1, 128], strides = [1, 1]} : vector<8x128xf32> to vector<1x128xf32>
    %cst_53 = arith.constant dense<0.000000e+00> : vector<1x128xf32>
    %243 = tpu.matmul %223, %52, %cst_53 {dimension_numbers = #tpu.dot_dimension_numbers<[1], [0], [0], [1], [0, 0, 1, 1], [], []>} : vector<1x32xf32>, vector<32x128xf32>, vector<1x128xf32> -> vector<1x128xf32>
    %244 = arith.addf %242, %243 : vector<1x128xf32>
    %245 = arith.negf %244 : vector<1x128xf32>
    %246 = math.exp %245 : vector<1x128xf32>
    %cst_54 = arith.constant 1.000000e+00 : f32
    %247 = vector.broadcast %cst_54 : f32 to vector<1x128xf32>
    %248 = arith.addf %247, %246 : vector<1x128xf32>
    %249 = arith.divf %247, %248 : vector<1x128xf32>
    %250 = math.tanh %244 : vector<1x128xf32>
    %251 = vector.extract_strided_slice %249 {offsets = [0, 0], sizes = [1, 32], strides = [1, 1]} : vector<1x128xf32> to vector<1x32xf32>
    %252 = vector.extract_strided_slice %249 {offsets = [0, 32], sizes = [1, 32], strides = [1, 1]} : vector<1x128xf32> to vector<1x32xf32>
    %253 = vector.extract_strided_slice %250 {offsets = [0, 64], sizes = [1, 32], strides = [1, 1]} : vector<1x128xf32> to vector<1x32xf32>
    %254 = vector.extract_strided_slice %249 {offsets = [0, 96], sizes = [1, 32], strides = [1, 1]} : vector<1x128xf32> to vector<1x32xf32>
    %255 = arith.mulf %252, %221 : vector<1x32xf32>
    %256 = arith.mulf %251, %253 : vector<1x32xf32>
    %257 = arith.addf %255, %256 : vector<1x32xf32>
    %258 = math.tanh %257 : vector<1x32xf32>
    %259 = arith.mulf %254, %258 : vector<1x32xf32>
    %260 = vector.extract_strided_slice %60 {offsets = [2, 0], sizes = [1, 128], strides = [1, 1]} : vector<8x128xf32> to vector<1x128xf32>
    %cst_55 = arith.constant dense<0.000000e+00> : vector<1x128xf32>
    %261 = tpu.matmul %241, %53, %cst_55 {dimension_numbers = #tpu.dot_dimension_numbers<[1], [0], [0], [1], [0, 0, 1, 1], [], []>} : vector<1x32xf32>, vector<32x128xf32>, vector<1x128xf32> -> vector<1x128xf32>
    %262 = arith.addf %260, %261 : vector<1x128xf32>
    %263 = arith.negf %262 : vector<1x128xf32>
    %264 = math.exp %263 : vector<1x128xf32>
    %cst_56 = arith.constant 1.000000e+00 : f32
    %265 = vector.broadcast %cst_56 : f32 to vector<1x128xf32>
    %266 = arith.addf %265, %264 : vector<1x128xf32>
    %267 = arith.divf %265, %266 : vector<1x128xf32>
    %268 = math.tanh %262 : vector<1x128xf32>
    %269 = vector.extract_strided_slice %267 {offsets = [0, 0], sizes = [1, 32], strides = [1, 1]} : vector<1x128xf32> to vector<1x32xf32>
    %270 = vector.extract_strided_slice %267 {offsets = [0, 32], sizes = [1, 32], strides = [1, 1]} : vector<1x128xf32> to vector<1x32xf32>
    %271 = vector.extract_strided_slice %268 {offsets = [0, 64], sizes = [1, 32], strides = [1, 1]} : vector<1x128xf32> to vector<1x32xf32>
    %272 = vector.extract_strided_slice %267 {offsets = [0, 96], sizes = [1, 32], strides = [1, 1]} : vector<1x128xf32> to vector<1x32xf32>
    %273 = arith.mulf %270, %239 : vector<1x32xf32>
    %274 = arith.mulf %269, %271 : vector<1x32xf32>
    %275 = arith.addf %273, %274 : vector<1x32xf32>
    %276 = math.tanh %275 : vector<1x32xf32>
    %277 = arith.mulf %272, %276 : vector<1x32xf32>
    %278 = vector.extract_strided_slice %59 {offsets = [6, 0], sizes = [1, 128], strides = [1, 1]} : vector<8x128xf32> to vector<1x128xf32>
    %cst_57 = arith.constant dense<0.000000e+00> : vector<1x128xf32>
    %279 = tpu.matmul %259, %52, %cst_57 {dimension_numbers = #tpu.dot_dimension_numbers<[1], [0], [0], [1], [0, 0, 1, 1], [], []>} : vector<1x32xf32>, vector<32x128xf32>, vector<1x128xf32> -> vector<1x128xf32>
    %280 = arith.addf %278, %279 : vector<1x128xf32>
    %281 = arith.negf %280 : vector<1x128xf32>
    %282 = math.exp %281 : vector<1x128xf32>
    %cst_58 = arith.constant 1.000000e+00 : f32
    %283 = vector.broadcast %cst_58 : f32 to vector<1x128xf32>
    %284 = arith.addf %283, %282 : vector<1x128xf32>
    %285 = arith.divf %283, %284 : vector<1x128xf32>
    %286 = math.tanh %280 : vector<1x128xf32>
    %287 = vector.extract_strided_slice %285 {offsets = [0, 0], sizes = [1, 32], strides = [1, 1]} : vector<1x128xf32> to vector<1x32xf32>
    %288 = vector.extract_strided_slice %285 {offsets = [0, 32], sizes = [1, 32], strides = [1, 1]} : vector<1x128xf32> to vector<1x32xf32>
    %289 = vector.extract_strided_slice %286 {offsets = [0, 64], sizes = [1, 32], strides = [1, 1]} : vector<1x128xf32> to vector<1x32xf32>
    %290 = vector.extract_strided_slice %285 {offsets = [0, 96], sizes = [1, 32], strides = [1, 1]} : vector<1x128xf32> to vector<1x32xf32>
    %291 = arith.mulf %288, %257 : vector<1x32xf32>
    %292 = arith.mulf %287, %289 : vector<1x32xf32>
    %293 = arith.addf %291, %292 : vector<1x32xf32>
    %294 = math.tanh %293 : vector<1x32xf32>
    %295 = arith.mulf %290, %294 : vector<1x32xf32>
    %296 = vector.extract_strided_slice %60 {offsets = [1, 0], sizes = [1, 128], strides = [1, 1]} : vector<8x128xf32> to vector<1x128xf32>
    %cst_59 = arith.constant dense<0.000000e+00> : vector<1x128xf32>
    %297 = tpu.matmul %277, %53, %cst_59 {dimension_numbers = #tpu.dot_dimension_numbers<[1], [0], [0], [1], [0, 0, 1, 1], [], []>} : vector<1x32xf32>, vector<32x128xf32>, vector<1x128xf32> -> vector<1x128xf32>
    %298 = arith.addf %296, %297 : vector<1x128xf32>
    %299 = arith.negf %298 : vector<1x128xf32>
    %300 = math.exp %299 : vector<1x128xf32>
    %cst_60 = arith.constant 1.000000e+00 : f32
    %301 = vector.broadcast %cst_60 : f32 to vector<1x128xf32>
    %302 = arith.addf %301, %300 : vector<1x128xf32>
    %303 = arith.divf %301, %302 : vector<1x128xf32>
    %304 = math.tanh %298 : vector<1x128xf32>
    %305 = vector.extract_strided_slice %303 {offsets = [0, 0], sizes = [1, 32], strides = [1, 1]} : vector<1x128xf32> to vector<1x32xf32>
    %306 = vector.extract_strided_slice %303 {offsets = [0, 32], sizes = [1, 32], strides = [1, 1]} : vector<1x128xf32> to vector<1x32xf32>
    %307 = vector.extract_strided_slice %304 {offsets = [0, 64], sizes = [1, 32], strides = [1, 1]} : vector<1x128xf32> to vector<1x32xf32>
    %308 = vector.extract_strided_slice %303 {offsets = [0, 96], sizes = [1, 32], strides = [1, 1]} : vector<1x128xf32> to vector<1x32xf32>
    %309 = arith.mulf %306, %275 : vector<1x32xf32>
    %310 = arith.mulf %305, %307 : vector<1x32xf32>
    %311 = arith.addf %309, %310 : vector<1x32xf32>
    %312 = math.tanh %311 : vector<1x32xf32>
    %313 = arith.mulf %308, %312 : vector<1x32xf32>
    %314 = vector.extract_strided_slice %59 {offsets = [7, 0], sizes = [1, 128], strides = [1, 1]} : vector<8x128xf32> to vector<1x128xf32>
    %cst_61 = arith.constant dense<0.000000e+00> : vector<1x128xf32>
    %315 = tpu.matmul %295, %52, %cst_61 {dimension_numbers = #tpu.dot_dimension_numbers<[1], [0], [0], [1], [0, 0, 1, 1], [], []>} : vector<1x32xf32>, vector<32x128xf32>, vector<1x128xf32> -> vector<1x128xf32>
    %316 = arith.addf %314, %315 : vector<1x128xf32>
    %317 = arith.negf %316 : vector<1x128xf32>
    %318 = math.exp %317 : vector<1x128xf32>
    %cst_62 = arith.constant 1.000000e+00 : f32
    %319 = vector.broadcast %cst_62 : f32 to vector<1x128xf32>
    %320 = arith.addf %319, %318 : vector<1x128xf32>
    %321 = arith.divf %319, %320 : vector<1x128xf32>
    %322 = math.tanh %316 : vector<1x128xf32>
    %323 = vector.extract_strided_slice %321 {offsets = [0, 0], sizes = [1, 32], strides = [1, 1]} : vector<1x128xf32> to vector<1x32xf32>
    %324 = vector.extract_strided_slice %321 {offsets = [0, 32], sizes = [1, 32], strides = [1, 1]} : vector<1x128xf32> to vector<1x32xf32>
    %325 = vector.extract_strided_slice %322 {offsets = [0, 64], sizes = [1, 32], strides = [1, 1]} : vector<1x128xf32> to vector<1x32xf32>
    %326 = vector.extract_strided_slice %321 {offsets = [0, 96], sizes = [1, 32], strides = [1, 1]} : vector<1x128xf32> to vector<1x32xf32>
    %327 = arith.mulf %324, %293 : vector<1x32xf32>
    %328 = arith.mulf %323, %325 : vector<1x32xf32>
    %329 = arith.addf %327, %328 : vector<1x32xf32>
    %330 = math.tanh %329 : vector<1x32xf32>
    %331 = arith.mulf %326, %330 : vector<1x32xf32>
    %332 = vector.extract_strided_slice %60 {offsets = [0, 0], sizes = [1, 128], strides = [1, 1]} : vector<8x128xf32> to vector<1x128xf32>
    %cst_63 = arith.constant dense<0.000000e+00> : vector<1x128xf32>
    %333 = tpu.matmul %313, %53, %cst_63 {dimension_numbers = #tpu.dot_dimension_numbers<[1], [0], [0], [1], [0, 0, 1, 1], [], []>} : vector<1x32xf32>, vector<32x128xf32>, vector<1x128xf32> -> vector<1x128xf32>
    %334 = arith.addf %332, %333 : vector<1x128xf32>
    %335 = arith.negf %334 : vector<1x128xf32>
    %336 = math.exp %335 : vector<1x128xf32>
    %cst_64 = arith.constant 1.000000e+00 : f32
    %337 = vector.broadcast %cst_64 : f32 to vector<1x128xf32>
    %338 = arith.addf %337, %336 : vector<1x128xf32>
    %339 = arith.divf %337, %338 : vector<1x128xf32>
    %340 = math.tanh %334 : vector<1x128xf32>
    %341 = vector.extract_strided_slice %339 {offsets = [0, 0], sizes = [1, 32], strides = [1, 1]} : vector<1x128xf32> to vector<1x32xf32>
    %342 = vector.extract_strided_slice %339 {offsets = [0, 32], sizes = [1, 32], strides = [1, 1]} : vector<1x128xf32> to vector<1x32xf32>
    %343 = vector.extract_strided_slice %340 {offsets = [0, 64], sizes = [1, 32], strides = [1, 1]} : vector<1x128xf32> to vector<1x32xf32>
    %344 = vector.extract_strided_slice %339 {offsets = [0, 96], sizes = [1, 32], strides = [1, 1]} : vector<1x128xf32> to vector<1x32xf32>
    %345 = arith.mulf %342, %311 : vector<1x32xf32>
    %346 = arith.mulf %341, %343 : vector<1x32xf32>
    %347 = arith.addf %345, %346 : vector<1x32xf32>
    %348 = math.tanh %347 : vector<1x32xf32>
    %349 = arith.mulf %344, %348 : vector<1x32xf32>
    %350 = tpu.concatenate %79, %115, %151, %187, %223, %259, %295, %331 in 0 : vector<1x32xf32>, vector<1x32xf32>, vector<1x32xf32>, vector<1x32xf32>, vector<1x32xf32>, vector<1x32xf32>, vector<1x32xf32>, vector<1x32xf32> -> vector<8x32xf32>
    %351 = arith.addf %50, %350 : vector<8x32xf32>
    %352 = tpu.concatenate %349, %313, %277, %241, %205, %169, %133, %97 in 0 : vector<1x32xf32>, vector<1x32xf32>, vector<1x32xf32>, vector<1x32xf32>, vector<1x32xf32>, vector<1x32xf32>, vector<1x32xf32>, vector<1x32xf32> -> vector<8x32xf32>
    %353 = arith.addf %351, %352 : vector<8x32xf32>
    %354 = tpu.transpose %353, [1, 0] : vector<8x32xf32> -> vector<32x8xf32>
    %c0_65 = arith.constant 0 : index
    %c0_66 = arith.constant 0 : index
    %355 = vector.load %arg10[%c0_65, %c0_66] : memref<32x128xf32, #tpu.memory_space<vmem>>, vector<32x128xf32>
    %cst_67 = arith.constant dense<0.000000e+00> : vector<8x128xf32>
    %356 = tpu.matmul %353, %355, %cst_67 {dimension_numbers = #tpu.dot_dimension_numbers<[1], [0], [0], [1], [0, 0, 1, 1], [], []>} : vector<8x32xf32>, vector<32x128xf32>, vector<8x128xf32> -> vector<8x128xf32>
    %c0_68 = arith.constant 0 : index
    %c0_69 = arith.constant 0 : index
    %357 = vector.load %arg9[%c0_68, %c0_69] : memref<32x128xf32, #tpu.memory_space<vmem>>, vector<32x128xf32>
    %cst_70 = arith.constant dense<0.000000e+00> : vector<4x128xf32>
    %358 = tpu.matmul %51, %357, %cst_70 {dimension_numbers = #tpu.dot_dimension_numbers<[1], [0], [0], [1], [0, 0, 1, 1], [], []>} : vector<4x32xf32>, vector<32x128xf32>, vector<4x128xf32> -> vector<4x128xf32>
    %c0_71 = arith.constant 0 : index
    %c0_72 = arith.constant 0 : index
    %359 = vector.load %arg12[%c0_71, %c0_72] : memref<1x128xf32, #tpu.memory_space<vmem>>, vector<1x128xf32>
    %360 = vector.broadcast %359 : vector<1x128xf32> to vector<4x128xf32>
    %361 = arith.addf %358, %360 : vector<4x128xf32>
    %c0_73 = arith.constant 0 : index
    %c0_74 = arith.constant 0 : index
    %362 = vector.load %arg11[%c0_73, %c0_74] : memref<32x128xf32, #tpu.memory_space<vmem>>, vector<32x128xf32>
    %cst_75 = arith.constant 0.000000e+00 : f32
    %363 = vector.broadcast %cst_75 : f32 to vector<4x32xf32>
    %cst_76 = arith.constant dense<0.000000e+00> : vector<4x8xf32>
    %364 = tpu.matmul %51, %354, %cst_76 {dimension_numbers = #tpu.dot_dimension_numbers<[1], [0], [0], [1], [0, 0, 1, 1], [], []>} : vector<4x32xf32>, vector<32x8xf32>, vector<4x8xf32> -> vector<4x8xf32>
    %cst_77 = arith.constant dense<0xFF800000> : vector<4xf32>
    %365 = vector.multi_reduction <maximumf>, %364, %cst_77 [1] : vector<4x8xf32> to vector<4xf32>
    %366 = vector.shape_cast %365 : vector<4xf32> to vector<4x1xf32>
    %367 = vector.broadcast %366 : vector<4x1xf32> to vector<4x8xf32>
    %368 = arith.subf %364, %367 : vector<4x8xf32>
    %369 = math.exp %368 : vector<4x8xf32>
    %cst_78 = arith.constant dense<0.000000e+00> : vector<4xf32>
    %370 = vector.multi_reduction <add>, %369, %cst_78 [1] : vector<4x8xf32> to vector<4xf32>
    %371 = vector.shape_cast %370 : vector<4xf32> to vector<4x1xf32>
    %372 = tpu.reciprocal %371 {approx = true} : vector<4x1xf32> -> vector<4x1xf32>
    %373 = vector.broadcast %372 : vector<4x1xf32> to vector<4x8xf32>
    %374 = arith.mulf %369, %373 : vector<4x8xf32>
    %cst_79 = arith.constant dense<0.000000e+00> : vector<4x128xf32>
    %375 = tpu.matmul %374, %356, %cst_79 {dimension_numbers = #tpu.dot_dimension_numbers<[1], [0], [0], [1], [0, 0, 1, 1], [], []>} : vector<4x8xf32>, vector<8x128xf32>, vector<4x128xf32> -> vector<4x128xf32>
    %376 = arith.addf %361, %375 : vector<4x128xf32>
    %cst_80 = arith.constant dense<0.000000e+00> : vector<4x128xf32>
    %377 = tpu.matmul %51, %362, %cst_80 {dimension_numbers = #tpu.dot_dimension_numbers<[1], [0], [0], [1], [0, 0, 1, 1], [], []>} : vector<4x32xf32>, vector<32x128xf32>, vector<4x128xf32> -> vector<4x128xf32>
    %378 = arith.addf %376, %377 : vector<4x128xf32>
    %379 = arith.negf %378 : vector<4x128xf32>
    %380 = math.exp %379 : vector<4x128xf32>
    %cst_81 = arith.constant 1.000000e+00 : f32
    %381 = vector.broadcast %cst_81 : f32 to vector<4x128xf32>
    %382 = arith.addf %381, %380 : vector<4x128xf32>
    %383 = arith.divf %381, %382 : vector<4x128xf32>
    %384 = math.tanh %378 : vector<4x128xf32>
    %385 = vector.extract_strided_slice %383 {offsets = [0, 0], sizes = [4, 32], strides = [1, 1]} : vector<4x128xf32> to vector<4x32xf32>
    %386 = vector.extract_strided_slice %383 {offsets = [0, 32], sizes = [4, 32], strides = [1, 1]} : vector<4x128xf32> to vector<4x32xf32>
    %387 = vector.extract_strided_slice %384 {offsets = [0, 64], sizes = [4, 32], strides = [1, 1]} : vector<4x128xf32> to vector<4x32xf32>
    %388 = vector.extract_strided_slice %383 {offsets = [0, 96], sizes = [4, 32], strides = [1, 1]} : vector<4x128xf32> to vector<4x32xf32>
    %389 = arith.mulf %386, %363 : vector<4x32xf32>
    %390 = arith.mulf %385, %387 : vector<4x32xf32>
    %391 = arith.addf %389, %390 : vector<4x32xf32>
    %392 = math.tanh %391 : vector<4x32xf32>
    %393 = arith.mulf %388, %392 : vector<4x32xf32>
    %394 = arith.addf %393, %51 : vector<4x32xf32>
    %cst_82 = arith.constant dense<0.000000e+00> : vector<4x8xf32>
    %395 = tpu.matmul %394, %354, %cst_82 {dimension_numbers = #tpu.dot_dimension_numbers<[1], [0], [0], [1], [0, 0, 1, 1], [], []>} : vector<4x32xf32>, vector<32x8xf32>, vector<4x8xf32> -> vector<4x8xf32>
    %cst_83 = arith.constant dense<0xFF800000> : vector<4xf32>
    %396 = vector.multi_reduction <maximumf>, %395, %cst_83 [1] : vector<4x8xf32> to vector<4xf32>
    %397 = vector.shape_cast %396 : vector<4xf32> to vector<4x1xf32>
    %398 = vector.broadcast %397 : vector<4x1xf32> to vector<4x8xf32>
    %399 = arith.subf %395, %398 : vector<4x8xf32>
    %400 = math.exp %399 : vector<4x8xf32>
    %cst_84 = arith.constant dense<0.000000e+00> : vector<4xf32>
    %401 = vector.multi_reduction <add>, %400, %cst_84 [1] : vector<4x8xf32> to vector<4xf32>
    %402 = vector.shape_cast %401 : vector<4xf32> to vector<4x1xf32>
    %403 = tpu.reciprocal %402 {approx = true} : vector<4x1xf32> -> vector<4x1xf32>
    %404 = vector.broadcast %403 : vector<4x1xf32> to vector<4x8xf32>
    %405 = arith.mulf %400, %404 : vector<4x8xf32>
    %cst_85 = arith.constant dense<0.000000e+00> : vector<4x128xf32>
    %406 = tpu.matmul %405, %356, %cst_85 {dimension_numbers = #tpu.dot_dimension_numbers<[1], [0], [0], [1], [0, 0, 1, 1], [], []>} : vector<4x8xf32>, vector<8x128xf32>, vector<4x128xf32> -> vector<4x128xf32>
    %407 = arith.addf %361, %406 : vector<4x128xf32>
    %cst_86 = arith.constant dense<0.000000e+00> : vector<4x128xf32>
    %408 = tpu.matmul %394, %362, %cst_86 {dimension_numbers = #tpu.dot_dimension_numbers<[1], [0], [0], [1], [0, 0, 1, 1], [], []>} : vector<4x32xf32>, vector<32x128xf32>, vector<4x128xf32> -> vector<4x128xf32>
    %409 = arith.addf %407, %408 : vector<4x128xf32>
    %410 = arith.negf %409 : vector<4x128xf32>
    %411 = math.exp %410 : vector<4x128xf32>
    %cst_87 = arith.constant 1.000000e+00 : f32
    %412 = vector.broadcast %cst_87 : f32 to vector<4x128xf32>
    %413 = arith.addf %412, %411 : vector<4x128xf32>
    %414 = arith.divf %412, %413 : vector<4x128xf32>
    %415 = math.tanh %409 : vector<4x128xf32>
    %416 = vector.extract_strided_slice %414 {offsets = [0, 0], sizes = [4, 32], strides = [1, 1]} : vector<4x128xf32> to vector<4x32xf32>
    %417 = vector.extract_strided_slice %414 {offsets = [0, 32], sizes = [4, 32], strides = [1, 1]} : vector<4x128xf32> to vector<4x32xf32>
    %418 = vector.extract_strided_slice %415 {offsets = [0, 64], sizes = [4, 32], strides = [1, 1]} : vector<4x128xf32> to vector<4x32xf32>
    %419 = vector.extract_strided_slice %414 {offsets = [0, 96], sizes = [4, 32], strides = [1, 1]} : vector<4x128xf32> to vector<4x32xf32>
    %420 = arith.mulf %417, %391 : vector<4x32xf32>
    %421 = arith.mulf %416, %418 : vector<4x32xf32>
    %422 = arith.addf %420, %421 : vector<4x32xf32>
    %423 = math.tanh %422 : vector<4x32xf32>
    %424 = arith.mulf %419, %423 : vector<4x32xf32>
    %425 = arith.addf %424, %51 : vector<4x32xf32>
    %cst_88 = arith.constant dense<0.000000e+00> : vector<4x8xf32>
    %426 = tpu.matmul %425, %354, %cst_88 {dimension_numbers = #tpu.dot_dimension_numbers<[1], [0], [0], [1], [0, 0, 1, 1], [], []>} : vector<4x32xf32>, vector<32x8xf32>, vector<4x8xf32> -> vector<4x8xf32>
    %cst_89 = arith.constant dense<0xFF800000> : vector<4xf32>
    %427 = vector.multi_reduction <maximumf>, %426, %cst_89 [1] : vector<4x8xf32> to vector<4xf32>
    %428 = vector.shape_cast %427 : vector<4xf32> to vector<4x1xf32>
    %429 = vector.broadcast %428 : vector<4x1xf32> to vector<4x8xf32>
    %430 = arith.subf %426, %429 : vector<4x8xf32>
    %431 = math.exp %430 : vector<4x8xf32>
    %cst_90 = arith.constant dense<0.000000e+00> : vector<4xf32>
    %432 = vector.multi_reduction <add>, %431, %cst_90 [1] : vector<4x8xf32> to vector<4xf32>
    %433 = vector.shape_cast %432 : vector<4xf32> to vector<4x1xf32>
    %434 = tpu.reciprocal %433 {approx = true} : vector<4x1xf32> -> vector<4x1xf32>
    %435 = vector.broadcast %434 : vector<4x1xf32> to vector<4x8xf32>
    %436 = arith.mulf %431, %435 : vector<4x8xf32>
    %cst_91 = arith.constant dense<0.000000e+00> : vector<4x128xf32>
    %437 = tpu.matmul %436, %356, %cst_91 {dimension_numbers = #tpu.dot_dimension_numbers<[1], [0], [0], [1], [0, 0, 1, 1], [], []>} : vector<4x8xf32>, vector<8x128xf32>, vector<4x128xf32> -> vector<4x128xf32>
    %438 = arith.addf %361, %437 : vector<4x128xf32>
    %cst_92 = arith.constant dense<0.000000e+00> : vector<4x128xf32>
    %439 = tpu.matmul %425, %362, %cst_92 {dimension_numbers = #tpu.dot_dimension_numbers<[1], [0], [0], [1], [0, 0, 1, 1], [], []>} : vector<4x32xf32>, vector<32x128xf32>, vector<4x128xf32> -> vector<4x128xf32>
    %440 = arith.addf %438, %439 : vector<4x128xf32>
    %441 = arith.negf %440 : vector<4x128xf32>
    %442 = math.exp %441 : vector<4x128xf32>
    %cst_93 = arith.constant 1.000000e+00 : f32
    %443 = vector.broadcast %cst_93 : f32 to vector<4x128xf32>
    %444 = arith.addf %443, %442 : vector<4x128xf32>
    %445 = arith.divf %443, %444 : vector<4x128xf32>
    %446 = math.tanh %440 : vector<4x128xf32>
    %447 = vector.extract_strided_slice %445 {offsets = [0, 0], sizes = [4, 32], strides = [1, 1]} : vector<4x128xf32> to vector<4x32xf32>
    %448 = vector.extract_strided_slice %445 {offsets = [0, 32], sizes = [4, 32], strides = [1, 1]} : vector<4x128xf32> to vector<4x32xf32>
    %449 = vector.extract_strided_slice %446 {offsets = [0, 64], sizes = [4, 32], strides = [1, 1]} : vector<4x128xf32> to vector<4x32xf32>
    %450 = vector.extract_strided_slice %445 {offsets = [0, 96], sizes = [4, 32], strides = [1, 1]} : vector<4x128xf32> to vector<4x32xf32>
    %451 = arith.mulf %448, %422 : vector<4x32xf32>
    %452 = arith.mulf %447, %449 : vector<4x32xf32>
    %453 = arith.addf %451, %452 : vector<4x32xf32>
    %454 = math.tanh %453 : vector<4x32xf32>
    %455 = arith.mulf %450, %454 : vector<4x32xf32>
    %456 = arith.addf %455, %51 : vector<4x32xf32>
    %cst_94 = arith.constant dense<0.000000e+00> : vector<4x8xf32>
    %457 = tpu.matmul %456, %354, %cst_94 {dimension_numbers = #tpu.dot_dimension_numbers<[1], [0], [0], [1], [0, 0, 1, 1], [], []>} : vector<4x32xf32>, vector<32x8xf32>, vector<4x8xf32> -> vector<4x8xf32>
    %cst_95 = arith.constant dense<0xFF800000> : vector<4xf32>
    %458 = vector.multi_reduction <maximumf>, %457, %cst_95 [1] : vector<4x8xf32> to vector<4xf32>
    %459 = vector.shape_cast %458 : vector<4xf32> to vector<4x1xf32>
    %460 = vector.broadcast %459 : vector<4x1xf32> to vector<4x8xf32>
    %461 = arith.subf %457, %460 : vector<4x8xf32>
    %462 = math.exp %461 : vector<4x8xf32>
    %cst_96 = arith.constant dense<0.000000e+00> : vector<4xf32>
    %463 = vector.multi_reduction <add>, %462, %cst_96 [1] : vector<4x8xf32> to vector<4xf32>
    %464 = vector.shape_cast %463 : vector<4xf32> to vector<4x1xf32>
    %465 = tpu.reciprocal %464 {approx = true} : vector<4x1xf32> -> vector<4x1xf32>
    %466 = vector.broadcast %465 : vector<4x1xf32> to vector<4x8xf32>
    %467 = arith.mulf %462, %466 : vector<4x8xf32>
    %cst_97 = arith.constant dense<0.000000e+00> : vector<4x128xf32>
    %468 = tpu.matmul %467, %356, %cst_97 {dimension_numbers = #tpu.dot_dimension_numbers<[1], [0], [0], [1], [0, 0, 1, 1], [], []>} : vector<4x8xf32>, vector<8x128xf32>, vector<4x128xf32> -> vector<4x128xf32>
    %469 = arith.addf %361, %468 : vector<4x128xf32>
    %cst_98 = arith.constant dense<0.000000e+00> : vector<4x128xf32>
    %470 = tpu.matmul %456, %362, %cst_98 {dimension_numbers = #tpu.dot_dimension_numbers<[1], [0], [0], [1], [0, 0, 1, 1], [], []>} : vector<4x32xf32>, vector<32x128xf32>, vector<4x128xf32> -> vector<4x128xf32>
    %471 = arith.addf %469, %470 : vector<4x128xf32>
    %472 = arith.negf %471 : vector<4x128xf32>
    %473 = math.exp %472 : vector<4x128xf32>
    %cst_99 = arith.constant 1.000000e+00 : f32
    %474 = vector.broadcast %cst_99 : f32 to vector<4x128xf32>
    %475 = arith.addf %474, %473 : vector<4x128xf32>
    %476 = arith.divf %474, %475 : vector<4x128xf32>
    %477 = math.tanh %471 : vector<4x128xf32>
    %478 = vector.extract_strided_slice %476 {offsets = [0, 0], sizes = [4, 32], strides = [1, 1]} : vector<4x128xf32> to vector<4x32xf32>
    %479 = vector.extract_strided_slice %476 {offsets = [0, 32], sizes = [4, 32], strides = [1, 1]} : vector<4x128xf32> to vector<4x32xf32>
    %480 = vector.extract_strided_slice %477 {offsets = [0, 64], sizes = [4, 32], strides = [1, 1]} : vector<4x128xf32> to vector<4x32xf32>
    %481 = vector.extract_strided_slice %476 {offsets = [0, 96], sizes = [4, 32], strides = [1, 1]} : vector<4x128xf32> to vector<4x32xf32>
    %482 = arith.mulf %479, %453 : vector<4x32xf32>
    %483 = arith.mulf %478, %480 : vector<4x32xf32>
    %484 = arith.addf %482, %483 : vector<4x32xf32>
    %485 = math.tanh %484 : vector<4x32xf32>
    %486 = arith.mulf %481, %485 : vector<4x32xf32>
    %487 = arith.addf %486, %51 : vector<4x32xf32>
    %cst_100 = arith.constant dense<0.000000e+00> : vector<4x8xf32>
    %488 = tpu.matmul %487, %354, %cst_100 {dimension_numbers = #tpu.dot_dimension_numbers<[1], [0], [0], [1], [0, 0, 1, 1], [], []>} : vector<4x32xf32>, vector<32x8xf32>, vector<4x8xf32> -> vector<4x8xf32>
    %cst_101 = arith.constant dense<0xFF800000> : vector<4xf32>
    %489 = vector.multi_reduction <maximumf>, %488, %cst_101 [1] : vector<4x8xf32> to vector<4xf32>
    %490 = vector.shape_cast %489 : vector<4xf32> to vector<4x1xf32>
    %491 = vector.broadcast %490 : vector<4x1xf32> to vector<4x8xf32>
    %492 = arith.subf %488, %491 : vector<4x8xf32>
    %493 = math.exp %492 : vector<4x8xf32>
    %cst_102 = arith.constant dense<0.000000e+00> : vector<4xf32>
    %494 = vector.multi_reduction <add>, %493, %cst_102 [1] : vector<4x8xf32> to vector<4xf32>
    %495 = vector.shape_cast %494 : vector<4xf32> to vector<4x1xf32>
    %496 = tpu.reciprocal %495 {approx = true} : vector<4x1xf32> -> vector<4x1xf32>
    %497 = vector.broadcast %496 : vector<4x1xf32> to vector<4x8xf32>
    %498 = arith.mulf %493, %497 : vector<4x8xf32>
    %cst_103 = arith.constant dense<0.000000e+00> : vector<4x128xf32>
    %499 = tpu.matmul %498, %356, %cst_103 {dimension_numbers = #tpu.dot_dimension_numbers<[1], [0], [0], [1], [0, 0, 1, 1], [], []>} : vector<4x8xf32>, vector<8x128xf32>, vector<4x128xf32> -> vector<4x128xf32>
    %500 = arith.addf %361, %499 : vector<4x128xf32>
    %cst_104 = arith.constant dense<0.000000e+00> : vector<4x128xf32>
    %501 = tpu.matmul %487, %362, %cst_104 {dimension_numbers = #tpu.dot_dimension_numbers<[1], [0], [0], [1], [0, 0, 1, 1], [], []>} : vector<4x32xf32>, vector<32x128xf32>, vector<4x128xf32> -> vector<4x128xf32>
    %502 = arith.addf %500, %501 : vector<4x128xf32>
    %503 = arith.negf %502 : vector<4x128xf32>
    %504 = math.exp %503 : vector<4x128xf32>
    %cst_105 = arith.constant 1.000000e+00 : f32
    %505 = vector.broadcast %cst_105 : f32 to vector<4x128xf32>
    %506 = arith.addf %505, %504 : vector<4x128xf32>
    %507 = arith.divf %505, %506 : vector<4x128xf32>
    %508 = math.tanh %502 : vector<4x128xf32>
    %509 = vector.extract_strided_slice %507 {offsets = [0, 0], sizes = [4, 32], strides = [1, 1]} : vector<4x128xf32> to vector<4x32xf32>
    %510 = vector.extract_strided_slice %507 {offsets = [0, 32], sizes = [4, 32], strides = [1, 1]} : vector<4x128xf32> to vector<4x32xf32>
    %511 = vector.extract_strided_slice %508 {offsets = [0, 64], sizes = [4, 32], strides = [1, 1]} : vector<4x128xf32> to vector<4x32xf32>
    %512 = vector.extract_strided_slice %507 {offsets = [0, 96], sizes = [4, 32], strides = [1, 1]} : vector<4x128xf32> to vector<4x32xf32>
    %513 = arith.mulf %510, %484 : vector<4x32xf32>
    %514 = arith.mulf %509, %511 : vector<4x32xf32>
    %515 = arith.addf %513, %514 : vector<4x32xf32>
    %516 = math.tanh %515 : vector<4x32xf32>
    %517 = arith.mulf %512, %516 : vector<4x32xf32>
    %518 = arith.addf %517, %51 : vector<4x32xf32>
    %cst_106 = arith.constant dense<0.000000e+00> : vector<4x8xf32>
    %519 = tpu.matmul %518, %354, %cst_106 {dimension_numbers = #tpu.dot_dimension_numbers<[1], [0], [0], [1], [0, 0, 1, 1], [], []>} : vector<4x32xf32>, vector<32x8xf32>, vector<4x8xf32> -> vector<4x8xf32>
    %cst_107 = arith.constant dense<0xFF800000> : vector<4xf32>
    %520 = vector.multi_reduction <maximumf>, %519, %cst_107 [1] : vector<4x8xf32> to vector<4xf32>
    %521 = vector.shape_cast %520 : vector<4xf32> to vector<4x1xf32>
    %522 = vector.broadcast %521 : vector<4x1xf32> to vector<4x8xf32>
    %523 = arith.subf %519, %522 : vector<4x8xf32>
    %524 = math.exp %523 : vector<4x8xf32>
    %cst_108 = arith.constant dense<0.000000e+00> : vector<4xf32>
    %525 = vector.multi_reduction <add>, %524, %cst_108 [1] : vector<4x8xf32> to vector<4xf32>
    %526 = vector.shape_cast %525 : vector<4xf32> to vector<4x1xf32>
    %527 = tpu.reciprocal %526 {approx = true} : vector<4x1xf32> -> vector<4x1xf32>
    %528 = vector.broadcast %527 : vector<4x1xf32> to vector<4x8xf32>
    %529 = arith.mulf %524, %528 : vector<4x8xf32>
    %cst_109 = arith.constant dense<0.000000e+00> : vector<4x128xf32>
    %530 = tpu.matmul %529, %356, %cst_109 {dimension_numbers = #tpu.dot_dimension_numbers<[1], [0], [0], [1], [0, 0, 1, 1], [], []>} : vector<4x8xf32>, vector<8x128xf32>, vector<4x128xf32> -> vector<4x128xf32>
    %531 = arith.addf %361, %530 : vector<4x128xf32>
    %cst_110 = arith.constant dense<0.000000e+00> : vector<4x128xf32>
    %532 = tpu.matmul %518, %362, %cst_110 {dimension_numbers = #tpu.dot_dimension_numbers<[1], [0], [0], [1], [0, 0, 1, 1], [], []>} : vector<4x32xf32>, vector<32x128xf32>, vector<4x128xf32> -> vector<4x128xf32>
    %533 = arith.addf %531, %532 : vector<4x128xf32>
    %534 = arith.negf %533 : vector<4x128xf32>
    %535 = math.exp %534 : vector<4x128xf32>
    %cst_111 = arith.constant 1.000000e+00 : f32
    %536 = vector.broadcast %cst_111 : f32 to vector<4x128xf32>
    %537 = arith.addf %536, %535 : vector<4x128xf32>
    %538 = arith.divf %536, %537 : vector<4x128xf32>
    %539 = math.tanh %533 : vector<4x128xf32>
    %540 = vector.extract_strided_slice %538 {offsets = [0, 0], sizes = [4, 32], strides = [1, 1]} : vector<4x128xf32> to vector<4x32xf32>
    %541 = vector.extract_strided_slice %538 {offsets = [0, 32], sizes = [4, 32], strides = [1, 1]} : vector<4x128xf32> to vector<4x32xf32>
    %542 = vector.extract_strided_slice %539 {offsets = [0, 64], sizes = [4, 32], strides = [1, 1]} : vector<4x128xf32> to vector<4x32xf32>
    %543 = vector.extract_strided_slice %538 {offsets = [0, 96], sizes = [4, 32], strides = [1, 1]} : vector<4x128xf32> to vector<4x32xf32>
    %544 = arith.mulf %541, %515 : vector<4x32xf32>
    %545 = arith.mulf %540, %542 : vector<4x32xf32>
    %546 = arith.addf %544, %545 : vector<4x32xf32>
    %547 = math.tanh %546 : vector<4x32xf32>
    %548 = arith.mulf %543, %547 : vector<4x32xf32>
    %549 = arith.addf %548, %51 : vector<4x32xf32>
    %cst_112 = arith.constant dense<0.000000e+00> : vector<4x8xf32>
    %550 = tpu.matmul %549, %354, %cst_112 {dimension_numbers = #tpu.dot_dimension_numbers<[1], [0], [0], [1], [0, 0, 1, 1], [], []>} : vector<4x32xf32>, vector<32x8xf32>, vector<4x8xf32> -> vector<4x8xf32>
    %cst_113 = arith.constant dense<0xFF800000> : vector<4xf32>
    %551 = vector.multi_reduction <maximumf>, %550, %cst_113 [1] : vector<4x8xf32> to vector<4xf32>
    %552 = vector.shape_cast %551 : vector<4xf32> to vector<4x1xf32>
    %553 = vector.broadcast %552 : vector<4x1xf32> to vector<4x8xf32>
    %554 = arith.subf %550, %553 : vector<4x8xf32>
    %555 = math.exp %554 : vector<4x8xf32>
    %cst_114 = arith.constant dense<0.000000e+00> : vector<4xf32>
    %556 = vector.multi_reduction <add>, %555, %cst_114 [1] : vector<4x8xf32> to vector<4xf32>
    %557 = vector.shape_cast %556 : vector<4xf32> to vector<4x1xf32>
    %558 = tpu.reciprocal %557 {approx = true} : vector<4x1xf32> -> vector<4x1xf32>
    %559 = vector.broadcast %558 : vector<4x1xf32> to vector<4x8xf32>
    %560 = arith.mulf %555, %559 : vector<4x8xf32>
    %cst_115 = arith.constant dense<0.000000e+00> : vector<4x128xf32>
    %561 = tpu.matmul %560, %356, %cst_115 {dimension_numbers = #tpu.dot_dimension_numbers<[1], [0], [0], [1], [0, 0, 1, 1], [], []>} : vector<4x8xf32>, vector<8x128xf32>, vector<4x128xf32> -> vector<4x128xf32>
    %562 = arith.addf %361, %561 : vector<4x128xf32>
    %cst_116 = arith.constant dense<0.000000e+00> : vector<4x128xf32>
    %563 = tpu.matmul %549, %362, %cst_116 {dimension_numbers = #tpu.dot_dimension_numbers<[1], [0], [0], [1], [0, 0, 1, 1], [], []>} : vector<4x32xf32>, vector<32x128xf32>, vector<4x128xf32> -> vector<4x128xf32>
    %564 = arith.addf %562, %563 : vector<4x128xf32>
    %565 = arith.negf %564 : vector<4x128xf32>
    %566 = math.exp %565 : vector<4x128xf32>
    %cst_117 = arith.constant 1.000000e+00 : f32
    %567 = vector.broadcast %cst_117 : f32 to vector<4x128xf32>
    %568 = arith.addf %567, %566 : vector<4x128xf32>
    %569 = arith.divf %567, %568 : vector<4x128xf32>
    %570 = math.tanh %564 : vector<4x128xf32>
    %571 = vector.extract_strided_slice %569 {offsets = [0, 0], sizes = [4, 32], strides = [1, 1]} : vector<4x128xf32> to vector<4x32xf32>
    %572 = vector.extract_strided_slice %569 {offsets = [0, 32], sizes = [4, 32], strides = [1, 1]} : vector<4x128xf32> to vector<4x32xf32>
    %573 = vector.extract_strided_slice %570 {offsets = [0, 64], sizes = [4, 32], strides = [1, 1]} : vector<4x128xf32> to vector<4x32xf32>
    %574 = vector.extract_strided_slice %569 {offsets = [0, 96], sizes = [4, 32], strides = [1, 1]} : vector<4x128xf32> to vector<4x32xf32>
    %575 = arith.mulf %572, %546 : vector<4x32xf32>
    %576 = arith.mulf %571, %573 : vector<4x32xf32>
    %577 = arith.addf %575, %576 : vector<4x32xf32>
    %578 = math.tanh %577 : vector<4x32xf32>
    %579 = arith.mulf %574, %578 : vector<4x32xf32>
    %580 = arith.addf %579, %51 : vector<4x32xf32>
    %cst_118 = arith.constant dense<0.000000e+00> : vector<4x8xf32>
    %581 = tpu.matmul %580, %354, %cst_118 {dimension_numbers = #tpu.dot_dimension_numbers<[1], [0], [0], [1], [0, 0, 1, 1], [], []>} : vector<4x32xf32>, vector<32x8xf32>, vector<4x8xf32> -> vector<4x8xf32>
    %cst_119 = arith.constant dense<0xFF800000> : vector<4xf32>
    %582 = vector.multi_reduction <maximumf>, %581, %cst_119 [1] : vector<4x8xf32> to vector<4xf32>
    %583 = vector.shape_cast %582 : vector<4xf32> to vector<4x1xf32>
    %584 = vector.broadcast %583 : vector<4x1xf32> to vector<4x8xf32>
    %585 = arith.subf %581, %584 : vector<4x8xf32>
    %586 = math.exp %585 : vector<4x8xf32>
    %cst_120 = arith.constant dense<0.000000e+00> : vector<4xf32>
    %587 = vector.multi_reduction <add>, %586, %cst_120 [1] : vector<4x8xf32> to vector<4xf32>
    %588 = vector.shape_cast %587 : vector<4xf32> to vector<4x1xf32>
    %589 = tpu.reciprocal %588 {approx = true} : vector<4x1xf32> -> vector<4x1xf32>
    %590 = vector.broadcast %589 : vector<4x1xf32> to vector<4x8xf32>
    %591 = arith.mulf %586, %590 : vector<4x8xf32>
    %cst_121 = arith.constant dense<0.000000e+00> : vector<4x128xf32>
    %592 = tpu.matmul %591, %356, %cst_121 {dimension_numbers = #tpu.dot_dimension_numbers<[1], [0], [0], [1], [0, 0, 1, 1], [], []>} : vector<4x8xf32>, vector<8x128xf32>, vector<4x128xf32> -> vector<4x128xf32>
    %593 = arith.addf %361, %592 : vector<4x128xf32>
    %cst_122 = arith.constant dense<0.000000e+00> : vector<4x128xf32>
    %594 = tpu.matmul %580, %362, %cst_122 {dimension_numbers = #tpu.dot_dimension_numbers<[1], [0], [0], [1], [0, 0, 1, 1], [], []>} : vector<4x32xf32>, vector<32x128xf32>, vector<4x128xf32> -> vector<4x128xf32>
    %595 = arith.addf %593, %594 : vector<4x128xf32>
    %596 = arith.negf %595 : vector<4x128xf32>
    %597 = math.exp %596 : vector<4x128xf32>
    %cst_123 = arith.constant 1.000000e+00 : f32
    %598 = vector.broadcast %cst_123 : f32 to vector<4x128xf32>
    %599 = arith.addf %598, %597 : vector<4x128xf32>
    %600 = arith.divf %598, %599 : vector<4x128xf32>
    %601 = math.tanh %595 : vector<4x128xf32>
    %602 = vector.extract_strided_slice %600 {offsets = [0, 0], sizes = [4, 32], strides = [1, 1]} : vector<4x128xf32> to vector<4x32xf32>
    %603 = vector.extract_strided_slice %600 {offsets = [0, 32], sizes = [4, 32], strides = [1, 1]} : vector<4x128xf32> to vector<4x32xf32>
    %604 = vector.extract_strided_slice %601 {offsets = [0, 64], sizes = [4, 32], strides = [1, 1]} : vector<4x128xf32> to vector<4x32xf32>
    %605 = vector.extract_strided_slice %600 {offsets = [0, 96], sizes = [4, 32], strides = [1, 1]} : vector<4x128xf32> to vector<4x32xf32>
    %606 = arith.mulf %603, %577 : vector<4x32xf32>
    %607 = arith.mulf %602, %604 : vector<4x32xf32>
    %608 = arith.addf %606, %607 : vector<4x32xf32>
    %609 = math.tanh %608 : vector<4x32xf32>
    %610 = arith.mulf %605, %609 : vector<4x32xf32>
    %611 = arith.addf %610, %51 : vector<4x32xf32>
    %612 = arith.mulf %353, %353 : vector<8x32xf32>
    %cst_124 = arith.constant dense<0.000000e+00> : vector<8xf32>
    %613 = vector.multi_reduction <add>, %612, %cst_124 [1] : vector<8x32xf32> to vector<8xf32>
    %614 = vector.shape_cast %613 : vector<8xf32> to vector<8x1xf32>
    %cst_125 = arith.constant 1.000000e-24 : f32
    %615 = vector.broadcast %cst_125 : f32 to vector<8x1xf32>
    %616 = arith.addf %614, %615 : vector<8x1xf32>
    %617 = math.rsqrt %616 : vector<8x1xf32>
    %618 = vector.broadcast %617 : vector<8x1xf32> to vector<8x32xf32>
    %619 = arith.mulf %353, %618 : vector<8x32xf32>
    %620 = tpu.transpose %619, [1, 0] : vector<8x32xf32> -> vector<32x8xf32>
    %cst_126 = arith.constant dense<0.000000e+00> : vector<4x8xf32>
    %621 = tpu.matmul %611, %620, %cst_126 {dimension_numbers = #tpu.dot_dimension_numbers<[1], [0], [0], [1], [0, 0, 1, 1], [], []>} : vector<4x32xf32>, vector<32x8xf32>, vector<4x8xf32> -> vector<4x8xf32>
    %cst_127 = arith.constant dense<0xFF800000> : vector<4xf32>
    %622 = vector.multi_reduction <maximumf>, %621, %cst_127 [1] : vector<4x8xf32> to vector<4xf32>
    %623 = vector.shape_cast %622 : vector<4xf32> to vector<4x1xf32>
    %624 = vector.broadcast %623 : vector<4x1xf32> to vector<4x8xf32>
    %625 = arith.subf %621, %624 : vector<4x8xf32>
    %626 = math.exp %625 : vector<4x8xf32>
    %cst_128 = arith.constant dense<0.000000e+00> : vector<4xf32>
    %627 = vector.multi_reduction <add>, %626, %cst_128 [1] : vector<4x8xf32> to vector<4xf32>
    %628 = vector.shape_cast %627 : vector<4xf32> to vector<4x1xf32>
    %629 = tpu.reciprocal %628 {approx = true} : vector<4x1xf32> -> vector<4x1xf32>
    %630 = vector.broadcast %629 : vector<4x1xf32> to vector<4x8xf32>
    %631 = arith.mulf %626, %630 : vector<4x8xf32>
    %c0_129 = arith.constant 0 : index
    %c0_130 = arith.constant 0 : index
    %632 = vector.load %arg13[%c0_129, %c0_130] : memref<8x4xf32, #tpu.memory_space<vmem>>, vector<8x4xf32>
    %cst_131 = arith.constant dense<0.000000e+00> : vector<4x4xf32>
    %633 = tpu.matmul %631, %632, %cst_131 {dimension_numbers = #tpu.dot_dimension_numbers<[1], [0], [0], [1], [0, 0, 1, 1], [], []>} : vector<4x8xf32>, vector<8x4xf32>, vector<4x4xf32> -> vector<4x4xf32>
    %cst_132 = arith.constant 9.99999974E-5 : f32
    %634 = vector.broadcast %cst_132 : f32 to vector<4x4xf32>
    %635 = arith.addf %633, %634 : vector<4x4xf32>
    %636 = math.log %635 : vector<4x4xf32>
    %c0_133 = arith.constant 0 : index
    %c0_134 = arith.constant 0 : index
    %637 = vector.load %arg14[%c0_133, %c0_134] : memref<4x4xf32, #tpu.memory_space<vmem>>, vector<4x4xf32>
    tpu.vector_store %arg14[%c0_133, %c0_134], %636 {strides = array<i32>} : memref<4x4xf32, #tpu.memory_space<vmem>>, vector<4x4xf32>,
    return
  }
}

</mosaic_0001>

<llo_original>
// kernel: matching_network_forward.1
$region0: #{matching_network_forward.1}
  #allocation0 [shape = 'u32[]', space=smem, size = 0x4, offset = 0x4, fixed_abs, tag = 'smem constant byte address 0x4 - core index']
  #allocation1 [shape = 'u32[72,128]{1,0:T(1,128)}', space=vmem, size = 0x9000, scoped, tag = 'internal scratch']
  %s0 = inlined_call_operand.vmem [shape: f32[3072,27], index: 0, kind: input, shape index: {}]
  %s1 = inlined_call_operand.vmem [shape: f32[27,8], index: 1, kind: input, shape index: {}]
  %s2 = inlined_call_operand.vmem [shape: f32[1,8], index: 2, kind: input, shape index: {}]
  %s3 = inlined_call_operand.vmem [shape: f32[8,32], index: 3, kind: input, shape index: {}]
  %s4 = inlined_call_operand.vmem [shape: f32[1,32], index: 4, kind: input, shape index: {}]
  %s5 = inlined_call_operand.vmem [shape: f32[32,256], index: 5, kind: input, shape index: {}]
  %s6 = inlined_call_operand.vmem [shape: f32[1,256], index: 6, kind: input, shape index: {}]
  %s7 = inlined_call_operand.vmem [shape: f32[32,128], index: 7, kind: input, shape index: {}]
  %s8 = inlined_call_operand.vmem [shape: f32[32,128], index: 8, kind: input, shape index: {}]
  %s9 = inlined_call_operand.vmem [shape: f32[32,128], index: 9, kind: input, shape index: {}]
  %s10 = inlined_call_operand.vmem [shape: f32[32,128], index: 10, kind: input, shape index: {}]
  %s11 = inlined_call_operand.vmem [shape: f32[32,128], index: 11, kind: input, shape index: {}]
  %s12 = inlined_call_operand.vmem [shape: f32[1,128], index: 12, kind: input, shape index: {}]
  %s13 = inlined_call_operand.vmem [shape: f32[8,4], index: 13, kind: input, shape index: {}]
  %s14 = inlined_call_operand.hbm [shape: f32[4,4], index: 14, kind: output, shape index: {}]
  %s15 = sld [smem:[#allocation0]]
  $region66: #{matching_network_forward.1} parent=0
    _
  %s17 = ssub.s32 1, %s15
  %s18 = scalar_select 0, %s17, %s15
  $region1: #{matching_network_forward.1} parent=0
    #allocation2 [shape = 'u8[2048]{0}', space=vmem, size = 0x800, scoped, tag = 'output window, operand 0, single buffered']
    #allocation3 [shape = 's32[1]{0}', space=sflag, size = 0x4, scoped, tag = 'scoped memory for matching_network_forward.1']
    %19 = vsyncpa [#allocation3], 0
    // Predicated region
    $region2: #{matching_network_forward.1} parent=1 // pred_check
      _
    $region3: #{matching_network_forward.1} parent=1 // pred_check_branch
      %21 = sbr.rel (0) target = $region5
    $region4: #{matching_network_forward.1} parent=1 // pred_region
      _
    $region5: #{matching_network_forward.1} parent=1 // pred_fallthru
      _
    // Predicated region
    $region6: #{matching_network_forward.1} parent=1 // pred_check
      _
    $region7: #{matching_network_forward.1} parent=1 // pred_check_branch
      %23 = sbr.rel (0) target = $region9
    $region8: #{matching_network_forward.1} parent=1 // pred_region
      _
    $region9: #{matching_network_forward.1} parent=1 // pred_fallthru
      _
    // Predicated region
    $region10: #{matching_network_forward.1} parent=1 // pred_check
      _
    $region11: #{matching_network_forward.1} parent=1 // pred_check_branch
      %25 = sbr.rel (0) target = $region13
    $region12: #{matching_network_forward.1} parent=1 // pred_region
      _
    $region13: #{matching_network_forward.1} parent=1 // pred_fallthru
      _
    // Predicated region
    $region14: #{matching_network_forward.1} parent=1 // pred_check
      _
    $region15: #{matching_network_forward.1} parent=1 // pred_check_branch
      %27 = sbr.rel (0) target = $region17
    $region16: #{matching_network_forward.1} parent=1 // pred_region
      _
    $region17: #{matching_network_forward.1} parent=1 // pred_fallthru
      _
    // Predicated region
    $region18: #{matching_network_forward.1} parent=1 // pred_check
      _
    $region19: #{matching_network_forward.1} parent=1 // pred_check_branch
      %29 = sbr.rel (0) target = $region21
    $region20: #{matching_network_forward.1} parent=1 // pred_region
      _
    $region21: #{matching_network_forward.1} parent=1 // pred_fallthru
      _
    // Predicated region
    $region22: #{matching_network_forward.1} parent=1 // pred_check
      _
    $region23: #{matching_network_forward.1} parent=1 // pred_check_branch
      %31 = sbr.rel (0) target = $region25
    $region24: #{matching_network_forward.1} parent=1 // pred_region
      _
    $region25: #{matching_network_forward.1} parent=1 // pred_fallthru
      _
    // Predicated region
    $region26: #{matching_network_forward.1} parent=1 // pred_check
      _
    $region27: #{matching_network_forward.1} parent=1 // pred_check_branch
      %33 = sbr.rel (0) target = $region29
    $region28: #{matching_network_forward.1} parent=1 // pred_region
      _
    $region29: #{matching_network_forward.1} parent=1 // pred_fallthru
      _
    // Predicated region
    $region30: #{matching_network_forward.1} parent=1 // pred_check
      _
    $region31: #{matching_network_forward.1} parent=1 // pred_check_branch
      %35 = sbr.rel (0) target = $region33
    $region32: #{matching_network_forward.1} parent=1 // pred_region
      _
    $region33: #{matching_network_forward.1} parent=1 // pred_fallthru
      _
    // Predicated region
    $region34: #{matching_network_forward.1} parent=1 // pred_check
      _
    $region35: #{matching_network_forward.1} parent=1 // pred_check_branch
      %37 = sbr.rel (0) target = $region37
    $region36: #{matching_network_forward.1} parent=1 // pred_region
      _
    $region37: #{matching_network_forward.1} parent=1 // pred_fallthru
      _
    // Predicated region
    $region38: #{matching_network_forward.1} parent=1 // pred_check
      _
    $region39: #{matching_network_forward.1} parent=1 // pred_check_branch
      %39 = sbr.rel (0) target = $region41
    $region40: #{matching_network_forward.1} parent=1 // pred_region
      _
    $region41: #{matching_network_forward.1} parent=1 // pred_fallthru
      _
    // Predicated region
    $region42: #{matching_network_forward.1} parent=1 // pred_check
      _
    $region43: #{matching_network_forward.1} parent=1 // pred_check_branch
      %41 = sbr.rel (0) target = $region45
    $region44: #{matching_network_forward.1} parent=1 // pred_region
      _
    $region45: #{matching_network_forward.1} parent=1 // pred_fallthru
      _
    // Predicated region
    $region46: #{matching_network_forward.1} parent=1 // pred_check
      _
    $region47: #{matching_network_forward.1} parent=1 // pred_check_branch
      %43 = sbr.rel (0) target = $region49
    $region48: #{matching_network_forward.1} parent=1 // pred_region
      _
    $region49: #{matching_network_forward.1} parent=1 // pred_fallthru
      _
    // Predicated region
    $region50: #{matching_network_forward.1} parent=1 // pred_check
      _
    $region51: #{matching_network_forward.1} parent=1 // pred_check_branch
      %45 = sbr.rel (0) target = $region53
    $region52: #{matching_network_forward.1} parent=1 // pred_region
      _
    $region53: #{matching_network_forward.1} parent=1 // pred_fallthru
      _
    // Predicated region
    $region54: #{matching_network_forward.1} parent=1 // pred_check
      _
    $region55: #{matching_network_forward.1} parent=1 // pred_check_branch
      %47 = sbr.rel (0) target = $region57
    $region56: #{matching_network_forward.1} parent=1 // pred_region
      _
    $region57: #{matching_network_forward.1} parent=1 // pred_fallthru
      _
    %v48 = vld [vmem:[%s0] sm:$0xff]
    %v49 = vld [vmem:[%s0 + $0x8] sm:$0xff]
    %v50 = vld [vmem:[%s0 + $0x10] sm:$0xff]
    %v51 = vld [vmem:[%s0 + $0x18] sm:$0xff]
    %v52 = vld [vmem:[%s0 + $0x20] sm:$0xff]
    %v53 = vld [vmem:[%s0 + $0x28] sm:$0xff]
    %v54 = vld [vmem:[%s0 + $0x30] sm:$0xff]
    %v55 = vld [vmem:[%s0 + $0x38] sm:$0xff]
    %v56 = vld [vmem:[%s0 + $0x40] sm:$0xff]
    %v57 = vld [vmem:[%s0 + $0x48] sm:$0xff]
    %v58 = vld [vmem:[%s0 + $0x50] sm:$0xff]
    %v59 = vld [vmem:[%s0 + $0x58] sm:$0xff]
    %v60 = vld [vmem:[%s0 + $0x60] sm:$0xff]
    %v61 = vld [vmem:[%s0 + $0x68] sm:$0xff]
    %v62 = vld [vmem:[%s0 + $0x70] sm:$0xff]
    %v63 = vld [vmem:[%s0 + $0x78] sm:$0xff]
    %v64 = vld [vmem:[%s0 + $0x80] sm:$0xff]
    %v65 = vld [vmem:[%s0 + $0x88] sm:$0xff]
    %v66 = vld [vmem:[%s0 + $0x90] sm:$0xff]
    %v67 = vld [vmem:[%s0 + $0x98] sm:$0xff]
    %v68 = vld [vmem:[%s0 + $0xa0] sm:$0xff]
    %v69 = vld [vmem:[%s0 + $0xa8] sm:$0xff]
    %v70 = vld [vmem:[%s0 + $0xb0] sm:$0xff]
    %v71 = vld [vmem:[%s0 + $0xb8] sm:$0xff]
    %v72 = vld [vmem:[%s0 + $0xc0] sm:$0xff]
    %v73 = vld [vmem:[%s0 + $0xc8] sm:$0xff]
    %v74 = vld [vmem:[%s0 + $0xd0] sm:$0xff]
    %v75 = vld [vmem:[%s0 + $0xd8] sm:$0xff]
    %v76 = vld [vmem:[%s0 + $0xe0] sm:$0xff]
    %v77 = vld [vmem:[%s0 + $0xe8] sm:$0xff]
    %v78 = vld [vmem:[%s0 + $0xf0] sm:$0xff]
    %v79 = vld [vmem:[%s0 + $0xf8] sm:$0xff]
    %v80 = vld [vmem:[%s0 + $0x100] sm:$0xff]
    %v81 = vld [vmem:[%s0 + $0x108] sm:$0xff]
    %v82 = vld [vmem:[%s0 + $0x110] sm:$0xff]
    %v83 = vld [vmem:[%s0 + $0x118] sm:$0xff]
    %v84 = vld [vmem:[%s0 + $0x120] sm:$0xff]
    %v85 = vld [vmem:[%s0 + $0x128] sm:$0xff]
    %v86 = vld [vmem:[%s0 + $0x130] sm:$0xff]
    %v87 = vld [vmem:[%s0 + $0x138] sm:$0xff]
    %v88 = vld [vmem:[%s0 + $0x140] sm:$0xff]
    %v89 = vld [vmem:[%s0 + $0x148] sm:$0xff]
    %v90 = vld [vmem:[%s0 + $0x150] sm:$0xff]
    %v91 = vld [vmem:[%s0 + $0x158] sm:$0xff]
    %v92 = vld [vmem:[%s0 + $0x160] sm:$0xff]
    %v93 = vld [vmem:[%s0 + $0x168] sm:$0xff]
    %v94 = vld [vmem:[%s0 + $0x170] sm:$0xff]
    %v95 = vld [vmem:[%s0 + $0x178] sm:$0xff]
    %v96 = vld [vmem:[%s0 + $0x180] sm:$0xff]
    %v97 = vld [vmem:[%s0 + $0x188] sm:$0xff]
    %v98 = vld [vmem:[%s0 + $0x190] sm:$0xff]
    %v99 = vld [vmem:[%s0 + $0x198] sm:$0xff]
    %v100 = vld [vmem:[%s0 + $0x1a0] sm:$0xff]
    %v101 = vld [vmem:[%s0 + $0x1a8] sm:$0xff]
    %v102 = vld [vmem:[%s0 + $0x1b0] sm:$0xff]
    %v103 = vld [vmem:[%s0 + $0x1b8] sm:$0xff]
    %v104 = vld [vmem:[%s0 + $0x1c0] sm:$0xff]
    %v105 = vld [vmem:[%s0 + $0x1c8] sm:$0xff]
    %v106 = vld [vmem:[%s0 + $0x1d0] sm:$0xff]
    %v107 = vld [vmem:[%s0 + $0x1d8] sm:$0xff]
    %v108 = vld [vmem:[%s0 + $0x1e0] sm:$0xff]
    %v109 = vld [vmem:[%s0 + $0x1e8] sm:$0xff]
    %v110 = vld [vmem:[%s0 + $0x1f0] sm:$0xff]
    %v111 = vld [vmem:[%s0 + $0x1f8] sm:$0xff]
    %v112 = vld [vmem:[%s0 + $0x200] sm:$0xff]
    %v113 = vld [vmem:[%s0 + $0x208] sm:$0xff]
    %v114 = vld [vmem:[%s0 + $0x210] sm:$0xff]
    %v115 = vld [vmem:[%s0 + $0x218] sm:$0xff]
    %v116 = vld [vmem:[%s0 + $0x220] sm:$0xff]
    %v117 = vld [vmem:[%s0 + $0x228] sm:$0xff]
    %v118 = vld [vmem:[%s0 + $0x230] sm:$0xff]
    %v119 = vld [vmem:[%s0 + $0x238] sm:$0xff]
    %v120 = vld [vmem:[%s0 + $0x240] sm:$0xff]
    %v121 = vld [vmem:[%s0 + $0x248] sm:$0xff]
    %v122 = vld [vmem:[%s0 + $0x250] sm:$0xff]
    %v123 = vld [vmem:[%s0 + $0x258] sm:$0xff]
    %v124 = vld [vmem:[%s0 + $0x260] sm:$0xff]
    %v125 = vld [vmem:[%s0 + $0x268] sm:$0xff]
    %v126 = vld [vmem:[%s0 + $0x270] sm:$0xff]
    %v127 = vld [vmem:[%s0 + $0x278] sm:$0xff]
    %v128 = vld [vmem:[%s0 + $0x280] sm:$0xff]
    %v129 = vld [vmem:[%s0 + $0x288] sm:$0xff]
    %v130 = vld [vmem:[%s0 + $0x290] sm:$0xff]
    %v131 = vld [vmem:[%s0 + $0x298] sm:$0xff]
    %v132 = vld [vmem:[%s0 + $0x2a0] sm:$0xff]
    %v133 = vld [vmem:[%s0 + $0x2a8] sm:$0xff]
    %v134 = vld [vmem:[%s0 + $0x2b0] sm:$0xff]
    %v135 = vld [vmem:[%s0 + $0x2b8] sm:$0xff]
    %v136 = vld [vmem:[%s0 + $0x2c0] sm:$0xff]
    %v137 = vld [vmem:[%s0 + $0x2c8] sm:$0xff]
    %v138 = vld [vmem:[%s0 + $0x2d0] sm:$0xff]
    %v139 = vld [vmem:[%s0 + $0x2d8] sm:$0xff]
    %v140 = vld [vmem:[%s0 + $0x2e0] sm:$0xff]
    %v141 = vld [vmem:[%s0 + $0x2e8] sm:$0xff]
    %v142 = vld [vmem:[%s0 + $0x2f0] sm:$0xff]
    %v143 = vld [vmem:[%s0 + $0x2f8] sm:$0xff]
    %v144 = vld [vmem:[%s0 + $0x300] sm:$0xff]
    %v145 = vld [vmem:[%s0 + $0x308] sm:$0xff]
    %v146 = vld [vmem:[%s0 + $0x310] sm:$0xff]
    %v147 = vld [vmem:[%s0 + $0x318] sm:$0xff]
    %v148 = vld [vmem:[%s0 + $0x320] sm:$0xff]
    %v149 = vld [vmem:[%s0 + $0x328] sm:$0xff]
    %v150 = vld [vmem:[%s0 + $0x330] sm:$0xff]
    %v151 = vld [vmem:[%s0 + $0x338] sm:$0xff]
    %v152 = vld [vmem:[%s0 + $0x340] sm:$0xff]
    %v153 = vld [vmem:[%s0 + $0x348] sm:$0xff]
    %v154 = vld [vmem:[%s0 + $0x350] sm:$0xff]
    %v155 = vld [vmem:[%s0 + $0x358] sm:$0xff]
    %v156 = vld [vmem:[%s0 + $0x360] sm:$0xff]
    %v157 = vld [vmem:[%s0 + $0x368] sm:$0xff]
    %v158 = vld [vmem:[%s0 + $0x370] sm:$0xff]
    %v159 = vld [vmem:[%s0 + $0x378] sm:$0xff]
    %v160 = vld [vmem:[%s0 + $0x380] sm:$0xff]
    %v161 = vld [vmem:[%s0 + $0x388] sm:$0xff]
    %v162 = vld [vmem:[%s0 + $0x390] sm:$0xff]
    %v163 = vld [vmem:[%s0 + $0x398] sm:$0xff]
    %v164 = vld [vmem:[%s0 + $0x3a0] sm:$0xff]
    %v165 = vld [vmem:[%s0 + $0x3a8] sm:$0xff]
    %v166 = vld [vmem:[%s0 + $0x3b0] sm:$0xff]
    %v167 = vld [vmem:[%s0 + $0x3b8] sm:$0xff]
    %v168 = vld [vmem:[%s0 + $0x3c0] sm:$0xff]
    %v169 = vld [vmem:[%s0 + $0x3c8] sm:$0xff]
    %v170 = vld [vmem:[%s0 + $0x3d0] sm:$0xff]
    %v171 = vld [vmem:[%s0 + $0x3d8] sm:$0xff]
    %v172 = vld [vmem:[%s0 + $0x3e0] sm:$0xff]
    %v173 = vld [vmem:[%s0 + $0x3e8] sm:$0xff]
    %v174 = vld [vmem:[%s0 + $0x3f0] sm:$0xff]
    %v175 = vld [vmem:[%s0 + $0x3f8] sm:$0xff]
    %v176 = vld [vmem:[%s0 + $0x400] sm:$0xff]
    %v177 = vld [vmem:[%s0 + $0x408] sm:$0xff]
    %v178 = vld [vmem:[%s0 + $0x410] sm:$0xff]
    %v179 = vld [vmem:[%s0 + $0x418] sm:$0xff]
    %v180 = vld [vmem:[%s0 + $0x420] sm:$0xff]
    %v181 = vld [vmem:[%s0 + $0x428] sm:$0xff]
    %v182 = vld [vmem:[%s0 + $0x430] sm:$0xff]
    %v183 = vld [vmem:[%s0 + $0x438] sm:$0xff]
    %v184 = vld [vmem:[%s0 + $0x440] sm:$0xff]
    %v185 = vld [vmem:[%s0 + $0x448] sm:$0xff]
    %v186 = vld [vmem:[%s0 + $0x450] sm:$0xff]
    %v187 = vld [vmem:[%s0 + $0x458] sm:$0xff]
    %v188 = vld [vmem:[%s0 + $0x460] sm:$0xff]
    %v189 = vld [vmem:[%s0 + $0x468] sm:$0xff]
    %v190 = vld [vmem:[%s0 + $0x470] sm:$0xff]
    %v191 = vld [vmem:[%s0 + $0x478] sm:$0xff]
    %v192 = vld [vmem:[%s0 + $0x480] sm:$0xff]
    %v193 = vld [vmem:[%s0 + $0x488] sm:$0xff]
    %v194 = vld [vmem:[%s0 + $0x490] sm:$0xff]
    %v195 = vld [vmem:[%s0 + $0x498] sm:$0xff]
    %v196 = vld [vmem:[%s0 + $0x4a0] sm:$0xff]
    %v197 = vld [vmem:[%s0 + $0x4a8] sm:$0xff]
    %v198 = vld [vmem:[%s0 + $0x4b0] sm:$0xff]
    %v199 = vld [vmem:[%s0 + $0x4b8] sm:$0xff]
    %v200 = vld [vmem:[%s0 + $0x4c0] sm:$0xff]
    %v201 = vld [vmem:[%s0 + $0x4c8] sm:$0xff]
    %v202 = vld [vmem:[%s0 + $0x4d0] sm:$0xff]
    %v203 = vld [vmem:[%s0 + $0x4d8] sm:$0xff]
    %v204 = vld [vmem:[%s0 + $0x4e0] sm:$0xff]
    %v205 = vld [vmem:[%s0 + $0x4e8] sm:$0xff]
    %v206 = vld [vmem:[%s0 + $0x4f0] sm:$0xff]
    %v207 = vld [vmem:[%s0 + $0x4f8] sm:$0xff]
    %v208 = vld [vmem:[%s0 + $0x500] sm:$0xff]
    %v209 = vld [vmem:[%s0 + $0x508] sm:$0xff]
    %v210 = vld [vmem:[%s0 + $0x510] sm:$0xff]
    %v211 = vld [vmem:[%s0 + $0x518] sm:$0xff]
    %v212 = vld [vmem:[%s0 + $0x520] sm:$0xff]
    %v213 = vld [vmem:[%s0 + $0x528] sm:$0xff]
    %v214 = vld [vmem:[%s0 + $0x530] sm:$0xff]
    %v215 = vld [vmem:[%s0 + $0x538] sm:$0xff]
    %v216 = vld [vmem:[%s0 + $0x540] sm:$0xff]
    %v217 = vld [vmem:[%s0 + $0x548] sm:$0xff]
    %v218 = vld [vmem:[%s0 + $0x550] sm:$0xff]
    %v219 = vld [vmem:[%s0 + $0x558] sm:$0xff]
    %v220 = vld [vmem:[%s0 + $0x560] sm:$0xff]
    %v221 = vld [vmem:[%s0 + $0x568] sm:$0xff]
    %v222 = vld [vmem:[%s0 + $0x570] sm:$0xff]
    %v223 = vld [vmem:[%s0 + $0x578] sm:$0xff]
    %v224 = vld [vmem:[%s0 + $0x580] sm:$0xff]
    %v225 = vld [vmem:[%s0 + $0x588] sm:$0xff]
    %v226 = vld [vmem:[%s0 + $0x590] sm:$0xff]
    %v227 = vld [vmem:[%s0 + $0x598] sm:$0xff]
    %v228 = vld [vmem:[%s0 + $0x5a0] sm:$0xff]
    %v229 = vld [vmem:[%s0 + $0x5a8] sm:$0xff]
    %v230 = vld [vmem:[%s0 + $0x5b0] sm:$0xff]
    %v231 = vld [vmem:[%s0 + $0x5b8] sm:$0xff]
    %v232 = vld [vmem:[%s0 + $0x5c0] sm:$0xff]
    %v233 = vld [vmem:[%s0 + $0x5c8] sm:$0xff]
    %v234 = vld [vmem:[%s0 + $0x5d0] sm:$0xff]
    %v235 = vld [vmem:[%s0 + $0x5d8] sm:$0xff]
    %v236 = vld [vmem:[%s0 + $0x5e0] sm:$0xff]
    %v237 = vld [vmem:[%s0 + $0x5e8] sm:$0xff]
    %v238 = vld [vmem:[%s0 + $0x5f0] sm:$0xff]
    %v239 = vld [vmem:[%s0 + $0x5f8] sm:$0xff]
    %v240 = vld [vmem:[%s0 + $0x600] sm:$0xff]
    %v241 = vld [vmem:[%s0 + $0x608] sm:$0xff]
    %v242 = vld [vmem:[%s0 + $0x610] sm:$0xff]
    %v243 = vld [vmem:[%s0 + $0x618] sm:$0xff]
    %v244 = vld [vmem:[%s0 + $0x620] sm:$0xff]
    %v245 = vld [vmem:[%s0 + $0x628] sm:$0xff]
    %v246 = vld [vmem:[%s0 + $0x630] sm:$0xff]
    %v247 = vld [vmem:[%s0 + $0x638] sm:$0xff]
    %v248 = vld [vmem:[%s0 + $0x640] sm:$0xff]
    %v249 = vld [vmem:[%s0 + $0x648] sm:$0xff]
    %v250 = vld [vmem:[%s0 + $0x650] sm:$0xff]
    %v251 = vld [vmem:[%s0 + $0x658] sm:$0xff]
    %v252 = vld [vmem:[%s0 + $0x660] sm:$0xff]
    %v253 = vld [vmem:[%s0 + $0x668] sm:$0xff]
    %v254 = vld [vmem:[%s0 + $0x670] sm:$0xff]
    %v255 = vld [vmem:[%s0 + $0x678] sm:$0xff]
    %v256 = vld [vmem:[%s0 + $0x680] sm:$0xff]
    %v257 = vld [vmem:[%s0 + $0x688] sm:$0xff]
    %v258 = vld [vmem:[%s0 + $0x690] sm:$0xff]
    %v259 = vld [vmem:[%s0 + $0x698] sm:$0xff]
    %v260 = vld [vmem:[%s0 + $0x6a0] sm:$0xff]
    %v261 = vld [vmem:[%s0 + $0x6a8] sm:$0xff]
    %v262 = vld [vmem:[%s0 + $0x6b0] sm:$0xff]
    %v263 = vld [vmem:[%s0 + $0x6b8] sm:$0xff]
    %v264 = vld [vmem:[%s0 + $0x6c0] sm:$0xff]
    %v265 = vld [vmem:[%s0 + $0x6c8] sm:$0xff]
    %v266 = vld [vmem:[%s0 + $0x6d0] sm:$0xff]
    %v267 = vld [vmem:[%s0 + $0x6d8] sm:$0xff]
    %v268 = vld [vmem:[%s0 + $0x6e0] sm:$0xff]
    %v269 = vld [vmem:[%s0 + $0x6e8] sm:$0xff]
    %v270 = vld [vmem:[%s0 + $0x6f0] sm:$0xff]
    %v271 = vld [vmem:[%s0 + $0x6f8] sm:$0xff]
    %v272 = vld [vmem:[%s0 + $0x700] sm:$0xff]
    %v273 = vld [vmem:[%s0 + $0x708] sm:$0xff]
    %v274 = vld [vmem:[%s0 + $0x710] sm:$0xff]
    %v275 = vld [vmem:[%s0 + $0x718] sm:$0xff]
    %v276 = vld [vmem:[%s0 + $0x720] sm:$0xff]
    %v277 = vld [vmem:[%s0 + $0x728] sm:$0xff]
    %v278 = vld [vmem:[%s0 + $0x730] sm:$0xff]
    %v279 = vld [vmem:[%s0 + $0x738] sm:$0xff]
    %v280 = vld [vmem:[%s0 + $0x740] sm:$0xff]
    %v281 = vld [vmem:[%s0 + $0x748] sm:$0xff]
    %v282 = vld [vmem:[%s0 + $0x750] sm:$0xff]
    %v283 = vld [vmem:[%s0 + $0x758] sm:$0xff]
    %v284 = vld [vmem:[%s0 + $0x760] sm:$0xff]
    %v285 = vld [vmem:[%s0 + $0x768] sm:$0xff]
    %v286 = vld [vmem:[%s0 + $0x770] sm:$0xff]
    %v287 = vld [vmem:[%s0 + $0x778] sm:$0xff]
    %v288 = vld [vmem:[%s0 + $0x780] sm:$0xff]
    %v289 = vld [vmem:[%s0 + $0x788] sm:$0xff]
    %v290 = vld [vmem:[%s0 + $0x790] sm:$0xff]
    %v291 = vld [vmem:[%s0 + $0x798] sm:$0xff]
    %v292 = vld [vmem:[%s0 + $0x7a0] sm:$0xff]
    %v293 = vld [vmem:[%s0 + $0x7a8] sm:$0xff]
    %v294 = vld [vmem:[%s0 + $0x7b0] sm:$0xff]
    %v295 = vld [vmem:[%s0 + $0x7b8] sm:$0xff]
    %v296 = vld [vmem:[%s0 + $0x7c0] sm:$0xff]
    %v297 = vld [vmem:[%s0 + $0x7c8] sm:$0xff]
    %v298 = vld [vmem:[%s0 + $0x7d0] sm:$0xff]
    %v299 = vld [vmem:[%s0 + $0x7d8] sm:$0xff]
    %v300 = vld [vmem:[%s0 + $0x7e0] sm:$0xff]
    %v301 = vld [vmem:[%s0 + $0x7e8] sm:$0xff]
    %v302 = vld [vmem:[%s0 + $0x7f0] sm:$0xff]
    %v303 = vld [vmem:[%s0 + $0x7f8] sm:$0xff]
    %v304 = vld [vmem:[%s0 + $0x800] sm:$0xff]
    %v305 = vld [vmem:[%s0 + $0x808] sm:$0xff]
    %v306 = vld [vmem:[%s0 + $0x810] sm:$0xff]
    %v307 = vld [vmem:[%s0 + $0x818] sm:$0xff]
    %v308 = vld [vmem:[%s0 + $0x820] sm:$0xff]
    %v309 = vld [vmem:[%s0 + $0x828] sm:$0xff]
    %v310 = vld [vmem:[%s0 + $0x830] sm:$0xff]
    %v311 = vld [vmem:[%s0 + $0x838] sm:$0xff]
    %v312 = vld [vmem:[%s0 + $0x840] sm:$0xff]
    %v313 = vld [vmem:[%s0 + $0x848] sm:$0xff]
    %v314 = vld [vmem:[%s0 + $0x850] sm:$0xff]
    %v315 = vld [vmem:[%s0 + $0x858] sm:$0xff]
    %v316 = vld [vmem:[%s0 + $0x860] sm:$0xff]
    %v317 = vld [vmem:[%s0 + $0x868] sm:$0xff]
    %v318 = vld [vmem:[%s0 + $0x870] sm:$0xff]
    %v319 = vld [vmem:[%s0 + $0x878] sm:$0xff]
    %v320 = vld [vmem:[%s0 + $0x880] sm:$0xff]
    %v321 = vld [vmem:[%s0 + $0x888] sm:$0xff]
    %v322 = vld [vmem:[%s0 + $0x890] sm:$0xff]
    %v323 = vld [vmem:[%s0 + $0x898] sm:$0xff]
    %v324 = vld [vmem:[%s0 + $0x8a0] sm:$0xff]
    %v325 = vld [vmem:[%s0 + $0x8a8] sm:$0xff]
    %v326 = vld [vmem:[%s0 + $0x8b0] sm:$0xff]
    %v327 = vld [vmem:[%s0 + $0x8b8] sm:$0xff]
    %v328 = vld [vmem:[%s0 + $0x8c0] sm:$0xff]
    %v329 = vld [vmem:[%s0 + $0x8c8] sm:$0xff]
    %v330 = vld [vmem:[%s0 + $0x8d0] sm:$0xff]
    %v331 = vld [vmem:[%s0 + $0x8d8] sm:$0xff]
    %v332 = vld [vmem:[%s0 + $0x8e0] sm:$0xff]
    %v333 = vld [vmem:[%s0 + $0x8e8] sm:$0xff]
    %v334 = vld [vmem:[%s0 + $0x8f0] sm:$0xff]
    %v335 = vld [vmem:[%s0 + $0x8f8] sm:$0xff]
    %v336 = vld [vmem:[%s0 + $0x900] sm:$0xff]
    %v337 = vld [vmem:[%s0 + $0x908] sm:$0xff]
    %v338 = vld [vmem:[%s0 + $0x910] sm:$0xff]
    %v339 = vld [vmem:[%s0 + $0x918] sm:$0xff]
    %v340 = vld [vmem:[%s0 + $0x920] sm:$0xff]
    %v341 = vld [vmem:[%s0 + $0x928] sm:$0xff]
    %v342 = vld [vmem:[%s0 + $0x930] sm:$0xff]
    %v343 = vld [vmem:[%s0 + $0x938] sm:$0xff]
    %v344 = vld [vmem:[%s0 + $0x940] sm:$0xff]
    %v345 = vld [vmem:[%s0 + $0x948] sm:$0xff]
    %v346 = vld [vmem:[%s0 + $0x950] sm:$0xff]
    %v347 = vld [vmem:[%s0 + $0x958] sm:$0xff]
    %v348 = vld [vmem:[%s0 + $0x960] sm:$0xff]
    %v349 = vld [vmem:[%s0 + $0x968] sm:$0xff]
    %v350 = vld [vmem:[%s0 + $0x970] sm:$0xff]
    %v351 = vld [vmem:[%s0 + $0x978] sm:$0xff]
    %v352 = vld [vmem:[%s0 + $0x980] sm:$0xff]
    %v353 = vld [vmem:[%s0 + $0x988] sm:$0xff]
    %v354 = vld [vmem:[%s0 + $0x990] sm:$0xff]
    %v355 = vld [vmem:[%s0 + $0x998] sm:$0xff]
    %v356 = vld [vmem:[%s0 + $0x9a0] sm:$0xff]
    %v357 = vld [vmem:[%s0 + $0x9a8] sm:$0xff]
    %v358 = vld [vmem:[%s0 + $0x9b0] sm:$0xff]
    %v359 = vld [vmem:[%s0 + $0x9b8] sm:$0xff]
    %v360 = vld [vmem:[%s0 + $0x9c0] sm:$0xff]
    %v361 = vld [vmem:[%s0 + $0x9c8] sm:$0xff]
    %v362 = vld [vmem:[%s0 + $0x9d0] sm:$0xff]
    %v363 = vld [vmem:[%s0 + $0x9d8] sm:$0xff]
    %v364 = vld [vmem:[%s0 + $0x9e0] sm:$0xff]
    %v365 = vld [vmem:[%s0 + $0x9e8] sm:$0xff]
    %v366 = vld [vmem:[%s0 + $0x9f0] sm:$0xff]
    %v367 = vld [vmem:[%s0 + $0x9f8] sm:$0xff]
    %v368 = vld [vmem:[%s0 + $0xa00] sm:$0xff]
    %v369 = vld [vmem:[%s0 + $0xa08] sm:$0xff]
    %v370 = vld [vmem:[%s0 + $0xa10] sm:$0xff]
    %v371 = vld [vmem:[%s0 + $0xa18] sm:$0xff]
    %v372 = vld [vmem:[%s0 + $0xa20] sm:$0xff]
    %v373 = vld [vmem:[%s0 + $0xa28] sm:$0xff]
    %v374 = vld [vmem:[%s0 + $0xa30] sm:$0xff]
    %v375 = vld [vmem:[%s0 + $0xa38] sm:$0xff]
    %v376 = vld [vmem:[%s0 + $0xa40] sm:$0xff]
    %v377 = vld [vmem:[%s0 + $0xa48] sm:$0xff]
    %v378 = vld [vmem:[%s0 + $0xa50] sm:$0xff]
    %v379 = vld [vmem:[%s0 + $0xa58] sm:$0xff]
    %v380 = vld [vmem:[%s0 + $0xa60] sm:$0xff]
    %v381 = vld [vmem:[%s0 + $0xa68] sm:$0xff]
    %v382 = vld [vmem:[%s0 + $0xa70] sm:$0xff]
    %v383 = vld [vmem:[%s0 + $0xa78] sm:$0xff]
    %v384 = vld [vmem:[%s0 + $0xa80] sm:$0xff]
    %v385 = vld [vmem:[%s0 + $0xa88] sm:$0xff]
    %v386 = vld [vmem:[%s0 + $0xa90] sm:$0xff]
    %v387 = vld [vmem:[%s0 + $0xa98] sm:$0xff]
    %v388 = vld [vmem:[%s0 + $0xaa0] sm:$0xff]
    %v389 = vld [vmem:[%s0 + $0xaa8] sm:$0xff]
    %v390 = vld [vmem:[%s0 + $0xab0] sm:$0xff]
    %v391 = vld [vmem:[%s0 + $0xab8] sm:$0xff]
    %v392 = vld [vmem:[%s0 + $0xac0] sm:$0xff]
    %v393 = vld [vmem:[%s0 + $0xac8] sm:$0xff]
    %v394 = vld [vmem:[%s0 + $0xad0] sm:$0xff]
    %v395 = vld [vmem:[%s0 + $0xad8] sm:$0xff]
    %v396 = vld [vmem:[%s0 + $0xae0] sm:$0xff]
    %v397 = vld [vmem:[%s0 + $0xae8] sm:$0xff]
    %v398 = vld [vmem:[%s0 + $0xaf0] sm:$0xff]
    %v399 = vld [vmem:[%s0 + $0xaf8] sm:$0xff]
    %v400 = vld [vmem:[%s0 + $0xb00] sm:$0xff]
    %v401 = vld [vmem:[%s0 + $0xb08] sm:$0xff]
    %v402 = vld [vmem:[%s0 + $0xb10] sm:$0xff]
    %v403 = vld [vmem:[%s0 + $0xb18] sm:$0xff]
    %v404 = vld [vmem:[%s0 + $0xb20] sm:$0xff]
    %v405 = vld [vmem:[%s0 + $0xb28] sm:$0xff]
    %v406 = vld [vmem:[%s0 + $0xb30] sm:$0xff]
    %v407 = vld [vmem:[%s0 + $0xb38] sm:$0xff]
    %v408 = vld [vmem:[%s0 + $0xb40] sm:$0xff]
    %v409 = vld [vmem:[%s0 + $0xb48] sm:$0xff]
    %v410 = vld [vmem:[%s0 + $0xb50] sm:$0xff]
    %v411 = vld [vmem:[%s0 + $0xb58] sm:$0xff]
    %v412 = vld [vmem:[%s0 + $0xb60] sm:$0xff]
    %v413 = vld [vmem:[%s0 + $0xb68] sm:$0xff]
    %v414 = vld [vmem:[%s0 + $0xb70] sm:$0xff]
    %v415 = vld [vmem:[%s0 + $0xb78] sm:$0xff]
    %v416 = vld [vmem:[%s0 + $0xb80] sm:$0xff]
    %v417 = vld [vmem:[%s0 + $0xb88] sm:$0xff]
    %v418 = vld [vmem:[%s0 + $0xb90] sm:$0xff]
    %v419 = vld [vmem:[%s0 + $0xb98] sm:$0xff]
    %v420 = vld [vmem:[%s0 + $0xba0] sm:$0xff]
    %v421 = vld [vmem:[%s0 + $0xba8] sm:$0xff]
    %v422 = vld [vmem:[%s0 + $0xbb0] sm:$0xff]
    %v423 = vld [vmem:[%s0 + $0xbb8] sm:$0xff]
    %v424 = vld [vmem:[%s0 + $0xbc0] sm:$0xff]
    %v425 = vld [vmem:[%s0 + $0xbc8] sm:$0xff]
    %v426 = vld [vmem:[%s0 + $0xbd0] sm:$0xff]
    %v427 = vld [vmem:[%s0 + $0xbd8] sm:$0xff]
    %v428 = vld [vmem:[%s0 + $0xbe0] sm:$0xff]
    %v429 = vld [vmem:[%s0 + $0xbe8] sm:$0xff]
    %v430 = vld [vmem:[%s0 + $0xbf0] sm:$0xff]
    %v431 = vld [vmem:[%s0 + $0xbf8] sm:$0xff]
    %v432 = vld [vmem:[%s1] sm:$0xff]
    %v433 = vld [vmem:[%s1 + $0x8] sm:$0xff]
    %v434 = vld [vmem:[%s1 + $0x10] sm:$0xff]
    %v435 = vld [vmem:[%s1 + $0x18] sm:$0x7]
    %v436 = vld [vmem:[%s2] sm:$0x1]
    %v438 = vperm.slane %v436, 0
    %vm440 = vcmask 220160
    %v442 = vsel %vm440, %v48, 0
    %v445 = vsel %vm440, %v49, 0
    %v448 = vsel %vm440, %v50, 0
    %v451 = vsel %vm440, %v51, 0
    %v454 = vsel %vm440, %v52, 0
    %v457 = vsel %vm440, %v53, 0
    %v460 = vsel %vm440, %v54, 0
    %v463 = vsel %vm440, %v55, 0
    %v466 = vsel %vm440, %v56, 0
    %v469 = vsel %vm440, %v57, 0
    %v472 = vsel %vm440, %v58, 0
    %v475 = vsel %vm440, %v59, 0
    %v478 = vsel %vm440, %v60, 0
    %v481 = vsel %vm440, %v61, 0
    %v484 = vsel %vm440, %v62, 0
    %v487 = vsel %vm440, %v63, 0
    %v490 = vsel %vm440, %v64, 0
    %v493 = vsel %vm440, %v65, 0
    %v496 = vsel %vm440, %v66, 0
    %v499 = vsel %vm440, %v67, 0
    %v502 = vsel %vm440, %v68, 0
    %v505 = vsel %vm440, %v69, 0
    %v508 = vsel %vm440, %v70, 0
    %v511 = vsel %vm440, %v71, 0
    %v514 = vsel %vm440, %v72, 0
    %v517 = vsel %vm440, %v73, 0
    %v520 = vsel %vm440, %v74, 0
    %v523 = vsel %vm440, %v75, 0
    %v526 = vsel %vm440, %v76, 0
    %v529 = vsel %vm440, %v77, 0
    %v532 = vsel %vm440, %v78, 0
    %v535 = vsel %vm440, %v79, 0
    %v538 = vsel %vm440, %v80, 0
    %v541 = vsel %vm440, %v81, 0
    %v544 = vsel %vm440, %v82, 0
    %v547 = vsel %vm440, %v83, 0
    %v550 = vsel %vm440, %v84, 0
    %v553 = vsel %vm440, %v85, 0
    %v556 = vsel %vm440, %v86, 0
    %v559 = vsel %vm440, %v87, 0
    %v562 = vsel %vm440, %v88, 0
    %v565 = vsel %vm440, %v89, 0
    %v568 = vsel %vm440, %v90, 0
    %v571 = vsel %vm440, %v91, 0
    %v574 = vsel %vm440, %v92, 0
    %v577 = vsel %vm440, %v93, 0
    %v580 = vsel %vm440, %v94, 0
    %v583 = vsel %vm440, %v95, 0
    %v586 = vsel %vm440, %v96, 0
    %v589 = vsel %vm440, %v97, 0
    %v592 = vsel %vm440, %v98, 0
    %v595 = vsel %vm440, %v99, 0
    %v598 = vsel %vm440, %v100, 0
    %v601 = vsel %vm440, %v101, 0
    %v604 = vsel %vm440, %v102, 0
    %v607 = vsel %vm440, %v103, 0
    %v610 = vsel %vm440, %v104, 0
    %v613 = vsel %vm440, %v105, 0
    %v616 = vsel %vm440, %v106, 0
    %v619 = vsel %vm440, %v107, 0
    %v622 = vsel %vm440, %v108, 0
    %v625 = vsel %vm440, %v109, 0
    %v628 = vsel %vm440, %v110, 0
    %v631 = vsel %vm440, %v111, 0
    %v634 = vsel %vm440, %v112, 0
    %v637 = vsel %vm440, %v113, 0
    %v640 = vsel %vm440, %v114, 0
    %v643 = vsel %vm440, %v115, 0
    %v646 = vsel %vm440, %v116, 0
    %v649 = vsel %vm440, %v117, 0
    %v652 = vsel %vm440, %v118, 0
    %v655 = vsel %vm440, %v119, 0
    %v658 = vsel %vm440, %v120, 0
    %v661 = vsel %vm440, %v121, 0
    %v664 = vsel %vm440, %v122, 0
    %v667 = vsel %vm440, %v123, 0
    %v670 = vsel %vm440, %v124, 0
    %v673 = vsel %vm440, %v125, 0
    %v676 = vsel %vm440, %v126, 0
    %v679 = vsel %vm440, %v127, 0
    %v682 = vsel %vm440, %v128, 0
    %v685 = vsel %vm440, %v129, 0
    %v688 = vsel %vm440, %v130, 0
    %v691 = vsel %vm440, %v131, 0
    %v694 = vsel %vm440, %v132, 0
    %v697 = vsel %vm440, %v133, 0
    %v700 = vsel %vm440, %v134, 0
    %v703 = vsel %vm440, %v135, 0
    %v706 = vsel %vm440, %v136, 0
    %v709 = vsel %vm440, %v137, 0
    %v712 = vsel %vm440, %v138, 0
    %v715 = vsel %vm440, %v139, 0
    %v718 = vsel %vm440, %v140, 0
    %v721 = vsel %vm440, %v141, 0
    %v724 = vsel %vm440, %v142, 0
    %v727 = vsel %vm440, %v143, 0
    %v730 = vsel %vm440, %v144, 0
    %v733 = vsel %vm440, %v145, 0
    %v736 = vsel %vm440, %v146, 0
    %v739 = vsel %vm440, %v147, 0
    %v742 = vsel %vm440, %v148, 0
    %v745 = vsel %vm440, %v149, 0
    %v748 = vsel %vm440, %v150, 0
    %v751 = vsel %vm440, %v151, 0
    %v754 = vsel %vm440, %v152, 0
    %v757 = vsel %vm440, %v153, 0
    %v760 = vsel %vm440, %v154, 0
    %v763 = vsel %vm440, %v155, 0
    %v766 = vsel %vm440, %v156, 0
    %v769 = vsel %vm440, %v157, 0
    %v772 = vsel %vm440, %v158, 0
    %v775 = vsel %vm440, %v159, 0
    %v778 = vsel %vm440, %v160, 0
    %v781 = vsel %vm440, %v161, 0
    %v784 = vsel %vm440, %v162, 0
    %v787 = vsel %vm440, %v163, 0
    %v790 = vsel %vm440, %v164, 0
    %v793 = vsel %vm440, %v165, 0
    %v796 = vsel %vm440, %v166, 0
    %v799 = vsel %vm440, %v167, 0
    %v802 = vsel %vm440, %v168, 0
    %v805 = vsel %vm440, %v169, 0
    %v808 = vsel %vm440, %v170, 0
    %v811 = vsel %vm440, %v171, 0
    %v814 = vsel %vm440, %v172, 0
    %v817 = vsel %vm440, %v173, 0
    %v820 = vsel %vm440, %v174, 0
    %v823 = vsel %vm440, %v175, 0
    %v826 = vsel %vm440, %v176, 0
    %v829 = vsel %vm440, %v177, 0
    %v832 = vsel %vm440, %v178, 0
    %v835 = vsel %vm440, %v179, 0
    %v838 = vsel %vm440, %v180, 0
    %v841 = vsel %vm440, %v181, 0
    %v844 = vsel %vm440, %v182, 0
    %v847 = vsel %vm440, %v183, 0
    %v850 = vsel %vm440, %v184, 0
    %v853 = vsel %vm440, %v185, 0
    %v856 = vsel %vm440, %v186, 0
    %v859 = vsel %vm440, %v187, 0
    %v862 = vsel %vm440, %v188, 0
    %v865 = vsel %vm440, %v189, 0
    %v868 = vsel %vm440, %v190, 0
    %v871 = vsel %vm440, %v191, 0
    %v874 = vsel %vm440, %v192, 0
    %v877 = vsel %vm440, %v193, 0
    %v880 = vsel %vm440, %v194, 0
    %v883 = vsel %vm440, %v195, 0
    %v886 = vsel %vm440, %v196, 0
    %v889 = vsel %vm440, %v197, 0
    %v892 = vsel %vm440, %v198, 0
    %v895 = vsel %vm440, %v199, 0
    %v898 = vsel %vm440, %v200, 0
    %v901 = vsel %vm440, %v201, 0
    %v904 = vsel %vm440, %v202, 0
    %v907 = vsel %vm440, %v203, 0
    %v910 = vsel %vm440, %v204, 0
    %v913 = vsel %vm440, %v205, 0
    %v916 = vsel %vm440, %v206, 0
    %v919 = vsel %vm440, %v207, 0
    %v922 = vsel %vm440, %v208, 0
    %v925 = vsel %vm440, %v209, 0
    %v928 = vsel %vm440, %v210, 0
    %v931 = vsel %vm440, %v211, 0
    %v934 = vsel %vm440, %v212, 0
    %v937 = vsel %vm440, %v213, 0
    %v940 = vsel %vm440, %v214, 0
    %v943 = vsel %vm440, %v215, 0
    %v946 = vsel %vm440, %v216, 0
    %v949 = vsel %vm440, %v217, 0
    %v952 = vsel %vm440, %v218, 0
    %v955 = vsel %vm440, %v219, 0
    %v958 = vsel %vm440, %v220, 0
    %v961 = vsel %vm440, %v221, 0
    %v964 = vsel %vm440, %v222, 0
    %v967 = vsel %vm440, %v223, 0
    %v970 = vsel %vm440, %v224, 0
    %v973 = vsel %vm440, %v225, 0
    %v976 = vsel %vm440, %v226, 0
    %v979 = vsel %vm440, %v227, 0
    %v982 = vsel %vm440, %v228, 0
    %v985 = vsel %vm440, %v229, 0
    %v988 = vsel %vm440, %v230, 0
    %v991 = vsel %vm440, %v231, 0
    %v994 = vsel %vm440, %v232, 0
    %v997 = vsel %vm440, %v233, 0
    %v1000 = vsel %vm440, %v234, 0
    %v1003 = vsel %vm440, %v235, 0
    %v1006 = vsel %vm440, %v236, 0
    %v1009 = vsel %vm440, %v237, 0
    %v1012 = vsel %vm440, %v238, 0
    %v1015 = vsel %vm440, %v239, 0
    %v1018 = vsel %vm440, %v240, 0
    %v1021 = vsel %vm440, %v241, 0
    %v1024 = vsel %vm440, %v242, 0
    %v1027 = vsel %vm440, %v243, 0
    %v1030 = vsel %vm440, %v244, 0
    %v1033 = vsel %vm440, %v245, 0
    %v1036 = vsel %vm440, %v246, 0
    %v1039 = vsel %vm440, %v247, 0
    %v1042 = vsel %vm440, %v248, 0
    %v1045 = vsel %vm440, %v249, 0
    %v1048 = vsel %vm440, %v250, 0
    %v1051 = vsel %vm440, %v251, 0
    %v1054 = vsel %vm440, %v252, 0
    %v1057 = vsel %vm440, %v253, 0
    %v1060 = vsel %vm440, %v254, 0
    %v1063 = vsel %vm440, %v255, 0
    %v1066 = vsel %vm440, %v256, 0
    %v1069 = vsel %vm440, %v257, 0
    %v1072 = vsel %vm440, %v258, 0
    %v1075 = vsel %vm440, %v259, 0
    %v1078 = vsel %vm440, %v260, 0
    %v1081 = vsel %vm440, %v261, 0
    %v1084 = vsel %vm440, %v262, 0
    %v1087 = vsel %vm440, %v263, 0
    %v1090 = vsel %vm440, %v264, 0
    %v1093 = vsel %vm440, %v265, 0
    %v1096 = vsel %vm440, %v266, 0
    %v1099 = vsel %vm440, %v267, 0
    %v1102 = vsel %vm440, %v268, 0
    %v1105 = vsel %vm440, %v269, 0
    %v1108 = vsel %vm440, %v270, 0
    %v1111 = vsel %vm440, %v271, 0
    %v1114 = vsel %vm440, %v272, 0
    %v1117 = vsel %vm440, %v273, 0
    %v1120 = vsel %vm440, %v274, 0
    %v1123 = vsel %vm440, %v275, 0
    %v1126 = vsel %vm440, %v276, 0
    %v1129 = vsel %vm440, %v277, 0
    %v1132 = vsel %vm440, %v278, 0
    %v1135 = vsel %vm440, %v279, 0
    %v1138 = vsel %vm440, %v280, 0
    %v1141 = vsel %vm440, %v281, 0
    %v1144 = vsel %vm440, %v282, 0
    %v1147 = vsel %vm440, %v283, 0
    %v1150 = vsel %vm440, %v284, 0
    %v1153 = vsel %vm440, %v285, 0
    %v1156 = vsel %vm440, %v286, 0
    %v1159 = vsel %vm440, %v287, 0
    %v1162 = vsel %vm440, %v288, 0
    %v1165 = vsel %vm440, %v289, 0
    %v1168 = vsel %vm440, %v290, 0
    %v1171 = vsel %vm440, %v291, 0
    %v1174 = vsel %vm440, %v292, 0
    %v1177 = vsel %vm440, %v293, 0
    %v1180 = vsel %vm440, %v294, 0
    %v1183 = vsel %vm440, %v295, 0
    %v1186 = vsel %vm440, %v296, 0
    %v1189 = vsel %vm440, %v297, 0
    %v1192 = vsel %vm440, %v298, 0
    %v1195 = vsel %vm440, %v299, 0
    %v1198 = vsel %vm440, %v300, 0
    %v1201 = vsel %vm440, %v301, 0
    %v1204 = vsel %vm440, %v302, 0
    %v1207 = vsel %vm440, %v303, 0
    %v1210 = vsel %vm440, %v304, 0
    %v1213 = vsel %vm440, %v305, 0
    %v1216 = vsel %vm440, %v306, 0
    %v1219 = vsel %vm440, %v307, 0
    %v1222 = vsel %vm440, %v308, 0
    %v1225 = vsel %vm440, %v309, 0
    %v1228 = vsel %vm440, %v310, 0
    %v1231 = vsel %vm440, %v311, 0
    %v1234 = vsel %vm440, %v312, 0
    %v1237 = vsel %vm440, %v313, 0
    %v1240 = vsel %vm440, %v314, 0
    %v1243 = vsel %vm440, %v315, 0
    %v1246 = vsel %vm440, %v316, 0
    %v1249 = vsel %vm440, %v317, 0
    %v1252 = vsel %vm440, %v318, 0
    %v1255 = vsel %vm440, %v319, 0
    %v1258 = vsel %vm440, %v320, 0
    %v1261 = vsel %vm440, %v321, 0
    %v1264 = vsel %vm440, %v322, 0
    %v1267 = vsel %vm440, %v323, 0
    %v1270 = vsel %vm440, %v324, 0
    %v1273 = vsel %vm440, %v325, 0
    %v1276 = vsel %vm440, %v326, 0
    %v1279 = vsel %vm440, %v327, 0
    %v1282 = vsel %vm440, %v328, 0
    %v1285 = vsel %vm440, %v329, 0
    %v1288 = vsel %vm440, %v330, 0
    %v1291 = vsel %vm440, %v331, 0
    %v1294 = vsel %vm440, %v332, 0
    %v1297 = vsel %vm440, %v333, 0
    %v1300 = vsel %vm440, %v334, 0
    %v1303 = vsel %vm440, %v335, 0
    %v1306 = vsel %vm440, %v336, 0
    %v1309 = vsel %vm440, %v337, 0
    %v1312 = vsel %vm440, %v338, 0
    %v1315 = vsel %vm440, %v339, 0
    %v1318 = vsel %vm440, %v340, 0
    %v1321 = vsel %vm440, %v341, 0
    %v1324 = vsel %vm440, %v342, 0
    %v1327 = vsel %vm440, %v343, 0
    %v1330 = vsel %vm440, %v344, 0
    %v1333 = vsel %vm440, %v345, 0
    %v1336 = vsel %vm440, %v346, 0
    %v1339 = vsel %vm440, %v347, 0
    %v1342 = vsel %vm440, %v348, 0
    %v1345 = vsel %vm440, %v349, 0
    %v1348 = vsel %vm440, %v350, 0
    %v1351 = vsel %vm440, %v351, 0
    %v1354 = vsel %vm440, %v352, 0
    %v1357 = vsel %vm440, %v353, 0
    %v1360 = vsel %vm440, %v354, 0
    %v1363 = vsel %vm440, %v355, 0
    %v1366 = vsel %vm440, %v356, 0
    %v1369 = vsel %vm440, %v357, 0
    %v1372 = vsel %vm440, %v358, 0
    %v1375 = vsel %vm440, %v359, 0
    %v1378 = vsel %vm440, %v360, 0
    %v1381 = vsel %vm440, %v361, 0
    %v1384 = vsel %vm440, %v362, 0
    %v1387 = vsel %vm440, %v363, 0
    %v1390 = vsel %vm440, %v364, 0
    %v1393 = vsel %vm440, %v365, 0
    %v1396 = vsel %vm440, %v366, 0
    %v1399 = vsel %vm440, %v367, 0
    %v1402 = vsel %vm440, %v368, 0
    %v1405 = vsel %vm440, %v369, 0
    %v1408 = vsel %vm440, %v370, 0
    %v1411 = vsel %vm440, %v371, 0
    %v1414 = vsel %vm440, %v372, 0
    %v1417 = vsel %vm440, %v373, 0
    %v1420 = vsel %vm440, %v374, 0
    %v1423 = vsel %vm440, %v375, 0
    %v1426 = vsel %vm440, %v376, 0
    %v1429 = vsel %vm440, %v377, 0
    %v1432 = vsel %vm440, %v378, 0
    %v1435 = vsel %vm440, %v379, 0
    %v1438 = vsel %vm440, %v380, 0
    %v1441 = vsel %vm440, %v381, 0
    %v1444 = vsel %vm440, %v382, 0
    %v1447 = vsel %vm440, %v383, 0
    %v1450 = vsel %vm440, %v384, 0
    %v1453 = vsel %vm440, %v385, 0
    %v1456 = vsel %vm440, %v386, 0
    %v1459 = vsel %vm440, %v387, 0
    %v1462 = vsel %vm440, %v388, 0
    %v1465 = vsel %vm440, %v389, 0
    %v1468 = vsel %vm440, %v390, 0
    %v1471 = vsel %vm440, %v391, 0
    %v1474 = vsel %vm440, %v392, 0
    %v1477 = vsel %vm440, %v393, 0
    %v1480 = vsel %vm440, %v394, 0
    %v1483 = vsel %vm440, %v395, 0
    %v1486 = vsel %vm440, %v396, 0
    %v1489 = vsel %vm440, %v397, 0
    %v1492 = vsel %vm440, %v398, 0
    %v1495 = vsel %vm440, %v399, 0
    %v1498 = vsel %vm440, %v400, 0
    %v1501 = vsel %vm440, %v401, 0
    %v1504 = vsel %vm440, %v402, 0
    %v1507 = vsel %vm440, %v403, 0
    %v1510 = vsel %vm440, %v404, 0
    %v1513 = vsel %vm440, %v405, 0
    %v1516 = vsel %vm440, %v406, 0
    %v1519 = vsel %vm440, %v407, 0
    %v1522 = vsel %vm440, %v408, 0
    %v1525 = vsel %vm440, %v409, 0
    %v1528 = vsel %vm440, %v410, 0
    %v1531 = vsel %vm440, %v411, 0
    %v1534 = vsel %vm440, %v412, 0
    %v1537 = vsel %vm440, %v413, 0
    %v1540 = vsel %vm440, %v414, 0
    %v1543 = vsel %vm440, %v415, 0
    %v1546 = vsel %vm440, %v416, 0
    %v1549 = vsel %vm440, %v417, 0
    %v1552 = vsel %vm440, %v418, 0
    %v1555 = vsel %vm440, %v419, 0
    %v1558 = vsel %vm440, %v420, 0
    %v1561 = vsel %vm440, %v421, 0
    %v1564 = vsel %vm440, %v422, 0
    %v1567 = vsel %vm440, %v423, 0
    %v1570 = vsel %vm440, %v424, 0
    %v1573 = vsel %vm440, %v425, 0
    %v1576 = vsel %vm440, %v426, 0
    %v1579 = vsel %vm440, %v427, 0
    %v1582 = vsel %vm440, %v428, 0
    %v1585 = vsel %vm440, %v429, 0
    %v1588 = vsel %vm440, %v430, 0
    %v1591 = vsel %vm440, %v431, 0
    %vm1593 = vcmask 1042432
    %v1595 = vsel %vm1593, %v435, 0
    %1597 = vmatpush.msra.mxu0 0.0
    %1598 = vmatpush.msra.mxu0 0.0
    %1599 = vmatpush.msra.mxu0 0.0
    %1600 = vmatpush.msra.mxu0 0.0
    %1601 = vmatpush.msra.mxu0 0.0
    %1602 = vmatpush.msra.mxu0 0.0
    %1603 = vmatpush.msra.mxu0 0.0
    %1604 = vmatpush.msra.mxu0 0.0
    %1605 = vmatpush.msra.mxu0 0.0
    %1606 = vmatpush.msra.mxu0 0.0
    %1607 = vmatpush.msra.mxu0 0.0
    %1608 = vmatpush.msra.mxu0 0.0
    %1609 = vmatpush.msra.mxu0 %v1595
    %1610 = vmatpush.msra.mxu0 %v434
    %1611 = vmatpush.msra.mxu0 %v433
    %1612 = vmatpush.msra.mxu0 %v432
    %1613 = vmatmul.f32.gmra.mxu0 %v442
    %v1614 = vpop.f32.mrf.mxu0
    %v1615 = vadd.f32 %v438, %v1614
    %1616 = vmatmul.f32.gmra.mxu0 %v445
    %v1617 = vpop.f32.mrf.mxu0
    %v1618 = vadd.f32 %v438, %v1617
    %1619 = vmatmul.f32.gmra.mxu0 %v448
    %v1620 = vpop.f32.mrf.mxu0
    %v1621 = vadd.f32 %v438, %v1620
    %1622 = vmatmul.f32.gmra.mxu0 %v451
    %v1623 = vpop.f32.mrf.mxu0
    %v1624 = vadd.f32 %v438, %v1623
    %1625 = vmatmul.f32.gmra.mxu0 %v454
    %v1626 = vpop.f32.mrf.mxu0
    %v1627 = vadd.f32 %v438, %v1626
    %1628 = vmatmul.f32.gmra.mxu0 %v457
    %v1629 = vpop.f32.mrf.mxu0
    %v1630 = vadd.f32 %v438, %v1629
    %1631 = vmatmul.f32.gmra.mxu0 %v460
    %v1632 = vpop.f32.mrf.mxu0
    %v1633 = vadd.f32 %v438, %v1632
    %1634 = vmatmul.f32.gmra.mxu0 %v463
    %v1635 = vpop.f32.mrf.mxu0
    %v1636 = vadd.f32 %v438, %v1635
    %1637 = vmatmul.f32.gmra.mxu0 %v466
    %v1638 = vpop.f32.mrf.mxu0
    %v1639 = vadd.f32 %v438, %v1638
    %1640 = vmatmul.f32.gmra.mxu0 %v469
    %v1641 = vpop.f32.mrf.mxu0
    %v1642 = vadd.f32 %v438, %v1641
    %1643 = vmatmul.f32.gmra.mxu0 %v472
    %v1644 = vpop.f32.mrf.mxu0
    %v1645 = vadd.f32 %v438, %v1644
    %1646 = vmatmul.f32.gmra.mxu0 %v475
    %v1647 = vpop.f32.mrf.mxu0
    %v1648 = vadd.f32 %v438, %v1647
    %1649 = vmatmul.f32.gmra.mxu0 %v478
    %v1650 = vpop.f32.mrf.mxu0
    %v1651 = vadd.f32 %v438, %v1650
    %1652 = vmatmul.f32.gmra.mxu0 %v481
    %v1653 = vpop.f32.mrf.mxu0
    %v1654 = vadd.f32 %v438, %v1653
    %1655 = vmatmul.f32.gmra.mxu0 %v484
    %v1656 = vpop.f32.mrf.mxu0
    %v1657 = vadd.f32 %v438, %v1656
    %1658 = vmatmul.f32.gmra.mxu0 %v487
    %v1659 = vpop.f32.mrf.mxu0
    %v1660 = vadd.f32 %v438, %v1659
    %1661 = vmatmul.f32.gmra.mxu0 %v490
    %v1662 = vpop.f32.mrf.mxu0
    %v1663 = vadd.f32 %v438, %v1662
    %1664 = vmatmul.f32.gmra.mxu0 %v493
    %v1665 = vpop.f32.mrf.mxu0
    %v1666 = vadd.f32 %v438, %v1665
    %1667 = vmatmul.f32.gmra.mxu0 %v496
    %v1668 = vpop.f32.mrf.mxu0
    %v1669 = vadd.f32 %v438, %v1668
    %1670 = vmatmul.f32.gmra.mxu0 %v499
    %v1671 = vpop.f32.mrf.mxu0
    %v1672 = vadd.f32 %v438, %v1671
    %1673 = vmatmul.f32.gmra.mxu0 %v502
    %v1674 = vpop.f32.mrf.mxu0
    %v1675 = vadd.f32 %v438, %v1674
    %1676 = vmatmul.f32.gmra.mxu0 %v505
    %v1677 = vpop.f32.mrf.mxu0
    %v1678 = vadd.f32 %v438, %v1677
    %1679 = vmatmul.f32.gmra.mxu0 %v508
    %v1680 = vpop.f32.mrf.mxu0
    %v1681 = vadd.f32 %v438, %v1680
    %1682 = vmatmul.f32.gmra.mxu0 %v511
    %v1683 = vpop.f32.mrf.mxu0
    %v1684 = vadd.f32 %v438, %v1683
    %1685 = vmatmul.f32.gmra.mxu0 %v514
    %v1686 = vpop.f32.mrf.mxu0
    %v1687 = vadd.f32 %v438, %v1686
    %1688 = vmatmul.f32.gmra.mxu0 %v517
    %v1689 = vpop.f32.mrf.mxu0
    %v1690 = vadd.f32 %v438, %v1689
    %1691 = vmatmul.f32.gmra.mxu0 %v520
    %v1692 = vpop.f32.mrf.mxu0
    %v1693 = vadd.f32 %v438, %v1692
    %1694 = vmatmul.f32.gmra.mxu0 %v523
    %v1695 = vpop.f32.mrf.mxu0
    %v1696 = vadd.f32 %v438, %v1695
    %1697 = vmatmul.f32.gmra.mxu0 %v526
    %v1698 = vpop.f32.mrf.mxu0
    %v1699 = vadd.f32 %v438, %v1698
    %1700 = vmatmul.f32.gmra.mxu0 %v529
    %v1701 = vpop.f32.mrf.mxu0
    %v1702 = vadd.f32 %v438, %v1701
    %1703 = vmatmul.f32.gmra.mxu0 %v532
    %v1704 = vpop.f32.mrf.mxu0
    %v1705 = vadd.f32 %v438, %v1704
    %1706 = vmatmul.f32.gmra.mxu0 %v535
    %v1707 = vpop.f32.mrf.mxu0
    %v1708 = vadd.f32 %v438, %v1707
    %1709 = vmatmul.f32.gmra.mxu0 %v538
    %v1710 = vpop.f32.mrf.mxu0
    %v1711 = vadd.f32 %v438, %v1710
    %1712 = vmatmul.f32.gmra.mxu0 %v541
    %v1713 = vpop.f32.mrf.mxu0
    %v1714 = vadd.f32 %v438, %v1713
    %1715 = vmatmul.f32.gmra.mxu0 %v544
    %v1716 = vpop.f32.mrf.mxu0
    %v1717 = vadd.f32 %v438, %v1716
    %1718 = vmatmul.f32.gmra.mxu0 %v547
    %v1719 = vpop.f32.mrf.mxu0
    %v1720 = vadd.f32 %v438, %v1719
    %1721 = vmatmul.f32.gmra.mxu0 %v550
    %v1722 = vpop.f32.mrf.mxu0
    %v1723 = vadd.f32 %v438, %v1722
    %1724 = vmatmul.f32.gmra.mxu0 %v553
    %v1725 = vpop.f32.mrf.mxu0
    %v1726 = vadd.f32 %v438, %v1725
    %1727 = vmatmul.f32.gmra.mxu0 %v556
    %v1728 = vpop.f32.mrf.mxu0
    %v1729 = vadd.f32 %v438, %v1728
    %1730 = vmatmul.f32.gmra.mxu0 %v559
    %v1731 = vpop.f32.mrf.mxu0
    %v1732 = vadd.f32 %v438, %v1731
    %1733 = vmatmul.f32.gmra.mxu0 %v562
    %v1734 = vpop.f32.mrf.mxu0
    %v1735 = vadd.f32 %v438, %v1734
    %1736 = vmatmul.f32.gmra.mxu0 %v565
    %v1737 = vpop.f32.mrf.mxu0
    %v1738 = vadd.f32 %v438, %v1737
    %1739 = vmatmul.f32.gmra.mxu0 %v568
    %v1740 = vpop.f32.mrf.mxu0
    %v1741 = vadd.f32 %v438, %v1740
    %1742 = vmatmul.f32.gmra.mxu0 %v571
    %v1743 = vpop.f32.mrf.mxu0
    %v1744 = vadd.f32 %v438, %v1743
    %1745 = vmatmul.f32.gmra.mxu0 %v574
    %v1746 = vpop.f32.mrf.mxu0
    %v1747 = vadd.f32 %v438, %v1746
    %1748 = vmatmul.f32.gmra.mxu0 %v577
    %v1749 = vpop.f32.mrf.mxu0
    %v1750 = vadd.f32 %v438, %v1749
    %1751 = vmatmul.f32.gmra.mxu0 %v580
    %v1752 = vpop.f32.mrf.mxu0
    %v1753 = vadd.f32 %v438, %v1752
    %1754 = vmatmul.f32.gmra.mxu0 %v583
    %v1755 = vpop.f32.mrf.mxu0
    %v1756 = vadd.f32 %v438, %v1755
    %1757 = vmatmul.f32.gmra.mxu0 %v586
    %v1758 = vpop.f32.mrf.mxu0
    %v1759 = vadd.f32 %v438, %v1758
    %1760 = vmatmul.f32.gmra.mxu0 %v589
    %v1761 = vpop.f32.mrf.mxu0
    %v1762 = vadd.f32 %v438, %v1761
    %1763 = vmatmul.f32.gmra.mxu0 %v592
    %v1764 = vpop.f32.mrf.mxu0
    %v1765 = vadd.f32 %v438, %v1764
    %1766 = vmatmul.f32.gmra.mxu0 %v595
    %v1767 = vpop.f32.mrf.mxu0
    %v1768 = vadd.f32 %v438, %v1767
    %1769 = vmatmul.f32.gmra.mxu0 %v598
    %v1770 = vpop.f32.mrf.mxu0
    %v1771 = vadd.f32 %v438, %v1770
    %1772 = vmatmul.f32.gmra.mxu0 %v601
    %v1773 = vpop.f32.mrf.mxu0
    %v1774 = vadd.f32 %v438, %v1773
    %1775 = vmatmul.f32.gmra.mxu0 %v604
    %v1776 = vpop.f32.mrf.mxu0
    %v1777 = vadd.f32 %v438, %v1776
    %1778 = vmatmul.f32.gmra.mxu0 %v607
    %v1779 = vpop.f32.mrf.mxu0
    %v1780 = vadd.f32 %v438, %v1779
    %1781 = vmatmul.f32.gmra.mxu0 %v610
    %v1782 = vpop.f32.mrf.mxu0
    %v1783 = vadd.f32 %v438, %v1782
    %1784 = vmatmul.f32.gmra.mxu0 %v613
    %v1785 = vpop.f32.mrf.mxu0
    %v1786 = vadd.f32 %v438, %v1785
    %1787 = vmatmul.f32.gmra.mxu0 %v616
    %v1788 = vpop.f32.mrf.mxu0
    %v1789 = vadd.f32 %v438, %v1788
    %1790 = vmatmul.f32.gmra.mxu0 %v619
    %v1791 = vpop.f32.mrf.mxu0
    %v1792 = vadd.f32 %v438, %v1791
    %1793 = vmatmul.f32.gmra.mxu0 %v622
    %v1794 = vpop.f32.mrf.mxu0
    %v1795 = vadd.f32 %v438, %v1794
    %1796 = vmatmul.f32.gmra.mxu0 %v625
    %v1797 = vpop.f32.mrf.mxu0
    %v1798 = vadd.f32 %v438, %v1797
    %1799 = vmatmul.f32.gmra.mxu0 %v628
    %v1800 = vpop.f32.mrf.mxu0
    %v1801 = vadd.f32 %v438, %v1800
    %1802 = vmatmul.f32.gmra.mxu0 %v631
    %v1803 = vpop.f32.mrf.mxu0
    %v1804 = vadd.f32 %v438, %v1803
    %1805 = vmatmul.f32.gmra.mxu0 %v634
    %v1806 = vpop.f32.mrf.mxu0
    %v1807 = vadd.f32 %v438, %v1806
    %1808 = vmatmul.f32.gmra.mxu0 %v637
    %v1809 = vpop.f32.mrf.mxu0
    %v1810 = vadd.f32 %v438, %v1809
    %1811 = vmatmul.f32.gmra.mxu0 %v640
    %v1812 = vpop.f32.mrf.mxu0
    %v1813 = vadd.f32 %v438, %v1812
    %1814 = vmatmul.f32.gmra.mxu0 %v643
    %v1815 = vpop.f32.mrf.mxu0
    %v1816 = vadd.f32 %v438, %v1815
    %1817 = vmatmul.f32.gmra.mxu0 %v646
    %v1818 = vpop.f32.mrf.mxu0
    %v1819 = vadd.f32 %v438, %v1818
    %1820 = vmatmul.f32.gmra.mxu0 %v649
    %v1821 = vpop.f32.mrf.mxu0
    %v1822 = vadd.f32 %v438, %v1821
    %1823 = vmatmul.f32.gmra.mxu0 %v652
    %v1824 = vpop.f32.mrf.mxu0
    %v1825 = vadd.f32 %v438, %v1824
    %1826 = vmatmul.f32.gmra.mxu0 %v655
    %v1827 = vpop.f32.mrf.mxu0
    %v1828 = vadd.f32 %v438, %v1827
    %1829 = vmatmul.f32.gmra.mxu0 %v658
    %v1830 = vpop.f32.mrf.mxu0
    %v1831 = vadd.f32 %v438, %v1830
    %1832 = vmatmul.f32.gmra.mxu0 %v661
    %v1833 = vpop.f32.mrf.mxu0
    %v1834 = vadd.f32 %v438, %v1833
    %1835 = vmatmul.f32.gmra.mxu0 %v664
    %v1836 = vpop.f32.mrf.mxu0
    %v1837 = vadd.f32 %v438, %v1836
    %1838 = vmatmul.f32.gmra.mxu0 %v667
    %v1839 = vpop.f32.mrf.mxu0
    %v1840 = vadd.f32 %v438, %v1839
    %1841 = vmatmul.f32.gmra.mxu0 %v670
    %v1842 = vpop.f32.mrf.mxu0
    %v1843 = vadd.f32 %v438, %v1842
    %1844 = vmatmul.f32.gmra.mxu0 %v673
    %v1845 = vpop.f32.mrf.mxu0
    %v1846 = vadd.f32 %v438, %v1845
    %1847 = vmatmul.f32.gmra.mxu0 %v676
    %v1848 = vpop.f32.mrf.mxu0
    %v1849 = vadd.f32 %v438, %v1848
    %1850 = vmatmul.f32.gmra.mxu0 %v679
    %v1851 = vpop.f32.mrf.mxu0
    %v1852 = vadd.f32 %v438, %v1851
    %1853 = vmatmul.f32.gmra.mxu0 %v682
    %v1854 = vpop.f32.mrf.mxu0
    %v1855 = vadd.f32 %v438, %v1854
    %1856 = vmatmul.f32.gmra.mxu0 %v685
    %v1857 = vpop.f32.mrf.mxu0
    %v1858 = vadd.f32 %v438, %v1857
    %1859 = vmatmul.f32.gmra.mxu0 %v688
    %v1860 = vpop.f32.mrf.mxu0
    %v1861 = vadd.f32 %v438, %v1860
    %1862 = vmatmul.f32.gmra.mxu0 %v691
    %v1863 = vpop.f32.mrf.mxu0
    %v1864 = vadd.f32 %v438, %v1863
    %1865 = vmatmul.f32.gmra.mxu0 %v694
    %v1866 = vpop.f32.mrf.mxu0
    %v1867 = vadd.f32 %v438, %v1866
    %1868 = vmatmul.f32.gmra.mxu0 %v697
    %v1869 = vpop.f32.mrf.mxu0
    %v1870 = vadd.f32 %v438, %v1869
    %1871 = vmatmul.f32.gmra.mxu0 %v700
    %v1872 = vpop.f32.mrf.mxu0
    %v1873 = vadd.f32 %v438, %v1872
    %1874 = vmatmul.f32.gmra.mxu0 %v703
    %v1875 = vpop.f32.mrf.mxu0
    %v1876 = vadd.f32 %v438, %v1875
    %1877 = vmatmul.f32.gmra.mxu0 %v706
    %v1878 = vpop.f32.mrf.mxu0
    %v1879 = vadd.f32 %v438, %v1878
    %1880 = vmatmul.f32.gmra.mxu0 %v709
    %v1881 = vpop.f32.mrf.mxu0
    %v1882 = vadd.f32 %v438, %v1881
    %1883 = vmatmul.f32.gmra.mxu0 %v712
    %v1884 = vpop.f32.mrf.mxu0
    %v1885 = vadd.f32 %v438, %v1884
    %1886 = vmatmul.f32.gmra.mxu0 %v715
    %v1887 = vpop.f32.mrf.mxu0
    %v1888 = vadd.f32 %v438, %v1887
    %1889 = vmatmul.f32.gmra.mxu0 %v718
    %v1890 = vpop.f32.mrf.mxu0
    %v1891 = vadd.f32 %v438, %v1890
    %1892 = vmatmul.f32.gmra.mxu0 %v721
    %v1893 = vpop.f32.mrf.mxu0
    %v1894 = vadd.f32 %v438, %v1893
    %1895 = vmatmul.f32.gmra.mxu0 %v724
    %v1896 = vpop.f32.mrf.mxu0
    %v1897 = vadd.f32 %v438, %v1896
    %1898 = vmatmul.f32.gmra.mxu0 %v727
    %v1899 = vpop.f32.mrf.mxu0
    %v1900 = vadd.f32 %v438, %v1899
    %1901 = vmatmul.f32.gmra.mxu0 %v730
    %v1902 = vpop.f32.mrf.mxu0
    %v1903 = vadd.f32 %v438, %v1902
    %1904 = vmatmul.f32.gmra.mxu0 %v733
    %v1905 = vpop.f32.mrf.mxu0
    %v1906 = vadd.f32 %v438, %v1905
    %1907 = vmatmul.f32.gmra.mxu0 %v736
    %v1908 = vpop.f32.mrf.mxu0
    %v1909 = vadd.f32 %v438, %v1908
    %1910 = vmatmul.f32.gmra.mxu0 %v739
    %v1911 = vpop.f32.mrf.mxu0
    %v1912 = vadd.f32 %v438, %v1911
    %1913 = vmatmul.f32.gmra.mxu0 %v742
    %v1914 = vpop.f32.mrf.mxu0
    %v1915 = vadd.f32 %v438, %v1914
    %1916 = vmatmul.f32.gmra.mxu0 %v745
    %v1917 = vpop.f32.mrf.mxu0
    %v1918 = vadd.f32 %v438, %v1917
    %1919 = vmatmul.f32.gmra.mxu0 %v748
    %v1920 = vpop.f32.mrf.mxu0
    %v1921 = vadd.f32 %v438, %v1920
    %1922 = vmatmul.f32.gmra.mxu0 %v751
    %v1923 = vpop.f32.mrf.mxu0
    %v1924 = vadd.f32 %v438, %v1923
    %1925 = vmatmul.f32.gmra.mxu0 %v754
    %v1926 = vpop.f32.mrf.mxu0
    %v1927 = vadd.f32 %v438, %v1926
    %1928 = vmatmul.f32.gmra.mxu0 %v757
    %v1929 = vpop.f32.mrf.mxu0
    %v1930 = vadd.f32 %v438, %v1929
    %1931 = vmatmul.f32.gmra.mxu0 %v760
    %v1932 = vpop.f32.mrf.mxu0
    %v1933 = vadd.f32 %v438, %v1932
    %1934 = vmatmul.f32.gmra.mxu0 %v763
    %v1935 = vpop.f32.mrf.mxu0
    %v1936 = vadd.f32 %v438, %v1935
    %1937 = vmatmul.f32.gmra.mxu0 %v766
    %v1938 = vpop.f32.mrf.mxu0
    %v1939 = vadd.f32 %v438, %v1938
    %1940 = vmatmul.f32.gmra.mxu0 %v769
    %v1941 = vpop.f32.mrf.mxu0
    %v1942 = vadd.f32 %v438, %v1941
    %1943 = vmatmul.f32.gmra.mxu0 %v772
    %v1944 = vpop.f32.mrf.mxu0
    %v1945 = vadd.f32 %v438, %v1944
    %1946 = vmatmul.f32.gmra.mxu0 %v775
    %v1947 = vpop.f32.mrf.mxu0
    %v1948 = vadd.f32 %v438, %v1947
    %1949 = vmatmul.f32.gmra.mxu0 %v778
    %v1950 = vpop.f32.mrf.mxu0
    %v1951 = vadd.f32 %v438, %v1950
    %1952 = vmatmul.f32.gmra.mxu0 %v781
    %v1953 = vpop.f32.mrf.mxu0
    %v1954 = vadd.f32 %v438, %v1953
    %1955 = vmatmul.f32.gmra.mxu0 %v784
    %v1956 = vpop.f32.mrf.mxu0
    %v1957 = vadd.f32 %v438, %v1956
    %1958 = vmatmul.f32.gmra.mxu0 %v787
    %v1959 = vpop.f32.mrf.mxu0
    %v1960 = vadd.f32 %v438, %v1959
    %1961 = vmatmul.f32.gmra.mxu0 %v790
    %v1962 = vpop.f32.mrf.mxu0
    %v1963 = vadd.f32 %v438, %v1962
    %1964 = vmatmul.f32.gmra.mxu0 %v793
    %v1965 = vpop.f32.mrf.mxu0
    %v1966 = vadd.f32 %v438, %v1965
    %1967 = vmatmul.f32.gmra.mxu0 %v796
    %v1968 = vpop.f32.mrf.mxu0
    %v1969 = vadd.f32 %v438, %v1968
    %1970 = vmatmul.f32.gmra.mxu0 %v799
    %v1971 = vpop.f32.mrf.mxu0
    %v1972 = vadd.f32 %v438, %v1971
    %1973 = vmatmul.f32.gmra.mxu0 %v802
    %v1974 = vpop.f32.mrf.mxu0
    %v1975 = vadd.f32 %v438, %v1974
    %1976 = vmatmul.f32.gmra.mxu0 %v805
    %v1977 = vpop.f32.mrf.mxu0
    %v1978 = vadd.f32 %v438, %v1977
    %1979 = vmatmul.f32.gmra.mxu0 %v808
    %v1980 = vpop.f32.mrf.mxu0
    %v1981 = vadd.f32 %v438, %v1980
    %1982 = vmatmul.f32.gmra.mxu0 %v811
    %v1983 = vpop.f32.mrf.mxu0
    %v1984 = vadd.f32 %v438, %v1983
    %1985 = vmatmul.f32.gmra.mxu0 %v814
    %v1986 = vpop.f32.mrf.mxu0
    %v1987 = vadd.f32 %v438, %v1986
    %1988 = vmatmul.f32.gmra.mxu0 %v817
    %v1989 = vpop.f32.mrf.mxu0
    %v1990 = vadd.f32 %v438, %v1989
    %1991 = vmatmul.f32.gmra.mxu0 %v820
    %v1992 = vpop.f32.mrf.mxu0
    %v1993 = vadd.f32 %v438, %v1992
    %1994 = vmatmul.f32.gmra.mxu0 %v823
    %v1995 = vpop.f32.mrf.mxu0
    %v1996 = vadd.f32 %v438, %v1995
    %1997 = vmatmul.f32.gmra.mxu0 %v826
    %v1998 = vpop.f32.mrf.mxu0
    %v1999 = vadd.f32 %v438, %v1998
    %2000 = vmatmul.f32.gmra.mxu0 %v829
    %v2001 = vpop.f32.mrf.mxu0
    %v2002 = vadd.f32 %v438, %v2001
    %2003 = vmatmul.f32.gmra.mxu0 %v832
    %v2004 = vpop.f32.mrf.mxu0
    %v2005 = vadd.f32 %v438, %v2004
    %2006 = vmatmul.f32.gmra.mxu0 %v835
    %v2007 = vpop.f32.mrf.mxu0
    %v2008 = vadd.f32 %v438, %v2007
    %2009 = vmatmul.f32.gmra.mxu0 %v838
    %v2010 = vpop.f32.mrf.mxu0
    %v2011 = vadd.f32 %v438, %v2010
    %2012 = vmatmul.f32.gmra.mxu0 %v841
    %v2013 = vpop.f32.mrf.mxu0
    %v2014 = vadd.f32 %v438, %v2013
    %2015 = vmatmul.f32.gmra.mxu0 %v844
    %v2016 = vpop.f32.mrf.mxu0
    %v2017 = vadd.f32 %v438, %v2016
    %2018 = vmatmul.f32.gmra.mxu0 %v847
    %v2019 = vpop.f32.mrf.mxu0
    %v2020 = vadd.f32 %v438, %v2019
    %2021 = vmatmul.f32.gmra.mxu0 %v850
    %v2022 = vpop.f32.mrf.mxu0
    %v2023 = vadd.f32 %v438, %v2022
    %2024 = vmatmul.f32.gmra.mxu0 %v853
    %v2025 = vpop.f32.mrf.mxu0
    %v2026 = vadd.f32 %v438, %v2025
    %2027 = vmatmul.f32.gmra.mxu0 %v856
    %v2028 = vpop.f32.mrf.mxu0
    %v2029 = vadd.f32 %v438, %v2028
    %2030 = vmatmul.f32.gmra.mxu0 %v859
    %v2031 = vpop.f32.mrf.mxu0
    %v2032 = vadd.f32 %v438, %v2031
    %2033 = vmatmul.f32.gmra.mxu0 %v862
    %v2034 = vpop.f32.mrf.mxu0
    %v2035 = vadd.f32 %v438, %v2034
    %2036 = vmatmul.f32.gmra.mxu0 %v865
    %v2037 = vpop.f32.mrf.mxu0
    %v2038 = vadd.f32 %v438, %v2037
    %2039 = vmatmul.f32.gmra.mxu0 %v868
    %v2040 = vpop.f32.mrf.mxu0
    %v2041 = vadd.f32 %v438, %v2040
    %2042 = vmatmul.f32.gmra.mxu0 %v871
    %v2043 = vpop.f32.mrf.mxu0
    %v2044 = vadd.f32 %v438, %v2043
    %2045 = vmatmul.f32.gmra.mxu0 %v874
    %v2046 = vpop.f32.mrf.mxu0
    %v2047 = vadd.f32 %v438, %v2046
    %2048 = vmatmul.f32.gmra.mxu0 %v877
    %v2049 = vpop.f32.mrf.mxu0
    %v2050 = vadd.f32 %v438, %v2049
    %2051 = vmatmul.f32.gmra.mxu0 %v880
    %v2052 = vpop.f32.mrf.mxu0
    %v2053 = vadd.f32 %v438, %v2052
    %2054 = vmatmul.f32.gmra.mxu0 %v883
    %v2055 = vpop.f32.mrf.mxu0
    %v2056 = vadd.f32 %v438, %v2055
    %2057 = vmatmul.f32.gmra.mxu0 %v886
    %v2058 = vpop.f32.mrf.mxu0
    %v2059 = vadd.f32 %v438, %v2058
    %2060 = vmatmul.f32.gmra.mxu0 %v889
    %v2061 = vpop.f32.mrf.mxu0
    %v2062 = vadd.f32 %v438, %v2061
    %2063 = vmatmul.f32.gmra.mxu0 %v892
    %v2064 = vpop.f32.mrf.mxu0
    %v2065 = vadd.f32 %v438, %v2064
    %2066 = vmatmul.f32.gmra.mxu0 %v895
    %v2067 = vpop.f32.mrf.mxu0
    %v2068 = vadd.f32 %v438, %v2067
    %2069 = vmatmul.f32.gmra.mxu0 %v898
    %v2070 = vpop.f32.mrf.mxu0
    %v2071 = vadd.f32 %v438, %v2070
    %2072 = vmatmul.f32.gmra.mxu0 %v901
    %v2073 = vpop.f32.mrf.mxu0
    %v2074 = vadd.f32 %v438, %v2073
    %2075 = vmatmul.f32.gmra.mxu0 %v904
    %v2076 = vpop.f32.mrf.mxu0
    %v2077 = vadd.f32 %v438, %v2076
    %2078 = vmatmul.f32.gmra.mxu0 %v907
    %v2079 = vpop.f32.mrf.mxu0
    %v2080 = vadd.f32 %v438, %v2079
    %2081 = vmatmul.f32.gmra.mxu0 %v910
    %v2082 = vpop.f32.mrf.mxu0
    %v2083 = vadd.f32 %v438, %v2082
    %2084 = vmatmul.f32.gmra.mxu0 %v913
    %v2085 = vpop.f32.mrf.mxu0
    %v2086 = vadd.f32 %v438, %v2085
    %2087 = vmatmul.f32.gmra.mxu0 %v916
    %v2088 = vpop.f32.mrf.mxu0
    %v2089 = vadd.f32 %v438, %v2088
    %2090 = vmatmul.f32.gmra.mxu0 %v919
    %v2091 = vpop.f32.mrf.mxu0
    %v2092 = vadd.f32 %v438, %v2091
    %2093 = vmatmul.f32.gmra.mxu0 %v922
    %v2094 = vpop.f32.mrf.mxu0
    %v2095 = vadd.f32 %v438, %v2094
    %2096 = vmatmul.f32.gmra.mxu0 %v925
    %v2097 = vpop.f32.mrf.mxu0
    %v2098 = vadd.f32 %v438, %v2097
    %2099 = vmatmul.f32.gmra.mxu0 %v928
    %v2100 = vpop.f32.mrf.mxu0
    %v2101 = vadd.f32 %v438, %v2100
    %2102 = vmatmul.f32.gmra.mxu0 %v931
    %v2103 = vpop.f32.mrf.mxu0
    %v2104 = vadd.f32 %v438, %v2103
    %2105 = vmatmul.f32.gmra.mxu0 %v934
    %v2106 = vpop.f32.mrf.mxu0
    %v2107 = vadd.f32 %v438, %v2106
    %2108 = vmatmul.f32.gmra.mxu0 %v937
    %v2109 = vpop.f32.mrf.mxu0
    %v2110 = vadd.f32 %v438, %v2109
    %2111 = vmatmul.f32.gmra.mxu0 %v940
    %v2112 = vpop.f32.mrf.mxu0
    %v2113 = vadd.f32 %v438, %v2112
    %2114 = vmatmul.f32.gmra.mxu0 %v943
    %v2115 = vpop.f32.mrf.mxu0
    %v2116 = vadd.f32 %v438, %v2115
    %2117 = vmatmul.f32.gmra.mxu0 %v946
    %v2118 = vpop.f32.mrf.mxu0
    %v2119 = vadd.f32 %v438, %v2118
    %2120 = vmatmul.f32.gmra.mxu0 %v949
    %v2121 = vpop.f32.mrf.mxu0
    %v2122 = vadd.f32 %v438, %v2121
    %2123 = vmatmul.f32.gmra.mxu0 %v952
    %v2124 = vpop.f32.mrf.mxu0
    %v2125 = vadd.f32 %v438, %v2124
    %2126 = vmatmul.f32.gmra.mxu0 %v955
    %v2127 = vpop.f32.mrf.mxu0
    %v2128 = vadd.f32 %v438, %v2127
    %2129 = vmatmul.f32.gmra.mxu0 %v958
    %v2130 = vpop.f32.mrf.mxu0
    %v2131 = vadd.f32 %v438, %v2130
    %2132 = vmatmul.f32.gmra.mxu0 %v961
    %v2133 = vpop.f32.mrf.mxu0
    %v2134 = vadd.f32 %v438, %v2133
    %2135 = vmatmul.f32.gmra.mxu0 %v964
    %v2136 = vpop.f32.mrf.mxu0
    %v2137 = vadd.f32 %v438, %v2136
    %2138 = vmatmul.f32.gmra.mxu0 %v967
    %v2139 = vpop.f32.mrf.mxu0
    %v2140 = vadd.f32 %v438, %v2139
    %2141 = vmatmul.f32.gmra.mxu0 %v970
    %v2142 = vpop.f32.mrf.mxu0
    %v2143 = vadd.f32 %v438, %v2142
    %2144 = vmatmul.f32.gmra.mxu0 %v973
    %v2145 = vpop.f32.mrf.mxu0
    %v2146 = vadd.f32 %v438, %v2145
    %2147 = vmatmul.f32.gmra.mxu0 %v976
    %v2148 = vpop.f32.mrf.mxu0
    %v2149 = vadd.f32 %v438, %v2148
    %2150 = vmatmul.f32.gmra.mxu0 %v979
    %v2151 = vpop.f32.mrf.mxu0
    %v2152 = vadd.f32 %v438, %v2151
    %2153 = vmatmul.f32.gmra.mxu0 %v982
    %v2154 = vpop.f32.mrf.mxu0
    %v2155 = vadd.f32 %v438, %v2154
    %2156 = vmatmul.f32.gmra.mxu0 %v985
    %v2157 = vpop.f32.mrf.mxu0
    %v2158 = vadd.f32 %v438, %v2157
    %2159 = vmatmul.f32.gmra.mxu0 %v988
    %v2160 = vpop.f32.mrf.mxu0
    %v2161 = vadd.f32 %v438, %v2160
    %2162 = vmatmul.f32.gmra.mxu0 %v991
    %v2163 = vpop.f32.mrf.mxu0
    %v2164 = vadd.f32 %v438, %v2163
    %2165 = vmatmul.f32.gmra.mxu0 %v994
    %v2166 = vpop.f32.mrf.mxu0
    %v2167 = vadd.f32 %v438, %v2166
    %2168 = vmatmul.f32.gmra.mxu0 %v997
    %v2169 = vpop.f32.mrf.mxu0
    %v2170 = vadd.f32 %v438, %v2169
    %2171 = vmatmul.f32.gmra.mxu0 %v1000
    %v2172 = vpop.f32.mrf.mxu0
    %v2173 = vadd.f32 %v438, %v2172
    %2174 = vmatmul.f32.gmra.mxu0 %v1003
    %v2175 = vpop.f32.mrf.mxu0
    %v2176 = vadd.f32 %v438, %v2175
    %2177 = vmatmul.f32.gmra.mxu0 %v1006
    %v2178 = vpop.f32.mrf.mxu0
    %v2179 = vadd.f32 %v438, %v2178
    %2180 = vmatmul.f32.gmra.mxu0 %v1009
    %v2181 = vpop.f32.mrf.mxu0
    %v2182 = vadd.f32 %v438, %v2181
    %2183 = vmatmul.f32.gmra.mxu0 %v1012
    %v2184 = vpop.f32.mrf.mxu0
    %v2185 = vadd.f32 %v438, %v2184
    %2186 = vmatmul.f32.gmra.mxu0 %v1015
    %v2187 = vpop.f32.mrf.mxu0
    %v2188 = vadd.f32 %v438, %v2187
    %2189 = vmatmul.f32.gmra.mxu0 %v1018
    %v2190 = vpop.f32.mrf.mxu0
    %v2191 = vadd.f32 %v438, %v2190
    %2192 = vmatmul.f32.gmra.mxu0 %v1021
    %v2193 = vpop.f32.mrf.mxu0
    %v2194 = vadd.f32 %v438, %v2193
    %2195 = vmatmul.f32.gmra.mxu0 %v1024
    %v2196 = vpop.f32.mrf.mxu0
    %v2197 = vadd.f32 %v438, %v2196
    %2198 = vmatmul.f32.gmra.mxu0 %v1027
    %v2199 = vpop.f32.mrf.mxu0
    %v2200 = vadd.f32 %v438, %v2199
    %2201 = vmatmul.f32.gmra.mxu0 %v1030
    %v2202 = vpop.f32.mrf.mxu0
    %v2203 = vadd.f32 %v438, %v2202
    %2204 = vmatmul.f32.gmra.mxu0 %v1033
    %v2205 = vpop.f32.mrf.mxu0
    %v2206 = vadd.f32 %v438, %v2205
    %2207 = vmatmul.f32.gmra.mxu0 %v1036
    %v2208 = vpop.f32.mrf.mxu0
    %v2209 = vadd.f32 %v438, %v2208
    %2210 = vmatmul.f32.gmra.mxu0 %v1039
    %v2211 = vpop.f32.mrf.mxu0
    %v2212 = vadd.f32 %v438, %v2211
    %2213 = vmatmul.f32.gmra.mxu0 %v1042
    %v2214 = vpop.f32.mrf.mxu0
    %v2215 = vadd.f32 %v438, %v2214
    %2216 = vmatmul.f32.gmra.mxu0 %v1045
    %v2217 = vpop.f32.mrf.mxu0
    %v2218 = vadd.f32 %v438, %v2217
    %2219 = vmatmul.f32.gmra.mxu0 %v1048
    %v2220 = vpop.f32.mrf.mxu0
    %v2221 = vadd.f32 %v438, %v2220
    %2222 = vmatmul.f32.gmra.mxu0 %v1051
    %v2223 = vpop.f32.mrf.mxu0
    %v2224 = vadd.f32 %v438, %v2223
    %2225 = vmatmul.f32.gmra.mxu0 %v1054
    %v2226 = vpop.f32.mrf.mxu0
    %v2227 = vadd.f32 %v438, %v2226
    %2228 = vmatmul.f32.gmra.mxu0 %v1057
    %v2229 = vpop.f32.mrf.mxu0
    %v2230 = vadd.f32 %v438, %v2229
    %2231 = vmatmul.f32.gmra.mxu0 %v1060
    %v2232 = vpop.f32.mrf.mxu0
    %v2233 = vadd.f32 %v438, %v2232
    %2234 = vmatmul.f32.gmra.mxu0 %v1063
    %v2235 = vpop.f32.mrf.mxu0
    %v2236 = vadd.f32 %v438, %v2235
    %2237 = vmatmul.f32.gmra.mxu0 %v1066
    %v2238 = vpop.f32.mrf.mxu0
    %v2239 = vadd.f32 %v438, %v2238
    %2240 = vmatmul.f32.gmra.mxu0 %v1069
    %v2241 = vpop.f32.mrf.mxu0
    %v2242 = vadd.f32 %v438, %v2241
    %2243 = vmatmul.f32.gmra.mxu0 %v1072
    %v2244 = vpop.f32.mrf.mxu0
    %v2245 = vadd.f32 %v438, %v2244
    %2246 = vmatmul.f32.gmra.mxu0 %v1075
    %v2247 = vpop.f32.mrf.mxu0
    %v2248 = vadd.f32 %v438, %v2247
    %2249 = vmatmul.f32.gmra.mxu0 %v1078
    %v2250 = vpop.f32.mrf.mxu0
    %v2251 = vadd.f32 %v438, %v2250
    %2252 = vmatmul.f32.gmra.mxu0 %v1081
    %v2253 = vpop.f32.mrf.mxu0
    %v2254 = vadd.f32 %v438, %v2253
    %2255 = vmatmul.f32.gmra.mxu0 %v1084
    %v2256 = vpop.f32.mrf.mxu0
    %v2257 = vadd.f32 %v438, %v2256
    %2258 = vmatmul.f32.gmra.mxu0 %v1087
    %v2259 = vpop.f32.mrf.mxu0
    %v2260 = vadd.f32 %v438, %v2259
    %2261 = vmatmul.f32.gmra.mxu0 %v1090
    %v2262 = vpop.f32.mrf.mxu0
    %v2263 = vadd.f32 %v438, %v2262
    %2264 = vmatmul.f32.gmra.mxu0 %v1093
    %v2265 = vpop.f32.mrf.mxu0
    %v2266 = vadd.f32 %v438, %v2265
    %2267 = vmatmul.f32.gmra.mxu0 %v1096
    %v2268 = vpop.f32.mrf.mxu0
    %v2269 = vadd.f32 %v438, %v2268
    %2270 = vmatmul.f32.gmra.mxu0 %v1099
    %v2271 = vpop.f32.mrf.mxu0
    %v2272 = vadd.f32 %v438, %v2271
    %2273 = vmatmul.f32.gmra.mxu0 %v1102
    %v2274 = vpop.f32.mrf.mxu0
    %v2275 = vadd.f32 %v438, %v2274
    %2276 = vmatmul.f32.gmra.mxu0 %v1105
    %v2277 = vpop.f32.mrf.mxu0
    %v2278 = vadd.f32 %v438, %v2277
    %2279 = vmatmul.f32.gmra.mxu0 %v1108
    %v2280 = vpop.f32.mrf.mxu0
    %v2281 = vadd.f32 %v438, %v2280
    %2282 = vmatmul.f32.gmra.mxu0 %v1111
    %v2283 = vpop.f32.mrf.mxu0
    %v2284 = vadd.f32 %v438, %v2283
    %2285 = vmatmul.f32.gmra.mxu0 %v1114
    %v2286 = vpop.f32.mrf.mxu0
    %v2287 = vadd.f32 %v438, %v2286
    %2288 = vmatmul.f32.gmra.mxu0 %v1117
    %v2289 = vpop.f32.mrf.mxu0
    %v2290 = vadd.f32 %v438, %v2289
    %2291 = vmatmul.f32.gmra.mxu0 %v1120
    %v2292 = vpop.f32.mrf.mxu0
    %v2293 = vadd.f32 %v438, %v2292
    %2294 = vmatmul.f32.gmra.mxu0 %v1123
    %v2295 = vpop.f32.mrf.mxu0
    %v2296 = vadd.f32 %v438, %v2295
    %2297 = vmatmul.f32.gmra.mxu0 %v1126
    %v2298 = vpop.f32.mrf.mxu0
    %v2299 = vadd.f32 %v438, %v2298
    %2300 = vmatmul.f32.gmra.mxu0 %v1129
    %v2301 = vpop.f32.mrf.mxu0
    %v2302 = vadd.f32 %v438, %v2301
    %2303 = vmatmul.f32.gmra.mxu0 %v1132
    %v2304 = vpop.f32.mrf.mxu0
    %v2305 = vadd.f32 %v438, %v2304
    %2306 = vmatmul.f32.gmra.mxu0 %v1135
    %v2307 = vpop.f32.mrf.mxu0
    %v2308 = vadd.f32 %v438, %v2307
    %2309 = vmatmul.f32.gmra.mxu0 %v1138
    %v2310 = vpop.f32.mrf.mxu0
    %v2311 = vadd.f32 %v438, %v2310
    %2312 = vmatmul.f32.gmra.mxu0 %v1141
    %v2313 = vpop.f32.mrf.mxu0
    %v2314 = vadd.f32 %v438, %v2313
    %2315 = vmatmul.f32.gmra.mxu0 %v1144
    %v2316 = vpop.f32.mrf.mxu0
    %v2317 = vadd.f32 %v438, %v2316
    %2318 = vmatmul.f32.gmra.mxu0 %v1147
    %v2319 = vpop.f32.mrf.mxu0
    %v2320 = vadd.f32 %v438, %v2319
    %2321 = vmatmul.f32.gmra.mxu0 %v1150
    %v2322 = vpop.f32.mrf.mxu0
    %v2323 = vadd.f32 %v438, %v2322
    %2324 = vmatmul.f32.gmra.mxu0 %v1153
    %v2325 = vpop.f32.mrf.mxu0
    %v2326 = vadd.f32 %v438, %v2325
    %2327 = vmatmul.f32.gmra.mxu0 %v1156
    %v2328 = vpop.f32.mrf.mxu0
    %v2329 = vadd.f32 %v438, %v2328
    %2330 = vmatmul.f32.gmra.mxu0 %v1159
    %v2331 = vpop.f32.mrf.mxu0
    %v2332 = vadd.f32 %v438, %v2331
    %2333 = vmatmul.f32.gmra.mxu0 %v1162
    %v2334 = vpop.f32.mrf.mxu0
    %v2335 = vadd.f32 %v438, %v2334
    %2336 = vmatmul.f32.gmra.mxu0 %v1165
    %v2337 = vpop.f32.mrf.mxu0
    %v2338 = vadd.f32 %v438, %v2337
    %2339 = vmatmul.f32.gmra.mxu0 %v1168
    %v2340 = vpop.f32.mrf.mxu0
    %v2341 = vadd.f32 %v438, %v2340
    %2342 = vmatmul.f32.gmra.mxu0 %v1171
    %v2343 = vpop.f32.mrf.mxu0
    %v2344 = vadd.f32 %v438, %v2343
    %2345 = vmatmul.f32.gmra.mxu0 %v1174
    %v2346 = vpop.f32.mrf.mxu0
    %v2347 = vadd.f32 %v438, %v2346
    %2348 = vmatmul.f32.gmra.mxu0 %v1177
    %v2349 = vpop.f32.mrf.mxu0
    %v2350 = vadd.f32 %v438, %v2349
    %2351 = vmatmul.f32.gmra.mxu0 %v1180
    %v2352 = vpop.f32.mrf.mxu0
    %v2353 = vadd.f32 %v438, %v2352
    %2354 = vmatmul.f32.gmra.mxu0 %v1183
    %v2355 = vpop.f32.mrf.mxu0
    %v2356 = vadd.f32 %v438, %v2355
    %2357 = vmatmul.f32.gmra.mxu0 %v1186
    %v2358 = vpop.f32.mrf.mxu0
    %v2359 = vadd.f32 %v438, %v2358
    %2360 = vmatmul.f32.gmra.mxu0 %v1189
    %v2361 = vpop.f32.mrf.mxu0
    %v2362 = vadd.f32 %v438, %v2361
    %2363 = vmatmul.f32.gmra.mxu0 %v1192
    %v2364 = vpop.f32.mrf.mxu0
    %v2365 = vadd.f32 %v438, %v2364
    %2366 = vmatmul.f32.gmra.mxu0 %v1195
    %v2367 = vpop.f32.mrf.mxu0
    %v2368 = vadd.f32 %v438, %v2367
    %2369 = vmatmul.f32.gmra.mxu0 %v1198
    %v2370 = vpop.f32.mrf.mxu0
    %v2371 = vadd.f32 %v438, %v2370
    %2372 = vmatmul.f32.gmra.mxu0 %v1201
    %v2373 = vpop.f32.mrf.mxu0
    %v2374 = vadd.f32 %v438, %v2373
    %2375 = vmatmul.f32.gmra.mxu0 %v1204
    %v2376 = vpop.f32.mrf.mxu0
    %v2377 = vadd.f32 %v438, %v2376
    %2378 = vmatmul.f32.gmra.mxu0 %v1207
    %v2379 = vpop.f32.mrf.mxu0
    %v2380 = vadd.f32 %v438, %v2379
    %2381 = vmatmul.f32.gmra.mxu0 %v1210
    %v2382 = vpop.f32.mrf.mxu0
    %v2383 = vadd.f32 %v438, %v2382
    %2384 = vmatmul.f32.gmra.mxu0 %v1213
    %v2385 = vpop.f32.mrf.mxu0
    %v2386 = vadd.f32 %v438, %v2385
    %2387 = vmatmul.f32.gmra.mxu0 %v1216
    %v2388 = vpop.f32.mrf.mxu0
    %v2389 = vadd.f32 %v438, %v2388
    %2390 = vmatmul.f32.gmra.mxu0 %v1219
    %v2391 = vpop.f32.mrf.mxu0
    %v2392 = vadd.f32 %v438, %v2391
    %2393 = vmatmul.f32.gmra.mxu0 %v1222
    %v2394 = vpop.f32.mrf.mxu0
    %v2395 = vadd.f32 %v438, %v2394
    %2396 = vmatmul.f32.gmra.mxu0 %v1225
    %v2397 = vpop.f32.mrf.mxu0
    %v2398 = vadd.f32 %v438, %v2397
    %2399 = vmatmul.f32.gmra.mxu0 %v1228
    %v2400 = vpop.f32.mrf.mxu0
    %v2401 = vadd.f32 %v438, %v2400
    %2402 = vmatmul.f32.gmra.mxu0 %v1231
    %v2403 = vpop.f32.mrf.mxu0
    %v2404 = vadd.f32 %v438, %v2403
    %2405 = vmatmul.f32.gmra.mxu0 %v1234
    %v2406 = vpop.f32.mrf.mxu0
    %v2407 = vadd.f32 %v438, %v2406
    %2408 = vmatmul.f32.gmra.mxu0 %v1237
    %v2409 = vpop.f32.mrf.mxu0
    %v2410 = vadd.f32 %v438, %v2409
    %2411 = vmatmul.f32.gmra.mxu0 %v1240
    %v2412 = vpop.f32.mrf.mxu0
    %v2413 = vadd.f32 %v438, %v2412
    %2414 = vmatmul.f32.gmra.mxu0 %v1243
    %v2415 = vpop.f32.mrf.mxu0
    %v2416 = vadd.f32 %v438, %v2415
    %2417 = vmatmul.f32.gmra.mxu0 %v1246
    %v2418 = vpop.f32.mrf.mxu0
    %v2419 = vadd.f32 %v438, %v2418
    %2420 = vmatmul.f32.gmra.mxu0 %v1249
    %v2421 = vpop.f32.mrf.mxu0
    %v2422 = vadd.f32 %v438, %v2421
    %2423 = vmatmul.f32.gmra.mxu0 %v1252
    %v2424 = vpop.f32.mrf.mxu0
    %v2425 = vadd.f32 %v438, %v2424
    %2426 = vmatmul.f32.gmra.mxu0 %v1255
    %v2427 = vpop.f32.mrf.mxu0
    %v2428 = vadd.f32 %v438, %v2427
    %2429 = vmatmul.f32.gmra.mxu0 %v1258
    %v2430 = vpop.f32.mrf.mxu0
    %v2431 = vadd.f32 %v438, %v2430
    %2432 = vmatmul.f32.gmra.mxu0 %v1261
    %v2433 = vpop.f32.mrf.mxu0
    %v2434 = vadd.f32 %v438, %v2433
    %2435 = vmatmul.f32.gmra.mxu0 %v1264
    %v2436 = vpop.f32.mrf.mxu0
    %v2437 = vadd.f32 %v438, %v2436
    %2438 = vmatmul.f32.gmra.mxu0 %v1267
    %v2439 = vpop.f32.mrf.mxu0
    %v2440 = vadd.f32 %v438, %v2439
    %2441 = vmatmul.f32.gmra.mxu0 %v1270
    %v2442 = vpop.f32.mrf.mxu0
    %v2443 = vadd.f32 %v438, %v2442
    %2444 = vmatmul.f32.gmra.mxu0 %v1273
    %v2445 = vpop.f32.mrf.mxu0
    %v2446 = vadd.f32 %v438, %v2445
    %2447 = vmatmul.f32.gmra.mxu0 %v1276
    %v2448 = vpop.f32.mrf.mxu0
    %v2449 = vadd.f32 %v438, %v2448
    %2450 = vmatmul.f32.gmra.mxu0 %v1279
    %v2451 = vpop.f32.mrf.mxu0
    %v2452 = vadd.f32 %v438, %v2451
    %2453 = vmatmul.f32.gmra.mxu0 %v1282
    %v2454 = vpop.f32.mrf.mxu0
    %v2455 = vadd.f32 %v438, %v2454
    %2456 = vmatmul.f32.gmra.mxu0 %v1285
    %v2457 = vpop.f32.mrf.mxu0
    %v2458 = vadd.f32 %v438, %v2457
    %2459 = vmatmul.f32.gmra.mxu0 %v1288
    %v2460 = vpop.f32.mrf.mxu0
    %v2461 = vadd.f32 %v438, %v2460
    %2462 = vmatmul.f32.gmra.mxu0 %v1291
    %v2463 = vpop.f32.mrf.mxu0
    %v2464 = vadd.f32 %v438, %v2463
    %2465 = vmatmul.f32.gmra.mxu0 %v1294
    %v2466 = vpop.f32.mrf.mxu0
    %v2467 = vadd.f32 %v438, %v2466
    %2468 = vmatmul.f32.gmra.mxu0 %v1297
    %v2469 = vpop.f32.mrf.mxu0
    %v2470 = vadd.f32 %v438, %v2469
    %2471 = vmatmul.f32.gmra.mxu0 %v1300
    %v2472 = vpop.f32.mrf.mxu0
    %v2473 = vadd.f32 %v438, %v2472
    %2474 = vmatmul.f32.gmra.mxu0 %v1303
    %v2475 = vpop.f32.mrf.mxu0
    %v2476 = vadd.f32 %v438, %v2475
    %2477 = vmatmul.f32.gmra.mxu0 %v1306
    %v2478 = vpop.f32.mrf.mxu0
    %v2479 = vadd.f32 %v438, %v2478
    %2480 = vmatmul.f32.gmra.mxu0 %v1309
    %v2481 = vpop.f32.mrf.mxu0
    %v2482 = vadd.f32 %v438, %v2481
    %2483 = vmatmul.f32.gmra.mxu0 %v1312
    %v2484 = vpop.f32.mrf.mxu0
    %v2485 = vadd.f32 %v438, %v2484
    %2486 = vmatmul.f32.gmra.mxu0 %v1315
    %v2487 = vpop.f32.mrf.mxu0
    %v2488 = vadd.f32 %v438, %v2487
    %2489 = vmatmul.f32.gmra.mxu0 %v1318
    %v2490 = vpop.f32.mrf.mxu0
    %v2491 = vadd.f32 %v438, %v2490
    %2492 = vmatmul.f32.gmra.mxu0 %v1321
    %v2493 = vpop.f32.mrf.mxu0
    %v2494 = vadd.f32 %v438, %v2493
    %2495 = vmatmul.f32.gmra.mxu0 %v1324
    %v2496 = vpop.f32.mrf.mxu0
    %v2497 = vadd.f32 %v438, %v2496
    %2498 = vmatmul.f32.gmra.mxu0 %v1327
    %v2499 = vpop.f32.mrf.mxu0
    %v2500 = vadd.f32 %v438, %v2499
    %2501 = vmatmul.f32.gmra.mxu0 %v1330
    %v2502 = vpop.f32.mrf.mxu0
    %v2503 = vadd.f32 %v438, %v2502
    %2504 = vmatmul.f32.gmra.mxu0 %v1333
    %v2505 = vpop.f32.mrf.mxu0
    %v2506 = vadd.f32 %v438, %v2505
    %2507 = vmatmul.f32.gmra.mxu0 %v1336
    %v2508 = vpop.f32.mrf.mxu0
    %v2509 = vadd.f32 %v438, %v2508
    %2510 = vmatmul.f32.gmra.mxu0 %v1339
    %v2511 = vpop.f32.mrf.mxu0
    %v2512 = vadd.f32 %v438, %v2511
    %2513 = vmatmul.f32.gmra.mxu0 %v1342
    %v2514 = vpop.f32.mrf.mxu0
    %v2515 = vadd.f32 %v438, %v2514
    %2516 = vmatmul.f32.gmra.mxu0 %v1345
    %v2517 = vpop.f32.mrf.mxu0
    %v2518 = vadd.f32 %v438, %v2517
    %2519 = vmatmul.f32.gmra.mxu0 %v1348
    %v2520 = vpop.f32.mrf.mxu0
    %v2521 = vadd.f32 %v438, %v2520
    %2522 = vmatmul.f32.gmra.mxu0 %v1351
    %v2523 = vpop.f32.mrf.mxu0
    %v2524 = vadd.f32 %v438, %v2523
    %2525 = vmatmul.f32.gmra.mxu0 %v1354
    %v2526 = vpop.f32.mrf.mxu0
    %v2527 = vadd.f32 %v438, %v2526
    %2528 = vmatmul.f32.gmra.mxu0 %v1357
    %v2529 = vpop.f32.mrf.mxu0
    %v2530 = vadd.f32 %v438, %v2529
    %2531 = vmatmul.f32.gmra.mxu0 %v1360
    %v2532 = vpop.f32.mrf.mxu0
    %v2533 = vadd.f32 %v438, %v2532
    %2534 = vmatmul.f32.gmra.mxu0 %v1363
    %v2535 = vpop.f32.mrf.mxu0
    %v2536 = vadd.f32 %v438, %v2535
    %2537 = vmatmul.f32.gmra.mxu0 %v1366
    %v2538 = vpop.f32.mrf.mxu0
    %v2539 = vadd.f32 %v438, %v2538
    %2540 = vmatmul.f32.gmra.mxu0 %v1369
    %v2541 = vpop.f32.mrf.mxu0
    %v2542 = vadd.f32 %v438, %v2541
    %2543 = vmatmul.f32.gmra.mxu0 %v1372
    %v2544 = vpop.f32.mrf.mxu0
    %v2545 = vadd.f32 %v438, %v2544
    %2546 = vmatmul.f32.gmra.mxu0 %v1375
    %v2547 = vpop.f32.mrf.mxu0
    %v2548 = vadd.f32 %v438, %v2547
    %2549 = vmatmul.f32.gmra.mxu0 %v1378
    %v2550 = vpop.f32.mrf.mxu0
    %v2551 = vadd.f32 %v438, %v2550
    %2552 = vmatmul.f32.gmra.mxu0 %v1381
    %v2553 = vpop.f32.mrf.mxu0
    %v2554 = vadd.f32 %v438, %v2553
    %2555 = vmatmul.f32.gmra.mxu0 %v1384
    %v2556 = vpop.f32.mrf.mxu0
    %v2557 = vadd.f32 %v438, %v2556
    %2558 = vmatmul.f32.gmra.mxu0 %v1387
    %v2559 = vpop.f32.mrf.mxu0
    %v2560 = vadd.f32 %v438, %v2559
    %2561 = vmatmul.f32.gmra.mxu0 %v1390
    %v2562 = vpop.f32.mrf.mxu0
    %v2563 = vadd.f32 %v438, %v2562
    %2564 = vmatmul.f32.gmra.mxu0 %v1393
    %v2565 = vpop.f32.mrf.mxu0
    %v2566 = vadd.f32 %v438, %v2565
    %2567 = vmatmul.f32.gmra.mxu0 %v1396
    %v2568 = vpop.f32.mrf.mxu0
    %v2569 = vadd.f32 %v438, %v2568
    %2570 = vmatmul.f32.gmra.mxu0 %v1399
    %v2571 = vpop.f32.mrf.mxu0
    %v2572 = vadd.f32 %v438, %v2571
    %2573 = vmatmul.f32.gmra.mxu0 %v1402
    %v2574 = vpop.f32.mrf.mxu0
    %v2575 = vadd.f32 %v438, %v2574
    %2576 = vmatmul.f32.gmra.mxu0 %v1405
    %v2577 = vpop.f32.mrf.mxu0
    %v2578 = vadd.f32 %v438, %v2577
    %2579 = vmatmul.f32.gmra.mxu0 %v1408
    %v2580 = vpop.f32.mrf.mxu0
    %v2581 = vadd.f32 %v438, %v2580
    %2582 = vmatmul.f32.gmra.mxu0 %v1411
    %v2583 = vpop.f32.mrf.mxu0
    %v2584 = vadd.f32 %v438, %v2583
    %2585 = vmatmul.f32.gmra.mxu0 %v1414
    %v2586 = vpop.f32.mrf.mxu0
    %v2587 = vadd.f32 %v438, %v2586
    %2588 = vmatmul.f32.gmra.mxu0 %v1417
    %v2589 = vpop.f32.mrf.mxu0
    %v2590 = vadd.f32 %v438, %v2589
    %2591 = vmatmul.f32.gmra.mxu0 %v1420
    %v2592 = vpop.f32.mrf.mxu0
    %v2593 = vadd.f32 %v438, %v2592
    %2594 = vmatmul.f32.gmra.mxu0 %v1423
    %v2595 = vpop.f32.mrf.mxu0
    %v2596 = vadd.f32 %v438, %v2595
    %2597 = vmatmul.f32.gmra.mxu0 %v1426
    %v2598 = vpop.f32.mrf.mxu0
    %v2599 = vadd.f32 %v438, %v2598
    %2600 = vmatmul.f32.gmra.mxu0 %v1429
    %v2601 = vpop.f32.mrf.mxu0
    %v2602 = vadd.f32 %v438, %v2601
    %2603 = vmatmul.f32.gmra.mxu0 %v1432
    %v2604 = vpop.f32.mrf.mxu0
    %v2605 = vadd.f32 %v438, %v2604
    %2606 = vmatmul.f32.gmra.mxu0 %v1435
    %v2607 = vpop.f32.mrf.mxu0
    %v2608 = vadd.f32 %v438, %v2607
    %2609 = vmatmul.f32.gmra.mxu0 %v1438
    %v2610 = vpop.f32.mrf.mxu0
    %v2611 = vadd.f32 %v438, %v2610
    %2612 = vmatmul.f32.gmra.mxu0 %v1441
    %v2613 = vpop.f32.mrf.mxu0
    %v2614 = vadd.f32 %v438, %v2613
    %2615 = vmatmul.f32.gmra.mxu0 %v1444
    %v2616 = vpop.f32.mrf.mxu0
    %v2617 = vadd.f32 %v438, %v2616
    %2618 = vmatmul.f32.gmra.mxu0 %v1447
    %v2619 = vpop.f32.mrf.mxu0
    %v2620 = vadd.f32 %v438, %v2619
    %2621 = vmatmul.f32.gmra.mxu0 %v1450
    %v2622 = vpop.f32.mrf.mxu0
    %v2623 = vadd.f32 %v438, %v2622
    %2624 = vmatmul.f32.gmra.mxu0 %v1453
    %v2625 = vpop.f32.mrf.mxu0
    %v2626 = vadd.f32 %v438, %v2625
    %2627 = vmatmul.f32.gmra.mxu0 %v1456
    %v2628 = vpop.f32.mrf.mxu0
    %v2629 = vadd.f32 %v438, %v2628
    %2630 = vmatmul.f32.gmra.mxu0 %v1459
    %v2631 = vpop.f32.mrf.mxu0
    %v2632 = vadd.f32 %v438, %v2631
    %2633 = vmatmul.f32.gmra.mxu0 %v1462
    %v2634 = vpop.f32.mrf.mxu0
    %v2635 = vadd.f32 %v438, %v2634
    %2636 = vmatmul.f32.gmra.mxu0 %v1465
    %v2637 = vpop.f32.mrf.mxu0
    %v2638 = vadd.f32 %v438, %v2637
    %2639 = vmatmul.f32.gmra.mxu0 %v1468
    %v2640 = vpop.f32.mrf.mxu0
    %v2641 = vadd.f32 %v438, %v2640
    %2642 = vmatmul.f32.gmra.mxu0 %v1471
    %v2643 = vpop.f32.mrf.mxu0
    %v2644 = vadd.f32 %v438, %v2643
    %2645 = vmatmul.f32.gmra.mxu0 %v1474
    %v2646 = vpop.f32.mrf.mxu0
    %v2647 = vadd.f32 %v438, %v2646
    %2648 = vmatmul.f32.gmra.mxu0 %v1477
    %v2649 = vpop.f32.mrf.mxu0
    %v2650 = vadd.f32 %v438, %v2649
    %2651 = vmatmul.f32.gmra.mxu0 %v1480
    %v2652 = vpop.f32.mrf.mxu0
    %v2653 = vadd.f32 %v438, %v2652
    %2654 = vmatmul.f32.gmra.mxu0 %v1483
    %v2655 = vpop.f32.mrf.mxu0
    %v2656 = vadd.f32 %v438, %v2655
    %2657 = vmatmul.f32.gmra.mxu0 %v1486
    %v2658 = vpop.f32.mrf.mxu0
    %v2659 = vadd.f32 %v438, %v2658
    %2660 = vmatmul.f32.gmra.mxu0 %v1489
    %v2661 = vpop.f32.mrf.mxu0
    %v2662 = vadd.f32 %v438, %v2661
    %2663 = vmatmul.f32.gmra.mxu0 %v1492
    %v2664 = vpop.f32.mrf.mxu0
    %v2665 = vadd.f32 %v438, %v2664
    %2666 = vmatmul.f32.gmra.mxu0 %v1495
    %v2667 = vpop.f32.mrf.mxu0
    %v2668 = vadd.f32 %v438, %v2667
    %2669 = vmatmul.f32.gmra.mxu0 %v1498
    %v2670 = vpop.f32.mrf.mxu0
    %v2671 = vadd.f32 %v438, %v2670
    %2672 = vmatmul.f32.gmra.mxu0 %v1501
    %v2673 = vpop.f32.mrf.mxu0
    %v2674 = vadd.f32 %v438, %v2673
    %2675 = vmatmul.f32.gmra.mxu0 %v1504
    %v2676 = vpop.f32.mrf.mxu0
    %v2677 = vadd.f32 %v438, %v2676
    %2678 = vmatmul.f32.gmra.mxu0 %v1507
    %v2679 = vpop.f32.mrf.mxu0
    %v2680 = vadd.f32 %v438, %v2679
    %2681 = vmatmul.f32.gmra.mxu0 %v1510
    %v2682 = vpop.f32.mrf.mxu0
    %v2683 = vadd.f32 %v438, %v2682
    %2684 = vmatmul.f32.gmra.mxu0 %v1513
    %v2685 = vpop.f32.mrf.mxu0
    %v2686 = vadd.f32 %v438, %v2685
    %2687 = vmatmul.f32.gmra.mxu0 %v1516
    %v2688 = vpop.f32.mrf.mxu0
    %v2689 = vadd.f32 %v438, %v2688
    %2690 = vmatmul.f32.gmra.mxu0 %v1519
    %v2691 = vpop.f32.mrf.mxu0
    %v2692 = vadd.f32 %v438, %v2691
    %2693 = vmatmul.f32.gmra.mxu0 %v1522
    %v2694 = vpop.f32.mrf.mxu0
    %v2695 = vadd.f32 %v438, %v2694
    %2696 = vmatmul.f32.gmra.mxu0 %v1525
    %v2697 = vpop.f32.mrf.mxu0
    %v2698 = vadd.f32 %v438, %v2697
    %2699 = vmatmul.f32.gmra.mxu0 %v1528
    %v2700 = vpop.f32.mrf.mxu0
    %v2701 = vadd.f32 %v438, %v2700
    %2702 = vmatmul.f32.gmra.mxu0 %v1531
    %v2703 = vpop.f32.mrf.mxu0
    %v2704 = vadd.f32 %v438, %v2703
    %2705 = vmatmul.f32.gmra.mxu0 %v1534
    %v2706 = vpop.f32.mrf.mxu0
    %v2707 = vadd.f32 %v438, %v2706
    %2708 = vmatmul.f32.gmra.mxu0 %v1537
    %v2709 = vpop.f32.mrf.mxu0
    %v2710 = vadd.f32 %v438, %v2709
    %2711 = vmatmul.f32.gmra.mxu0 %v1540
    %v2712 = vpop.f32.mrf.mxu0
    %v2713 = vadd.f32 %v438, %v2712
    %2714 = vmatmul.f32.gmra.mxu0 %v1543
    %v2715 = vpop.f32.mrf.mxu0
    %v2716 = vadd.f32 %v438, %v2715
    %2717 = vmatmul.f32.gmra.mxu0 %v1546
    %v2718 = vpop.f32.mrf.mxu0
    %v2719 = vadd.f32 %v438, %v2718
    %2720 = vmatmul.f32.gmra.mxu0 %v1549
    %v2721 = vpop.f32.mrf.mxu0
    %v2722 = vadd.f32 %v438, %v2721
    %2723 = vmatmul.f32.gmra.mxu0 %v1552
    %v2724 = vpop.f32.mrf.mxu0
    %v2725 = vadd.f32 %v438, %v2724
    %2726 = vmatmul.f32.gmra.mxu0 %v1555
    %v2727 = vpop.f32.mrf.mxu0
    %v2728 = vadd.f32 %v438, %v2727
    %2729 = vmatmul.f32.gmra.mxu0 %v1558
    %v2730 = vpop.f32.mrf.mxu0
    %v2731 = vadd.f32 %v438, %v2730
    %2732 = vmatmul.f32.gmra.mxu0 %v1561
    %v2733 = vpop.f32.mrf.mxu0
    %v2734 = vadd.f32 %v438, %v2733
    %2735 = vmatmul.f32.gmra.mxu0 %v1564
    %v2736 = vpop.f32.mrf.mxu0
    %v2737 = vadd.f32 %v438, %v2736
    %2738 = vmatmul.f32.gmra.mxu0 %v1567
    %v2739 = vpop.f32.mrf.mxu0
    %v2740 = vadd.f32 %v438, %v2739
    %2741 = vmatmul.f32.gmra.mxu0 %v1570
    %v2742 = vpop.f32.mrf.mxu0
    %v2743 = vadd.f32 %v438, %v2742
    %2744 = vmatmul.f32.gmra.mxu0 %v1573
    %v2745 = vpop.f32.mrf.mxu0
    %v2746 = vadd.f32 %v438, %v2745
    %2747 = vmatmul.f32.gmra.mxu0 %v1576
    %v2748 = vpop.f32.mrf.mxu0
    %v2749 = vadd.f32 %v438, %v2748
    %2750 = vmatmul.f32.gmra.mxu0 %v1579
    %v2751 = vpop.f32.mrf.mxu0
    %v2752 = vadd.f32 %v438, %v2751
    %2753 = vmatmul.f32.gmra.mxu0 %v1582
    %v2754 = vpop.f32.mrf.mxu0
    %v2755 = vadd.f32 %v438, %v2754
    %2756 = vmatmul.f32.gmra.mxu0 %v1585
    %v2757 = vpop.f32.mrf.mxu0
    %v2758 = vadd.f32 %v438, %v2757
    %2759 = vmatmul.f32.gmra.mxu0 %v1588
    %v2760 = vpop.f32.mrf.mxu0
    %v2761 = vadd.f32 %v438, %v2760
    %2762 = vmatmul.f32.gmra.mxu0 %v1591
    %v2763 = vpop.f32.mrf.mxu0
    %v2764 = vadd.f32 %v438, %v2763
    %2765 = vdwg.mxu0
    %v2766 = vmax.f32 %v1615, 0.0
    %v2767 = vmax.f32 %v1618, 0.0
    %v2768 = vmax.f32 %v1621, 0.0
    %v2769 = vmax.f32 %v1624, 0.0
    %v2770 = vmax.f32 %v1627, 0.0
    %v2771 = vmax.f32 %v1630, 0.0
    %v2772 = vmax.f32 %v1633, 0.0
    %v2773 = vmax.f32 %v1636, 0.0
    %v2774 = vmax.f32 %v1639, 0.0
    %v2775 = vmax.f32 %v1642, 0.0
    %v2776 = vmax.f32 %v1645, 0.0
    %v2777 = vmax.f32 %v1648, 0.0
    %v2778 = vmax.f32 %v1651, 0.0
    %v2779 = vmax.f32 %v1654, 0.0
    %v2780 = vmax.f32 %v1657, 0.0
    %v2781 = vmax.f32 %v1660, 0.0
    %v2782 = vmax.f32 %v1663, 0.0
    %v2783 = vmax.f32 %v1666, 0.0
    %v2784 = vmax.f32 %v1669, 0.0
    %v2785 = vmax.f32 %v1672, 0.0
    %v2786 = vmax.f32 %v1675, 0.0
    %v2787 = vmax.f32 %v1678, 0.0
    %v2788 = vmax.f32 %v1681, 0.0
    %v2789 = vmax.f32 %v1684, 0.0
    %v2790 = vmax.f32 %v1687, 0.0
    %v2791 = vmax.f32 %v1690, 0.0
    %v2792 = vmax.f32 %v1693, 0.0
    %v2793 = vmax.f32 %v1696, 0.0
    %v2794 = vmax.f32 %v1699, 0.0
    %v2795 = vmax.f32 %v1702, 0.0
    %v2796 = vmax.f32 %v1705, 0.0
    %v2797 = vmax.f32 %v1708, 0.0
    %v2798 = vmax.f32 %v1711, 0.0
    %v2799 = vmax.f32 %v1714, 0.0
    %v2800 = vmax.f32 %v1717, 0.0
    %v2801 = vmax.f32 %v1720, 0.0
    %v2802 = vmax.f32 %v1723, 0.0
    %v2803 = vmax.f32 %v1726, 0.0
    %v2804 = vmax.f32 %v1729, 0.0
    %v2805 = vmax.f32 %v1732, 0.0
    %v2806 = vmax.f32 %v1735, 0.0
    %v2807 = vmax.f32 %v1738, 0.0
    %v2808 = vmax.f32 %v1741, 0.0
    %v2809 = vmax.f32 %v1744, 0.0
    %v2810 = vmax.f32 %v1747, 0.0
    %v2811 = vmax.f32 %v1750, 0.0
    %v2812 = vmax.f32 %v1753, 0.0
    %v2813 = vmax.f32 %v1756, 0.0
    %v2814 = vmax.f32 %v1759, 0.0
    %v2815 = vmax.f32 %v1762, 0.0
    %v2816 = vmax.f32 %v1765, 0.0
    %v2817 = vmax.f32 %v1768, 0.0
    %v2818 = vmax.f32 %v1771, 0.0
    %v2819 = vmax.f32 %v1774, 0.0
    %v2820 = vmax.f32 %v1777, 0.0
    %v2821 = vmax.f32 %v1780, 0.0
    %v2822 = vmax.f32 %v1783, 0.0
    %v2823 = vmax.f32 %v1786, 0.0
    %v2824 = vmax.f32 %v1789, 0.0
    %v2825 = vmax.f32 %v1792, 0.0
    %v2826 = vmax.f32 %v1795, 0.0
    %v2827 = vmax.f32 %v1798, 0.0
    %v2828 = vmax.f32 %v1801, 0.0
    %v2829 = vmax.f32 %v1804, 0.0
    %v2830 = vmax.f32 %v1807, 0.0
    %v2831 = vmax.f32 %v1810, 0.0
    %v2832 = vmax.f32 %v1813, 0.0
    %v2833 = vmax.f32 %v1816, 0.0
    %v2834 = vmax.f32 %v1819, 0.0
    %v2835 = vmax.f32 %v1822, 0.0
    %v2836 = vmax.f32 %v1825, 0.0
    %v2837 = vmax.f32 %v1828, 0.0
    %v2838 = vmax.f32 %v1831, 0.0
    %v2839 = vmax.f32 %v1834, 0.0
    %v2840 = vmax.f32 %v1837, 0.0
    %v2841 = vmax.f32 %v1840, 0.0
    %v2842 = vmax.f32 %v1843, 0.0
    %v2843 = vmax.f32 %v1846, 0.0
    %v2844 = vmax.f32 %v1849, 0.0
    %v2845 = vmax.f32 %v1852, 0.0
    %v2846 = vmax.f32 %v1855, 0.0
    %v2847 = vmax.f32 %v1858, 0.0
    %v2848 = vmax.f32 %v1861, 0.0
    %v2849 = vmax.f32 %v1864, 0.0
    %v2850 = vmax.f32 %v1867, 0.0
    %v2851 = vmax.f32 %v1870, 0.0
    %v2852 = vmax.f32 %v1873, 0.0
    %v2853 = vmax.f32 %v1876, 0.0
    %v2854 = vmax.f32 %v1879, 0.0
    %v2855 = vmax.f32 %v1882, 0.0
    %v2856 = vmax.f32 %v1885, 0.0
    %v2857 = vmax.f32 %v1888, 0.0
    %v2858 = vmax.f32 %v1891, 0.0
    %v2859 = vmax.f32 %v1894, 0.0
    %v2860 = vmax.f32 %v1897, 0.0
    %v2861 = vmax.f32 %v1900, 0.0
    %v2862 = vmax.f32 %v1903, 0.0
    %v2863 = vmax.f32 %v1906, 0.0
    %v2864 = vmax.f32 %v1909, 0.0
    %v2865 = vmax.f32 %v1912, 0.0
    %v2866 = vmax.f32 %v1915, 0.0
    %v2867 = vmax.f32 %v1918, 0.0
    %v2868 = vmax.f32 %v1921, 0.0
    %v2869 = vmax.f32 %v1924, 0.0
    %v2870 = vmax.f32 %v1927, 0.0
    %v2871 = vmax.f32 %v1930, 0.0
    %v2872 = vmax.f32 %v1933, 0.0
    %v2873 = vmax.f32 %v1936, 0.0
    %v2874 = vmax.f32 %v1939, 0.0
    %v2875 = vmax.f32 %v1942, 0.0
    %v2876 = vmax.f32 %v1945, 0.0
    %v2877 = vmax.f32 %v1948, 0.0
    %v2878 = vmax.f32 %v1951, 0.0
    %v2879 = vmax.f32 %v1954, 0.0
    %v2880 = vmax.f32 %v1957, 0.0
    %v2881 = vmax.f32 %v1960, 0.0
    %v2882 = vmax.f32 %v1963, 0.0
    %v2883 = vmax.f32 %v1966, 0.0
    %v2884 = vmax.f32 %v1969, 0.0
    %v2885 = vmax.f32 %v1972, 0.0
    %v2886 = vmax.f32 %v1975, 0.0
    %v2887 = vmax.f32 %v1978, 0.0
    %v2888 = vmax.f32 %v1981, 0.0
    %v2889 = vmax.f32 %v1984, 0.0
    %v2890 = vmax.f32 %v1987, 0.0
    %v2891 = vmax.f32 %v1990, 0.0
    %v2892 = vmax.f32 %v1993, 0.0
    %v2893 = vmax.f32 %v1996, 0.0
    %v2894 = vmax.f32 %v1999, 0.0
    %v2895 = vmax.f32 %v2002, 0.0
    %v2896 = vmax.f32 %v2005, 0.0
    %v2897 = vmax.f32 %v2008, 0.0
    %v2898 = vmax.f32 %v2011, 0.0
    %v2899 = vmax.f32 %v2014, 0.0
    %v2900 = vmax.f32 %v2017, 0.0
    %v2901 = vmax.f32 %v2020, 0.0
    %v2902 = vmax.f32 %v2023, 0.0
    %v2903 = vmax.f32 %v2026, 0.0
    %v2904 = vmax.f32 %v2029, 0.0
    %v2905 = vmax.f32 %v2032, 0.0
    %v2906 = vmax.f32 %v2035, 0.0
    %v2907 = vmax.f32 %v2038, 0.0
    %v2908 = vmax.f32 %v2041, 0.0
    %v2909 = vmax.f32 %v2044, 0.0
    %v2910 = vmax.f32 %v2047, 0.0
    %v2911 = vmax.f32 %v2050, 0.0
    %v2912 = vmax.f32 %v2053, 0.0
    %v2913 = vmax.f32 %v2056, 0.0
    %v2914 = vmax.f32 %v2059, 0.0
    %v2915 = vmax.f32 %v2062, 0.0
    %v2916 = vmax.f32 %v2065, 0.0
    %v2917 = vmax.f32 %v2068, 0.0
    %v2918 = vmax.f32 %v2071, 0.0
    %v2919 = vmax.f32 %v2074, 0.0
    %v2920 = vmax.f32 %v2077, 0.0
    %v2921 = vmax.f32 %v2080, 0.0
    %v2922 = vmax.f32 %v2083, 0.0
    %v2923 = vmax.f32 %v2086, 0.0
    %v2924 = vmax.f32 %v2089, 0.0
    %v2925 = vmax.f32 %v2092, 0.0
    %v2926 = vmax.f32 %v2095, 0.0
    %v2927 = vmax.f32 %v2098, 0.0
    %v2928 = vmax.f32 %v2101, 0.0
    %v2929 = vmax.f32 %v2104, 0.0
    %v2930 = vmax.f32 %v2107, 0.0
    %v2931 = vmax.f32 %v2110, 0.0
    %v2932 = vmax.f32 %v2113, 0.0
    %v2933 = vmax.f32 %v2116, 0.0
    %v2934 = vmax.f32 %v2119, 0.0
    %v2935 = vmax.f32 %v2122, 0.0
    %v2936 = vmax.f32 %v2125, 0.0
    %v2937 = vmax.f32 %v2128, 0.0
    %v2938 = vmax.f32 %v2131, 0.0
    %v2939 = vmax.f32 %v2134, 0.0
    %v2940 = vmax.f32 %v2137, 0.0
    %v2941 = vmax.f32 %v2140, 0.0
    %v2942 = vmax.f32 %v2143, 0.0
    %v2943 = vmax.f32 %v2146, 0.0
    %v2944 = vmax.f32 %v2149, 0.0
    %v2945 = vmax.f32 %v2152, 0.0
    %v2946 = vmax.f32 %v2155, 0.0
    %v2947 = vmax.f32 %v2158, 0.0
    %v2948 = vmax.f32 %v2161, 0.0
    %v2949 = vmax.f32 %v2164, 0.0
    %v2950 = vmax.f32 %v2167, 0.0
    %v2951 = vmax.f32 %v2170, 0.0
    %v2952 = vmax.f32 %v2173, 0.0
    %v2953 = vmax.f32 %v2176, 0.0
    %v2954 = vmax.f32 %v2179, 0.0
    %v2955 = vmax.f32 %v2182, 0.0
    %v2956 = vmax.f32 %v2185, 0.0
    %v2957 = vmax.f32 %v2188, 0.0
    %v2958 = vmax.f32 %v2191, 0.0
    %v2959 = vmax.f32 %v2194, 0.0
    %v2960 = vmax.f32 %v2197, 0.0
    %v2961 = vmax.f32 %v2200, 0.0
    %v2962 = vmax.f32 %v2203, 0.0
    %v2963 = vmax.f32 %v2206, 0.0
    %v2964 = vmax.f32 %v2209, 0.0
    %v2965 = vmax.f32 %v2212, 0.0
    %v2966 = vmax.f32 %v2215, 0.0
    %v2967 = vmax.f32 %v2218, 0.0
    %v2968 = vmax.f32 %v2221, 0.0
    %v2969 = vmax.f32 %v2224, 0.0
    %v2970 = vmax.f32 %v2227, 0.0
    %v2971 = vmax.f32 %v2230, 0.0
    %v2972 = vmax.f32 %v2233, 0.0
    %v2973 = vmax.f32 %v2236, 0.0
    %v2974 = vmax.f32 %v2239, 0.0
    %v2975 = vmax.f32 %v2242, 0.0
    %v2976 = vmax.f32 %v2245, 0.0
    %v2977 = vmax.f32 %v2248, 0.0
    %v2978 = vmax.f32 %v2251, 0.0
    %v2979 = vmax.f32 %v2254, 0.0
    %v2980 = vmax.f32 %v2257, 0.0
    %v2981 = vmax.f32 %v2260, 0.0
    %v2982 = vmax.f32 %v2263, 0.0
    %v2983 = vmax.f32 %v2266, 0.0
    %v2984 = vmax.f32 %v2269, 0.0
    %v2985 = vmax.f32 %v2272, 0.0
    %v2986 = vmax.f32 %v2275, 0.0
    %v2987 = vmax.f32 %v2278, 0.0
    %v2988 = vmax.f32 %v2281, 0.0
    %v2989 = vmax.f32 %v2284, 0.0
    %v2990 = vmax.f32 %v2287, 0.0
    %v2991 = vmax.f32 %v2290, 0.0
    %v2992 = vmax.f32 %v2293, 0.0
    %v2993 = vmax.f32 %v2296, 0.0
    %v2994 = vmax.f32 %v2299, 0.0
    %v2995 = vmax.f32 %v2302, 0.0
    %v2996 = vmax.f32 %v2305, 0.0
    %v2997 = vmax.f32 %v2308, 0.0
    %v2998 = vmax.f32 %v2311, 0.0
    %v2999 = vmax.f32 %v2314, 0.0
    %v3000 = vmax.f32 %v2317, 0.0
    %v3001 = vmax.f32 %v2320, 0.0
    %v3002 = vmax.f32 %v2323, 0.0
    %v3003 = vmax.f32 %v2326, 0.0
    %v3004 = vmax.f32 %v2329, 0.0
    %v3005 = vmax.f32 %v2332, 0.0
    %v3006 = vmax.f32 %v2335, 0.0
    %v3007 = vmax.f32 %v2338, 0.0
    %v3008 = vmax.f32 %v2341, 0.0
    %v3009 = vmax.f32 %v2344, 0.0
    %v3010 = vmax.f32 %v2347, 0.0
    %v3011 = vmax.f32 %v2350, 0.0
    %v3012 = vmax.f32 %v2353, 0.0
    %v3013 = vmax.f32 %v2356, 0.0
    %v3014 = vmax.f32 %v2359, 0.0
    %v3015 = vmax.f32 %v2362, 0.0
    %v3016 = vmax.f32 %v2365, 0.0
    %v3017 = vmax.f32 %v2368, 0.0
    %v3018 = vmax.f32 %v2371, 0.0
    %v3019 = vmax.f32 %v2374, 0.0
    %v3020 = vmax.f32 %v2377, 0.0
    %v3021 = vmax.f32 %v2380, 0.0
    %v3022 = vmax.f32 %v2383, 0.0
    %v3023 = vmax.f32 %v2386, 0.0
    %v3024 = vmax.f32 %v2389, 0.0
    %v3025 = vmax.f32 %v2392, 0.0
    %v3026 = vmax.f32 %v2395, 0.0
    %v3027 = vmax.f32 %v2398, 0.0
    %v3028 = vmax.f32 %v2401, 0.0
    %v3029 = vmax.f32 %v2404, 0.0
    %v3030 = vmax.f32 %v2407, 0.0
    %v3031 = vmax.f32 %v2410, 0.0
    %v3032 = vmax.f32 %v2413, 0.0
    %v3033 = vmax.f32 %v2416, 0.0
    %v3034 = vmax.f32 %v2419, 0.0
    %v3035 = vmax.f32 %v2422, 0.0
    %v3036 = vmax.f32 %v2425, 0.0
    %v3037 = vmax.f32 %v2428, 0.0
    %v3038 = vmax.f32 %v2431, 0.0
    %v3039 = vmax.f32 %v2434, 0.0
    %v3040 = vmax.f32 %v2437, 0.0
    %v3041 = vmax.f32 %v2440, 0.0
    %v3042 = vmax.f32 %v2443, 0.0
    %v3043 = vmax.f32 %v2446, 0.0
    %v3044 = vmax.f32 %v2449, 0.0
    %v3045 = vmax.f32 %v2452, 0.0
    %v3046 = vmax.f32 %v2455, 0.0
    %v3047 = vmax.f32 %v2458, 0.0
    %v3048 = vmax.f32 %v2461, 0.0
    %v3049 = vmax.f32 %v2464, 0.0
    %v3050 = vmax.f32 %v2467, 0.0
    %v3051 = vmax.f32 %v2470, 0.0
    %v3052 = vmax.f32 %v2473, 0.0
    %v3053 = vmax.f32 %v2476, 0.0
    %v3054 = vmax.f32 %v2479, 0.0
    %v3055 = vmax.f32 %v2482, 0.0
    %v3056 = vmax.f32 %v2485, 0.0
    %v3057 = vmax.f32 %v2488, 0.0
    %v3058 = vmax.f32 %v2491, 0.0
    %v3059 = vmax.f32 %v2494, 0.0
    %v3060 = vmax.f32 %v2497, 0.0
    %v3061 = vmax.f32 %v2500, 0.0
    %v3062 = vmax.f32 %v2503, 0.0
    %v3063 = vmax.f32 %v2506, 0.0
    %v3064 = vmax.f32 %v2509, 0.0
    %v3065 = vmax.f32 %v2512, 0.0
    %v3066 = vmax.f32 %v2515, 0.0
    %v3067 = vmax.f32 %v2518, 0.0
    %v3068 = vmax.f32 %v2521, 0.0
    %v3069 = vmax.f32 %v2524, 0.0
    %v3070 = vmax.f32 %v2527, 0.0
    %v3071 = vmax.f32 %v2530, 0.0
    %v3072 = vmax.f32 %v2533, 0.0
    %v3073 = vmax.f32 %v2536, 0.0
    %v3074 = vmax.f32 %v2539, 0.0
    %v3075 = vmax.f32 %v2542, 0.0
    %v3076 = vmax.f32 %v2545, 0.0
    %v3077 = vmax.f32 %v2548, 0.0
    %v3078 = vmax.f32 %v2551, 0.0
    %v3079 = vmax.f32 %v2554, 0.0
    %v3080 = vmax.f32 %v2557, 0.0
    %v3081 = vmax.f32 %v2560, 0.0
    %v3082 = vmax.f32 %v2563, 0.0
    %v3083 = vmax.f32 %v2566, 0.0
    %v3084 = vmax.f32 %v2569, 0.0
    %v3085 = vmax.f32 %v2572, 0.0
    %v3086 = vmax.f32 %v2575, 0.0
    %v3087 = vmax.f32 %v2578, 0.0
    %v3088 = vmax.f32 %v2581, 0.0
    %v3089 = vmax.f32 %v2584, 0.0
    %v3090 = vmax.f32 %v2587, 0.0
    %v3091 = vmax.f32 %v2590, 0.0
    %v3092 = vmax.f32 %v2593, 0.0
    %v3093 = vmax.f32 %v2596, 0.0
    %v3094 = vmax.f32 %v2599, 0.0
    %v3095 = vmax.f32 %v2602, 0.0
    %v3096 = vmax.f32 %v2605, 0.0
    %v3097 = vmax.f32 %v2608, 0.0
    %v3098 = vmax.f32 %v2611, 0.0
    %v3099 = vmax.f32 %v2614, 0.0
    %v3100 = vmax.f32 %v2617, 0.0
    %v3101 = vmax.f32 %v2620, 0.0
    %v3102 = vmax.f32 %v2623, 0.0
    %v3103 = vmax.f32 %v2626, 0.0
    %v3104 = vmax.f32 %v2629, 0.0
    %v3105 = vmax.f32 %v2632, 0.0
    %v3106 = vmax.f32 %v2635, 0.0
    %v3107 = vmax.f32 %v2638, 0.0
    %v3108 = vmax.f32 %v2641, 0.0
    %v3109 = vmax.f32 %v2644, 0.0
    %v3110 = vmax.f32 %v2647, 0.0
    %v3111 = vmax.f32 %v2650, 0.0
    %v3112 = vmax.f32 %v2653, 0.0
    %v3113 = vmax.f32 %v2656, 0.0
    %v3114 = vmax.f32 %v2659, 0.0
    %v3115 = vmax.f32 %v2662, 0.0
    %v3116 = vmax.f32 %v2665, 0.0
    %v3117 = vmax.f32 %v2668, 0.0
    %v3118 = vmax.f32 %v2671, 0.0
    %v3119 = vmax.f32 %v2674, 0.0
    %v3120 = vmax.f32 %v2677, 0.0
    %v3121 = vmax.f32 %v2680, 0.0
    %v3122 = vmax.f32 %v2683, 0.0
    %v3123 = vmax.f32 %v2686, 0.0
    %v3124 = vmax.f32 %v2689, 0.0
    %v3125 = vmax.f32 %v2692, 0.0
    %v3126 = vmax.f32 %v2695, 0.0
    %v3127 = vmax.f32 %v2698, 0.0
    %v3128 = vmax.f32 %v2701, 0.0
    %v3129 = vmax.f32 %v2704, 0.0
    %v3130 = vmax.f32 %v2707, 0.0
    %v3131 = vmax.f32 %v2710, 0.0
    %v3132 = vmax.f32 %v2713, 0.0
    %v3133 = vmax.f32 %v2716, 0.0
    %v3134 = vmax.f32 %v2719, 0.0
    %v3135 = vmax.f32 %v2722, 0.0
    %v3136 = vmax.f32 %v2725, 0.0
    %v3137 = vmax.f32 %v2728, 0.0
    %v3138 = vmax.f32 %v2731, 0.0
    %v3139 = vmax.f32 %v2734, 0.0
    %v3140 = vmax.f32 %v2737, 0.0
    %v3141 = vmax.f32 %v2740, 0.0
    %v3142 = vmax.f32 %v2743, 0.0
    %v3143 = vmax.f32 %v2746, 0.0
    %v3144 = vmax.f32 %v2749, 0.0
    %v3145 = vmax.f32 %v2752, 0.0
    %v3146 = vmax.f32 %v2755, 0.0
    %v3147 = vmax.f32 %v2758, 0.0
    %v3148 = vmax.f32 %v2761, 0.0
    %v3149 = vmax.f32 %v2764, 0.0
    %vm3150 = vcmask 64512
    %v3151 = vsel %vm3150, %v2766, 0.0
    %v3152 = vsel %vm3150, %v2767, 0.0
    %v3153 = vadd.f32 %v3151, %v3152
    %v3154 = vsel %vm3150, %v2768, 0.0
    %v3155 = vadd.f32 %v3153, %v3154
    %v3156 = vsel %vm3150, %v2769, 0.0
    %v3157 = vadd.f32 %v3155, %v3156
    %v3158 = vsel %vm3150, %v2770, 0.0
    %v3159 = vadd.f32 %v3157, %v3158
    %v3160 = vsel %vm3150, %v2771, 0.0
    %v3161 = vadd.f32 %v3159, %v3160
    %v3162 = vsel %vm3150, %v2772, 0.0
    %v3163 = vadd.f32 %v3161, %v3162
    %v3164 = vsel %vm3150, %v2773, 0.0
    %v3165 = vadd.f32 %v3163, %v3164
    %v3166 = vsel %vm3150, %v2774, 0.0
    %v3167 = vadd.f32 %v3165, %v3166
    %v3168 = vsel %vm3150, %v2775, 0.0
    %v3169 = vadd.f32 %v3167, %v3168
    %v3170 = vsel %vm3150, %v2776, 0.0
    %v3171 = vadd.f32 %v3169, %v3170
    %v3172 = vsel %vm3150, %v2777, 0.0
    %v3173 = vadd.f32 %v3171, %v3172
    %v3174 = vsel %vm3150, %v2778, 0.0
    %v3175 = vadd.f32 %v3173, %v3174
    %v3176 = vsel %vm3150, %v2779, 0.0
    %v3177 = vadd.f32 %v3175, %v3176
    %v3178 = vsel %vm3150, %v2780, 0.0
    %v3179 = vadd.f32 %v3177, %v3178
    %v3180 = vsel %vm3150, %v2781, 0.0
    %v3181 = vadd.f32 %v3179, %v3180
    %v3182 = vsel %vm3150, %v2782, 0.0
    %v3183 = vadd.f32 %v3181, %v3182
    %v3184 = vsel %vm3150, %v2783, 0.0
    %v3185 = vadd.f32 %v3183, %v3184
    %v3186 = vsel %vm3150, %v2784, 0.0
    %v3187 = vadd.f32 %v3185, %v3186
    %v3188 = vsel %vm3150, %v2785, 0.0
    %v3189 = vadd.f32 %v3187, %v3188
    %v3190 = vsel %vm3150, %v2786, 0.0
    %v3191 = vadd.f32 %v3189, %v3190
    %v3192 = vsel %vm3150, %v2787, 0.0
    %v3193 = vadd.f32 %v3191, %v3192
    %v3194 = vsel %vm3150, %v2788, 0.0
    %v3195 = vadd.f32 %v3193, %v3194
    %v3196 = vsel %vm3150, %v2789, 0.0
    %v3197 = vadd.f32 %v3195, %v3196
    %v3198 = vsel %vm3150, %v2790, 0.0
    %v3199 = vadd.f32 %v3197, %v3198
    %v3200 = vsel %vm3150, %v2791, 0.0
    %v3201 = vadd.f32 %v3199, %v3200
    %v3202 = vsel %vm3150, %v2792, 0.0
    %v3203 = vadd.f32 %v3201, %v3202
    %v3204 = vsel %vm3150, %v2793, 0.0
    %v3205 = vadd.f32 %v3203, %v3204
    %v3206 = vsel %vm3150, %v2794, 0.0
    %v3207 = vadd.f32 %v3205, %v3206
    %v3208 = vsel %vm3150, %v2795, 0.0
    %v3209 = vadd.f32 %v3207, %v3208
    %v3210 = vsel %vm3150, %v2796, 0.0
    %v3211 = vadd.f32 %v3209, %v3210
    %v3212 = vsel %vm3150, %v2797, 0.0
    %v3213 = vadd.f32 %v3211, %v3212
    %v3214 = vrot.slane %v3213, 4
    %v3215 = vadd.f32 %v3213, %v3214
    %v3216 = vrot.slane %v3215, 2
    %v3217 = vadd.f32 %v3215, %v3216
    %v3218 = vrot.slane %v3217, 1
    %v3219 = vadd.f32 %v3217, %v3218
    %v3220 = vsel %vm3150, %v2798, 0.0
    %v3221 = vsel %vm3150, %v2799, 0.0
    %v3222 = vadd.f32 %v3220, %v3221
    %v3223 = vsel %vm3150, %v2800, 0.0
    %v3224 = vadd.f32 %v3222, %v3223
    %v3225 = vsel %vm3150, %v2801, 0.0
    %v3226 = vadd.f32 %v3224, %v3225
    %v3227 = vsel %vm3150, %v2802, 0.0
    %v3228 = vadd.f32 %v3226, %v3227
    %v3229 = vsel %vm3150, %v2803, 0.0
    %v3230 = vadd.f32 %v3228, %v3229
    %v3231 = vsel %vm3150, %v2804, 0.0
    %v3232 = vadd.f32 %v3230, %v3231
    %v3233 = vsel %vm3150, %v2805, 0.0
    %v3234 = vadd.f32 %v3232, %v3233
    %v3235 = vsel %vm3150, %v2806, 0.0
    %v3236 = vadd.f32 %v3234, %v3235
    %v3237 = vsel %vm3150, %v2807, 0.0
    %v3238 = vadd.f32 %v3236, %v3237
    %v3239 = vsel %vm3150, %v2808, 0.0
    %v3240 = vadd.f32 %v3238, %v3239
    %v3241 = vsel %vm3150, %v2809, 0.0
    %v3242 = vadd.f32 %v3240, %v3241
    %v3243 = vsel %vm3150, %v2810, 0.0
    %v3244 = vadd.f32 %v3242, %v3243
    %v3245 = vsel %vm3150, %v2811, 0.0
    %v3246 = vadd.f32 %v3244, %v3245
    %v3247 = vsel %vm3150, %v2812, 0.0
    %v3248 = vadd.f32 %v3246, %v3247
    %v3249 = vsel %vm3150, %v2813, 0.0
    %v3250 = vadd.f32 %v3248, %v3249
    %v3251 = vsel %vm3150, %v2814, 0.0
    %v3252 = vadd.f32 %v3250, %v3251
    %v3253 = vsel %vm3150, %v2815, 0.0
    %v3254 = vadd.f32 %v3252, %v3253
    %v3255 = vsel %vm3150, %v2816, 0.0
    %v3256 = vadd.f32 %v3254, %v3255
    %v3257 = vsel %vm3150, %v2817, 0.0
    %v3258 = vadd.f32 %v3256, %v3257
    %v3259 = vsel %vm3150, %v2818, 0.0
    %v3260 = vadd.f32 %v3258, %v3259
    %v3261 = vsel %vm3150, %v2819, 0.0
    %v3262 = vadd.f32 %v3260, %v3261
    %v3263 = vsel %vm3150, %v2820, 0.0
    %v3264 = vadd.f32 %v3262, %v3263
    %v3265 = vsel %vm3150, %v2821, 0.0
    %v3266 = vadd.f32 %v3264, %v3265
    %v3267 = vsel %vm3150, %v2822, 0.0
    %v3268 = vadd.f32 %v3266, %v3267
    %v3269 = vsel %vm3150, %v2823, 0.0
    %v3270 = vadd.f32 %v3268, %v3269
    %v3271 = vsel %vm3150, %v2824, 0.0
    %v3272 = vadd.f32 %v3270, %v3271
    %v3273 = vsel %vm3150, %v2825, 0.0
    %v3274 = vadd.f32 %v3272, %v3273
    %v3275 = vsel %vm3150, %v2826, 0.0
    %v3276 = vadd.f32 %v3274, %v3275
    %v3277 = vsel %vm3150, %v2827, 0.0
    %v3278 = vadd.f32 %v3276, %v3277
    %v3279 = vsel %vm3150, %v2828, 0.0
    %v3280 = vadd.f32 %v3278, %v3279
    %v3281 = vsel %vm3150, %v2829, 0.0
    %v3282 = vadd.f32 %v3280, %v3281
    %v3283 = vrot.slane %v3282, 4
    %v3284 = vadd.f32 %v3282, %v3283
    %v3285 = vrot.slane %v3284, 2
    %v3286 = vadd.f32 %v3284, %v3285
    %v3287 = vrot.slane %v3286, 1
    %v3288 = vadd.f32 %v3286, %v3287
    %v3289 = vsel %vm3150, %v2830, 0.0
    %v3290 = vsel %vm3150, %v2831, 0.0
    %v3291 = vadd.f32 %v3289, %v3290
    %v3292 = vsel %vm3150, %v2832, 0.0
    %v3293 = vadd.f32 %v3291, %v3292
    %v3294 = vsel %vm3150, %v2833, 0.0
    %v3295 = vadd.f32 %v3293, %v3294
    %v3296 = vsel %vm3150, %v2834, 0.0
    %v3297 = vadd.f32 %v3295, %v3296
    %v3298 = vsel %vm3150, %v2835, 0.0
    %v3299 = vadd.f32 %v3297, %v3298
    %v3300 = vsel %vm3150, %v2836, 0.0
    %v3301 = vadd.f32 %v3299, %v3300
    %v3302 = vsel %vm3150, %v2837, 0.0
    %v3303 = vadd.f32 %v3301, %v3302
    %v3304 = vsel %vm3150, %v2838, 0.0
    %v3305 = vadd.f32 %v3303, %v3304
    %v3306 = vsel %vm3150, %v2839, 0.0
    %v3307 = vadd.f32 %v3305, %v3306
    %v3308 = vsel %vm3150, %v2840, 0.0
    %v3309 = vadd.f32 %v3307, %v3308
    %v3310 = vsel %vm3150, %v2841, 0.0
    %v3311 = vadd.f32 %v3309, %v3310
    %v3312 = vsel %vm3150, %v2842, 0.0
    %v3313 = vadd.f32 %v3311, %v3312
    %v3314 = vsel %vm3150, %v2843, 0.0
    %v3315 = vadd.f32 %v3313, %v3314
    %v3316 = vsel %vm3150, %v2844, 0.0
    %v3317 = vadd.f32 %v3315, %v3316
    %v3318 = vsel %vm3150, %v2845, 0.0
    %v3319 = vadd.f32 %v3317, %v3318
    %v3320 = vsel %vm3150, %v2846, 0.0
    %v3321 = vadd.f32 %v3319, %v3320
    %v3322 = vsel %vm3150, %v2847, 0.0
    %v3323 = vadd.f32 %v3321, %v3322
    %v3324 = vsel %vm3150, %v2848, 0.0
    %v3325 = vadd.f32 %v3323, %v3324
    %v3326 = vsel %vm3150, %v2849, 0.0
    %v3327 = vadd.f32 %v3325, %v3326
    %v3328 = vsel %vm3150, %v2850, 0.0
    %v3329 = vadd.f32 %v3327, %v3328
    %v3330 = vsel %vm3150, %v2851, 0.0
    %v3331 = vadd.f32 %v3329, %v3330
    %v3332 = vsel %vm3150, %v2852, 0.0
    %v3333 = vadd.f32 %v3331, %v3332
    %v3334 = vsel %vm3150, %v2853, 0.0
    %v3335 = vadd.f32 %v3333, %v3334
    %v3336 = vsel %vm3150, %v2854, 0.0
    %v3337 = vadd.f32 %v3335, %v3336
    %v3338 = vsel %vm3150, %v2855, 0.0
    %v3339 = vadd.f32 %v3337, %v3338
    %v3340 = vsel %vm3150, %v2856, 0.0
    %v3341 = vadd.f32 %v3339, %v3340
    %v3342 = vsel %vm3150, %v2857, 0.0
    %v3343 = vadd.f32 %v3341, %v3342
    %v3344 = vsel %vm3150, %v2858, 0.0
    %v3345 = vadd.f32 %v3343, %v3344
    %v3346 = vsel %vm3150, %v2859, 0.0
    %v3347 = vadd.f32 %v3345, %v3346
    %v3348 = vsel %vm3150, %v2860, 0.0
    %v3349 = vadd.f32 %v3347, %v3348
    %v3350 = vsel %vm3150, %v2861, 0.0
    %v3351 = vadd.f32 %v3349, %v3350
    %v3352 = vrot.slane %v3351, 4
    %v3353 = vadd.f32 %v3351, %v3352
    %v3354 = vrot.slane %v3353, 2
    %v3355 = vadd.f32 %v3353, %v3354
    %v3356 = vrot.slane %v3355, 1
    %v3357 = vadd.f32 %v3355, %v3356
    %v3358 = vsel %vm3150, %v2862, 0.0
    %v3359 = vsel %vm3150, %v2863, 0.0
    %v3360 = vadd.f32 %v3358, %v3359
    %v3361 = vsel %vm3150, %v2864, 0.0
    %v3362 = vadd.f32 %v3360, %v3361
    %v3363 = vsel %vm3150, %v2865, 0.0
    %v3364 = vadd.f32 %v3362, %v3363
    %v3365 = vsel %vm3150, %v2866, 0.0
    %v3366 = vadd.f32 %v3364, %v3365
    %v3367 = vsel %vm3150, %v2867, 0.0
    %v3368 = vadd.f32 %v3366, %v3367
    %v3369 = vsel %vm3150, %v2868, 0.0
    %v3370 = vadd.f32 %v3368, %v3369
    %v3371 = vsel %vm3150, %v2869, 0.0
    %v3372 = vadd.f32 %v3370, %v3371
    %v3373 = vsel %vm3150, %v2870, 0.0
    %v3374 = vadd.f32 %v3372, %v3373
    %v3375 = vsel %vm3150, %v2871, 0.0
    %v3376 = vadd.f32 %v3374, %v3375
    %v3377 = vsel %vm3150, %v2872, 0.0
    %v3378 = vadd.f32 %v3376, %v3377
    %v3379 = vsel %vm3150, %v2873, 0.0
    %v3380 = vadd.f32 %v3378, %v3379
    %v3381 = vsel %vm3150, %v2874, 0.0
    %v3382 = vadd.f32 %v3380, %v3381
    %v3383 = vsel %vm3150, %v2875, 0.0
    %v3384 = vadd.f32 %v3382, %v3383
    %v3385 = vsel %vm3150, %v2876, 0.0
    %v3386 = vadd.f32 %v3384, %v3385
    %v3387 = vsel %vm3150, %v2877, 0.0
    %v3388 = vadd.f32 %v3386, %v3387
    %v3389 = vsel %vm3150, %v2878, 0.0
    %v3390 = vadd.f32 %v3388, %v3389
    %v3391 = vsel %vm3150, %v2879, 0.0
    %v3392 = vadd.f32 %v3390, %v3391
    %v3393 = vsel %vm3150, %v2880, 0.0
    %v3394 = vadd.f32 %v3392, %v3393
    %v3395 = vsel %vm3150, %v2881, 0.0
    %v3396 = vadd.f32 %v3394, %v3395
    %v3397 = vsel %vm3150, %v2882, 0.0
    %v3398 = vadd.f32 %v3396, %v3397
    %v3399 = vsel %vm3150, %v2883, 0.0
    %v3400 = vadd.f32 %v3398, %v3399
    %v3401 = vsel %vm3150, %v2884, 0.0
    %v3402 = vadd.f32 %v3400, %v3401
    %v3403 = vsel %vm3150, %v2885, 0.0
    %v3404 = vadd.f32 %v3402, %v3403
    %v3405 = vsel %vm3150, %v2886, 0.0
    %v3406 = vadd.f32 %v3404, %v3405
    %v3407 = vsel %vm3150, %v2887, 0.0
    %v3408 = vadd.f32 %v3406, %v3407
    %v3409 = vsel %vm3150, %v2888, 0.0
    %v3410 = vadd.f32 %v3408, %v3409
    %v3411 = vsel %vm3150, %v2889, 0.0
    %v3412 = vadd.f32 %v3410, %v3411
    %v3413 = vsel %vm3150, %v2890, 0.0
    %v3414 = vadd.f32 %v3412, %v3413
    %v3415 = vsel %vm3150, %v2891, 0.0
    %v3416 = vadd.f32 %v3414, %v3415
    %v3417 = vsel %vm3150, %v2892, 0.0
    %v3418 = vadd.f32 %v3416, %v3417
    %v3419 = vsel %vm3150, %v2893, 0.0
    %v3420 = vadd.f32 %v3418, %v3419
    %v3421 = vrot.slane %v3420, 4
    %v3422 = vadd.f32 %v3420, %v3421
    %v3423 = vrot.slane %v3422, 2
    %v3424 = vadd.f32 %v3422, %v3423
    %v3425 = vrot.slane %v3424, 1
    %v3426 = vadd.f32 %v3424, %v3425
    %v3427 = vsel %vm3150, %v2894, 0.0
    %v3428 = vsel %vm3150, %v2895, 0.0
    %v3429 = vadd.f32 %v3427, %v3428
    %v3430 = vsel %vm3150, %v2896, 0.0
    %v3431 = vadd.f32 %v3429, %v3430
    %v3432 = vsel %vm3150, %v2897, 0.0
    %v3433 = vadd.f32 %v3431, %v3432
    %v3434 = vsel %vm3150, %v2898, 0.0
    %v3435 = vadd.f32 %v3433, %v3434
    %v3436 = vsel %vm3150, %v2899, 0.0
    %v3437 = vadd.f32 %v3435, %v3436
    %v3438 = vsel %vm3150, %v2900, 0.0
    %v3439 = vadd.f32 %v3437, %v3438
    %v3440 = vsel %vm3150, %v2901, 0.0
    %v3441 = vadd.f32 %v3439, %v3440
    %v3442 = vsel %vm3150, %v2902, 0.0
    %v3443 = vadd.f32 %v3441, %v3442
    %v3444 = vsel %vm3150, %v2903, 0.0
    %v3445 = vadd.f32 %v3443, %v3444
    %v3446 = vsel %vm3150, %v2904, 0.0
    %v3447 = vadd.f32 %v3445, %v3446
    %v3448 = vsel %vm3150, %v2905, 0.0
    %v3449 = vadd.f32 %v3447, %v3448
    %v3450 = vsel %vm3150, %v2906, 0.0
    %v3451 = vadd.f32 %v3449, %v3450
    %v3452 = vsel %vm3150, %v2907, 0.0
    %v3453 = vadd.f32 %v3451, %v3452
    %v3454 = vsel %vm3150, %v2908, 0.0
    %v3455 = vadd.f32 %v3453, %v3454
    %v3456 = vsel %vm3150, %v2909, 0.0
    %v3457 = vadd.f32 %v3455, %v3456
    %v3458 = vsel %vm3150, %v2910, 0.0
    %v3459 = vadd.f32 %v3457, %v3458
    %v3460 = vsel %vm3150, %v2911, 0.0
    %v3461 = vadd.f32 %v3459, %v3460
    %v3462 = vsel %vm3150, %v2912, 0.0
    %v3463 = vadd.f32 %v3461, %v3462
    %v3464 = vsel %vm3150, %v2913, 0.0
    %v3465 = vadd.f32 %v3463, %v3464
    %v3466 = vsel %vm3150, %v2914, 0.0
    %v3467 = vadd.f32 %v3465, %v3466
    %v3468 = vsel %vm3150, %v2915, 0.0
    %v3469 = vadd.f32 %v3467, %v3468
    %v3470 = vsel %vm3150, %v2916, 0.0
    %v3471 = vadd.f32 %v3469, %v3470
    %v3472 = vsel %vm3150, %v2917, 0.0
    %v3473 = vadd.f32 %v3471, %v3472
    %v3474 = vsel %vm3150, %v2918, 0.0
    %v3475 = vadd.f32 %v3473, %v3474
    %v3476 = vsel %vm3150, %v2919, 0.0
    %v3477 = vadd.f32 %v3475, %v3476
    %v3478 = vsel %vm3150, %v2920, 0.0
    %v3479 = vadd.f32 %v3477, %v3478
    %v3480 = vsel %vm3150, %v2921, 0.0
    %v3481 = vadd.f32 %v3479, %v3480
    %v3482 = vsel %vm3150, %v2922, 0.0
    %v3483 = vadd.f32 %v3481, %v3482
    %v3484 = vsel %vm3150, %v2923, 0.0
    %v3485 = vadd.f32 %v3483, %v3484
    %v3486 = vsel %vm3150, %v2924, 0.0
    %v3487 = vadd.f32 %v3485, %v3486
    %v3488 = vsel %vm3150, %v2925, 0.0
    %v3489 = vadd.f32 %v3487, %v3488
    %v3490 = vrot.slane %v3489, 4
    %v3491 = vadd.f32 %v3489, %v3490
    %v3492 = vrot.slane %v3491, 2
    %v3493 = vadd.f32 %v3491, %v3492
    %v3494 = vrot.slane %v3493, 1
    %v3495 = vadd.f32 %v3493, %v3494
    %v3496 = vsel %vm3150, %v2926, 0.0
    %v3497 = vsel %vm3150, %v2927, 0.0
    %v3498 = vadd.f32 %v3496, %v3497
    %v3499 = vsel %vm3150, %v2928, 0.0
    %v3500 = vadd.f32 %v3498, %v3499
    %v3501 = vsel %vm3150, %v2929, 0.0
    %v3502 = vadd.f32 %v3500, %v3501
    %v3503 = vsel %vm3150, %v2930, 0.0
    %v3504 = vadd.f32 %v3502, %v3503
    %v3505 = vsel %vm3150, %v2931, 0.0
    %v3506 = vadd.f32 %v3504, %v3505
    %v3507 = vsel %vm3150, %v2932, 0.0
    %v3508 = vadd.f32 %v3506, %v3507
    %v3509 = vsel %vm3150, %v2933, 0.0
    %v3510 = vadd.f32 %v3508, %v3509
    %v3511 = vsel %vm3150, %v2934, 0.0
    %v3512 = vadd.f32 %v3510, %v3511
    %v3513 = vsel %vm3150, %v2935, 0.0
    %v3514 = vadd.f32 %v3512, %v3513
    %v3515 = vsel %vm3150, %v2936, 0.0
    %v3516 = vadd.f32 %v3514, %v3515
    %v3517 = vsel %vm3150, %v2937, 0.0
    %v3518 = vadd.f32 %v3516, %v3517
    %v3519 = vsel %vm3150, %v2938, 0.0
    %v3520 = vadd.f32 %v3518, %v3519
    %v3521 = vsel %vm3150, %v2939, 0.0
    %v3522 = vadd.f32 %v3520, %v3521
    %v3523 = vsel %vm3150, %v2940, 0.0
    %v3524 = vadd.f32 %v3522, %v3523
    %v3525 = vsel %vm3150, %v2941, 0.0
    %v3526 = vadd.f32 %v3524, %v3525
    %v3527 = vsel %vm3150, %v2942, 0.0
    %v3528 = vadd.f32 %v3526, %v3527
    %v3529 = vsel %vm3150, %v2943, 0.0
    %v3530 = vadd.f32 %v3528, %v3529
    %v3531 = vsel %vm3150, %v2944, 0.0
    %v3532 = vadd.f32 %v3530, %v3531
    %v3533 = vsel %vm3150, %v2945, 0.0
    %v3534 = vadd.f32 %v3532, %v3533
    %v3535 = vsel %vm3150, %v2946, 0.0
    %v3536 = vadd.f32 %v3534, %v3535
    %v3537 = vsel %vm3150, %v2947, 0.0
    %v3538 = vadd.f32 %v3536, %v3537
    %v3539 = vsel %vm3150, %v2948, 0.0
    %v3540 = vadd.f32 %v3538, %v3539
    %v3541 = vsel %vm3150, %v2949, 0.0
    %v3542 = vadd.f32 %v3540, %v3541
    %v3543 = vsel %vm3150, %v2950, 0.0
    %v3544 = vadd.f32 %v3542, %v3543
    %v3545 = vsel %vm3150, %v2951, 0.0
    %v3546 = vadd.f32 %v3544, %v3545
    %v3547 = vsel %vm3150, %v2952, 0.0
    %v3548 = vadd.f32 %v3546, %v3547
    %v3549 = vsel %vm3150, %v2953, 0.0
    %v3550 = vadd.f32 %v3548, %v3549
    %v3551 = vsel %vm3150, %v2954, 0.0
    %v3552 = vadd.f32 %v3550, %v3551
    %v3553 = vsel %vm3150, %v2955, 0.0
    %v3554 = vadd.f32 %v3552, %v3553
    %v3555 = vsel %vm3150, %v2956, 0.0
    %v3556 = vadd.f32 %v3554, %v3555
    %v3557 = vsel %vm3150, %v2957, 0.0
    %v3558 = vadd.f32 %v3556, %v3557
    %v3559 = vrot.slane %v3558, 4
    %v3560 = vadd.f32 %v3558, %v3559
    %v3561 = vrot.slane %v3560, 2
    %v3562 = vadd.f32 %v3560, %v3561
    %v3563 = vrot.slane %v3562, 1
    %v3564 = vadd.f32 %v3562, %v3563
    %v3565 = vsel %vm3150, %v2958, 0.0
    %v3566 = vsel %vm3150, %v2959, 0.0
    %v3567 = vadd.f32 %v3565, %v3566
    %v3568 = vsel %vm3150, %v2960, 0.0
    %v3569 = vadd.f32 %v3567, %v3568
    %v3570 = vsel %vm3150, %v2961, 0.0
    %v3571 = vadd.f32 %v3569, %v3570
    %v3572 = vsel %vm3150, %v2962, 0.0
    %v3573 = vadd.f32 %v3571, %v3572
    %v3574 = vsel %vm3150, %v2963, 0.0
    %v3575 = vadd.f32 %v3573, %v3574
    %v3576 = vsel %vm3150, %v2964, 0.0
    %v3577 = vadd.f32 %v3575, %v3576
    %v3578 = vsel %vm3150, %v2965, 0.0
    %v3579 = vadd.f32 %v3577, %v3578
    %v3580 = vsel %vm3150, %v2966, 0.0
    %v3581 = vadd.f32 %v3579, %v3580
    %v3582 = vsel %vm3150, %v2967, 0.0
    %v3583 = vadd.f32 %v3581, %v3582
    %v3584 = vsel %vm3150, %v2968, 0.0
    %v3585 = vadd.f32 %v3583, %v3584
    %v3586 = vsel %vm3150, %v2969, 0.0
    %v3587 = vadd.f32 %v3585, %v3586
    %v3588 = vsel %vm3150, %v2970, 0.0
    %v3589 = vadd.f32 %v3587, %v3588
    %v3590 = vsel %vm3150, %v2971, 0.0
    %v3591 = vadd.f32 %v3589, %v3590
    %v3592 = vsel %vm3150, %v2972, 0.0
    %v3593 = vadd.f32 %v3591, %v3592
    %v3594 = vsel %vm3150, %v2973, 0.0
    %v3595 = vadd.f32 %v3593, %v3594
    %v3596 = vsel %vm3150, %v2974, 0.0
    %v3597 = vadd.f32 %v3595, %v3596
    %v3598 = vsel %vm3150, %v2975, 0.0
    %v3599 = vadd.f32 %v3597, %v3598
    %v3600 = vsel %vm3150, %v2976, 0.0
    %v3601 = vadd.f32 %v3599, %v3600
    %v3602 = vsel %vm3150, %v2977, 0.0
    %v3603 = vadd.f32 %v3601, %v3602
    %v3604 = vsel %vm3150, %v2978, 0.0
    %v3605 = vadd.f32 %v3603, %v3604
    %v3606 = vsel %vm3150, %v2979, 0.0
    %v3607 = vadd.f32 %v3605, %v3606
    %v3608 = vsel %vm3150, %v2980, 0.0
    %v3609 = vadd.f32 %v3607, %v3608
    %v3610 = vsel %vm3150, %v2981, 0.0
    %v3611 = vadd.f32 %v3609, %v3610
    %v3612 = vsel %vm3150, %v2982, 0.0
    %v3613 = vadd.f32 %v3611, %v3612
    %v3614 = vsel %vm3150, %v2983, 0.0
    %v3615 = vadd.f32 %v3613, %v3614
    %v3616 = vsel %vm3150, %v2984, 0.0
    %v3617 = vadd.f32 %v3615, %v3616
    %v3618 = vsel %vm3150, %v2985, 0.0
    %v3619 = vadd.f32 %v3617, %v3618
    %v3620 = vsel %vm3150, %v2986, 0.0
    %v3621 = vadd.f32 %v3619, %v3620
    %v3622 = vsel %vm3150, %v2987, 0.0
    %v3623 = vadd.f32 %v3621, %v3622
    %v3624 = vsel %vm3150, %v2988, 0.0
    %v3625 = vadd.f32 %v3623, %v3624
    %v3626 = vsel %vm3150, %v2989, 0.0
    %v3627 = vadd.f32 %v3625, %v3626
    %v3628 = vrot.slane %v3627, 4
    %v3629 = vadd.f32 %v3627, %v3628
    %v3630 = vrot.slane %v3629, 2
    %v3631 = vadd.f32 %v3629, %v3630
    %v3632 = vrot.slane %v3631, 1
    %v3633 = vadd.f32 %v3631, %v3632
    %v3634 = vsel %vm3150, %v2990, 0.0
    %v3635 = vsel %vm3150, %v2991, 0.0
    %v3636 = vadd.f32 %v3634, %v3635
    %v3637 = vsel %vm3150, %v2992, 0.0
    %v3638 = vadd.f32 %v3636, %v3637
    %v3639 = vsel %vm3150, %v2993, 0.0
    %v3640 = vadd.f32 %v3638, %v3639
    %v3641 = vsel %vm3150, %v2994, 0.0
    %v3642 = vadd.f32 %v3640, %v3641
    %v3643 = vsel %vm3150, %v2995, 0.0
    %v3644 = vadd.f32 %v3642, %v3643
    %v3645 = vsel %vm3150, %v2996, 0.0
    %v3646 = vadd.f32 %v3644, %v3645
    %v3647 = vsel %vm3150, %v2997, 0.0
    %v3648 = vadd.f32 %v3646, %v3647
    %v3649 = vsel %vm3150, %v2998, 0.0
    %v3650 = vadd.f32 %v3648, %v3649
    %v3651 = vsel %vm3150, %v2999, 0.0
    %v3652 = vadd.f32 %v3650, %v3651
    %v3653 = vsel %vm3150, %v3000, 0.0
    %v3654 = vadd.f32 %v3652, %v3653
    %v3655 = vsel %vm3150, %v3001, 0.0
    %v3656 = vadd.f32 %v3654, %v3655
    %v3657 = vsel %vm3150, %v3002, 0.0
    %v3658 = vadd.f32 %v3656, %v3657
    %v3659 = vsel %vm3150, %v3003, 0.0
    %v3660 = vadd.f32 %v3658, %v3659
    %v3661 = vsel %vm3150, %v3004, 0.0
    %v3662 = vadd.f32 %v3660, %v3661
    %v3663 = vsel %vm3150, %v3005, 0.0
    %v3664 = vadd.f32 %v3662, %v3663
    %v3665 = vsel %vm3150, %v3006, 0.0
    %v3666 = vadd.f32 %v3664, %v3665
    %v3667 = vsel %vm3150, %v3007, 0.0
    %v3668 = vadd.f32 %v3666, %v3667
    %v3669 = vsel %vm3150, %v3008, 0.0
    %v3670 = vadd.f32 %v3668, %v3669
    %v3671 = vsel %vm3150, %v3009, 0.0
    %v3672 = vadd.f32 %v3670, %v3671
    %v3673 = vsel %vm3150, %v3010, 0.0
    %v3674 = vadd.f32 %v3672, %v3673
    %v3675 = vsel %vm3150, %v3011, 0.0
    %v3676 = vadd.f32 %v3674, %v3675
    %v3677 = vsel %vm3150, %v3012, 0.0
    %v3678 = vadd.f32 %v3676, %v3677
    %v3679 = vsel %vm3150, %v3013, 0.0
    %v3680 = vadd.f32 %v3678, %v3679
    %v3681 = vsel %vm3150, %v3014, 0.0
    %v3682 = vadd.f32 %v3680, %v3681
    %v3683 = vsel %vm3150, %v3015, 0.0
    %v3684 = vadd.f32 %v3682, %v3683
    %v3685 = vsel %vm3150, %v3016, 0.0
    %v3686 = vadd.f32 %v3684, %v3685
    %v3687 = vsel %vm3150, %v3017, 0.0
    %v3688 = vadd.f32 %v3686, %v3687
    %v3689 = vsel %vm3150, %v3018, 0.0
    %v3690 = vadd.f32 %v3688, %v3689
    %v3691 = vsel %vm3150, %v3019, 0.0
    %v3692 = vadd.f32 %v3690, %v3691
    %v3693 = vsel %vm3150, %v3020, 0.0
    %v3694 = vadd.f32 %v3692, %v3693
    %v3695 = vsel %vm3150, %v3021, 0.0
    %v3696 = vadd.f32 %v3694, %v3695
    %v3697 = vrot.slane %v3696, 4
    %v3698 = vadd.f32 %v3696, %v3697
    %v3699 = vrot.slane %v3698, 2
    %v3700 = vadd.f32 %v3698, %v3699
    %v3701 = vrot.slane %v3700, 1
    %v3702 = vadd.f32 %v3700, %v3701
    %v3703 = vsel %vm3150, %v3022, 0.0
    %v3704 = vsel %vm3150, %v3023, 0.0
    %v3705 = vadd.f32 %v3703, %v3704
    %v3706 = vsel %vm3150, %v3024, 0.0
    %v3707 = vadd.f32 %v3705, %v3706
    %v3708 = vsel %vm3150, %v3025, 0.0
    %v3709 = vadd.f32 %v3707, %v3708
    %v3710 = vsel %vm3150, %v3026, 0.0
    %v3711 = vadd.f32 %v3709, %v3710
    %v3712 = vsel %vm3150, %v3027, 0.0
    %v3713 = vadd.f32 %v3711, %v3712
    %v3714 = vsel %vm3150, %v3028, 0.0
    %v3715 = vadd.f32 %v3713, %v3714
    %v3716 = vsel %vm3150, %v3029, 0.0
    %v3717 = vadd.f32 %v3715, %v3716
    %v3718 = vsel %vm3150, %v3030, 0.0
    %v3719 = vadd.f32 %v3717, %v3718
    %v3720 = vsel %vm3150, %v3031, 0.0
    %v3721 = vadd.f32 %v3719, %v3720
    %v3722 = vsel %vm3150, %v3032, 0.0
    %v3723 = vadd.f32 %v3721, %v3722
    %v3724 = vsel %vm3150, %v3033, 0.0
    %v3725 = vadd.f32 %v3723, %v3724
    %v3726 = vsel %vm3150, %v3034, 0.0
    %v3727 = vadd.f32 %v3725, %v3726
    %v3728 = vsel %vm3150, %v3035, 0.0
    %v3729 = vadd.f32 %v3727, %v3728
    %v3730 = vsel %vm3150, %v3036, 0.0
    %v3731 = vadd.f32 %v3729, %v3730
    %v3732 = vsel %vm3150, %v3037, 0.0
    %v3733 = vadd.f32 %v3731, %v3732
    %v3734 = vsel %vm3150, %v3038, 0.0
    %v3735 = vadd.f32 %v3733, %v3734
    %v3736 = vsel %vm3150, %v3039, 0.0
    %v3737 = vadd.f32 %v3735, %v3736
    %v3738 = vsel %vm3150, %v3040, 0.0
    %v3739 = vadd.f32 %v3737, %v3738
    %v3740 = vsel %vm3150, %v3041, 0.0
    %v3741 = vadd.f32 %v3739, %v3740
    %v3742 = vsel %vm3150, %v3042, 0.0
    %v3743 = vadd.f32 %v3741, %v3742
    %v3744 = vsel %vm3150, %v3043, 0.0
    %v3745 = vadd.f32 %v3743, %v3744
    %v3746 = vsel %vm3150, %v3044, 0.0
    %v3747 = vadd.f32 %v3745, %v3746
    %v3748 = vsel %vm3150, %v3045, 0.0
    %v3749 = vadd.f32 %v3747, %v3748
    %v3750 = vsel %vm3150, %v3046, 0.0
    %v3751 = vadd.f32 %v3749, %v3750
    %v3752 = vsel %vm3150, %v3047, 0.0
    %v3753 = vadd.f32 %v3751, %v3752
    %v3754 = vsel %vm3150, %v3048, 0.0
    %v3755 = vadd.f32 %v3753, %v3754
    %v3756 = vsel %vm3150, %v3049, 0.0
    %v3757 = vadd.f32 %v3755, %v3756
    %v3758 = vsel %vm3150, %v3050, 0.0
    %v3759 = vadd.f32 %v3757, %v3758
    %v3760 = vsel %vm3150, %v3051, 0.0
    %v3761 = vadd.f32 %v3759, %v3760
    %v3762 = vsel %vm3150, %v3052, 0.0
    %v3763 = vadd.f32 %v3761, %v3762
    %v3764 = vsel %vm3150, %v3053, 0.0
    %v3765 = vadd.f32 %v3763, %v3764
    %v3766 = vrot.slane %v3765, 4
    %v3767 = vadd.f32 %v3765, %v3766
    %v3768 = vrot.slane %v3767, 2
    %v3769 = vadd.f32 %v3767, %v3768
    %v3770 = vrot.slane %v3769, 1
    %v3771 = vadd.f32 %v3769, %v3770
    %v3772 = vsel %vm3150, %v3054, 0.0
    %v3773 = vsel %vm3150, %v3055, 0.0
    %v3774 = vadd.f32 %v3772, %v3773
    %v3775 = vsel %vm3150, %v3056, 0.0
    %v3776 = vadd.f32 %v3774, %v3775
    %v3777 = vsel %vm3150, %v3057, 0.0
    %v3778 = vadd.f32 %v3776, %v3777
    %v3779 = vsel %vm3150, %v3058, 0.0
    %v3780 = vadd.f32 %v3778, %v3779
    %v3781 = vsel %vm3150, %v3059, 0.0
    %v3782 = vadd.f32 %v3780, %v3781
    %v3783 = vsel %vm3150, %v3060, 0.0
    %v3784 = vadd.f32 %v3782, %v3783
    %v3785 = vsel %vm3150, %v3061, 0.0
    %v3786 = vadd.f32 %v3784, %v3785
    %v3787 = vsel %vm3150, %v3062, 0.0
    %v3788 = vadd.f32 %v3786, %v3787
    %v3789 = vsel %vm3150, %v3063, 0.0
    %v3790 = vadd.f32 %v3788, %v3789
    %v3791 = vsel %vm3150, %v3064, 0.0
    %v3792 = vadd.f32 %v3790, %v3791
    %v3793 = vsel %vm3150, %v3065, 0.0
    %v3794 = vadd.f32 %v3792, %v3793
    %v3795 = vsel %vm3150, %v3066, 0.0
    %v3796 = vadd.f32 %v3794, %v3795
    %v3797 = vsel %vm3150, %v3067, 0.0
    %v3798 = vadd.f32 %v3796, %v3797
    %v3799 = vsel %vm3150, %v3068, 0.0
    %v3800 = vadd.f32 %v3798, %v3799
    %v3801 = vsel %vm3150, %v3069, 0.0
    %v3802 = vadd.f32 %v3800, %v3801
    %v3803 = vsel %vm3150, %v3070, 0.0
    %v3804 = vadd.f32 %v3802, %v3803
    %v3805 = vsel %vm3150, %v3071, 0.0
    %v3806 = vadd.f32 %v3804, %v3805
    %v3807 = vsel %vm3150, %v3072, 0.0
    %v3808 = vadd.f32 %v3806, %v3807
    %v3809 = vsel %vm3150, %v3073, 0.0
    %v3810 = vadd.f32 %v3808, %v3809
    %v3811 = vsel %vm3150, %v3074, 0.0
    %v3812 = vadd.f32 %v3810, %v3811
    %v3813 = vsel %vm3150, %v3075, 0.0
    %v3814 = vadd.f32 %v3812, %v3813
    %v3815 = vsel %vm3150, %v3076, 0.0
    %v3816 = vadd.f32 %v3814, %v3815
    %v3817 = vsel %vm3150, %v3077, 0.0
    %v3818 = vadd.f32 %v3816, %v3817
    %v3819 = vsel %vm3150, %v3078, 0.0
    %v3820 = vadd.f32 %v3818, %v3819
    %v3821 = vsel %vm3150, %v3079, 0.0
    %v3822 = vadd.f32 %v3820, %v3821
    %v3823 = vsel %vm3150, %v3080, 0.0
    %v3824 = vadd.f32 %v3822, %v3823
    %v3825 = vsel %vm3150, %v3081, 0.0
    %v3826 = vadd.f32 %v3824, %v3825
    %v3827 = vsel %vm3150, %v3082, 0.0
    %v3828 = vadd.f32 %v3826, %v3827
    %v3829 = vsel %vm3150, %v3083, 0.0
    %v3830 = vadd.f32 %v3828, %v3829
    %v3831 = vsel %vm3150, %v3084, 0.0
    %v3832 = vadd.f32 %v3830, %v3831
    %v3833 = vsel %vm3150, %v3085, 0.0
    %v3834 = vadd.f32 %v3832, %v3833
    %v3835 = vrot.slane %v3834, 4
    %v3836 = vadd.f32 %v3834, %v3835
    %v3837 = vrot.slane %v3836, 2
    %v3838 = vadd.f32 %v3836, %v3837
    %v3839 = vrot.slane %v3838, 1
    %v3840 = vadd.f32 %v3838, %v3839
    %v3841 = vsel %vm3150, %v3086, 0.0
    %v3842 = vsel %vm3150, %v3087, 0.0
    %v3843 = vadd.f32 %v3841, %v3842
    %v3844 = vsel %vm3150, %v3088, 0.0
    %v3845 = vadd.f32 %v3843, %v3844
    %v3846 = vsel %vm3150, %v3089, 0.0
    %v3847 = vadd.f32 %v3845, %v3846
    %v3848 = vsel %vm3150, %v3090, 0.0
    %v3849 = vadd.f32 %v3847, %v3848
    %v3850 = vsel %vm3150, %v3091, 0.0
    %v3851 = vadd.f32 %v3849, %v3850
    %v3852 = vsel %vm3150, %v3092, 0.0
    %v3853 = vadd.f32 %v3851, %v3852
    %v3854 = vsel %vm3150, %v3093, 0.0
    %v3855 = vadd.f32 %v3853, %v3854
    %v3856 = vsel %vm3150, %v3094, 0.0
    %v3857 = vadd.f32 %v3855, %v3856
    %v3858 = vsel %vm3150, %v3095, 0.0
    %v3859 = vadd.f32 %v3857, %v3858
    %v3860 = vsel %vm3150, %v3096, 0.0
    %v3861 = vadd.f32 %v3859, %v3860
    %v3862 = vsel %vm3150, %v3097, 0.0
    %v3863 = vadd.f32 %v3861, %v3862
    %v3864 = vsel %vm3150, %v3098, 0.0
    %v3865 = vadd.f32 %v3863, %v3864
    %v3866 = vsel %vm3150, %v3099, 0.0
    %v3867 = vadd.f32 %v3865, %v3866
    %v3868 = vsel %vm3150, %v3100, 0.0
    %v3869 = vadd.f32 %v3867, %v3868
    %v3870 = vsel %vm3150, %v3101, 0.0
    %v3871 = vadd.f32 %v3869, %v3870
    %v3872 = vsel %vm3150, %v3102, 0.0
    %v3873 = vadd.f32 %v3871, %v3872
    %v3874 = vsel %vm3150, %v3103, 0.0
    %v3875 = vadd.f32 %v3873, %v3874
    %v3876 = vsel %vm3150, %v3104, 0.0
    %v3877 = vadd.f32 %v3875, %v3876
    %v3878 = vsel %vm3150, %v3105, 0.0
    %v3879 = vadd.f32 %v3877, %v3878
    %v3880 = vsel %vm3150, %v3106, 0.0
    %v3881 = vadd.f32 %v3879, %v3880
    %v3882 = vsel %vm3150, %v3107, 0.0
    %v3883 = vadd.f32 %v3881, %v3882
    %v3884 = vsel %vm3150, %v3108, 0.0
    %v3885 = vadd.f32 %v3883, %v3884
    %v3886 = vsel %vm3150, %v3109, 0.0
    %v3887 = vadd.f32 %v3885, %v3886
    %v3888 = vsel %vm3150, %v3110, 0.0
    %v3889 = vadd.f32 %v3887, %v3888
    %v3890 = vsel %vm3150, %v3111, 0.0
    %v3891 = vadd.f32 %v3889, %v3890
    %v3892 = vsel %vm3150, %v3112, 0.0
    %v3893 = vadd.f32 %v3891, %v3892
    %v3894 = vsel %vm3150, %v3113, 0.0
    %v3895 = vadd.f32 %v3893, %v3894
    %v3896 = vsel %vm3150, %v3114, 0.0
    %v3897 = vadd.f32 %v3895, %v3896
    %v3898 = vsel %vm3150, %v3115, 0.0
    %v3899 = vadd.f32 %v3897, %v3898
    %v3900 = vsel %vm3150, %v3116, 0.0
    %v3901 = vadd.f32 %v3899, %v3900
    %v3902 = vsel %vm3150, %v3117, 0.0
    %v3903 = vadd.f32 %v3901, %v3902
    %v3904 = vrot.slane %v3903, 4
    %v3905 = vadd.f32 %v3903, %v3904
    %v3906 = vrot.slane %v3905, 2
    %v3907 = vadd.f32 %v3905, %v3906
    %v3908 = vrot.slane %v3907, 1
    %v3909 = vadd.f32 %v3907, %v3908
    %v3910 = vsel %vm3150, %v3118, 0.0
    %v3911 = vsel %vm3150, %v3119, 0.0
    %v3912 = vadd.f32 %v3910, %v3911
    %v3913 = vsel %vm3150, %v3120, 0.0
    %v3914 = vadd.f32 %v3912, %v3913
    %v3915 = vsel %vm3150, %v3121, 0.0
    %v3916 = vadd.f32 %v3914, %v3915
    %v3917 = vsel %vm3150, %v3122, 0.0
    %v3918 = vadd.f32 %v3916, %v3917
    %v3919 = vsel %vm3150, %v3123, 0.0
    %v3920 = vadd.f32 %v3918, %v3919
    %v3921 = vsel %vm3150, %v3124, 0.0
    %v3922 = vadd.f32 %v3920, %v3921
    %v3923 = vsel %vm3150, %v3125, 0.0
    %v3924 = vadd.f32 %v3922, %v3923
    %v3925 = vsel %vm3150, %v3126, 0.0
    %v3926 = vadd.f32 %v3924, %v3925
    %v3927 = vsel %vm3150, %v3127, 0.0
    %v3928 = vadd.f32 %v3926, %v3927
    %v3929 = vsel %vm3150, %v3128, 0.0
    %v3930 = vadd.f32 %v3928, %v3929
    %v3931 = vsel %vm3150, %v3129, 0.0
    %v3932 = vadd.f32 %v3930, %v3931
    %v3933 = vsel %vm3150, %v3130, 0.0
    %v3934 = vadd.f32 %v3932, %v3933
    %v3935 = vsel %vm3150, %v3131, 0.0
    %v3936 = vadd.f32 %v3934, %v3935
    %v3937 = vsel %vm3150, %v3132, 0.0
    %v3938 = vadd.f32 %v3936, %v3937
    %v3939 = vsel %vm3150, %v3133, 0.0
    %v3940 = vadd.f32 %v3938, %v3939
    %v3941 = vsel %vm3150, %v3134, 0.0
    %v3942 = vadd.f32 %v3940, %v3941
    %v3943 = vsel %vm3150, %v3135, 0.0
    %v3944 = vadd.f32 %v3942, %v3943
    %v3945 = vsel %vm3150, %v3136, 0.0
    %v3946 = vadd.f32 %v3944, %v3945
    %v3947 = vsel %vm3150, %v3137, 0.0
    %v3948 = vadd.f32 %v3946, %v3947
    %v3949 = vsel %vm3150, %v3138, 0.0
    %v3950 = vadd.f32 %v3948, %v3949
    %v3951 = vsel %vm3150, %v3139, 0.0
    %v3952 = vadd.f32 %v3950, %v3951
    %v3953 = vsel %vm3150, %v3140, 0.0
    %v3954 = vadd.f32 %v3952, %v3953
    %v3955 = vsel %vm3150, %v3141, 0.0
    %v3956 = vadd.f32 %v3954, %v3955
    %v3957 = vsel %vm3150, %v3142, 0.0
    %v3958 = vadd.f32 %v3956, %v3957
    %v3959 = vsel %vm3150, %v3143, 0.0
    %v3960 = vadd.f32 %v3958, %v3959
    %v3961 = vsel %vm3150, %v3144, 0.0
    %v3962 = vadd.f32 %v3960, %v3961
    %v3963 = vsel %vm3150, %v3145, 0.0
    %v3964 = vadd.f32 %v3962, %v3963
    %v3965 = vsel %vm3150, %v3146, 0.0
    %v3966 = vadd.f32 %v3964, %v3965
    %v3967 = vsel %vm3150, %v3147, 0.0
    %v3968 = vadd.f32 %v3966, %v3967
    %v3969 = vsel %vm3150, %v3148, 0.0
    %v3970 = vadd.f32 %v3968, %v3969
    %v3971 = vsel %vm3150, %v3149, 0.0
    %v3972 = vadd.f32 %v3970, %v3971
    %v3973 = vrot.slane %v3972, 4
    %v3974 = vadd.f32 %v3972, %v3973
    %v3975 = vrot.slane %v3974, 2
    %v3976 = vadd.f32 %v3974, %v3975
    %v3977 = vrot.slane %v3976, 1
    %v3978 = vadd.f32 %v3976, %v3977
    %vm3979 = vcmask 1040384
    %v3980 = vsel %vm3979, %v3219, %v3288
    %vm3981 = vcmask 1041408
    %v3982 = vsel %vm3981, %v3980, %v3357
    %v3983 = vsel %vm1593, %v3982, %v3426
    %vm3984 = vcmask 1043456
    %v3985 = vsel %vm3984, %v3983, %v3495
    %vm3986 = vcmask 1044480
    %v3987 = vsel %vm3986, %v3985, %v3564
    %vm3988 = vcmask 1045504
    %v3989 = vsel %vm3988, %v3987, %v3633
    %vm3990 = vcmask 1046528
    %v3991 = vsel %vm3990, %v3989, %v3702
    %v3992 = vsel %vm3979, %v3771, %v3840
    %v3993 = vsel %vm3981, %v3992, %v3909
    %v3994 = vsel %vm1593, %v3993, %v3978
    %v3995 = vld [vmem:[%s3] sm:$0xff]
    %v3996 = vld [vmem:[%s4] sm:$0x1]
    %v3998 = vperm.slane %v3996, 0
    %v4001 = vsel %vm3150, %v3991, 0
    %v4004 = vsel %vm3150, %v3994, 0
    %4006 = vmatpush.msra.mxu0 0.0
    %4007 = vmatpush.msra.mxu0 0.0
    %4008 = vmatpush.msra.mxu0 0.0
    %4009 = vmatpush.msra.mxu0 0.0
    %4010 = vmatpush.msra.mxu0 0.0
    %4011 = vmatpush.msra.mxu0 0.0
    %4012 = vmatpush.msra.mxu0 0.0
    %4013 = vmatpush.msra.mxu0 0.0
    %4014 = vmatpush.msra.mxu0 0.0
    %4015 = vmatpush.msra.mxu0 0.0
    %4016 = vmatpush.msra.mxu0 0.0
    %4017 = vmatpush.msra.mxu0 0.0
    %4018 = vmatpush.msra.mxu0 0.0
    %4019 = vmatpush.msra.mxu0 0.0
    %4020 = vmatpush.msra.mxu0 0.0
    %4021 = vmatpush.msra.mxu0 %v3995
    %4022 = vmatmul.f32.gmra.mxu0 %v4001
    %v4023 = vpop.f32.mrf.mxu0
    %v4024 = vadd.f32 %v3998, %v4023
    %4025 = vmatmul.f32.gmra.mxu0 %v4004
    %v4026 = vpop.f32.mrf.mxu0
    %v4027 = vadd.f32 %v3998, %v4026
    %4028 = vdwg.mxu0
    %v4029 = vld [vmem:[%s7] sm:$0xff]
    %v4030 = vld [vmem:[%s7 + $0x8] sm:$0xff]
    %v4031 = vld [vmem:[%s7 + $0x10] sm:$0xff]
    %v4032 = vld [vmem:[%s7 + $0x18] sm:$0xff]
    %v4033 = vld [vmem:[%s8] sm:$0xff]
    %v4034 = vld [vmem:[%s8 + $0x8] sm:$0xff]
    %v4035 = vld [vmem:[%s8 + $0x10] sm:$0xff]
    %v4036 = vld [vmem:[%s8 + $0x18] sm:$0xff]
    %v4037 = vld [vmem:[%s5] sm:$0xff]
    %v4038 = vld [vmem:[%s5 + $0x8] sm:$0xff]
    %v4039 = vld [vmem:[%s5 + $0x10] sm:$0xff]
    %v4040 = vld [vmem:[%s5 + $0x18] sm:$0xff]
    %v4041 = vld [vmem:[%s5 + $0x20] sm:$0xff]
    %v4042 = vld [vmem:[%s5 + $0x28] sm:$0xff]
    %v4043 = vld [vmem:[%s5 + $0x30] sm:$0xff]
    %v4044 = vld [vmem:[%s5 + $0x38] sm:$0xff]
    %v4045 = vld [vmem:[%s6] sm:$0x3]
    %v4047 = vperm.slane %v4045, 0
    %v4048 = vperm.slane %v4045, 1
    %vm4051 = vcmask 261120
    %v4053 = vsel %vm4051, %v4024, 0
    %4055 = vmatpush.msra.mxu0 0.0
    %4056 = vmatpush.msra.mxu0 0.0
    %4057 = vmatpush.msra.mxu0 0.0
    %4058 = vmatpush.msra.mxu0 0.0
    %4059 = vmatpush.msra.mxu0 0.0
    %4060 = vmatpush.msra.mxu0 0.0
    %4061 = vmatpush.msra.mxu0 0.0
    %4062 = vmatpush.msra.mxu0 0.0
    %4063 = vmatpush.msra.mxu0 0.0
    %4064 = vmatpush.msra.mxu0 0.0
    %4065 = vmatpush.msra.mxu0 0.0
    %4066 = vmatpush.msra.mxu0 0.0
    %4067 = vmatpush.msra.mxu0 %v4043
    %4068 = vmatpush.msra.mxu0 %v4041
    %4069 = vmatpush.msra.mxu0 %v4039
    %4070 = vmatpush.msra.mxu0 %v4037
    %4071 = vmatmul.f32.gmra.mxu0 %v4053
    %v4072 = vpop.f32.mrf.mxu0
    %v4073 = vadd.f32 %v4047, %v4072
    %4074 = vdwg.mxu0
    %4075 = vmatpush.msra.mxu0 0.0
    %4076 = vmatpush.msra.mxu0 0.0
    %4077 = vmatpush.msra.mxu0 0.0
    %4078 = vmatpush.msra.mxu0 0.0
    %4079 = vmatpush.msra.mxu0 0.0
    %4080 = vmatpush.msra.mxu0 0.0
    %4081 = vmatpush.msra.mxu0 0.0
    %4082 = vmatpush.msra.mxu0 0.0
    %4083 = vmatpush.msra.mxu0 0.0
    %4084 = vmatpush.msra.mxu0 0.0
    %4085 = vmatpush.msra.mxu0 0.0
    %4086 = vmatpush.msra.mxu0 0.0
    %4087 = vmatpush.msra.mxu0 %v4044
    %4088 = vmatpush.msra.mxu0 %v4042
    %4089 = vmatpush.msra.mxu0 %v4040
    %4090 = vmatpush.msra.mxu0 %v4038
    %4091 = vmatmul.f32.gmra.mxu0 %v4053
    %v4092 = vpop.f32.mrf.mxu0
    %v4093 = vadd.f32 %v4048, %v4092
    %4094 = vdwg.mxu0
    %v4096 = vsel %vm4051, 0.0, 0
    %4098 = vmatpush.msra.mxu0 0.0
    %4099 = vmatpush.msra.mxu0 0.0
    %4100 = vmatpush.msra.mxu0 0.0
    %4101 = vmatpush.msra.mxu0 0.0
    %4102 = vmatpush.msra.mxu0 0.0
    %4103 = vmatpush.msra.mxu0 0.0
    %4104 = vmatpush.msra.mxu0 0.0
    %4105 = vmatpush.msra.mxu0 0.0
    %4106 = vmatpush.msra.mxu0 0.0
    %4107 = vmatpush.msra.mxu0 0.0
    %4108 = vmatpush.msra.mxu0 0.0
    %4109 = vmatpush.msra.mxu0 0.0
    %4110 = vmatpush.msra.mxu0 %v4032
    %4111 = vmatpush.msra.mxu0 %v4031
    %4112 = vmatpush.msra.mxu0 %v4030
    %4113 = vmatpush.msra.mxu0 %v4029
    %4114 = vmatmul.f32.gmra.mxu0 %v4096
    %v4115 = vpop.f32.mrf.mxu0
    %v4116 = vadd.f32 0.0, %v4115
    %4117 = vdwg.mxu0
    %v4118 = vadd.f32 %v4073, %v4116
    %v4119 = vxor.u32 %v4118, 2147483648
    %v4120 = vmul.f32 %v4119, 1.442695
    %v4121 = vpow.pop %v4120
    %v4122 = vadd.f32 %v4121, 1.0
    %v4123 = vrcp.pop %v4122
    %v4124 = vmul.f32 %v4122, %v4123
    %v4125 = vsub.f32 1.0, %v4124
    %v4126 = vmul.f32 %v4123, %v4125
    %v4127 = vadd.f32 %v4123, %v4126
    %vm4128 = vweird.f32 %v4122
    %vm4129 = vweird.f32 %v4123
    %vm4130 = vmor %vm4128, %vm4129
    %v4131 = vsel %vm4130, %v4123, %v4127
    %v4132 = vand.u32 2147483647, %v4122
    %vm4133 = vcmp.eq.f32.partialorder %v4132, 8.507059e+37
    %v4134 = vand.u32 %v4122, 2147483648
    %v4135 = vor.u32 1.1754944e-38, %v4134
    %v4136 = vsel %vm4133, %v4135, %v4131
    %v4137 = vmul.f32 1.0, %v4136
    %v4138 = vtanh.pop %v4118
    %v4139 = vmul.f32 %v4137, 0.0
    %4141 = vrot.lane.b32.xlu0 %v4138, 64
    %v4142 = vpop.permute.xlu0 %4141
    %v4144 = vmul.f32 %v4137, %v4142
    %4146 = vrot.lane.b32.xlu0 %v4144, 32
    %v4147 = vpop.permute.xlu0 %4146
    %v4149 = vadd.f32 %v4139, %v4147
    %v4150 = vtanh.pop %v4149
    %4152 = vrot.lane.b32.xlu0 %v4150, 64
    %v4153 = vpop.permute.xlu0 %4152
    %v4155 = vmul.f32 %v4137, %v4153
    %4156 = vmatpush.msra.mxu0 0.0
    %4157 = vmatpush.msra.mxu0 0.0
    %4158 = vmatpush.msra.mxu0 0.0
    %4159 = vmatpush.msra.mxu0 0.0
    %4160 = vmatpush.msra.mxu0 0.0
    %4161 = vmatpush.msra.mxu0 0.0
    %4162 = vmatpush.msra.mxu0 0.0
    %4163 = vmatpush.msra.mxu0 0.0
    %4164 = vmatpush.msra.mxu0 0.0
    %4165 = vmatpush.msra.mxu0 0.0
    %4166 = vmatpush.msra.mxu0 0.0
    %4167 = vmatpush.msra.mxu0 0.0
    %4168 = vmatpush.msra.mxu0 %v4036
    %4169 = vmatpush.msra.mxu0 %v4035
    %4170 = vmatpush.msra.mxu0 %v4034
    %4171 = vmatpush.msra.mxu0 %v4033
    %4172 = vmatmul.f32.gmra.mxu0 %v4096
    %v4173 = vpop.f32.mrf.mxu0
    %v4174 = vadd.f32 0.0, %v4173
    %4175 = vdwg.mxu0
    %v4177 = vrot.slane %v4174, 1
    %v4179 = vadd.f32 %v4093, %v4177
    %v4180 = vxor.u32 %v4179, 2147483648
    %v4181 = vmul.f32 %v4180, 1.442695
    %v4182 = vpow.pop %v4181
    %v4183 = vadd.f32 %v4182, 1.0
    %v4184 = vrcp.pop %v4183
    %v4185 = vmul.f32 %v4183, %v4184
    %v4186 = vsub.f32 1.0, %v4185
    %v4187 = vmul.f32 %v4184, %v4186
    %v4188 = vadd.f32 %v4184, %v4187
    %vm4189 = vweird.f32 %v4183
    %vm4190 = vweird.f32 %v4184
    %vm4191 = vmor %vm4189, %vm4190
    %v4192 = vsel %vm4191, %v4184, %v4188
    %v4193 = vand.u32 2147483647, %v4183
    %vm4194 = vcmp.eq.f32.partialorder %v4193, 8.507059e+37
    %v4195 = vand.u32 %v4183, 2147483648
    %v4196 = vor.u32 1.1754944e-38, %v4195
    %v4197 = vsel %vm4194, %v4196, %v4192
    %v4198 = vmul.f32 1.0, %v4197
    %v4199 = vtanh.pop %v4179
    %v4200 = vmul.f32 %v4198, 0.0
    %4202 = vrot.lane.b32.xlu0 %v4199, 64
    %v4203 = vpop.permute.xlu0 %4202
    %v4205 = vmul.f32 %v4198, %v4203
    %4207 = vrot.lane.b32.xlu0 %v4205, 32
    %v4208 = vpop.permute.xlu0 %4207
    %v4210 = vadd.f32 %v4200, %v4208
    %v4211 = vtanh.pop %v4210
    %4213 = vrot.lane.b32.xlu0 %v4211, 64
    %v4214 = vpop.permute.xlu0 %4213
    %v4216 = vmul.f32 %v4198, %v4214
    %4218 = vrot.lane.b32.xlu0 %v4155, 32
    %v4219 = vpop.permute.xlu0 %4218
    %v4220 = vsel %vm4051, %v4219, 0
    %4222 = vmatpush.msra.mxu0 0.0
    %4223 = vmatpush.msra.mxu0 0.0
    %4224 = vmatpush.msra.mxu0 0.0
    %4225 = vmatpush.msra.mxu0 0.0
    %4226 = vmatpush.msra.mxu0 0.0
    %4227 = vmatpush.msra.mxu0 0.0
    %4228 = vmatpush.msra.mxu0 0.0
    %4229 = vmatpush.msra.mxu0 0.0
    %4230 = vmatpush.msra.mxu0 0.0
    %4231 = vmatpush.msra.mxu0 0.0
    %4232 = vmatpush.msra.mxu0 0.0
    %4233 = vmatpush.msra.mxu0 0.0
    %4234 = vmatpush.msra.mxu0 %v4032
    %4235 = vmatpush.msra.mxu0 %v4031
    %4236 = vmatpush.msra.mxu0 %v4030
    %4237 = vmatpush.msra.mxu0 %v4029
    %4238 = vmatmul.f32.gmra.mxu0 %v4220
    %v4239 = vpop.f32.mrf.mxu0
    %v4240 = vadd.f32 0.0, %v4239
    %4241 = vdwg.mxu0
    %v4243 = vrot.slane %v4240, 7
    %v4245 = vadd.f32 %v4073, %v4243
    %v4246 = vxor.u32 %v4245, 2147483648
    %v4247 = vmul.f32 %v4246, 1.442695
    %v4248 = vpow.pop %v4247
    %v4249 = vadd.f32 %v4248, 1.0
    %v4250 = vrcp.pop %v4249
    %v4251 = vmul.f32 %v4249, %v4250
    %v4252 = vsub.f32 1.0, %v4251
    %v4253 = vmul.f32 %v4250, %v4252
    %v4254 = vadd.f32 %v4250, %v4253
    %vm4255 = vweird.f32 %v4249
    %vm4256 = vweird.f32 %v4250
    %vm4257 = vmor %vm4255, %vm4256
    %v4258 = vsel %vm4257, %v4250, %v4254
    %v4259 = vand.u32 2147483647, %v4249
    %vm4260 = vcmp.eq.f32.partialorder %v4259, 8.507059e+37
    %v4261 = vand.u32 %v4249, 2147483648
    %v4262 = vor.u32 1.1754944e-38, %v4261
    %v4263 = vsel %vm4260, %v4262, %v4258
    %v4264 = vmul.f32 1.0, %v4263
    %v4265 = vtanh.pop %v4245
    %v4267 = vrot.slane %v4149, 7
    %v4269 = vmul.f32 %v4264, %v4267
    %4271 = vrot.lane.b32.xlu0 %v4265, 64
    %v4272 = vpop.permute.xlu0 %4271
    %v4274 = vmul.f32 %v4264, %v4272
    %4276 = vrot.lane.b32.xlu0 %v4274, 32
    %v4277 = vpop.permute.xlu0 %4276
    %v4279 = vadd.f32 %v4269, %v4277
    %v4280 = vtanh.pop %v4279
    %4282 = vrot.lane.b32.xlu0 %v4280, 64
    %v4283 = vpop.permute.xlu0 %4282
    %v4285 = vmul.f32 %v4264, %v4283
    %v4287 = vrot.slane %v4216, 7
    %4288 = vrot.lane.b32.xlu0 %v4287, 32
    %v4289 = vpop.permute.xlu0 %4288
    %v4290 = vsel %vm4051, %v4289, 0
    %4292 = vmatpush.msra.mxu0 0.0
    %4293 = vmatpush.msra.mxu0 0.0
    %4294 = vmatpush.msra.mxu0 0.0
    %4295 = vmatpush.msra.mxu0 0.0
    %4296 = vmatpush.msra.mxu0 0.0
    %4297 = vmatpush.msra.mxu0 0.0
    %4298 = vmatpush.msra.mxu0 0.0
    %4299 = vmatpush.msra.mxu0 0.0
    %4300 = vmatpush.msra.mxu0 0.0
    %4301 = vmatpush.msra.mxu0 0.0
    %4302 = vmatpush.msra.mxu0 0.0
    %4303 = vmatpush.msra.mxu0 0.0
    %4304 = vmatpush.msra.mxu0 %v4036
    %4305 = vmatpush.msra.mxu0 %v4035
    %4306 = vmatpush.msra.mxu0 %v4034
    %4307 = vmatpush.msra.mxu0 %v4033
    %4308 = vmatmul.f32.gmra.mxu0 %v4290
    %v4309 = vpop.f32.mrf.mxu0
    %v4310 = vadd.f32 0.0, %v4309
    %4311 = vdwg.mxu0
    %v4313 = vrot.slane %v4310, 2
    %v4315 = vadd.f32 %v4093, %v4313
    %v4316 = vxor.u32 %v4315, 2147483648
    %v4317 = vmul.f32 %v4316, 1.442695
    %v4318 = vpow.pop %v4317
    %v4319 = vadd.f32 %v4318, 1.0
    %v4320 = vrcp.pop %v4319
    %v4321 = vmul.f32 %v4319, %v4320
    %v4322 = vsub.f32 1.0, %v4321
    %v4323 = vmul.f32 %v4320, %v4322
    %v4324 = vadd.f32 %v4320, %v4323
    %vm4325 = vweird.f32 %v4319
    %vm4326 = vweird.f32 %v4320
    %vm4327 = vmor %vm4325, %vm4326
    %v4328 = vsel %vm4327, %v4320, %v4324
    %v4329 = vand.u32 2147483647, %v4319
    %vm4330 = vcmp.eq.f32.partialorder %v4329, 8.507059e+37
    %v4331 = vand.u32 %v4319, 2147483648
    %v4332 = vor.u32 1.1754944e-38, %v4331
    %v4333 = vsel %vm4330, %v4332, %v4328
    %v4334 = vmul.f32 1.0, %v4333
    %v4335 = vtanh.pop %v4315
    %v4337 = vrot.slane %v4210, 1
    %v4339 = vmul.f32 %v4334, %v4337
    %4341 = vrot.lane.b32.xlu0 %v4335, 64
    %v4342 = vpop.permute.xlu0 %4341
    %v4344 = vmul.f32 %v4334, %v4342
    %4346 = vrot.lane.b32.xlu0 %v4344, 32
    %v4347 = vpop.permute.xlu0 %4346
    %v4349 = vadd.f32 %v4339, %v4347
    %v4350 = vtanh.pop %v4349
    %4352 = vrot.lane.b32.xlu0 %v4350, 64
    %v4353 = vpop.permute.xlu0 %4352
    %v4355 = vmul.f32 %v4334, %v4353
    %v4357 = vrot.slane %v4285, 1
    %4358 = vrot.lane.b32.xlu0 %v4357, 32
    %v4359 = vpop.permute.xlu0 %4358
    %v4360 = vsel %vm4051, %v4359, 0
    %4362 = vmatpush.msra.mxu0 0.0
    %4363 = vmatpush.msra.mxu0 0.0
    %4364 = vmatpush.msra.mxu0 0.0
    %4365 = vmatpush.msra.mxu0 0.0
    %4366 = vmatpush.msra.mxu0 0.0
    %4367 = vmatpush.msra.mxu0 0.0
    %4368 = vmatpush.msra.mxu0 0.0
    %4369 = vmatpush.msra.mxu0 0.0
    %4370 = vmatpush.msra.mxu0 0.0
    %4371 = vmatpush.msra.mxu0 0.0
    %4372 = vmatpush.msra.mxu0 0.0
    %4373 = vmatpush.msra.mxu0 0.0
    %4374 = vmatpush.msra.mxu0 %v4032
    %4375 = vmatpush.msra.mxu0 %v4031
    %4376 = vmatpush.msra.mxu0 %v4030
    %4377 = vmatpush.msra.mxu0 %v4029
    %4378 = vmatmul.f32.gmra.mxu0 %v4360
    %v4379 = vpop.f32.mrf.mxu0
    %v4380 = vadd.f32 0.0, %v4379
    %4381 = vdwg.mxu0
    %v4383 = vrot.slane %v4380, 6
    %v4385 = vadd.f32 %v4073, %v4383
    %v4386 = vxor.u32 %v4385, 2147483648
    %v4387 = vmul.f32 %v4386, 1.442695
    %v4388 = vpow.pop %v4387
    %v4389 = vadd.f32 %v4388, 1.0
    %v4390 = vrcp.pop %v4389
    %v4391 = vmul.f32 %v4389, %v4390
    %v4392 = vsub.f32 1.0, %v4391
    %v4393 = vmul.f32 %v4390, %v4392
    %v4394 = vadd.f32 %v4390, %v4393
    %vm4395 = vweird.f32 %v4389
    %vm4396 = vweird.f32 %v4390
    %vm4397 = vmor %vm4395, %vm4396
    %v4398 = vsel %vm4397, %v4390, %v4394
    %v4399 = vand.u32 2147483647, %v4389
    %vm4400 = vcmp.eq.f32.partialorder %v4399, 8.507059e+37
    %v4401 = vand.u32 %v4389, 2147483648
    %v4402 = vor.u32 1.1754944e-38, %v4401
    %v4403 = vsel %vm4400, %v4402, %v4398
    %v4404 = vmul.f32 1.0, %v4403
    %v4405 = vtanh.pop %v4385
    %v4407 = vrot.slane %v4279, 7
    %v4409 = vmul.f32 %v4404, %v4407
    %4411 = vrot.lane.b32.xlu0 %v4405, 64
    %v4412 = vpop.permute.xlu0 %4411
    %v4414 = vmul.f32 %v4404, %v4412
    %4416 = vrot.lane.b32.xlu0 %v4414, 32
    %v4417 = vpop.permute.xlu0 %4416
    %v4419 = vadd.f32 %v4409, %v4417
    %v4420 = vtanh.pop %v4419
    %4422 = vrot.lane.b32.xlu0 %v4420, 64
    %v4423 = vpop.permute.xlu0 %4422
    %v4425 = vmul.f32 %v4404, %v4423
    %v4427 = vrot.slane %v4355, 6
    %4428 = vrot.lane.b32.xlu0 %v4427, 32
    %v4429 = vpop.permute.xlu0 %4428
    %v4430 = vsel %vm4051, %v4429, 0
    %4432 = vmatpush.msra.mxu0 0.0
    %4433 = vmatpush.msra.mxu0 0.0
    %4434 = vmatpush.msra.mxu0 0.0
    %4435 = vmatpush.msra.mxu0 0.0
    %4436 = vmatpush.msra.mxu0 0.0
    %4437 = vmatpush.msra.mxu0 0.0
    %4438 = vmatpush.msra.mxu0 0.0
    %4439 = vmatpush.msra.mxu0 0.0
    %4440 = vmatpush.msra.mxu0 0.0
    %4441 = vmatpush.msra.mxu0 0.0
    %4442 = vmatpush.msra.mxu0 0.0
    %4443 = vmatpush.msra.mxu0 0.0
    %4444 = vmatpush.msra.mxu0 %v4036
    %4445 = vmatpush.msra.mxu0 %v4035
    %4446 = vmatpush.msra.mxu0 %v4034
    %4447 = vmatpush.msra.mxu0 %v4033
    %4448 = vmatmul.f32.gmra.mxu0 %v4430
    %v4449 = vpop.f32.mrf.mxu0
    %v4450 = vadd.f32 0.0, %v4449
    %4451 = vdwg.mxu0
    %v4453 = vrot.slane %v4450, 3
    %v4455 = vadd.f32 %v4093, %v4453
    %v4456 = vxor.u32 %v4455, 2147483648
    %v4457 = vmul.f32 %v4456, 1.442695
    %v4458 = vpow.pop %v4457
    %v4459 = vadd.f32 %v4458, 1.0
    %v4460 = vrcp.pop %v4459
    %v4461 = vmul.f32 %v4459, %v4460
    %v4462 = vsub.f32 1.0, %v4461
    %v4463 = vmul.f32 %v4460, %v4462
    %v4464 = vadd.f32 %v4460, %v4463
    %vm4465 = vweird.f32 %v4459
    %vm4466 = vweird.f32 %v4460
    %vm4467 = vmor %vm4465, %vm4466
    %v4468 = vsel %vm4467, %v4460, %v4464
    %v4469 = vand.u32 2147483647, %v4459
    %vm4470 = vcmp.eq.f32.partialorder %v4469, 8.507059e+37
    %v4471 = vand.u32 %v4459, 2147483648
    %v4472 = vor.u32 1.1754944e-38, %v4471
    %v4473 = vsel %vm4470, %v4472, %v4468
    %v4474 = vmul.f32 1.0, %v4473
    %v4475 = vtanh.pop %v4455
    %v4477 = vrot.slane %v4349, 1
    %v4479 = vmul.f32 %v4474, %v4477
    %4481 = vrot.lane.b32.xlu0 %v4475, 64
    %v4482 = vpop.permute.xlu0 %4481
    %v4484 = vmul.f32 %v4474, %v4482
    %4486 = vrot.lane.b32.xlu0 %v4484, 32
    %v4487 = vpop.permute.xlu0 %4486
    %v4489 = vadd.f32 %v4479, %v4487
    %v4490 = vtanh.pop %v4489
    %4492 = vrot.lane.b32.xlu0 %v4490, 64
    %v4493 = vpop.permute.xlu0 %4492
    %v4495 = vmul.f32 %v4474, %v4493
    %v4497 = vrot.slane %v4425, 2
    %4498 = vrot.lane.b32.xlu0 %v4497, 32
    %v4499 = vpop.permute.xlu0 %4498
    %v4500 = vsel %vm4051, %v4499, 0
    %4502 = vmatpush.msra.mxu0 0.0
    %4503 = vmatpush.msra.mxu0 0.0
    %4504 = vmatpush.msra.mxu0 0.0
    %4505 = vmatpush.msra.mxu0 0.0
    %4506 = vmatpush.msra.mxu0 0.0
    %4507 = vmatpush.msra.mxu0 0.0
    %4508 = vmatpush.msra.mxu0 0.0
    %4509 = vmatpush.msra.mxu0 0.0
    %4510 = vmatpush.msra.mxu0 0.0
    %4511 = vmatpush.msra.mxu0 0.0
    %4512 = vmatpush.msra.mxu0 0.0
    %4513 = vmatpush.msra.mxu0 0.0
    %4514 = vmatpush.msra.mxu0 %v4032
    %4515 = vmatpush.msra.mxu0 %v4031
    %4516 = vmatpush.msra.mxu0 %v4030
    %4517 = vmatpush.msra.mxu0 %v4029
    %4518 = vmatmul.f32.gmra.mxu0 %v4500
    %v4519 = vpop.f32.mrf.mxu0
    %v4520 = vadd.f32 0.0, %v4519
    %4521 = vdwg.mxu0
    %v4523 = vrot.slane %v4520, 5
    %v4525 = vadd.f32 %v4073, %v4523
    %v4526 = vxor.u32 %v4525, 2147483648
    %v4527 = vmul.f32 %v4526, 1.442695
    %v4528 = vpow.pop %v4527
    %v4529 = vadd.f32 %v4528, 1.0
    %v4530 = vrcp.pop %v4529
    %v4531 = vmul.f32 %v4529, %v4530
    %v4532 = vsub.f32 1.0, %v4531
    %v4533 = vmul.f32 %v4530, %v4532
    %v4534 = vadd.f32 %v4530, %v4533
    %vm4535 = vweird.f32 %v4529
    %vm4536 = vweird.f32 %v4530
    %vm4537 = vmor %vm4535, %vm4536
    %v4538 = vsel %vm4537, %v4530, %v4534
    %v4539 = vand.u32 2147483647, %v4529
    %vm4540 = vcmp.eq.f32.partialorder %v4539, 8.507059e+37
    %v4541 = vand.u32 %v4529, 2147483648
    %v4542 = vor.u32 1.1754944e-38, %v4541
    %v4543 = vsel %vm4540, %v4542, %v4538
    %v4544 = vmul.f32 1.0, %v4543
    %v4545 = vtanh.pop %v4525
    %v4547 = vrot.slane %v4419, 7
    %v4549 = vmul.f32 %v4544, %v4547
    %4551 = vrot.lane.b32.xlu0 %v4545, 64
    %v4552 = vpop.permute.xlu0 %4551
    %v4554 = vmul.f32 %v4544, %v4552
    %4556 = vrot.lane.b32.xlu0 %v4554, 32
    %v4557 = vpop.permute.xlu0 %4556
    %v4559 = vadd.f32 %v4549, %v4557
    %v4560 = vtanh.pop %v4559
    %4562 = vrot.lane.b32.xlu0 %v4560, 64
    %v4563 = vpop.permute.xlu0 %4562
    %v4565 = vmul.f32 %v4544, %v4563
    %v4567 = vrot.slane %v4495, 5
    %4568 = vrot.lane.b32.xlu0 %v4567, 32
    %v4569 = vpop.permute.xlu0 %4568
    %v4570 = vsel %vm4051, %v4569, 0
    %4572 = vmatpush.msra.mxu0 0.0
    %4573 = vmatpush.msra.mxu0 0.0
    %4574 = vmatpush.msra.mxu0 0.0
    %4575 = vmatpush.msra.mxu0 0.0
    %4576 = vmatpush.msra.mxu0 0.0
    %4577 = vmatpush.msra.mxu0 0.0
    %4578 = vmatpush.msra.mxu0 0.0
    %4579 = vmatpush.msra.mxu0 0.0
    %4580 = vmatpush.msra.mxu0 0.0
    %4581 = vmatpush.msra.mxu0 0.0
    %4582 = vmatpush.msra.mxu0 0.0
    %4583 = vmatpush.msra.mxu0 0.0
    %4584 = vmatpush.msra.mxu0 %v4036
    %4585 = vmatpush.msra.mxu0 %v4035
    %4586 = vmatpush.msra.mxu0 %v4034
    %4587 = vmatpush.msra.mxu0 %v4033
    %4588 = vmatmul.f32.gmra.mxu0 %v4570
    %v4589 = vpop.f32.mrf.mxu0
    %v4590 = vadd.f32 0.0, %v4589
    %4591 = vdwg.mxu0
    %v4593 = vrot.slane %v4590, 4
    %v4595 = vadd.f32 %v4093, %v4593
    %v4596 = vxor.u32 %v4595, 2147483648
    %v4597 = vmul.f32 %v4596, 1.442695
    %v4598 = vpow.pop %v4597
    %v4599 = vadd.f32 %v4598, 1.0
    %v4600 = vrcp.pop %v4599
    %v4601 = vmul.f32 %v4599, %v4600
    %v4602 = vsub.f32 1.0, %v4601
    %v4603 = vmul.f32 %v4600, %v4602
    %v4604 = vadd.f32 %v4600, %v4603
    %vm4605 = vweird.f32 %v4599
    %vm4606 = vweird.f32 %v4600
    %vm4607 = vmor %vm4605, %vm4606
    %v4608 = vsel %vm4607, %v4600, %v4604
    %v4609 = vand.u32 2147483647, %v4599
    %vm4610 = vcmp.eq.f32.partialorder %v4609, 8.507059e+37
    %v4611 = vand.u32 %v4599, 2147483648
    %v4612 = vor.u32 1.1754944e-38, %v4611
    %v4613 = vsel %vm4610, %v4612, %v4608
    %v4614 = vmul.f32 1.0, %v4613
    %v4615 = vtanh.pop %v4595
    %v4617 = vrot.slane %v4489, 1
    %v4619 = vmul.f32 %v4614, %v4617
    %4621 = vrot.lane.b32.xlu0 %v4615, 64
    %v4622 = vpop.permute.xlu0 %4621
    %v4624 = vmul.f32 %v4614, %v4622
    %4626 = vrot.lane.b32.xlu0 %v4624, 32
    %v4627 = vpop.permute.xlu0 %4626
    %v4629 = vadd.f32 %v4619, %v4627
    %v4630 = vtanh.pop %v4629
    %4632 = vrot.lane.b32.xlu0 %v4630, 64
    %v4633 = vpop.permute.xlu0 %4632
    %v4635 = vmul.f32 %v4614, %v4633
    %v4637 = vrot.slane %v4565, 3
    %4638 = vrot.lane.b32.xlu0 %v4637, 32
    %v4639 = vpop.permute.xlu0 %4638
    %v4640 = vsel %vm4051, %v4639, 0
    %4642 = vmatpush.msra.mxu0 0.0
    %4643 = vmatpush.msra.mxu0 0.0
    %4644 = vmatpush.msra.mxu0 0.0
    %4645 = vmatpush.msra.mxu0 0.0
    %4646 = vmatpush.msra.mxu0 0.0
    %4647 = vmatpush.msra.mxu0 0.0
    %4648 = vmatpush.msra.mxu0 0.0
    %4649 = vmatpush.msra.mxu0 0.0
    %4650 = vmatpush.msra.mxu0 0.0
    %4651 = vmatpush.msra.mxu0 0.0
    %4652 = vmatpush.msra.mxu0 0.0
    %4653 = vmatpush.msra.mxu0 0.0
    %4654 = vmatpush.msra.mxu0 %v4032
    %4655 = vmatpush.msra.mxu0 %v4031
    %4656 = vmatpush.msra.mxu0 %v4030
    %4657 = vmatpush.msra.mxu0 %v4029
    %4658 = vmatmul.f32.gmra.mxu0 %v4640
    %v4659 = vpop.f32.mrf.mxu0
    %v4660 = vadd.f32 0.0, %v4659
    %4661 = vdwg.mxu0
    %v4663 = vrot.slane %v4660, 4
    %v4665 = vadd.f32 %v4073, %v4663
    %v4666 = vxor.u32 %v4665, 2147483648
    %v4667 = vmul.f32 %v4666, 1.442695
    %v4668 = vpow.pop %v4667
    %v4669 = vadd.f32 %v4668, 1.0
    %v4670 = vrcp.pop %v4669
    %v4671 = vmul.f32 %v4669, %v4670
    %v4672 = vsub.f32 1.0, %v4671
    %v4673 = vmul.f32 %v4670, %v4672
    %v4674 = vadd.f32 %v4670, %v4673
    %vm4675 = vweird.f32 %v4669
    %vm4676 = vweird.f32 %v4670
    %vm4677 = vmor %vm4675, %vm4676
    %v4678 = vsel %vm4677, %v4670, %v4674
    %v4679 = vand.u32 2147483647, %v4669
    %vm4680 = vcmp.eq.f32.partialorder %v4679, 8.507059e+37
    %v4681 = vand.u32 %v4669, 2147483648
    %v4682 = vor.u32 1.1754944e-38, %v4681
    %v4683 = vsel %vm4680, %v4682, %v4678
    %v4684 = vmul.f32 1.0, %v4683
    %v4685 = vtanh.pop %v4665
    %v4687 = vrot.slane %v4559, 7
    %v4689 = vmul.f32 %v4684, %v4687
    %4691 = vrot.lane.b32.xlu0 %v4685, 64
    %v4692 = vpop.permute.xlu0 %4691
    %v4694 = vmul.f32 %v4684, %v4692
    %4696 = vrot.lane.b32.xlu0 %v4694, 32
    %v4697 = vpop.permute.xlu0 %4696
    %v4699 = vadd.f32 %v4689, %v4697
    %v4700 = vtanh.pop %v4699
    %4702 = vrot.lane.b32.xlu0 %v4700, 64
    %v4703 = vpop.permute.xlu0 %4702
    %v4705 = vmul.f32 %v4684, %v4703
    %v4707 = vrot.slane %v4635, 4
    %4708 = vrot.lane.b32.xlu0 %v4707, 32
    %v4709 = vpop.permute.xlu0 %4708
    %v4710 = vsel %vm4051, %v4709, 0
    %4712 = vmatpush.msra.mxu0 0.0
    %4713 = vmatpush.msra.mxu0 0.0
    %4714 = vmatpush.msra.mxu0 0.0
    %4715 = vmatpush.msra.mxu0 0.0
    %4716 = vmatpush.msra.mxu0 0.0
    %4717 = vmatpush.msra.mxu0 0.0
    %4718 = vmatpush.msra.mxu0 0.0
    %4719 = vmatpush.msra.mxu0 0.0
    %4720 = vmatpush.msra.mxu0 0.0
    %4721 = vmatpush.msra.mxu0 0.0
    %4722 = vmatpush.msra.mxu0 0.0
    %4723 = vmatpush.msra.mxu0 0.0
    %4724 = vmatpush.msra.mxu0 %v4036
    %4725 = vmatpush.msra.mxu0 %v4035
    %4726 = vmatpush.msra.mxu0 %v4034
    %4727 = vmatpush.msra.mxu0 %v4033
    %4728 = vmatmul.f32.gmra.mxu0 %v4710
    %v4729 = vpop.f32.mrf.mxu0
    %v4730 = vadd.f32 0.0, %v4729
    %4731 = vdwg.mxu0
    %v4733 = vrot.slane %v4730, 5
    %v4735 = vadd.f32 %v4093, %v4733
    %v4736 = vxor.u32 %v4735, 2147483648
    %v4737 = vmul.f32 %v4736, 1.442695
    %v4738 = vpow.pop %v4737
    %v4739 = vadd.f32 %v4738, 1.0
    %v4740 = vrcp.pop %v4739
    %v4741 = vmul.f32 %v4739, %v4740
    %v4742 = vsub.f32 1.0, %v4741
    %v4743 = vmul.f32 %v4740, %v4742
    %v4744 = vadd.f32 %v4740, %v4743
    %vm4745 = vweird.f32 %v4739
    %vm4746 = vweird.f32 %v4740
    %vm4747 = vmor %vm4745, %vm4746
    %v4748 = vsel %vm4747, %v4740, %v4744
    %v4749 = vand.u32 2147483647, %v4739
    %vm4750 = vcmp.eq.f32.partialorder %v4749, 8.507059e+37
    %v4751 = vand.u32 %v4739, 2147483648
    %v4752 = vor.u32 1.1754944e-38, %v4751
    %v4753 = vsel %vm4750, %v4752, %v4748
    %v4754 = vmul.f32 1.0, %v4753
    %v4755 = vtanh.pop %v4735
    %v4757 = vrot.slane %v4629, 1
    %v4759 = vmul.f32 %v4754, %v4757
    %4761 = vrot.lane.b32.xlu0 %v4755, 64
    %v4762 = vpop.permute.xlu0 %4761
    %v4764 = vmul.f32 %v4754, %v4762
    %4766 = vrot.lane.b32.xlu0 %v4764, 32
    %v4767 = vpop.permute.xlu0 %4766
    %v4769 = vadd.f32 %v4759, %v4767
    %v4770 = vtanh.pop %v4769
    %4772 = vrot.lane.b32.xlu0 %v4770, 64
    %v4773 = vpop.permute.xlu0 %4772
    %v4775 = vmul.f32 %v4754, %v4773
    %v4777 = vrot.slane %v4705, 4
    %4778 = vrot.lane.b32.xlu0 %v4777, 32
    %v4779 = vpop.permute.xlu0 %4778
    %v4780 = vsel %vm4051, %v4779, 0
    %4782 = vmatpush.msra.mxu0 0.0
    %4783 = vmatpush.msra.mxu0 0.0
    %4784 = vmatpush.msra.mxu0 0.0
    %4785 = vmatpush.msra.mxu0 0.0
    %4786 = vmatpush.msra.mxu0 0.0
    %4787 = vmatpush.msra.mxu0 0.0
    %4788 = vmatpush.msra.mxu0 0.0
    %4789 = vmatpush.msra.mxu0 0.0
    %4790 = vmatpush.msra.mxu0 0.0
    %4791 = vmatpush.msra.mxu0 0.0
    %4792 = vmatpush.msra.mxu0 0.0
    %4793 = vmatpush.msra.mxu0 0.0
    %4794 = vmatpush.msra.mxu0 %v4032
    %4795 = vmatpush.msra.mxu0 %v4031
    %4796 = vmatpush.msra.mxu0 %v4030
    %4797 = vmatpush.msra.mxu0 %v4029
    %4798 = vmatmul.f32.gmra.mxu0 %v4780
    %v4799 = vpop.f32.mrf.mxu0
    %v4800 = vadd.f32 0.0, %v4799
    %4801 = vdwg.mxu0
    %v4803 = vrot.slane %v4800, 3
    %v4805 = vadd.f32 %v4073, %v4803
    %v4806 = vxor.u32 %v4805, 2147483648
    %v4807 = vmul.f32 %v4806, 1.442695
    %v4808 = vpow.pop %v4807
    %v4809 = vadd.f32 %v4808, 1.0
    %v4810 = vrcp.pop %v4809
    %v4811 = vmul.f32 %v4809, %v4810
    %v4812 = vsub.f32 1.0, %v4811
    %v4813 = vmul.f32 %v4810, %v4812
    %v4814 = vadd.f32 %v4810, %v4813
    %vm4815 = vweird.f32 %v4809
    %vm4816 = vweird.f32 %v4810
    %vm4817 = vmor %vm4815, %vm4816
    %v4818 = vsel %vm4817, %v4810, %v4814
    %v4819 = vand.u32 2147483647, %v4809
    %vm4820 = vcmp.eq.f32.partialorder %v4819, 8.507059e+37
    %v4821 = vand.u32 %v4809, 2147483648
    %v4822 = vor.u32 1.1754944e-38, %v4821
    %v4823 = vsel %vm4820, %v4822, %v4818
    %v4824 = vmul.f32 1.0, %v4823
    %v4825 = vtanh.pop %v4805
    %v4827 = vrot.slane %v4699, 7
    %v4829 = vmul.f32 %v4824, %v4827
    %4831 = vrot.lane.b32.xlu0 %v4825, 64
    %v4832 = vpop.permute.xlu0 %4831
    %v4834 = vmul.f32 %v4824, %v4832
    %4836 = vrot.lane.b32.xlu0 %v4834, 32
    %v4837 = vpop.permute.xlu0 %4836
    %v4839 = vadd.f32 %v4829, %v4837
    %v4840 = vtanh.pop %v4839
    %4842 = vrot.lane.b32.xlu0 %v4840, 64
    %v4843 = vpop.permute.xlu0 %4842
    %v4845 = vmul.f32 %v4824, %v4843
    %v4847 = vrot.slane %v4775, 3
    %4848 = vrot.lane.b32.xlu0 %v4847, 32
    %v4849 = vpop.permute.xlu0 %4848
    %v4850 = vsel %vm4051, %v4849, 0
    %4852 = vmatpush.msra.mxu0 0.0
    %4853 = vmatpush.msra.mxu0 0.0
    %4854 = vmatpush.msra.mxu0 0.0
    %4855 = vmatpush.msra.mxu0 0.0
    %4856 = vmatpush.msra.mxu0 0.0
    %4857 = vmatpush.msra.mxu0 0.0
    %4858 = vmatpush.msra.mxu0 0.0
    %4859 = vmatpush.msra.mxu0 0.0
    %4860 = vmatpush.msra.mxu0 0.0
    %4861 = vmatpush.msra.mxu0 0.0
    %4862 = vmatpush.msra.mxu0 0.0
    %4863 = vmatpush.msra.mxu0 0.0
    %4864 = vmatpush.msra.mxu0 %v4036
    %4865 = vmatpush.msra.mxu0 %v4035
    %4866 = vmatpush.msra.mxu0 %v4034
    %4867 = vmatpush.msra.mxu0 %v4033
    %4868 = vmatmul.f32.gmra.mxu0 %v4850
    %v4869 = vpop.f32.mrf.mxu0
    %v4870 = vadd.f32 0.0, %v4869
    %4871 = vdwg.mxu0
    %v4873 = vrot.slane %v4870, 6
    %v4875 = vadd.f32 %v4093, %v4873
    %v4876 = vxor.u32 %v4875, 2147483648
    %v4877 = vmul.f32 %v4876, 1.442695
    %v4878 = vpow.pop %v4877
    %v4879 = vadd.f32 %v4878, 1.0
    %v4880 = vrcp.pop %v4879
    %v4881 = vmul.f32 %v4879, %v4880
    %v4882 = vsub.f32 1.0, %v4881
    %v4883 = vmul.f32 %v4880, %v4882
    %v4884 = vadd.f32 %v4880, %v4883
    %vm4885 = vweird.f32 %v4879
    %vm4886 = vweird.f32 %v4880
    %vm4887 = vmor %vm4885, %vm4886
    %v4888 = vsel %vm4887, %v4880, %v4884
    %v4889 = vand.u32 2147483647, %v4879
    %vm4890 = vcmp.eq.f32.partialorder %v4889, 8.507059e+37
    %v4891 = vand.u32 %v4879, 2147483648
    %v4892 = vor.u32 1.1754944e-38, %v4891
    %v4893 = vsel %vm4890, %v4892, %v4888
    %v4894 = vmul.f32 1.0, %v4893
    %v4895 = vtanh.pop %v4875
    %v4897 = vrot.slane %v4769, 1
    %v4899 = vmul.f32 %v4894, %v4897
    %4901 = vrot.lane.b32.xlu0 %v4895, 64
    %v4902 = vpop.permute.xlu0 %4901
    %v4904 = vmul.f32 %v4894, %v4902
    %4906 = vrot.lane.b32.xlu0 %v4904, 32
    %v4907 = vpop.permute.xlu0 %4906
    %v4909 = vadd.f32 %v4899, %v4907
    %v4910 = vtanh.pop %v4909
    %4912 = vrot.lane.b32.xlu0 %v4910, 64
    %v4913 = vpop.permute.xlu0 %4912
    %v4915 = vmul.f32 %v4894, %v4913
    %v4917 = vrot.slane %v4845, 5
    %4918 = vrot.lane.b32.xlu0 %v4917, 32
    %v4919 = vpop.permute.xlu0 %4918
    %v4920 = vsel %vm4051, %v4919, 0
    %4922 = vmatpush.msra.mxu0 0.0
    %4923 = vmatpush.msra.mxu0 0.0
    %4924 = vmatpush.msra.mxu0 0.0
    %4925 = vmatpush.msra.mxu0 0.0
    %4926 = vmatpush.msra.mxu0 0.0
    %4927 = vmatpush.msra.mxu0 0.0
    %4928 = vmatpush.msra.mxu0 0.0
    %4929 = vmatpush.msra.mxu0 0.0
    %4930 = vmatpush.msra.mxu0 0.0
    %4931 = vmatpush.msra.mxu0 0.0
    %4932 = vmatpush.msra.mxu0 0.0
    %4933 = vmatpush.msra.mxu0 0.0
    %4934 = vmatpush.msra.mxu0 %v4032
    %4935 = vmatpush.msra.mxu0 %v4031
    %4936 = vmatpush.msra.mxu0 %v4030
    %4937 = vmatpush.msra.mxu0 %v4029
    %4938 = vmatmul.f32.gmra.mxu0 %v4920
    %v4939 = vpop.f32.mrf.mxu0
    %v4940 = vadd.f32 0.0, %v4939
    %4941 = vdwg.mxu0
    %v4943 = vrot.slane %v4940, 2
    %v4945 = vadd.f32 %v4073, %v4943
    %v4946 = vxor.u32 %v4945, 2147483648
    %v4947 = vmul.f32 %v4946, 1.442695
    %v4948 = vpow.pop %v4947
    %v4949 = vadd.f32 %v4948, 1.0
    %v4950 = vrcp.pop %v4949
    %v4951 = vmul.f32 %v4949, %v4950
    %v4952 = vsub.f32 1.0, %v4951
    %v4953 = vmul.f32 %v4950, %v4952
    %v4954 = vadd.f32 %v4950, %v4953
    %vm4955 = vweird.f32 %v4949
    %vm4956 = vweird.f32 %v4950
    %vm4957 = vmor %vm4955, %vm4956
    %v4958 = vsel %vm4957, %v4950, %v4954
    %v4959 = vand.u32 2147483647, %v4949
    %vm4960 = vcmp.eq.f32.partialorder %v4959, 8.507059e+37
    %v4961 = vand.u32 %v4949, 2147483648
    %v4962 = vor.u32 1.1754944e-38, %v4961
    %v4963 = vsel %vm4960, %v4962, %v4958
    %v4964 = vmul.f32 1.0, %v4963
    %v4965 = vtanh.pop %v4945
    %v4967 = vrot.slane %v4839, 7
    %v4969 = vmul.f32 %v4964, %v4967
    %4971 = vrot.lane.b32.xlu0 %v4965, 64
    %v4972 = vpop.permute.xlu0 %4971
    %v4974 = vmul.f32 %v4964, %v4972
    %4976 = vrot.lane.b32.xlu0 %v4974, 32
    %v4977 = vpop.permute.xlu0 %4976
    %v4979 = vadd.f32 %v4969, %v4977
    %v4980 = vtanh.pop %v4979
    %4982 = vrot.lane.b32.xlu0 %v4980, 64
    %v4983 = vpop.permute.xlu0 %4982
    %v4985 = vmul.f32 %v4964, %v4983
    %v4987 = vrot.slane %v4915, 2
    %4988 = vrot.lane.b32.xlu0 %v4987, 32
    %v4989 = vpop.permute.xlu0 %4988
    %v4990 = vsel %vm4051, %v4989, 0
    %4992 = vmatpush.msra.mxu0 0.0
    %4993 = vmatpush.msra.mxu0 0.0
    %4994 = vmatpush.msra.mxu0 0.0
    %4995 = vmatpush.msra.mxu0 0.0
    %4996 = vmatpush.msra.mxu0 0.0
    %4997 = vmatpush.msra.mxu0 0.0
    %4998 = vmatpush.msra.mxu0 0.0
    %4999 = vmatpush.msra.mxu0 0.0
    %5000 = vmatpush.msra.mxu0 0.0
    %5001 = vmatpush.msra.mxu0 0.0
    %5002 = vmatpush.msra.mxu0 0.0
    %5003 = vmatpush.msra.mxu0 0.0
    %5004 = vmatpush.msra.mxu0 %v4036
    %5005 = vmatpush.msra.mxu0 %v4035
    %5006 = vmatpush.msra.mxu0 %v4034
    %5007 = vmatpush.msra.mxu0 %v4033
    %5008 = vmatmul.f32.gmra.mxu0 %v4990
    %v5009 = vpop.f32.mrf.mxu0
    %v5010 = vadd.f32 0.0, %v5009
    %5011 = vdwg.mxu0
    %v5013 = vrot.slane %v5010, 7
    %v5015 = vadd.f32 %v4093, %v5013
    %v5016 = vxor.u32 %v5015, 2147483648
    %v5017 = vmul.f32 %v5016, 1.442695
    %v5018 = vpow.pop %v5017
    %v5019 = vadd.f32 %v5018, 1.0
    %v5020 = vrcp.pop %v5019
    %v5021 = vmul.f32 %v5019, %v5020
    %v5022 = vsub.f32 1.0, %v5021
    %v5023 = vmul.f32 %v5020, %v5022
    %v5024 = vadd.f32 %v5020, %v5023
    %vm5025 = vweird.f32 %v5019
    %vm5026 = vweird.f32 %v5020
    %vm5027 = vmor %vm5025, %vm5026
    %v5028 = vsel %vm5027, %v5020, %v5024
    %v5029 = vand.u32 2147483647, %v5019
    %vm5030 = vcmp.eq.f32.partialorder %v5029, 8.507059e+37
    %v5031 = vand.u32 %v5019, 2147483648
    %v5032 = vor.u32 1.1754944e-38, %v5031
    %v5033 = vsel %vm5030, %v5032, %v5028
    %v5034 = vmul.f32 1.0, %v5033
    %v5035 = vtanh.pop %v5015
    %v5037 = vrot.slane %v4909, 1
    %v5039 = vmul.f32 %v5034, %v5037
    %5041 = vrot.lane.b32.xlu0 %v5035, 64
    %v5042 = vpop.permute.xlu0 %5041
    %v5044 = vmul.f32 %v5034, %v5042
    %5046 = vrot.lane.b32.xlu0 %v5044, 32
    %v5047 = vpop.permute.xlu0 %5046
    %v5049 = vadd.f32 %v5039, %v5047
    %v5050 = vtanh.pop %v5049
    %5052 = vrot.lane.b32.xlu0 %v5050, 64
    %v5053 = vpop.permute.xlu0 %5052
    %v5055 = vmul.f32 %v5034, %v5053
    %v5057 = vrot.slane %v4985, 6
    %5058 = vrot.lane.b32.xlu0 %v5057, 32
    %v5059 = vpop.permute.xlu0 %5058
    %v5060 = vsel %vm4051, %v5059, 0
    %5062 = vmatpush.msra.mxu0 0.0
    %5063 = vmatpush.msra.mxu0 0.0
    %5064 = vmatpush.msra.mxu0 0.0
    %5065 = vmatpush.msra.mxu0 0.0
    %5066 = vmatpush.msra.mxu0 0.0
    %5067 = vmatpush.msra.mxu0 0.0
    %5068 = vmatpush.msra.mxu0 0.0
    %5069 = vmatpush.msra.mxu0 0.0
    %5070 = vmatpush.msra.mxu0 0.0
    %5071 = vmatpush.msra.mxu0 0.0
    %5072 = vmatpush.msra.mxu0 0.0
    %5073 = vmatpush.msra.mxu0 0.0
    %5074 = vmatpush.msra.mxu0 %v4032
    %5075 = vmatpush.msra.mxu0 %v4031
    %5076 = vmatpush.msra.mxu0 %v4030
    %5077 = vmatpush.msra.mxu0 %v4029
    %5078 = vmatmul.f32.gmra.mxu0 %v5060
    %v5079 = vpop.f32.mrf.mxu0
    %v5080 = vadd.f32 0.0, %v5079
    %5081 = vdwg.mxu0
    %v5083 = vrot.slane %v5080, 1
    %v5085 = vadd.f32 %v4073, %v5083
    %v5086 = vxor.u32 %v5085, 2147483648
    %v5087 = vmul.f32 %v5086, 1.442695
    %v5088 = vpow.pop %v5087
    %v5089 = vadd.f32 %v5088, 1.0
    %v5090 = vrcp.pop %v5089
    %v5091 = vmul.f32 %v5089, %v5090
    %v5092 = vsub.f32 1.0, %v5091
    %v5093 = vmul.f32 %v5090, %v5092
    %v5094 = vadd.f32 %v5090, %v5093
    %vm5095 = vweird.f32 %v5089
    %vm5096 = vweird.f32 %v5090
    %vm5097 = vmor %vm5095, %vm5096
    %v5098 = vsel %vm5097, %v5090, %v5094
    %v5099 = vand.u32 2147483647, %v5089
    %vm5100 = vcmp.eq.f32.partialorder %v5099, 8.507059e+37
    %v5101 = vand.u32 %v5089, 2147483648
    %v5102 = vor.u32 1.1754944e-38, %v5101
    %v5103 = vsel %vm5100, %v5102, %v5098
    %v5104 = vmul.f32 1.0, %v5103
    %v5105 = vtanh.pop %v5085
    %v5107 = vrot.slane %v4979, 7
    %v5109 = vmul.f32 %v5104, %v5107
    %5111 = vrot.lane.b32.xlu0 %v5105, 64
    %v5112 = vpop.permute.xlu0 %5111
    %v5114 = vmul.f32 %v5104, %v5112
    %5116 = vrot.lane.b32.xlu0 %v5114, 32
    %v5117 = vpop.permute.xlu0 %5116
    %v5119 = vadd.f32 %v5109, %v5117
    %v5120 = vtanh.pop %v5119
    %5122 = vrot.lane.b32.xlu0 %v5120, 64
    %v5123 = vpop.permute.xlu0 %5122
    %v5125 = vmul.f32 %v5104, %v5123
    %v5127 = vrot.slane %v5055, 1
    %5128 = vrot.lane.b32.xlu0 %v5127, 32
    %v5129 = vpop.permute.xlu0 %5128
    %v5130 = vsel %vm4051, %v5129, 0
    %5132 = vmatpush.msra.mxu0 0.0
    %5133 = vmatpush.msra.mxu0 0.0
    %5134 = vmatpush.msra.mxu0 0.0
    %5135 = vmatpush.msra.mxu0 0.0
    %5136 = vmatpush.msra.mxu0 0.0
    %5137 = vmatpush.msra.mxu0 0.0
    %5138 = vmatpush.msra.mxu0 0.0
    %5139 = vmatpush.msra.mxu0 0.0
    %5140 = vmatpush.msra.mxu0 0.0
    %5141 = vmatpush.msra.mxu0 0.0
    %5142 = vmatpush.msra.mxu0 0.0
    %5143 = vmatpush.msra.mxu0 0.0
    %5144 = vmatpush.msra.mxu0 %v4036
    %5145 = vmatpush.msra.mxu0 %v4035
    %5146 = vmatpush.msra.mxu0 %v4034
    %5147 = vmatpush.msra.mxu0 %v4033
    %5148 = vmatmul.f32.gmra.mxu0 %v5130
    %v5149 = vpop.f32.mrf.mxu0
    %v5150 = vadd.f32 0.0, %v5149
    %5151 = vdwg.mxu0
    %v5152 = vadd.f32 %v4093, %v5150
    %v5153 = vxor.u32 %v5152, 2147483648
    %v5154 = vmul.f32 %v5153, 1.442695
    %v5155 = vpow.pop %v5154
    %v5156 = vadd.f32 %v5155, 1.0
    %v5157 = vrcp.pop %v5156
    %v5158 = vmul.f32 %v5156, %v5157
    %v5159 = vsub.f32 1.0, %v5158
    %v5160 = vmul.f32 %v5157, %v5159
    %v5161 = vadd.f32 %v5157, %v5160
    %vm5162 = vweird.f32 %v5156
    %vm5163 = vweird.f32 %v5157
    %vm5164 = vmor %vm5162, %vm5163
    %v5165 = vsel %vm5164, %v5157, %v5161
    %v5166 = vand.u32 2147483647, %v5156
    %vm5167 = vcmp.eq.f32.partialorder %v5166, 8.507059e+37
    %v5168 = vand.u32 %v5156, 2147483648
    %v5169 = vor.u32 1.1754944e-38, %v5168
    %v5170 = vsel %vm5167, %v5169, %v5165
    %v5171 = vmul.f32 1.0, %v5170
    %v5172 = vtanh.pop %v5152
    %v5174 = vrot.slane %v5049, 1
    %v5176 = vmul.f32 %v5171, %v5174
    %5178 = vrot.lane.b32.xlu0 %v5172, 64
    %v5179 = vpop.permute.xlu0 %5178
    %v5181 = vmul.f32 %v5171, %v5179
    %5183 = vrot.lane.b32.xlu0 %v5181, 32
    %v5184 = vpop.permute.xlu0 %5183
    %v5186 = vadd.f32 %v5176, %v5184
    %v5187 = vtanh.pop %v5186
    %5189 = vrot.lane.b32.xlu0 %v5187, 64
    %v5190 = vpop.permute.xlu0 %5189
    %v5192 = vmul.f32 %v5171, %v5190
    %v5193 = vsel %vm3979, %v4155, %v4285
    %v5194 = vsel %vm3981, %v5193, %v4425
    %v5195 = vsel %vm1593, %v5194, %v4565
    %v5196 = vsel %vm3984, %v5195, %v4705
    %v5197 = vsel %vm3986, %v5196, %v4845
    %v5198 = vsel %vm3988, %v5197, %v4985
    %v5199 = vsel %vm3990, %v5198, %v5125
    %5201 = vrot.lane.b32.xlu0 %v5199, 32
    %v5202 = vpop.permute.xlu0 %5201
    %v5204 = vadd.f32 %v4024, %v5202
    %v5205 = vsel %vm3979, %v5192, %v5055
    %v5206 = vsel %vm3981, %v5205, %v4915
    %v5207 = vsel %vm1593, %v5206, %v4775
    %v5208 = vsel %vm3984, %v5207, %v4635
    %v5209 = vsel %vm3986, %v5208, %v4495
    %v5210 = vsel %vm3988, %v5209, %v4355
    %v5211 = vsel %vm3990, %v5210, %v4216
    %5213 = vrot.lane.b32.xlu0 %v5211, 32
    %v5214 = vpop.permute.xlu0 %5213
    %v5216 = vadd.f32 %v5204, %v5214
    %v5217 = vld [vmem:[%s10] sm:$0xff]
    %v5218 = vld [vmem:[%s10 + $0x8] sm:$0xff]
    %v5219 = vld [vmem:[%s10 + $0x10] sm:$0xff]
    %v5220 = vld [vmem:[%s10 + $0x18] sm:$0xff]
    %v5222 = vsel %vm4051, %v5216, 0
    %5224 = vmatpush.msra.mxu0 0.0
    %5225 = vmatpush.msra.mxu0 0.0
    %5226 = vmatpush.msra.mxu0 0.0
    %5227 = vmatpush.msra.mxu0 0.0
    %5228 = vmatpush.msra.mxu0 0.0
    %5229 = vmatpush.msra.mxu0 0.0
    %5230 = vmatpush.msra.mxu0 0.0
    %5231 = vmatpush.msra.mxu0 0.0
    %5232 = vmatpush.msra.mxu0 0.0
    %5233 = vmatpush.msra.mxu0 0.0
    %5234 = vmatpush.msra.mxu0 0.0
    %5235 = vmatpush.msra.mxu0 0.0
    %5236 = vmatpush.msra.mxu0 %v5220
    %5237 = vmatpush.msra.mxu0 %v5219
    %5238 = vmatpush.msra.mxu0 %v5218
    %5239 = vmatpush.msra.mxu0 %v5217
    %5240 = vmatmul.f32.gmra.mxu0 %v5222
    %v5241 = vpop.f32.mrf.mxu0
    %v5242 = vadd.f32 0.0, %v5241
    %5243 = vdwg.mxu0
    %v5244 = vld [vmem:[%s9] sm:$0xff]
    %v5245 = vld [vmem:[%s9 + $0x8] sm:$0xff]
    %v5246 = vld [vmem:[%s9 + $0x10] sm:$0xff]
    %v5247 = vld [vmem:[%s9 + $0x18] sm:$0xff]
    %v5248 = vld [vmem:[%s12] sm:$0x1]
    %v5250 = vperm.slane %v5248, 0
    %v5253 = vsel %vm4051, %v4027, 0
    %5255 = vmatpush.msra.mxu0 0.0
    %5256 = vmatpush.msra.mxu0 0.0
    %5257 = vmatpush.msra.mxu0 0.0
    %5258 = vmatpush.msra.mxu0 0.0
    %5259 = vmatpush.msra.mxu0 0.0
    %5260 = vmatpush.msra.mxu0 0.0
    %5261 = vmatpush.msra.mxu0 0.0
    %5262 = vmatpush.msra.mxu0 0.0
    %5263 = vmatpush.msra.mxu0 0.0
    %5264 = vmatpush.msra.mxu0 0.0
    %5265 = vmatpush.msra.mxu0 0.0
    %5266 = vmatpush.msra.mxu0 0.0
    %5267 = vmatpush.msra.mxu0 %v5247
    %5268 = vmatpush.msra.mxu0 %v5246
    %5269 = vmatpush.msra.mxu0 %v5245
    %5270 = vmatpush.msra.mxu0 %v5244
    %5271 = vmatmul.f32.gmra.mxu0 %v5253
    %v5272 = vpop.f32.mrf.mxu0
    %v5273 = vadd.f32 %v5250, %v5272
    %5274 = vdwg.mxu0
    %v5275 = vld [vmem:[%s11] sm:$0xff]
    %v5276 = vld [vmem:[%s11 + $0x8] sm:$0xff]
    %v5277 = vld [vmem:[%s11 + $0x10] sm:$0xff]
    %v5278 = vld [vmem:[%s11 + $0x18] sm:$0xff]
    %5279 = vmatpush.xpose.msra.mxu0 0.0
    %5280 = vmatpush.xpose.msra.mxu0 0.0
    %5281 = vmatpush.xpose.msra.mxu0 0.0
    %5282 = vmatpush.xpose.msra.mxu0 0.0
    %5283 = vmatpush.xpose.msra.mxu0 0.0
    %5284 = vmatpush.xpose.msra.mxu0 0.0
    %5285 = vmatpush.xpose.msra.mxu0 0.0
    %5286 = vmatpush.xpose.msra.mxu0 0.0
    %5287 = vmatpush.xpose.msra.mxu0 0.0
    %5288 = vmatpush.xpose.msra.mxu0 0.0
    %5289 = vmatpush.xpose.msra.mxu0 0.0
    %5290 = vmatpush.xpose.msra.mxu0 0.0
    %5291 = vmatpush.xpose.msra.mxu0 0.0
    %5292 = vmatpush.xpose.msra.mxu0 0.0
    %5293 = vmatpush.xpose.msra.mxu0 0.0
    %5294 = vmatpush.xpose.msra.mxu0 %v5222
    %5295 = vmatmul.f32.gmra.mxu0 %v5253
    %v5296 = vpop.f32.mrf.mxu0
    %v5297 = vadd.f32 0.0, %v5296
    %5298 = vdwg.mxu0
    %vm5299 = vcmask 60416
    %v5300 = vsel %vm5299, %v5297, -inf
    %5301 = vmax.xlane.f32.xlu0 %v5300
    %v5302 = vpop.xlane.xlu0 %5301
    %v5303 = vsub.f32 %v5297, %v5302
    %v5304 = vmul.f32 %v5303, 1.442695
    %v5305 = vpow.pop %v5304
    %v5306 = vsel %vm5299, %v5305, 0.0
    %5307 = vadd.xlane.f32.xlu0 %v5306
    %v5308 = vpop.xlane.xlu0 %5307
    %v5309 = vrcp.pop %v5308
    %v5310 = vmul.f32 %v5305, %v5309
    %v5312 = vsel %vm3150, %v5310, 0
    %5314 = vmatpush.msra.mxu0 0.0
    %5315 = vmatpush.msra.mxu0 0.0
    %5316 = vmatpush.msra.mxu0 0.0
    %5317 = vmatpush.msra.mxu0 0.0
    %5318 = vmatpush.msra.mxu0 0.0
    %5319 = vmatpush.msra.mxu0 0.0
    %5320 = vmatpush.msra.mxu0 0.0
    %5321 = vmatpush.msra.mxu0 0.0
    %5322 = vmatpush.msra.mxu0 0.0
    %5323 = vmatpush.msra.mxu0 0.0
    %5324 = vmatpush.msra.mxu0 0.0
    %5325 = vmatpush.msra.mxu0 0.0
    %5326 = vmatpush.msra.mxu0 0.0
    %5327 = vmatpush.msra.mxu0 0.0
    %5328 = vmatpush.msra.mxu0 0.0
    %5329 = vmatpush.msra.mxu0 %v5242
    %5330 = vmatmul.f32.gmra.mxu0 %v5312
    %v5331 = vpop.f32.mrf.mxu0
    %v5332 = vadd.f32 0.0, %v5331
    %5333 = vdwg.mxu0
    %v5334 = vadd.f32 %v5273, %v5332
    %5335 = vmatpush.msra.mxu0 0.0
    %5336 = vmatpush.msra.mxu0 0.0
    %5337 = vmatpush.msra.mxu0 0.0
    %5338 = vmatpush.msra.mxu0 0.0
    %5339 = vmatpush.msra.mxu0 0.0
    %5340 = vmatpush.msra.mxu0 0.0
    %5341 = vmatpush.msra.mxu0 0.0
    %5342 = vmatpush.msra.mxu0 0.0
    %5343 = vmatpush.msra.mxu0 0.0
    %5344 = vmatpush.msra.mxu0 0.0
    %5345 = vmatpush.msra.mxu0 0.0
    %5346 = vmatpush.msra.mxu0 0.0
    %5347 = vmatpush.msra.mxu0 %v5278
    %5348 = vmatpush.msra.mxu0 %v5277
    %5349 = vmatpush.msra.mxu0 %v5276
    %5350 = vmatpush.msra.mxu0 %v5275
    %5351 = vmatmul.f32.gmra.mxu0 %v5253
    %v5352 = vpop.f32.mrf.mxu0
    %v5353 = vadd.f32 0.0, %v5352
    %5354 = vdwg.mxu0
    %v5355 = vadd.f32 %v5334, %v5353
    %v5356 = vxor.u32 %v5355, 2147483648
    %v5357 = vmul.f32 %v5356, 1.442695
    %v5358 = vpow.pop %v5357
    %v5359 = vadd.f32 %v5358, 1.0
    %v5360 = vrcp.pop %v5359
    %v5361 = vmul.f32 %v5359, %v5360
    %v5362 = vsub.f32 1.0, %v5361
    %v5363 = vmul.f32 %v5360, %v5362
    %v5364 = vadd.f32 %v5360, %v5363
    %vm5365 = vweird.f32 %v5359
    %vm5366 = vweird.f32 %v5360
    %vm5367 = vmor %vm5365, %vm5366
    %v5368 = vsel %vm5367, %v5360, %v5364
    %v5369 = vand.u32 2147483647, %v5359
    %vm5370 = vcmp.eq.f32.partialorder %v5369, 8.507059e+37
    %v5371 = vand.u32 %v5359, 2147483648
    %v5372 = vor.u32 1.1754944e-38, %v5371
    %v5373 = vsel %vm5370, %v5372, %v5368
    %v5374 = vmul.f32 1.0, %v5373
    %v5375 = vtanh.pop %v5355
    %v5376 = vmul.f32 %v5374, 0.0
    %5378 = vrot.lane.b32.xlu0 %v5375, 64
    %v5379 = vpop.permute.xlu0 %5378
    %v5381 = vmul.f32 %v5374, %v5379
    %5383 = vrot.lane.b32.xlu0 %v5381, 32
    %v5384 = vpop.permute.xlu0 %5383
    %v5386 = vadd.f32 %v5376, %v5384
    %v5387 = vtanh.pop %v5386
    %5389 = vrot.lane.b32.xlu0 %v5387, 64
    %v5390 = vpop.permute.xlu0 %5389
    %v5392 = vmul.f32 %v5374, %v5390
    %5393 = vrot.lane.b32.xlu0 %v4027, 96
    %v5394 = vpop.permute.xlu0 %5393
    %v5396 = vadd.f32 %v5392, %v5394
    %5398 = vrot.lane.b32.xlu0 %v5396, 32
    %v5399 = vpop.permute.xlu0 %5398
    %v5400 = vsel %vm4051, %v5399, 0
    %5402 = vmatpush.xpose.msra.mxu0 0.0
    %5403 = vmatpush.xpose.msra.mxu0 0.0
    %5404 = vmatpush.xpose.msra.mxu0 0.0
    %5405 = vmatpush.xpose.msra.mxu0 0.0
    %5406 = vmatpush.xpose.msra.mxu0 0.0
    %5407 = vmatpush.xpose.msra.mxu0 0.0
    %5408 = vmatpush.xpose.msra.mxu0 0.0
    %5409 = vmatpush.xpose.msra.mxu0 0.0
    %5410 = vmatpush.xpose.msra.mxu0 0.0
    %5411 = vmatpush.xpose.msra.mxu0 0.0
    %5412 = vmatpush.xpose.msra.mxu0 0.0
    %5413 = vmatpush.xpose.msra.mxu0 0.0
    %5414 = vmatpush.xpose.msra.mxu0 0.0
    %5415 = vmatpush.xpose.msra.mxu0 0.0
    %5416 = vmatpush.xpose.msra.mxu0 0.0
    %5417 = vmatpush.xpose.msra.mxu0 %v5222
    %5418 = vmatmul.f32.gmra.mxu0 %v5400
    %v5419 = vpop.f32.mrf.mxu0
    %v5420 = vadd.f32 0.0, %v5419
    %5421 = vdwg.mxu0
    %v5422 = vsel %vm5299, %v5420, -inf
    %5423 = vmax.xlane.f32.xlu0 %v5422
    %v5424 = vpop.xlane.xlu0 %5423
    %v5425 = vsub.f32 %v5420, %v5424
    %v5426 = vmul.f32 %v5425, 1.442695
    %v5427 = vpow.pop %v5426
    %v5428 = vsel %vm5299, %v5427, 0.0
    %5429 = vadd.xlane.f32.xlu0 %v5428
    %v5430 = vpop.xlane.xlu0 %5429
    %v5431 = vrcp.pop %v5430
    %v5432 = vmul.f32 %v5427, %v5431
    %v5434 = vsel %vm3150, %v5432, 0
    %5436 = vmatpush.msra.mxu0 0.0
    %5437 = vmatpush.msra.mxu0 0.0
    %5438 = vmatpush.msra.mxu0 0.0
    %5439 = vmatpush.msra.mxu0 0.0
    %5440 = vmatpush.msra.mxu0 0.0
    %5441 = vmatpush.msra.mxu0 0.0
    %5442 = vmatpush.msra.mxu0 0.0
    %5443 = vmatpush.msra.mxu0 0.0
    %5444 = vmatpush.msra.mxu0 0.0
    %5445 = vmatpush.msra.mxu0 0.0
    %5446 = vmatpush.msra.mxu0 0.0
    %5447 = vmatpush.msra.mxu0 0.0
    %5448 = vmatpush.msra.mxu0 0.0
    %5449 = vmatpush.msra.mxu0 0.0
    %5450 = vmatpush.msra.mxu0 0.0
    %5451 = vmatpush.msra.mxu0 %v5242
    %5452 = vmatmul.f32.gmra.mxu0 %v5434
    %v5453 = vpop.f32.mrf.mxu0
    %v5454 = vadd.f32 0.0, %v5453
    %5455 = vdwg.mxu0
    %v5456 = vadd.f32 %v5273, %v5454
    %5457 = vmatpush.msra.mxu0 0.0
    %5458 = vmatpush.msra.mxu0 0.0
    %5459 = vmatpush.msra.mxu0 0.0
    %5460 = vmatpush.msra.mxu0 0.0
    %5461 = vmatpush.msra.mxu0 0.0
    %5462 = vmatpush.msra.mxu0 0.0
    %5463 = vmatpush.msra.mxu0 0.0
    %5464 = vmatpush.msra.mxu0 0.0
    %5465 = vmatpush.msra.mxu0 0.0
    %5466 = vmatpush.msra.mxu0 0.0
    %5467 = vmatpush.msra.mxu0 0.0
    %5468 = vmatpush.msra.mxu0 0.0
    %5469 = vmatpush.msra.mxu0 %v5278
    %5470 = vmatpush.msra.mxu0 %v5277
    %5471 = vmatpush.msra.mxu0 %v5276
    %5472 = vmatpush.msra.mxu0 %v5275
    %5473 = vmatmul.f32.gmra.mxu0 %v5400
    %v5474 = vpop.f32.mrf.mxu0
    %v5475 = vadd.f32 0.0, %v5474
    %5476 = vdwg.mxu0
    %v5477 = vadd.f32 %v5456, %v5475
    %v5478 = vxor.u32 %v5477, 2147483648
    %v5479 = vmul.f32 %v5478, 1.442695
    %v5480 = vpow.pop %v5479
    %v5481 = vadd.f32 %v5480, 1.0
    %v5482 = vrcp.pop %v5481
    %v5483 = vmul.f32 %v5481, %v5482
    %v5484 = vsub.f32 1.0, %v5483
    %v5485 = vmul.f32 %v5482, %v5484
    %v5486 = vadd.f32 %v5482, %v5485
    %vm5487 = vweird.f32 %v5481
    %vm5488 = vweird.f32 %v5482
    %vm5489 = vmor %vm5487, %vm5488
    %v5490 = vsel %vm5489, %v5482, %v5486
    %v5491 = vand.u32 2147483647, %v5481
    %vm5492 = vcmp.eq.f32.partialorder %v5491, 8.507059e+37
    %v5493 = vand.u32 %v5481, 2147483648
    %v5494 = vor.u32 1.1754944e-38, %v5493
    %v5495 = vsel %vm5492, %v5494, %v5490
    %v5496 = vmul.f32 1.0, %v5495
    %v5497 = vtanh.pop %v5477
    %v5498 = vmul.f32 %v5496, %v5386
    %5500 = vrot.lane.b32.xlu0 %v5497, 64
    %v5501 = vpop.permute.xlu0 %5500
    %v5503 = vmul.f32 %v5496, %v5501
    %5505 = vrot.lane.b32.xlu0 %v5503, 32
    %v5506 = vpop.permute.xlu0 %5505
    %v5508 = vadd.f32 %v5498, %v5506
    %v5509 = vtanh.pop %v5508
    %5511 = vrot.lane.b32.xlu0 %v5509, 64
    %v5512 = vpop.permute.xlu0 %5511
    %v5514 = vmul.f32 %v5496, %v5512
    %v5515 = vadd.f32 %v5514, %v5394
    %5517 = vrot.lane.b32.xlu0 %v5515, 32
    %v5518 = vpop.permute.xlu0 %5517
    %v5519 = vsel %vm4051, %v5518, 0
    %5521 = vmatpush.xpose.msra.mxu0 0.0
    %5522 = vmatpush.xpose.msra.mxu0 0.0
    %5523 = vmatpush.xpose.msra.mxu0 0.0
    %5524 = vmatpush.xpose.msra.mxu0 0.0
    %5525 = vmatpush.xpose.msra.mxu0 0.0
    %5526 = vmatpush.xpose.msra.mxu0 0.0
    %5527 = vmatpush.xpose.msra.mxu0 0.0
    %5528 = vmatpush.xpose.msra.mxu0 0.0
    %5529 = vmatpush.xpose.msra.mxu0 0.0
    %5530 = vmatpush.xpose.msra.mxu0 0.0
    %5531 = vmatpush.xpose.msra.mxu0 0.0
    %5532 = vmatpush.xpose.msra.mxu0 0.0
    %5533 = vmatpush.xpose.msra.mxu0 0.0
    %5534 = vmatpush.xpose.msra.mxu0 0.0
    %5535 = vmatpush.xpose.msra.mxu0 0.0
    %5536 = vmatpush.xpose.msra.mxu0 %v5222
    %5537 = vmatmul.f32.gmra.mxu0 %v5519
    %v5538 = vpop.f32.mrf.mxu0
    %v5539 = vadd.f32 0.0, %v5538
    %5540 = vdwg.mxu0
    %v5541 = vsel %vm5299, %v5539, -inf
    %5542 = vmax.xlane.f32.xlu0 %v5541
    %v5543 = vpop.xlane.xlu0 %5542
    %v5544 = vsub.f32 %v5539, %v5543
    %v5545 = vmul.f32 %v5544, 1.442695
    %v5546 = vpow.pop %v5545
    %v5547 = vsel %vm5299, %v5546, 0.0
    %5548 = vadd.xlane.f32.xlu0 %v5547
    %v5549 = vpop.xlane.xlu0 %5548
    %v5550 = vrcp.pop %v5549
    %v5551 = vmul.f32 %v5546, %v5550
    %v5553 = vsel %vm3150, %v5551, 0
    %5555 = vmatpush.msra.mxu0 0.0
    %5556 = vmatpush.msra.mxu0 0.0
    %5557 = vmatpush.msra.mxu0 0.0
    %5558 = vmatpush.msra.mxu0 0.0
    %5559 = vmatpush.msra.mxu0 0.0
    %5560 = vmatpush.msra.mxu0 0.0
    %5561 = vmatpush.msra.mxu0 0.0
    %5562 = vmatpush.msra.mxu0 0.0
    %5563 = vmatpush.msra.mxu0 0.0
    %5564 = vmatpush.msra.mxu0 0.0
    %5565 = vmatpush.msra.mxu0 0.0
    %5566 = vmatpush.msra.mxu0 0.0
    %5567 = vmatpush.msra.mxu0 0.0
    %5568 = vmatpush.msra.mxu0 0.0
    %5569 = vmatpush.msra.mxu0 0.0
    %5570 = vmatpush.msra.mxu0 %v5242
    %5571 = vmatmul.f32.gmra.mxu0 %v5553
    %v5572 = vpop.f32.mrf.mxu0
    %v5573 = vadd.f32 0.0, %v5572
    %5574 = vdwg.mxu0
    %v5575 = vadd.f32 %v5273, %v5573
    %5576 = vmatpush.msra.mxu0 0.0
    %5577 = vmatpush.msra.mxu0 0.0
    %5578 = vmatpush.msra.mxu0 0.0
    %5579 = vmatpush.msra.mxu0 0.0
    %5580 = vmatpush.msra.mxu0 0.0
    %5581 = vmatpush.msra.mxu0 0.0
    %5582 = vmatpush.msra.mxu0 0.0
    %5583 = vmatpush.msra.mxu0 0.0
    %5584 = vmatpush.msra.mxu0 0.0
    %5585 = vmatpush.msra.mxu0 0.0
    %5586 = vmatpush.msra.mxu0 0.0
    %5587 = vmatpush.msra.mxu0 0.0
    %5588 = vmatpush.msra.mxu0 %v5278
    %5589 = vmatpush.msra.mxu0 %v5277
    %5590 = vmatpush.msra.mxu0 %v5276
    %5591 = vmatpush.msra.mxu0 %v5275
    %5592 = vmatmul.f32.gmra.mxu0 %v5519
    %v5593 = vpop.f32.mrf.mxu0
    %v5594 = vadd.f32 0.0, %v5593
    %5595 = vdwg.mxu0
    %v5596 = vadd.f32 %v5575, %v5594
    %v5597 = vxor.u32 %v5596, 2147483648
    %v5598 = vmul.f32 %v5597, 1.442695
    %v5599 = vpow.pop %v5598
    %v5600 = vadd.f32 %v5599, 1.0
    %v5601 = vrcp.pop %v5600
    %v5602 = vmul.f32 %v5600, %v5601
    %v5603 = vsub.f32 1.0, %v5602
    %v5604 = vmul.f32 %v5601, %v5603
    %v5605 = vadd.f32 %v5601, %v5604
    %vm5606 = vweird.f32 %v5600
    %vm5607 = vweird.f32 %v5601
    %vm5608 = vmor %vm5606, %vm5607
    %v5609 = vsel %vm5608, %v5601, %v5605
    %v5610 = vand.u32 2147483647, %v5600
    %vm5611 = vcmp.eq.f32.partialorder %v5610, 8.507059e+37
    %v5612 = vand.u32 %v5600, 2147483648
    %v5613 = vor.u32 1.1754944e-38, %v5612
    %v5614 = vsel %vm5611, %v5613, %v5609
    %v5615 = vmul.f32 1.0, %v5614
    %v5616 = vtanh.pop %v5596
    %v5617 = vmul.f32 %v5615, %v5508
    %5619 = vrot.lane.b32.xlu0 %v5616, 64
    %v5620 = vpop.permute.xlu0 %5619
    %v5622 = vmul.f32 %v5615, %v5620
    %5624 = vrot.lane.b32.xlu0 %v5622, 32
    %v5625 = vpop.permute.xlu0 %5624
    %v5627 = vadd.f32 %v5617, %v5625
    %v5628 = vtanh.pop %v5627
    %5630 = vrot.lane.b32.xlu0 %v5628, 64
    %v5631 = vpop.permute.xlu0 %5630
    %v5633 = vmul.f32 %v5615, %v5631
    %v5634 = vadd.f32 %v5633, %v5394
    %5636 = vrot.lane.b32.xlu0 %v5634, 32
    %v5637 = vpop.permute.xlu0 %5636
    %v5638 = vsel %vm4051, %v5637, 0
    %5640 = vmatpush.xpose.msra.mxu0 0.0
    %5641 = vmatpush.xpose.msra.mxu0 0.0
    %5642 = vmatpush.xpose.msra.mxu0 0.0
    %5643 = vmatpush.xpose.msra.mxu0 0.0
    %5644 = vmatpush.xpose.msra.mxu0 0.0
    %5645 = vmatpush.xpose.msra.mxu0 0.0
    %5646 = vmatpush.xpose.msra.mxu0 0.0
    %5647 = vmatpush.xpose.msra.mxu0 0.0
    %5648 = vmatpush.xpose.msra.mxu0 0.0
    %5649 = vmatpush.xpose.msra.mxu0 0.0
    %5650 = vmatpush.xpose.msra.mxu0 0.0
    %5651 = vmatpush.xpose.msra.mxu0 0.0
    %5652 = vmatpush.xpose.msra.mxu0 0.0
    %5653 = vmatpush.xpose.msra.mxu0 0.0
    %5654 = vmatpush.xpose.msra.mxu0 0.0
    %5655 = vmatpush.xpose.msra.mxu0 %v5222
    %5656 = vmatmul.f32.gmra.mxu0 %v5638
    %v5657 = vpop.f32.mrf.mxu0
    %v5658 = vadd.f32 0.0, %v5657
    %5659 = vdwg.mxu0
    %v5660 = vsel %vm5299, %v5658, -inf
    %5661 = vmax.xlane.f32.xlu0 %v5660
    %v5662 = vpop.xlane.xlu0 %5661
    %v5663 = vsub.f32 %v5658, %v5662
    %v5664 = vmul.f32 %v5663, 1.442695
    %v5665 = vpow.pop %v5664
    %v5666 = vsel %vm5299, %v5665, 0.0
    %5667 = vadd.xlane.f32.xlu0 %v5666
    %v5668 = vpop.xlane.xlu0 %5667
    %v5669 = vrcp.pop %v5668
    %v5670 = vmul.f32 %v5665, %v5669
    %v5672 = vsel %vm3150, %v5670, 0
    %5674 = vmatpush.msra.mxu0 0.0
    %5675 = vmatpush.msra.mxu0 0.0
    %5676 = vmatpush.msra.mxu0 0.0
    %5677 = vmatpush.msra.mxu0 0.0
    %5678 = vmatpush.msra.mxu0 0.0
    %5679 = vmatpush.msra.mxu0 0.0
    %5680 = vmatpush.msra.mxu0 0.0
    %5681 = vmatpush.msra.mxu0 0.0
    %5682 = vmatpush.msra.mxu0 0.0
    %5683 = vmatpush.msra.mxu0 0.0
    %5684 = vmatpush.msra.mxu0 0.0
    %5685 = vmatpush.msra.mxu0 0.0
    %5686 = vmatpush.msra.mxu0 0.0
    %5687 = vmatpush.msra.mxu0 0.0
    %5688 = vmatpush.msra.mxu0 0.0
    %5689 = vmatpush.msra.mxu0 %v5242
    %5690 = vmatmul.f32.gmra.mxu0 %v5672
    %v5691 = vpop.f32.mrf.mxu0
    %v5692 = vadd.f32 0.0, %v5691
    %5693 = vdwg.mxu0
    %v5694 = vadd.f32 %v5273, %v5692
    %5695 = vmatpush.msra.mxu0 0.0
    %5696 = vmatpush.msra.mxu0 0.0
    %5697 = vmatpush.msra.mxu0 0.0
    %5698 = vmatpush.msra.mxu0 0.0
    %5699 = vmatpush.msra.mxu0 0.0
    %5700 = vmatpush.msra.mxu0 0.0
    %5701 = vmatpush.msra.mxu0 0.0
    %5702 = vmatpush.msra.mxu0 0.0
    %5703 = vmatpush.msra.mxu0 0.0
    %5704 = vmatpush.msra.mxu0 0.0
    %5705 = vmatpush.msra.mxu0 0.0
    %5706 = vmatpush.msra.mxu0 0.0
    %5707 = vmatpush.msra.mxu0 %v5278
    %5708 = vmatpush.msra.mxu0 %v5277
    %5709 = vmatpush.msra.mxu0 %v5276
    %5710 = vmatpush.msra.mxu0 %v5275
    %5711 = vmatmul.f32.gmra.mxu0 %v5638
    %v5712 = vpop.f32.mrf.mxu0
    %v5713 = vadd.f32 0.0, %v5712
    %5714 = vdwg.mxu0
    %v5715 = vadd.f32 %v5694, %v5713
    %v5716 = vxor.u32 %v5715, 2147483648
    %v5717 = vmul.f32 %v5716, 1.442695
    %v5718 = vpow.pop %v5717
    %v5719 = vadd.f32 %v5718, 1.0
    %v5720 = vrcp.pop %v5719
    %v5721 = vmul.f32 %v5719, %v5720
    %v5722 = vsub.f32 1.0, %v5721
    %v5723 = vmul.f32 %v5720, %v5722
    %v5724 = vadd.f32 %v5720, %v5723
    %vm5725 = vweird.f32 %v5719
    %vm5726 = vweird.f32 %v5720
    %vm5727 = vmor %vm5725, %vm5726
    %v5728 = vsel %vm5727, %v5720, %v5724
    %v5729 = vand.u32 2147483647, %v5719
    %vm5730 = vcmp.eq.f32.partialorder %v5729, 8.507059e+37
    %v5731 = vand.u32 %v5719, 2147483648
    %v5732 = vor.u32 1.1754944e-38, %v5731
    %v5733 = vsel %vm5730, %v5732, %v5728
    %v5734 = vmul.f32 1.0, %v5733
    %v5735 = vtanh.pop %v5715
    %v5736 = vmul.f32 %v5734, %v5627
    %5738 = vrot.lane.b32.xlu0 %v5735, 64
    %v5739 = vpop.permute.xlu0 %5738
    %v5741 = vmul.f32 %v5734, %v5739
    %5743 = vrot.lane.b32.xlu0 %v5741, 32
    %v5744 = vpop.permute.xlu0 %5743
    %v5746 = vadd.f32 %v5736, %v5744
    %v5747 = vtanh.pop %v5746
    %5749 = vrot.lane.b32.xlu0 %v5747, 64
    %v5750 = vpop.permute.xlu0 %5749
    %v5752 = vmul.f32 %v5734, %v5750
    %v5753 = vadd.f32 %v5752, %v5394
    %5755 = vrot.lane.b32.xlu0 %v5753, 32
    %v5756 = vpop.permute.xlu0 %5755
    %v5757 = vsel %vm4051, %v5756, 0
    %5759 = vmatpush.xpose.msra.mxu0 0.0
    %5760 = vmatpush.xpose.msra.mxu0 0.0
    %5761 = vmatpush.xpose.msra.mxu0 0.0
    %5762 = vmatpush.xpose.msra.mxu0 0.0
    %5763 = vmatpush.xpose.msra.mxu0 0.0
    %5764 = vmatpush.xpose.msra.mxu0 0.0
    %5765 = vmatpush.xpose.msra.mxu0 0.0
    %5766 = vmatpush.xpose.msra.mxu0 0.0
    %5767 = vmatpush.xpose.msra.mxu0 0.0
    %5768 = vmatpush.xpose.msra.mxu0 0.0
    %5769 = vmatpush.xpose.msra.mxu0 0.0
    %5770 = vmatpush.xpose.msra.mxu0 0.0
    %5771 = vmatpush.xpose.msra.mxu0 0.0
    %5772 = vmatpush.xpose.msra.mxu0 0.0
    %5773 = vmatpush.xpose.msra.mxu0 0.0
    %5774 = vmatpush.xpose.msra.mxu0 %v5222
    %5775 = vmatmul.f32.gmra.mxu0 %v5757
    %v5776 = vpop.f32.mrf.mxu0
    %v5777 = vadd.f32 0.0, %v5776
    %5778 = vdwg.mxu0
    %v5779 = vsel %vm5299, %v5777, -inf
    %5780 = vmax.xlane.f32.xlu0 %v5779
    %v5781 = vpop.xlane.xlu0 %5780
    %v5782 = vsub.f32 %v5777, %v5781
    %v5783 = vmul.f32 %v5782, 1.442695
    %v5784 = vpow.pop %v5783
    %v5785 = vsel %vm5299, %v5784, 0.0
    %5786 = vadd.xlane.f32.xlu0 %v5785
    %v5787 = vpop.xlane.xlu0 %5786
    %v5788 = vrcp.pop %v5787
    %v5789 = vmul.f32 %v5784, %v5788
    %v5791 = vsel %vm3150, %v5789, 0
    %5793 = vmatpush.msra.mxu0 0.0
    %5794 = vmatpush.msra.mxu0 0.0
    %5795 = vmatpush.msra.mxu0 0.0
    %5796 = vmatpush.msra.mxu0 0.0
    %5797 = vmatpush.msra.mxu0 0.0
    %5798 = vmatpush.msra.mxu0 0.0
    %5799 = vmatpush.msra.mxu0 0.0
    %5800 = vmatpush.msra.mxu0 0.0
    %5801 = vmatpush.msra.mxu0 0.0
    %5802 = vmatpush.msra.mxu0 0.0
    %5803 = vmatpush.msra.mxu0 0.0
    %5804 = vmatpush.msra.mxu0 0.0
    %5805 = vmatpush.msra.mxu0 0.0
    %5806 = vmatpush.msra.mxu0 0.0
    %5807 = vmatpush.msra.mxu0 0.0
    %5808 = vmatpush.msra.mxu0 %v5242
    %5809 = vmatmul.f32.gmra.mxu0 %v5791
    %v5810 = vpop.f32.mrf.mxu0
    %v5811 = vadd.f32 0.0, %v5810
    %5812 = vdwg.mxu0
    %v5813 = vadd.f32 %v5273, %v5811
    %5814 = vmatpush.msra.mxu0 0.0
    %5815 = vmatpush.msra.mxu0 0.0
    %5816 = vmatpush.msra.mxu0 0.0
    %5817 = vmatpush.msra.mxu0 0.0
    %5818 = vmatpush.msra.mxu0 0.0
    %5819 = vmatpush.msra.mxu0 0.0
    %5820 = vmatpush.msra.mxu0 0.0
    %5821 = vmatpush.msra.mxu0 0.0
    %5822 = vmatpush.msra.mxu0 0.0
    %5823 = vmatpush.msra.mxu0 0.0
    %5824 = vmatpush.msra.mxu0 0.0
    %5825 = vmatpush.msra.mxu0 0.0
    %5826 = vmatpush.msra.mxu0 %v5278
    %5827 = vmatpush.msra.mxu0 %v5277
    %5828 = vmatpush.msra.mxu0 %v5276
    %5829 = vmatpush.msra.mxu0 %v5275
    %5830 = vmatmul.f32.gmra.mxu0 %v5757
    %v5831 = vpop.f32.mrf.mxu0
    %v5832 = vadd.f32 0.0, %v5831
    %5833 = vdwg.mxu0
    %v5834 = vadd.f32 %v5813, %v5832
    %v5835 = vxor.u32 %v5834, 2147483648
    %v5836 = vmul.f32 %v5835, 1.442695
    %v5837 = vpow.pop %v5836
    %v5838 = vadd.f32 %v5837, 1.0
    %v5839 = vrcp.pop %v5838
    %v5840 = vmul.f32 %v5838, %v5839
    %v5841 = vsub.f32 1.0, %v5840
    %v5842 = vmul.f32 %v5839, %v5841
    %v5843 = vadd.f32 %v5839, %v5842
    %vm5844 = vweird.f32 %v5838
    %vm5845 = vweird.f32 %v5839
    %vm5846 = vmor %vm5844, %vm5845
    %v5847 = vsel %vm5846, %v5839, %v5843
    %v5848 = vand.u32 2147483647, %v5838
    %vm5849 = vcmp.eq.f32.partialorder %v5848, 8.507059e+37
    %v5850 = vand.u32 %v5838, 2147483648
    %v5851 = vor.u32 1.1754944e-38, %v5850
    %v5852 = vsel %vm5849, %v5851, %v5847
    %v5853 = vmul.f32 1.0, %v5852
    %v5854 = vtanh.pop %v5834
    %v5855 = vmul.f32 %v5853, %v5746
    %5857 = vrot.lane.b32.xlu0 %v5854, 64
    %v5858 = vpop.permute.xlu0 %5857
    %v5860 = vmul.f32 %v5853, %v5858
    %5862 = vrot.lane.b32.xlu0 %v5860, 32
    %v5863 = vpop.permute.xlu0 %5862
    %v5865 = vadd.f32 %v5855, %v5863
    %v5866 = vtanh.pop %v5865
    %5868 = vrot.lane.b32.xlu0 %v5866, 64
    %v5869 = vpop.permute.xlu0 %5868
    %v5871 = vmul.f32 %v5853, %v5869
    %v5872 = vadd.f32 %v5871, %v5394
    %5874 = vrot.lane.b32.xlu0 %v5872, 32
    %v5875 = vpop.permute.xlu0 %5874
    %v5876 = vsel %vm4051, %v5875, 0
    %5878 = vmatpush.xpose.msra.mxu0 0.0
    %5879 = vmatpush.xpose.msra.mxu0 0.0
    %5880 = vmatpush.xpose.msra.mxu0 0.0
    %5881 = vmatpush.xpose.msra.mxu0 0.0
    %5882 = vmatpush.xpose.msra.mxu0 0.0
    %5883 = vmatpush.xpose.msra.mxu0 0.0
    %5884 = vmatpush.xpose.msra.mxu0 0.0
    %5885 = vmatpush.xpose.msra.mxu0 0.0
    %5886 = vmatpush.xpose.msra.mxu0 0.0
    %5887 = vmatpush.xpose.msra.mxu0 0.0
    %5888 = vmatpush.xpose.msra.mxu0 0.0
    %5889 = vmatpush.xpose.msra.mxu0 0.0
    %5890 = vmatpush.xpose.msra.mxu0 0.0
    %5891 = vmatpush.xpose.msra.mxu0 0.0
    %5892 = vmatpush.xpose.msra.mxu0 0.0
    %5893 = vmatpush.xpose.msra.mxu0 %v5222
    %5894 = vmatmul.f32.gmra.mxu0 %v5876
    %v5895 = vpop.f32.mrf.mxu0
    %v5896 = vadd.f32 0.0, %v5895
    %5897 = vdwg.mxu0
    %v5898 = vsel %vm5299, %v5896, -inf
    %5899 = vmax.xlane.f32.xlu0 %v5898
    %v5900 = vpop.xlane.xlu0 %5899
    %v5901 = vsub.f32 %v5896, %v5900
    %v5902 = vmul.f32 %v5901, 1.442695
    %v5903 = vpow.pop %v5902
    %v5904 = vsel %vm5299, %v5903, 0.0
    %5905 = vadd.xlane.f32.xlu0 %v5904
    %v5906 = vpop.xlane.xlu0 %5905
    %v5907 = vrcp.pop %v5906
    %v5908 = vmul.f32 %v5903, %v5907
    %v5910 = vsel %vm3150, %v5908, 0
    %5912 = vmatpush.msra.mxu0 0.0
    %5913 = vmatpush.msra.mxu0 0.0
    %5914 = vmatpush.msra.mxu0 0.0
    %5915 = vmatpush.msra.mxu0 0.0
    %5916 = vmatpush.msra.mxu0 0.0
    %5917 = vmatpush.msra.mxu0 0.0
    %5918 = vmatpush.msra.mxu0 0.0
    %5919 = vmatpush.msra.mxu0 0.0
    %5920 = vmatpush.msra.mxu0 0.0
    %5921 = vmatpush.msra.mxu0 0.0
    %5922 = vmatpush.msra.mxu0 0.0
    %5923 = vmatpush.msra.mxu0 0.0
    %5924 = vmatpush.msra.mxu0 0.0
    %5925 = vmatpush.msra.mxu0 0.0
    %5926 = vmatpush.msra.mxu0 0.0
    %5927 = vmatpush.msra.mxu0 %v5242
    %5928 = vmatmul.f32.gmra.mxu0 %v5910
    %v5929 = vpop.f32.mrf.mxu0
    %v5930 = vadd.f32 0.0, %v5929
    %5931 = vdwg.mxu0
    %v5932 = vadd.f32 %v5273, %v5930
    %5933 = vmatpush.msra.mxu0 0.0
    %5934 = vmatpush.msra.mxu0 0.0
    %5935 = vmatpush.msra.mxu0 0.0
    %5936 = vmatpush.msra.mxu0 0.0
    %5937 = vmatpush.msra.mxu0 0.0
    %5938 = vmatpush.msra.mxu0 0.0
    %5939 = vmatpush.msra.mxu0 0.0
    %5940 = vmatpush.msra.mxu0 0.0
    %5941 = vmatpush.msra.mxu0 0.0
    %5942 = vmatpush.msra.mxu0 0.0
    %5943 = vmatpush.msra.mxu0 0.0
    %5944 = vmatpush.msra.mxu0 0.0
    %5945 = vmatpush.msra.mxu0 %v5278
    %5946 = vmatpush.msra.mxu0 %v5277
    %5947 = vmatpush.msra.mxu0 %v5276
    %5948 = vmatpush.msra.mxu0 %v5275
    %5949 = vmatmul.f32.gmra.mxu0 %v5876
    %v5950 = vpop.f32.mrf.mxu0
    %v5951 = vadd.f32 0.0, %v5950
    %5952 = vdwg.mxu0
    %v5953 = vadd.f32 %v5932, %v5951
    %v5954 = vxor.u32 %v5953, 2147483648
    %v5955 = vmul.f32 %v5954, 1.442695
    %v5956 = vpow.pop %v5955
    %v5957 = vadd.f32 %v5956, 1.0
    %v5958 = vrcp.pop %v5957
    %v5959 = vmul.f32 %v5957, %v5958
    %v5960 = vsub.f32 1.0, %v5959
    %v5961 = vmul.f32 %v5958, %v5960
    %v5962 = vadd.f32 %v5958, %v5961
    %vm5963 = vweird.f32 %v5957
    %vm5964 = vweird.f32 %v5958
    %vm5965 = vmor %vm5963, %vm5964
    %v5966 = vsel %vm5965, %v5958, %v5962
    %v5967 = vand.u32 2147483647, %v5957
    %vm5968 = vcmp.eq.f32.partialorder %v5967, 8.507059e+37
    %v5969 = vand.u32 %v5957, 2147483648
    %v5970 = vor.u32 1.1754944e-38, %v5969
    %v5971 = vsel %vm5968, %v5970, %v5966
    %v5972 = vmul.f32 1.0, %v5971
    %v5973 = vtanh.pop %v5953
    %v5974 = vmul.f32 %v5972, %v5865
    %5976 = vrot.lane.b32.xlu0 %v5973, 64
    %v5977 = vpop.permute.xlu0 %5976
    %v5979 = vmul.f32 %v5972, %v5977
    %5981 = vrot.lane.b32.xlu0 %v5979, 32
    %v5982 = vpop.permute.xlu0 %5981
    %v5984 = vadd.f32 %v5974, %v5982
    %v5985 = vtanh.pop %v5984
    %5987 = vrot.lane.b32.xlu0 %v5985, 64
    %v5988 = vpop.permute.xlu0 %5987
    %v5990 = vmul.f32 %v5972, %v5988
    %v5991 = vadd.f32 %v5990, %v5394
    %5993 = vrot.lane.b32.xlu0 %v5991, 32
    %v5994 = vpop.permute.xlu0 %5993
    %v5995 = vsel %vm4051, %v5994, 0
    %5997 = vmatpush.xpose.msra.mxu0 0.0
    %5998 = vmatpush.xpose.msra.mxu0 0.0
    %5999 = vmatpush.xpose.msra.mxu0 0.0
    %6000 = vmatpush.xpose.msra.mxu0 0.0
    %6001 = vmatpush.xpose.msra.mxu0 0.0
    %6002 = vmatpush.xpose.msra.mxu0 0.0
    %6003 = vmatpush.xpose.msra.mxu0 0.0
    %6004 = vmatpush.xpose.msra.mxu0 0.0
    %6005 = vmatpush.xpose.msra.mxu0 0.0
    %6006 = vmatpush.xpose.msra.mxu0 0.0
    %6007 = vmatpush.xpose.msra.mxu0 0.0
    %6008 = vmatpush.xpose.msra.mxu0 0.0
    %6009 = vmatpush.xpose.msra.mxu0 0.0
    %6010 = vmatpush.xpose.msra.mxu0 0.0
    %6011 = vmatpush.xpose.msra.mxu0 0.0
    %6012 = vmatpush.xpose.msra.mxu0 %v5222
    %6013 = vmatmul.f32.gmra.mxu0 %v5995
    %v6014 = vpop.f32.mrf.mxu0
    %v6015 = vadd.f32 0.0, %v6014
    %6016 = vdwg.mxu0
    %v6017 = vsel %vm5299, %v6015, -inf
    %6018 = vmax.xlane.f32.xlu0 %v6017
    %v6019 = vpop.xlane.xlu0 %6018
    %v6020 = vsub.f32 %v6015, %v6019
    %v6021 = vmul.f32 %v6020, 1.442695
    %v6022 = vpow.pop %v6021
    %v6023 = vsel %vm5299, %v6022, 0.0
    %6024 = vadd.xlane.f32.xlu0 %v6023
    %v6025 = vpop.xlane.xlu0 %6024
    %v6026 = vrcp.pop %v6025
    %v6027 = vmul.f32 %v6022, %v6026
    %v6029 = vsel %vm3150, %v6027, 0
    %6031 = vmatpush.msra.mxu0 0.0
    %6032 = vmatpush.msra.mxu0 0.0
    %6033 = vmatpush.msra.mxu0 0.0
    %6034 = vmatpush.msra.mxu0 0.0
    %6035 = vmatpush.msra.mxu0 0.0
    %6036 = vmatpush.msra.mxu0 0.0
    %6037 = vmatpush.msra.mxu0 0.0
    %6038 = vmatpush.msra.mxu0 0.0
    %6039 = vmatpush.msra.mxu0 0.0
    %6040 = vmatpush.msra.mxu0 0.0
    %6041 = vmatpush.msra.mxu0 0.0
    %6042 = vmatpush.msra.mxu0 0.0
    %6043 = vmatpush.msra.mxu0 0.0
    %6044 = vmatpush.msra.mxu0 0.0
    %6045 = vmatpush.msra.mxu0 0.0
    %6046 = vmatpush.msra.mxu0 %v5242
    %6047 = vmatmul.f32.gmra.mxu0 %v6029
    %v6048 = vpop.f32.mrf.mxu0
    %v6049 = vadd.f32 0.0, %v6048
    %6050 = vdwg.mxu0
    %v6051 = vadd.f32 %v5273, %v6049
    %6052 = vmatpush.msra.mxu0 0.0
    %6053 = vmatpush.msra.mxu0 0.0
    %6054 = vmatpush.msra.mxu0 0.0
    %6055 = vmatpush.msra.mxu0 0.0
    %6056 = vmatpush.msra.mxu0 0.0
    %6057 = vmatpush.msra.mxu0 0.0
    %6058 = vmatpush.msra.mxu0 0.0
    %6059 = vmatpush.msra.mxu0 0.0
    %6060 = vmatpush.msra.mxu0 0.0
    %6061 = vmatpush.msra.mxu0 0.0
    %6062 = vmatpush.msra.mxu0 0.0
    %6063 = vmatpush.msra.mxu0 0.0
    %6064 = vmatpush.msra.mxu0 %v5278
    %6065 = vmatpush.msra.mxu0 %v5277
    %6066 = vmatpush.msra.mxu0 %v5276
    %6067 = vmatpush.msra.mxu0 %v5275
    %6068 = vmatmul.f32.gmra.mxu0 %v5995
    %v6069 = vpop.f32.mrf.mxu0
    %v6070 = vadd.f32 0.0, %v6069
    %6071 = vdwg.mxu0
    %v6072 = vadd.f32 %v6051, %v6070
    %v6073 = vxor.u32 %v6072, 2147483648
    %v6074 = vmul.f32 %v6073, 1.442695
    %v6075 = vpow.pop %v6074
    %v6076 = vadd.f32 %v6075, 1.0
    %v6077 = vrcp.pop %v6076
    %v6078 = vmul.f32 %v6076, %v6077
    %v6079 = vsub.f32 1.0, %v6078
    %v6080 = vmul.f32 %v6077, %v6079
    %v6081 = vadd.f32 %v6077, %v6080
    %vm6082 = vweird.f32 %v6076
    %vm6083 = vweird.f32 %v6077
    %vm6084 = vmor %vm6082, %vm6083
    %v6085 = vsel %vm6084, %v6077, %v6081
    %v6086 = vand.u32 2147483647, %v6076
    %vm6087 = vcmp.eq.f32.partialorder %v6086, 8.507059e+37
    %v6088 = vand.u32 %v6076, 2147483648
    %v6089 = vor.u32 1.1754944e-38, %v6088
    %v6090 = vsel %vm6087, %v6089, %v6085
    %v6091 = vmul.f32 1.0, %v6090
    %v6092 = vtanh.pop %v6072
    %v6093 = vmul.f32 %v6091, %v5984
    %6095 = vrot.lane.b32.xlu0 %v6092, 64
    %v6096 = vpop.permute.xlu0 %6095
    %v6098 = vmul.f32 %v6091, %v6096
    %6100 = vrot.lane.b32.xlu0 %v6098, 32
    %v6101 = vpop.permute.xlu0 %6100
    %v6103 = vadd.f32 %v6093, %v6101
    %v6104 = vtanh.pop %v6103
    %6106 = vrot.lane.b32.xlu0 %v6104, 64
    %v6107 = vpop.permute.xlu0 %6106
    %v6109 = vmul.f32 %v6091, %v6107
    %v6110 = vadd.f32 %v6109, %v5394
    %6112 = vrot.lane.b32.xlu0 %v6110, 32
    %v6113 = vpop.permute.xlu0 %6112
    %v6114 = vsel %vm4051, %v6113, 0
    %6116 = vmatpush.xpose.msra.mxu0 0.0
    %6117 = vmatpush.xpose.msra.mxu0 0.0
    %6118 = vmatpush.xpose.msra.mxu0 0.0
    %6119 = vmatpush.xpose.msra.mxu0 0.0
    %6120 = vmatpush.xpose.msra.mxu0 0.0
    %6121 = vmatpush.xpose.msra.mxu0 0.0
    %6122 = vmatpush.xpose.msra.mxu0 0.0
    %6123 = vmatpush.xpose.msra.mxu0 0.0
    %6124 = vmatpush.xpose.msra.mxu0 0.0
    %6125 = vmatpush.xpose.msra.mxu0 0.0
    %6126 = vmatpush.xpose.msra.mxu0 0.0
    %6127 = vmatpush.xpose.msra.mxu0 0.0
    %6128 = vmatpush.xpose.msra.mxu0 0.0
    %6129 = vmatpush.xpose.msra.mxu0 0.0
    %6130 = vmatpush.xpose.msra.mxu0 0.0
    %6131 = vmatpush.xpose.msra.mxu0 %v5222
    %6132 = vmatmul.f32.gmra.mxu0 %v6114
    %v6133 = vpop.f32.mrf.mxu0
    %v6134 = vadd.f32 0.0, %v6133
    %6135 = vdwg.mxu0
    %v6136 = vsel %vm5299, %v6134, -inf
    %6137 = vmax.xlane.f32.xlu0 %v6136
    %v6138 = vpop.xlane.xlu0 %6137
    %v6139 = vsub.f32 %v6134, %v6138
    %v6140 = vmul.f32 %v6139, 1.442695
    %v6141 = vpow.pop %v6140
    %v6142 = vsel %vm5299, %v6141, 0.0
    %6143 = vadd.xlane.f32.xlu0 %v6142
    %v6144 = vpop.xlane.xlu0 %6143
    %v6145 = vrcp.pop %v6144
    %v6146 = vmul.f32 %v6141, %v6145
    %v6148 = vsel %vm3150, %v6146, 0
    %6150 = vmatpush.msra.mxu0 0.0
    %6151 = vmatpush.msra.mxu0 0.0
    %6152 = vmatpush.msra.mxu0 0.0
    %6153 = vmatpush.msra.mxu0 0.0
    %6154 = vmatpush.msra.mxu0 0.0
    %6155 = vmatpush.msra.mxu0 0.0
    %6156 = vmatpush.msra.mxu0 0.0
    %6157 = vmatpush.msra.mxu0 0.0
    %6158 = vmatpush.msra.mxu0 0.0
    %6159 = vmatpush.msra.mxu0 0.0
    %6160 = vmatpush.msra.mxu0 0.0
    %6161 = vmatpush.msra.mxu0 0.0
    %6162 = vmatpush.msra.mxu0 0.0
    %6163 = vmatpush.msra.mxu0 0.0
    %6164 = vmatpush.msra.mxu0 0.0
    %6165 = vmatpush.msra.mxu0 %v5242
    %6166 = vmatmul.f32.gmra.mxu0 %v6148
    %v6167 = vpop.f32.mrf.mxu0
    %v6168 = vadd.f32 0.0, %v6167
    %6169 = vdwg.mxu0
    %v6170 = vadd.f32 %v5273, %v6168
    %6171 = vmatpush.msra.mxu0 0.0
    %6172 = vmatpush.msra.mxu0 0.0
    %6173 = vmatpush.msra.mxu0 0.0
    %6174 = vmatpush.msra.mxu0 0.0
    %6175 = vmatpush.msra.mxu0 0.0
    %6176 = vmatpush.msra.mxu0 0.0
    %6177 = vmatpush.msra.mxu0 0.0
    %6178 = vmatpush.msra.mxu0 0.0
    %6179 = vmatpush.msra.mxu0 0.0
    %6180 = vmatpush.msra.mxu0 0.0
    %6181 = vmatpush.msra.mxu0 0.0
    %6182 = vmatpush.msra.mxu0 0.0
    %6183 = vmatpush.msra.mxu0 %v5278
    %6184 = vmatpush.msra.mxu0 %v5277
    %6185 = vmatpush.msra.mxu0 %v5276
    %6186 = vmatpush.msra.mxu0 %v5275
    %6187 = vmatmul.f32.gmra.mxu0 %v6114
    %v6188 = vpop.f32.mrf.mxu0
    %v6189 = vadd.f32 0.0, %v6188
    %6190 = vdwg.mxu0
    %v6191 = vadd.f32 %v6170, %v6189
    %v6192 = vxor.u32 %v6191, 2147483648
    %v6193 = vmul.f32 %v6192, 1.442695
    %v6194 = vpow.pop %v6193
    %v6195 = vadd.f32 %v6194, 1.0
    %v6196 = vrcp.pop %v6195
    %v6197 = vmul.f32 %v6195, %v6196
    %v6198 = vsub.f32 1.0, %v6197
    %v6199 = vmul.f32 %v6196, %v6198
    %v6200 = vadd.f32 %v6196, %v6199
    %vm6201 = vweird.f32 %v6195
    %vm6202 = vweird.f32 %v6196
    %vm6203 = vmor %vm6201, %vm6202
    %v6204 = vsel %vm6203, %v6196, %v6200
    %v6205 = vand.u32 2147483647, %v6195
    %vm6206 = vcmp.eq.f32.partialorder %v6205, 8.507059e+37
    %v6207 = vand.u32 %v6195, 2147483648
    %v6208 = vor.u32 1.1754944e-38, %v6207
    %v6209 = vsel %vm6206, %v6208, %v6204
    %v6210 = vmul.f32 1.0, %v6209
    %v6211 = vtanh.pop %v6191
    %v6212 = vmul.f32 %v6210, %v6103
    %6214 = vrot.lane.b32.xlu0 %v6211, 64
    %v6215 = vpop.permute.xlu0 %6214
    %v6217 = vmul.f32 %v6210, %v6215
    %6219 = vrot.lane.b32.xlu0 %v6217, 32
    %v6220 = vpop.permute.xlu0 %6219
    %v6222 = vadd.f32 %v6212, %v6220
    %v6223 = vtanh.pop %v6222
    %6225 = vrot.lane.b32.xlu0 %v6223, 64
    %v6226 = vpop.permute.xlu0 %6225
    %v6228 = vmul.f32 %v6210, %v6226
    %v6229 = vadd.f32 %v6228, %v5394
    %v6230 = vmul.f32 %v5216, %v5216
    %v6231 = vsel %vm4051, %v6230, 0.0
    %6232 = vadd.xlane.f32.xlu0 %v6231
    %v6233 = vpop.xlane.xlu0 %6232
    %v6234 = vadd.f32 %v6233, 1e-24
    %v6235 = vrsqrt.pop %v6234
    %v6236 = vmul.f32 %v6235, %v6234
    %v6237 = vmul.f32 %v6236, %v6235
    %v6238 = vmul.f32 0.5, %v6237
    %v6239 = vsub.f32 1.5, %v6238
    %v6240 = vmul.f32 %v6235, %v6239
    %vm6241 = vweird.f32 %v6234
    %vm6242 = vweird.f32 %v6235
    %vm6243 = vmor %vm6241, %vm6242
    %v6244 = vsel %vm6243, %v6235, %v6240
    %v6245 = vmul.f32 %v5216, %v6244
    %6247 = vrot.lane.b32.xlu0 %v6229, 32
    %v6248 = vpop.permute.xlu0 %6247
    %v6249 = vsel %vm4051, %v6248, 0
    %v6252 = vsel %vm4051, %v6245, 0
    %6254 = vmatpush.xpose.msra.mxu0 0.0
    %6255 = vmatpush.xpose.msra.mxu0 0.0
    %6256 = vmatpush.xpose.msra.mxu0 0.0
    %6257 = vmatpush.xpose.msra.mxu0 0.0
    %6258 = vmatpush.xpose.msra.mxu0 0.0
    %6259 = vmatpush.xpose.msra.mxu0 0.0
    %6260 = vmatpush.xpose.msra.mxu0 0.0
    %6261 = vmatpush.xpose.msra.mxu0 0.0
    %6262 = vmatpush.xpose.msra.mxu0 0.0
    %6263 = vmatpush.xpose.msra.mxu0 0.0
    %6264 = vmatpush.xpose.msra.mxu0 0.0
    %6265 = vmatpush.xpose.msra.mxu0 0.0
    %6266 = vmatpush.xpose.msra.mxu0 0.0
    %6267 = vmatpush.xpose.msra.mxu0 0.0
    %6268 = vmatpush.xpose.msra.mxu0 0.0
    %6269 = vmatpush.xpose.msra.mxu0 %v6252
    %6270 = vmatmul.f32.gmra.mxu0 %v6249
    %v6271 = vpop.f32.mrf.mxu0
    %v6272 = vadd.f32 0.0, %v6271
    %6273 = vdwg.mxu0
    %v6274 = vsel %vm5299, %v6272, -inf
    %6275 = vmax.xlane.f32.xlu0 %v6274
    %v6276 = vpop.xlane.xlu0 %6275
    %v6277 = vsub.f32 %v6272, %v6276
    %v6278 = vmul.f32 %v6277, 1.442695
    %v6279 = vpow.pop %v6278
    %v6280 = vsel %vm5299, %v6279, 0.0
    %6281 = vadd.xlane.f32.xlu0 %v6280
    %v6282 = vpop.xlane.xlu0 %6281
    %v6283 = vrcp.pop %v6282
    %v6284 = vmul.f32 %v6279, %v6283
    %v6285 = vld [vmem:[%s13] sm:$0xff]
    %v6287 = vsel %vm3150, %v6284, 0
    %6289 = vmatpush.msra.mxu0 0.0
    %6290 = vmatpush.msra.mxu0 0.0
    %6291 = vmatpush.msra.mxu0 0.0
    %6292 = vmatpush.msra.mxu0 0.0
    %6293 = vmatpush.msra.mxu0 0.0
    %6294 = vmatpush.msra.mxu0 0.0
    %6295 = vmatpush.msra.mxu0 0.0
    %6296 = vmatpush.msra.mxu0 0.0
    %6297 = vmatpush.msra.mxu0 0.0
    %6298 = vmatpush.msra.mxu0 0.0
    %6299 = vmatpush.msra.mxu0 0.0
    %6300 = vmatpush.msra.mxu0 0.0
    %6301 = vmatpush.msra.mxu0 0.0
    %6302 = vmatpush.msra.mxu0 0.0
    %6303 = vmatpush.msra.mxu0 0.0
    %6304 = vmatpush.msra.mxu0 %v6285
    %6305 = vmatmul.f32.gmra.mxu0 %v6287
    %v6306 = vpop.f32.mrf.mxu0
    %v6307 = vadd.f32 0.0001, %v6306
    %6308 = vdwg.mxu0
    %v6309 = vlog2.pop %v6307
    %v6310 = vmul.f32 %v6309, 0.6931472
    %vm6311 = vcmask 27648
    %6312 = vst.msk [vmem:[#allocation2] sm:$0xf] %vm6311, %v6310
    // Predicated region
    $region58: #{matching_network_forward.1} parent=1 // pred_check
      _
    $region59: #{matching_network_forward.1} parent=1 // pred_check_branch
      %6314 = sbr.rel (0) target = $region61
    $region60: #{matching_network_forward.1} parent=1 // pred_region
      %6316 = vsyncadd [#allocation3], 0
      %s6318 = sshll.u32 [#allocation2], 4
      %s6319 = int_to_ptr.vmem [resolvable:$true] %s6318
      %s6320 = sshll.u32 %s14, 4
      %s6321 = int_to_ptr.hbm [resolvable:$true] %s6320
      %6323 = dma.vmem_to_hbm [thread:$0]  %s6319, 64, %s6321, [#allocation3]
    $region61: #{matching_network_forward.1} parent=1 // pred_fallthru
      _
    // Predicated region
    $region62: #{matching_network_forward.1} parent=1 // pred_check
      _
    $region63: #{matching_network_forward.1} parent=1 // pred_check_branch
      %6325 = sbr.rel (0) target = $region65
    $region64: #{matching_network_forward.1} parent=1 // pred_region
      %6327 = dma.done [#allocation3], 64
    $region65: #{matching_network_forward.1} parent=1 // pred_fallthru
      _
    %6328 = vsyncpa [#allocation3], 1

</llo_original>
